<compile_context>
chip_gen: v5e
topology: v5e:2x2
jax: 0.10.0
libtpu: 0.0.40
codegen_flags: <defaults>
</compile_context>

<pallas_src>
import functools

import numpy as np

import jax
import jax.numpy as jnp
from jax.experimental import pallas as pl
from jax.experimental.pallas import tpu as pltpu


# ----------------------------------------------------------------------------
# pltpu.roll sign-convention probe (run eagerly once, cached)
# ----------------------------------------------------------------------------
_ROLL_MODE = None   # "np" | "inv" | "concat"


def _probe_roll_mode():
  """Resolve pltpu.roll's rotation direction with a one-off probe kernel.

  The fused kernel needs y[:, p] = x[:, (p + d) % L].  If pltpu.roll follows
  jnp.roll ("np": y[i] = x[(i - shift) % n]) the shift is (-d) % L; if it uses
  the inverse convention ("inv": y[i] = x[(i + shift) % n]) the shift is
  d % L.  If the probe cannot decide (or roll fails to lower) we fall back to
  a concatenate-of-slices shift ("concat").  Must be called eagerly (outside
  jit tracing) the first time; __main__ primes it before jitting the forward.
  """
  global _ROLL_MODE
  if _ROLL_MODE is not None:
    return _ROLL_MODE

  def probe(x_ref, o_ref):
    o_ref[...] = pltpu.roll(x_ref[...], 1, axis=1)

  try:
    x = jnp.arange(8 * 128, dtype=jnp.float32).reshape(8, 128)
    out = jax.device_get(
        pl.pallas_call(
            probe, out_shape=jax.ShapeDtypeStruct((8, 128), jnp.float32))(x))
    if out[0, 1] == 0.0:        # == x[0, 0]  -> jnp.roll convention
      _ROLL_MODE = "np"
    elif out[0, 1] == 2.0:      # == x[0, 2]  -> inverse convention
      _ROLL_MODE = "inv"
    else:
      _ROLL_MODE = "concat"
  except Exception:             # lowering unavailable -> safe fallback
    _ROLL_MODE = "concat"
  return _ROLL_MODE


# ----------------------------------------------------------------------------
# Fused Pallas kernel: TB batch elements per grid step, packed along lanes
# ----------------------------------------------------------------------------
def _fused_formant_disc_kernel(
    masks_ref, spec_ref, s4f_ref,
    ftw1, ftb1, ftw2, ftb2, ftw3, ftb3,
    cdw1, cdb1, cdw2, cdb2, cdw3, cdb3,
    heat_ref, score_ref, patch_ref, *, H, W, TB, roll_mode):
  """Refs per grid step n (L = TB*H*W):
       masks_ref : (72, L)    0/1 border masks; tap t's row repeated 8x and
                              tiled across the TB packed elements (resident)
       spec_ref  : (1, 1, L)  TB spectrograms, flattened + lane-packed
       s4f_ref   : (1, 1, L)  spectrograms fed to the formant tracker
       ft*/cd*   : im2col weights (Cout, 9*Cin) and biases (Cout, 1)
       heat_ref  : (1, 1, L)  formant heat-maps (packed like the inputs)
       score_ref : (1, 1, 128) per-element scores in the first TB lanes
       patch_ref : (72, L)    VMEM scratch for staged im2col patches
  """
  HW = H * W
  L = TB * HW
  offsets = tuple(dh * W + dw for dh in (-1, 0, 1) for dw in (-1, 0, 1))

  def lane_shift(x, d):
    # y[:, p] = x[:, (p + d) % L]; wrapped lanes land only in masked positions.
    d = d % L
    if d == 0:
      return x
    if roll_mode == "np":
      return pltpu.roll(x, (L - d) % L, axis=1)
    if roll_mode == "inv":
      return pltpu.roll(x, d, axis=1)
    return jnp.concatenate([x[:, d:], x[:, :d]], axis=1)

  def activate(y, kind):
    if kind == "relu":
      return jnp.maximum(y, 0.0)
    if kind == "leaky":
      return jnp.where(y >= 0.0, y, 0.2 * y)
    if kind == "sigmoid":
      return 0.5 * (jnp.tanh(0.5 * y) + 1.0)     # stable sigmoid, tanh on EUP
    return y

  def conv_small(x, cin, w_ref, b_ref, act):
    # Cin in {1, 2}: im2col patches (<= 18 rows) stay in vregs.
    taps = []
    for t, d in enumerate(offsets):
      taps.append(lane_shift(x, d) * masks_ref[t * 8:t * 8 + cin, :])
    patches = jnp.concatenate(taps, axis=0)                    # (9*cin, L)
    y = jnp.dot(w_ref[...], patches, preferred_element_type=jnp.float32)
    return activate(y + b_ref[...], act)

  def conv8(x, w_ref, b_ref, act):
    # Cin = 8: stage the 9 masked taps straight into the (72, L) VMEM scratch
    # (bounded vreg live ranges, no concat copy), then one im2col matmul.
    for t, d in enumerate(offsets):
      patch_ref[t * 8:(t + 1) * 8, :] = (
          lane_shift(x, d) * masks_ref[t * 8:(t + 1) * 8, :])
    y = jnp.dot(w_ref[...], patch_ref[...],
                preferred_element_type=jnp.float32)
    return activate(y + b_ref[...], act)

  spec = spec_ref[0]                                           # (1, L)
  s4f = s4f_ref[0]                                             # (1, L)

  # FormantTrackerWrapper (frozen, eval): 1 -> 8 -> 8 -> 1
  h = conv_small(s4f, 1, ftw1, ftb1, "relu")                   # (8, L)
  h = conv8(h, ftw2, ftb2, "relu")                             # (8, L)
  heat = conv8(h, ftw3, ftb3, "sigmoid")                       # (1, L)
  heat_ref[0] = heat

  # CombineDiscriminator on channel-concat(spec, heatmap): 2 -> 8 -> 8 -> 1
  x = jnp.concatenate([spec, heat], axis=0)                    # (2, L)
  x = conv_small(x, 2, cdw1, cdb1, "leaky")                    # (8, L)
  x = conv8(x, cdw2, cdb2, "leaky")                            # (8, L)
  y = conv8(x, cdw3, cdb3, "none")                             # (1, L)

  # Per-element global spatial means, packed into the first TB lanes of one
  # (1, 128) slab -> one unmasked store instead of TB tiny ones.
  lane = jax.lax.broadcasted_iota(jnp.int32, (1, 128), 1)
  slab = jnp.zeros((1, 128), jnp.float32)
  inv_hw = 1.0 / float(HW)
  for b in range(TB):
    s_b = jnp.sum(y[:, b * HW:(b + 1) * HW], axis=1, keepdims=True) * inv_hw
    slab = jnp.where(lane == b, s_b, slab)
  score_ref[0] = slab


# ----------------------------------------------------------------------------
# Host-side helpers
# ----------------------------------------------------------------------------
def _border_masks_rep8(H, W, TB):
  """(72, TB*H*W) 0/1 masks.  Rows [t*8, t*8+8) all equal the validity mask of
  3x3 tap t = (dh+1)*3 + (dw+1), tiled across the TB lane-packed elements.
  Pre-repeating each tap's row 8x means the kernel never emits a sublane
  broadcast for masking — it is a plain elementwise multiply."""
  p = np.arange(H * W)
  row, col = p // W, p % W
  blocks = []
  for dh in (-1, 0, 1):
    for dw in (-1, 0, 1):
      m = ((row + dh >= 0) & (row + dh < H) &
           (col + dw >= 0) & (col + dw < W)).astype(np.float32)
      m = np.tile(m, TB)                                       # (TB*HW,)
      blocks.append(np.broadcast_to(m, (8, m.shape[0])))
  return jnp.asarray(np.concatenate(blocks, axis=0))           # (72, TB*HW)


def _w_to_mat(w):
  """(3, 3, Cin, Cout) HWIO -> (Cout, 9*Cin), tap-major (kh, kw, cin)."""
  kh, kw, cin, cout = w.shape
  return jnp.transpose(w.reshape(kh * kw * cin, cout), (1, 0)).astype(jnp.float32)


def _pick_tb(N, HW):
  """Batch-block size: the largest divisor of N that (a) keeps the dominant
  resident VMEM users (the (72, TB*HW) patch scratch + masks, ~580 B/lane)
  well under every generation's scoped VMEM (incl. v5e's 16 MiB default),
  (b) leaves >= 2 grid steps when N >= 2 (v7x has 2 TensorCores), and
  (c) fits the TB scores into one 128-lane slab."""
  max_lanes = 16384
  cap = max(1, min(128, max_lanes // max(HW, 1)))
  if N >= 2:
    cap = min(cap, max(1, N // 2))
  tb = 1
  for cand in range(1, min(N, cap) + 1):
    if N % cand == 0:
      tb = cand
  return tb


def formant_discriminator_forward(params, spec_nchw, spec4formant_nchw, *,
                                  tb=None, roll_mode=None):
  """Mirrors FormantDiscriminator.forward (NCHW inputs, C == 1).

  Returns (score (N,), formant_heatmap (N, 1, H, W)).
  """
  N, C, H, W = spec_nchw.shape
  assert C == 1, "spectrogram inputs are expected to be single-channel"
  HW = H * W
  TB = _pick_tb(N, HW) if tb is None else tb
  assert N % TB == 0 and 1 <= TB <= 128
  NB = N // TB
  L = TB * HW
  if roll_mode is None:
    roll_mode = _probe_roll_mode()     # cached; primed eagerly in __main__

  spec = spec_nchw.astype(jnp.float32).reshape(NB, 1, L)
  s4f = spec4formant_nchw.astype(jnp.float32).reshape(NB, 1, L)
  masks = _border_masks_rep8(H, W, TB)                         # (72, L)

  ws = [_w_to_mat(params[k]) for k in
        ("ft_w1", "ft_w2", "ft_w3", "cd_w1", "cd_w2", "cd_w3")]
  bs = [params[k].reshape(-1, 1).astype(jnp.float32) for k in
        ("ft_b1", "ft_b2", "ft_b3", "cd_b1", "cd_b2", "cd_b3")]
  assert ws[1].shape == (8, 72), "kernel is specialized for hidden width 8"

  operands = [masks, spec, s4f]
  for w, b in zip(ws, bs):
    operands += [w, b]

  def batched_spec(shape):
    nd = len(shape)
    return pl.BlockSpec((1,) + tuple(shape[1:]),
                        lambda n, _nd=nd: (n,) + (0,) * (_nd - 1))

  def resident_spec(arr):
    nd = arr.ndim
    return pl.BlockSpec(tuple(arr.shape), lambda n, _nd=nd: (0,) * _nd)

  in_specs = [resident_spec(masks), batched_spec(spec.shape),
              batched_spec(s4f.shape)]
  for w, b in zip(ws, bs):
    in_specs += [resident_spec(w), resident_spec(b)]

  heat_flat, score_slab = pl.pallas_call(
      functools.partial(_fused_formant_disc_kernel,
                        H=H, W=W, TB=TB, roll_mode=roll_mode),
      out_shape=(jax.ShapeDtypeStruct((NB, 1, L), jnp.float32),
                 jax.ShapeDtypeStruct((NB, 1, 128), jnp.float32)),
      grid_spec=pltpu.PrefetchScalarGridSpec(
          num_scalar_prefetch=0,
          grid=(NB,),
          in_specs=in_specs,
          out_specs=[
              pl.BlockSpec((1, 1, L), lambda n: (n, 0, 0)),
              pl.BlockSpec((1, 1, 128), lambda n: (n, 0, 0)),
          ],
          scratch_shapes=[pltpu.VMEM((72, L), jnp.float32)]),
      compiler_params=pltpu.CompilerParams(
          dimension_semantics=("parallel",)),
  )(*operands)

  score = score_slab[:, 0, :TB].reshape(N)                     # (N,)
  heatmap = heat_flat.reshape(N, 1, H, W)                      # NCHW
  return score, heatmap


# ----------------------------------------------------------------------------
# Parameters (deterministic synthetic init — no checkpoint load)
# ----------------------------------------------------------------------------
def make_params(hidden=8):
  keys = jax.random.split(jax.random.PRNGKey(42), 6)

  def conv_w(key, cin, cout):
    return (jax.random.normal(key, (3, 3, cin, cout), jnp.float32)
            / jnp.sqrt(9.0 * cin))

  return {
      # FormantTrackerWrapper (frozen): 1 -> hidden -> hidden -> 1
      "ft_w1": conv_w(keys[0], 1, hidden), "ft_b1": jnp.zeros((hidden,), jnp.float32),
      "ft_w2": conv_w(keys[1], hidden, hidden), "ft_b2": jnp.zeros((hidden,), jnp.float32),
      "ft_w3": conv_w(keys[2], hidden, 1), "ft_b3": jnp.zeros((1,), jnp.float32),
      # CombineDiscriminator: 2 -> hidden -> hidden -> 1
      "cd_w1": conv_w(keys[3], 2, hidden), "cd_b1": jnp.zeros((hidden,), jnp.float32),
      "cd_w2": conv_w(keys[4], hidden, hidden), "cd_b2": jnp.zeros((hidden,), jnp.float32),
      "cd_w3": conv_w(keys[5], hidden, 1), "cd_b3": jnp.zeros((1,), jnp.float32),
  }


# ----------------------------------------------------------------------------
# Pure-JAX reference (XLA convs) used to validate the fused kernel
# ----------------------------------------------------------------------------
def _reference_forward(params, spec_nchw, spec4formant_nchw):
  def conv(x, w, b, act):
    y = jax.lax.conv_general_dilated(
        x, w, window_strides=(1, 1), padding="SAME",
        dimension_numbers=("NHWC", "HWIO", "NHWC"),
        precision=jax.lax.Precision.HIGHEST) + b
    if act == "relu":
      return jnp.maximum(y, 0.0)
    if act == "leaky":
      return jnp.where(y >= 0.0, y, 0.2 * y)
    if act == "sigmoid":
      return jax.nn.sigmoid(y)
    return y

  spec = jnp.transpose(spec_nchw, (0, 2, 3, 1)).astype(jnp.float32)
  s4f = jnp.transpose(spec4formant_nchw, (0, 2, 3, 1)).astype(jnp.float32)
  h = conv(s4f, params["ft_w1"], params["ft_b1"], "relu")
  h = conv(h, params["ft_w2"], params["ft_b2"], "relu")
  heat = conv(h, params["ft_w3"], params["ft_b3"], "sigmoid")
  x = jnp.concatenate([spec, heat], axis=-1)
  x = conv(x, params["cd_w1"], params["cd_b1"], "leaky")
  x = conv(x, params["cd_w2"], params["cd_b2"], "leaky")
  y = conv(x, params["cd_w3"], params["cd_b3"], "none")
  score = jnp.mean(y, axis=(1, 2, 3))
  heatmap = jnp.transpose(heat, (0, 3, 1, 2))
  return score, heatmap


if __name__ == "__main__":
  key = jax.random.PRNGKey(0)
  k1, k2 = jax.random.split(key)

  N, C, F, T = 8, 1, 16, 16                 # batch, channels, freq, time
  spec = jax.random.normal(k1, (N, C, F, T), jnp.float32)
  spec4formant = jax.random.normal(k2, (N, C, F, T), jnp.float32)

  params = make_params(hidden=8)

  _probe_roll_mode()                        # resolve roll convention pre-jit

  fwd = jax.jit(formant_discriminator_forward)
  score, heatmap = fwd(params, spec, spec4formant)
  jax.block_until_ready((score, heatmap))

  assert score.shape == (N,)
  assert heatmap.shape == (N, 1, F, T)
  assert bool(jnp.all(jnp.isfinite(score)))
  assert bool(jnp.all(jnp.isfinite(heatmap)))

  # Validate the fused kernel against the pure-JAX reference.
  ref_score, ref_heat = _reference_forward(params, spec, spec4formant)
  assert bool(jnp.allclose(score, ref_score, rtol=1e-3, atol=1e-5)), (
      float(jnp.max(jnp.abs(score - ref_score))))
  assert bool(jnp.allclose(heatmap, ref_heat, rtol=1e-3, atol=1e-5)), (
      float(jnp.max(jnp.abs(heatmap - ref_heat))))

  print("KERNEL_OK")
</pallas_src>

<mosaic_0001>
module attributes {stable_mosaic.version = 11 : i64} {
  func.func @probe(%arg0: memref<8x128xf32, #tpu.memory_space<vmem>>, %arg1: memref<8x128xf32, #tpu.memory_space<vmem>>) attributes {dimension_semantics = [], scalar_prefetch = 0 : i64, scratch_operands = 0 : i64, tpu.core_type = #tpu.core_type<tc>} {
    %c0 = arith.constant 0 : index
    %c0_0 = arith.constant 0 : index
    %0 = vector.load %arg0[%c0, %c0_0] : memref<8x128xf32, #tpu.memory_space<vmem>>, vector<8x128xf32>
    %c1_i32 = arith.constant 1 : i32
    %1 = tpu.dynamic_rotate %0 by %c1_i32 dim 1 : vector<8x128xf32>, i32 -> vector<8x128xf32>
    %c0_1 = arith.constant 0 : index
    %c0_2 = arith.constant 0 : index
    %2 = vector.load %arg1[%c0_1, %c0_2] : memref<8x128xf32, #tpu.memory_space<vmem>>, vector<8x128xf32>
    tpu.vector_store %arg1[%c0_1, %c0_2], %1 {strides = array<i32>} : memref<8x128xf32, #tpu.memory_space<vmem>>, vector<8x128xf32>,
    return
  }
}

module attributes {stable_mosaic.version = 11 : i64} {
  func.func @_fused_formant_disc_kernel(%arg0: i32, %arg1: memref<72x1024xf32, #tpu.memory_space<vmem>>, %arg2: memref<1x1x1024xf32, #tpu.memory_space<vmem>>, %arg3: memref<1x1x1024xf32, #tpu.memory_space<vmem>>, %arg4: memref<8x9xf32, #tpu.memory_space<vmem>>, %arg5: memref<8x1xf32, #tpu.memory_space<vmem>>, %arg6: memref<8x72xf32, #tpu.memory_space<vmem>>, %arg7: memref<8x1xf32, #tpu.memory_space<vmem>>, %arg8: memref<1x72xf32, #tpu.memory_space<vmem>>, %arg9: memref<1x1xf32, #tpu.memory_space<vmem>>, %arg10: memref<8x18xf32, #tpu.memory_space<vmem>>, %arg11: memref<8x1xf32, #tpu.memory_space<vmem>>, %arg12: memref<8x72xf32, #tpu.memory_space<vmem>>, %arg13: memref<8x1xf32, #tpu.memory_space<vmem>>, %arg14: memref<1x72xf32, #tpu.memory_space<vmem>>, %arg15: memref<1x1xf32, #tpu.memory_space<vmem>>, %arg16: memref<1x1x1024xf32, #tpu.memory_space<vmem>>, %arg17: memref<1x1x128xf32, #tpu.memory_space<vmem>>, %arg18: memref<72x1024xf32, #tpu.memory_space<vmem>>) attributes {dimension_semantics = [#tpu.dimension_semantics<parallel>], iteration_bounds = array<i64: 2>, scalar_prefetch = 0 : i64, scratch_operands = 1 : i64, tpu.core_type = #tpu.core_type<tc>, window_params = [{pipeline_mode = #tpu.pipeline_mode<synchronous>, transform_indices = @transform_0, window_bounds = array<i64: 72, 1024>}, {transform_indices = @transform_1, window_bounds = array<i64: 1, 1, 1024>}, {transform_indices = @transform_2, window_bounds = array<i64: 1, 1, 1024>}, {pipeline_mode = #tpu.pipeline_mode<synchronous>, transform_indices = @transform_3, window_bounds = array<i64: 8, 9>}, {pipeline_mode = #tpu.pipeline_mode<synchronous>, transform_indices = @transform_4, window_bounds = array<i64: 8, 1>}, {pipeline_mode = #tpu.pipeline_mode<synchronous>, transform_indices = @transform_5, window_bounds = array<i64: 8, 72>}, {pipeline_mode = #tpu.pipeline_mode<synchronous>, transform_indices = @transform_6, window_bounds = array<i64: 8, 1>}, {pipeline_mode = #tpu.pipeline_mode<synchronous>, transform_indices = @transform_7, window_bounds = array<i64: 1, 72>}, {pipeline_mode = #tpu.pipeline_mode<synchronous>, transform_indices = @transform_8, window_bounds = array<i64: 1, 1>}, {pipeline_mode = #tpu.pipeline_mode<synchronous>, transform_indices = @transform_9, window_bounds = array<i64: 8, 18>}, {pipeline_mode = #tpu.pipeline_mode<synchronous>, transform_indices = @transform_10, window_bounds = array<i64: 8, 1>}, {pipeline_mode = #tpu.pipeline_mode<synchronous>, transform_indices = @transform_11, window_bounds = array<i64: 8, 72>}, {pipeline_mode = #tpu.pipeline_mode<synchronous>, transform_indices = @transform_12, window_bounds = array<i64: 8, 1>}, {pipeline_mode = #tpu.pipeline_mode<synchronous>, transform_indices = @transform_13, window_bounds = array<i64: 1, 72>}, {pipeline_mode = #tpu.pipeline_mode<synchronous>, transform_indices = @transform_14, window_bounds = array<i64: 1, 1>}, {transform_indices = @transform_15, window_bounds = array<i64: 1, 1, 1024>}, {transform_indices = @transform_16, window_bounds = array<i64: 1, 1, 128>}]} {
    %c0 = arith.constant 0 : index
    %c0_0 = arith.constant 0 : index
    %c0_1 = arith.constant 0 : index
    %0 = vector.load %arg2[%c0, %c0_0, %c0_1] : memref<1x1x1024xf32, #tpu.memory_space<vmem>>, vector<1x1x1024xf32>
    %1 = vector.shape_cast %0 : vector<1x1x1024xf32> to vector<1x1024xf32>
    %c0_2 = arith.constant 0 : index
    %c0_3 = arith.constant 0 : index
    %c0_4 = arith.constant 0 : index
    %2 = vector.load %arg3[%c0_2, %c0_3, %c0_4] : memref<1x1x1024xf32, #tpu.memory_space<vmem>>, vector<1x1x1024xf32>
    %3 = vector.shape_cast %2 : vector<1x1x1024xf32> to vector<1x1024xf32>
    %4 = vector.extract_strided_slice %3 {offsets = [0, 1007], sizes = [1, 17], strides = [1, 1]} : vector<1x1024xf32> to vector<1x17xf32>
    %5 = vector.extract_strided_slice %3 {offsets = [0, 0], sizes = [1, 1007], strides = [1, 1]} : vector<1x1024xf32> to vector<1x1007xf32>
    %6 = tpu.concatenate %4, %5 in 1 : vector<1x17xf32>, vector<1x1007xf32> -> vector<1x1024xf32>
    %c0_5 = arith.constant 0 : index
    %c0_6 = arith.constant 0 : index
    %7 = vector.load %arg1[%c0_5, %c0_6] : memref<72x1024xf32, #tpu.memory_space<vmem>>, vector<1x1024xf32>
    %8 = arith.mulf %6, %7 : vector<1x1024xf32>
    %9 = vector.extract_strided_slice %3 {offsets = [0, 1008], sizes = [1, 16], strides = [1, 1]} : vector<1x1024xf32> to vector<1x16xf32>
    %10 = vector.extract_strided_slice %3 {offsets = [0, 0], sizes = [1, 1008], strides = [1, 1]} : vector<1x1024xf32> to vector<1x1008xf32>
    %11 = tpu.concatenate %9, %10 in 1 : vector<1x16xf32>, vector<1x1008xf32> -> vector<1x1024xf32>
    %c8 = arith.constant 8 : index
    %c0_7 = arith.constant 0 : index
    %12 = vector.load %arg1[%c8, %c0_7] : memref<72x1024xf32, #tpu.memory_space<vmem>>, vector<1x1024xf32>
    %13 = arith.mulf %11, %12 : vector<1x1024xf32>
    %14 = vector.extract_strided_slice %3 {offsets = [0, 1009], sizes = [1, 15], strides = [1, 1]} : vector<1x1024xf32> to vector<1x15xf32>
    %15 = vector.extract_strided_slice %3 {offsets = [0, 0], sizes = [1, 1009], strides = [1, 1]} : vector<1x1024xf32> to vector<1x1009xf32>
    %16 = tpu.concatenate %14, %15 in 1 : vector<1x15xf32>, vector<1x1009xf32> -> vector<1x1024xf32>
    %c16 = arith.constant 16 : index
    %c0_8 = arith.constant 0 : index
    %17 = vector.load %arg1[%c16, %c0_8] : memref<72x1024xf32, #tpu.memory_space<vmem>>, vector<1x1024xf32>
    %18 = arith.mulf %16, %17 : vector<1x1024xf32>
    %19 = vector.extract_strided_slice %3 {offsets = [0, 1023], sizes = [1, 1], strides = [1, 1]} : vector<1x1024xf32> to vector<1x1xf32>
    %20 = vector.extract_strided_slice %3 {offsets = [0, 0], sizes = [1, 1023], strides = [1, 1]} : vector<1x1024xf32> to vector<1x1023xf32>
    %21 = tpu.concatenate %19, %20 in 1 : vector<1x1xf32>, vector<1x1023xf32> -> vector<1x1024xf32>
    %c24 = arith.constant 24 : index
    %c0_9 = arith.constant 0 : index
    %22 = vector.load %arg1[%c24, %c0_9] : memref<72x1024xf32, #tpu.memory_space<vmem>>, vector<1x1024xf32>
    %23 = arith.mulf %21, %22 : vector<1x1024xf32>
    %c32 = arith.constant 32 : index
    %c0_10 = arith.constant 0 : index
    %24 = vector.load %arg1[%c32, %c0_10] : memref<72x1024xf32, #tpu.memory_space<vmem>>, vector<1x1024xf32>
    %25 = arith.mulf %3, %24 : vector<1x1024xf32>
    %26 = vector.extract_strided_slice %3 {offsets = [0, 1], sizes = [1, 1023], strides = [1, 1]} : vector<1x1024xf32> to vector<1x1023xf32>
    %27 = vector.extract_strided_slice %3 {offsets = [0, 0], sizes = [1, 1], strides = [1, 1]} : vector<1x1024xf32> to vector<1x1xf32>
    %28 = tpu.concatenate %26, %27 in 1 : vector<1x1023xf32>, vector<1x1xf32> -> vector<1x1024xf32>
    %c40 = arith.constant 40 : index
    %c0_11 = arith.constant 0 : index
    %29 = vector.load %arg1[%c40, %c0_11] : memref<72x1024xf32, #tpu.memory_space<vmem>>, vector<1x1024xf32>
    %30 = arith.mulf %28, %29 : vector<1x1024xf32>
    %31 = vector.extract_strided_slice %3 {offsets = [0, 15], sizes = [1, 1009], strides = [1, 1]} : vector<1x1024xf32> to vector<1x1009xf32>
    %32 = vector.extract_strided_slice %3 {offsets = [0, 0], sizes = [1, 15], strides = [1, 1]} : vector<1x1024xf32> to vector<1x15xf32>
    %33 = tpu.concatenate %31, %32 in 1 : vector<1x1009xf32>, vector<1x15xf32> -> vector<1x1024xf32>
    %c48 = arith.constant 48 : index
    %c0_12 = arith.constant 0 : index
    %34 = vector.load %arg1[%c48, %c0_12] : memref<72x1024xf32, #tpu.memory_space<vmem>>, vector<1x1024xf32>
    %35 = arith.mulf %33, %34 : vector<1x1024xf32>
    %36 = vector.extract_strided_slice %3 {offsets = [0, 16], sizes = [1, 1008], strides = [1, 1]} : vector<1x1024xf32> to vector<1x1008xf32>
    %37 = vector.extract_strided_slice %3 {offsets = [0, 0], sizes = [1, 16], strides = [1, 1]} : vector<1x1024xf32> to vector<1x16xf32>
    %38 = tpu.concatenate %36, %37 in 1 : vector<1x1008xf32>, vector<1x16xf32> -> vector<1x1024xf32>
    %c56 = arith.constant 56 : index
    %c0_13 = arith.constant 0 : index
    %39 = vector.load %arg1[%c56, %c0_13] : memref<72x1024xf32, #tpu.memory_space<vmem>>, vector<1x1024xf32>
    %40 = arith.mulf %38, %39 : vector<1x1024xf32>
    %41 = vector.extract_strided_slice %3 {offsets = [0, 17], sizes = [1, 1007], strides = [1, 1]} : vector<1x1024xf32> to vector<1x1007xf32>
    %42 = vector.extract_strided_slice %3 {offsets = [0, 0], sizes = [1, 17], strides = [1, 1]} : vector<1x1024xf32> to vector<1x17xf32>
    %43 = tpu.concatenate %41, %42 in 1 : vector<1x1007xf32>, vector<1x17xf32> -> vector<1x1024xf32>
    %c64 = arith.constant 64 : index
    %c0_14 = arith.constant 0 : index
    %44 = vector.load %arg1[%c64, %c0_14] : memref<72x1024xf32, #tpu.memory_space<vmem>>, vector<1x1024xf32>
    %45 = arith.mulf %43, %44 : vector<1x1024xf32>
    %46 = tpu.concatenate %8, %13, %18, %23, %25, %30, %35, %40, %45 in 0 : vector<1x1024xf32>, vector<1x1024xf32>, vector<1x1024xf32>, vector<1x1024xf32>, vector<1x1024xf32>, vector<1x1024xf32>, vector<1x1024xf32>, vector<1x1024xf32>, vector<1x1024xf32> -> vector<9x1024xf32>
    %c0_15 = arith.constant 0 : index
    %c0_16 = arith.constant 0 : index
    %47 = vector.load %arg4[%c0_15, %c0_16] : memref<8x9xf32, #tpu.memory_space<vmem>>, vector<8x9xf32>
    %cst = arith.constant dense<0.000000e+00> : vector<8x1024xf32>
    %48 = tpu.matmul %47, %46, %cst {dimension_numbers = #tpu.dot_dimension_numbers<[1], [0], [0], [1], [0, 0, 1, 1], [], []>} : vector<8x9xf32>, vector<9x1024xf32>, vector<8x1024xf32> -> vector<8x1024xf32>
    %c0_17 = arith.constant 0 : index
    %c0_18 = arith.constant 0 : index
    %49 = vector.load %arg5[%c0_17, %c0_18] : memref<8x1xf32, #tpu.memory_space<vmem>>, vector<8x1xf32>
    %50 = vector.broadcast %49 : vector<8x1xf32> to vector<8x1024xf32>
    %51 = arith.addf %48, %50 : vector<8x1024xf32>
    %cst_19 = arith.constant 0.000000e+00 : f32
    %52 = vector.broadcast %cst_19 : f32 to vector<8x1024xf32>
    %53 = arith.maximumf %51, %52 : vector<8x1024xf32>
    %54 = vector.extract_strided_slice %53 {offsets = [0, 1007], sizes = [8, 17], strides = [1, 1]} : vector<8x1024xf32> to vector<8x17xf32>
    %55 = vector.extract_strided_slice %53 {offsets = [0, 0], sizes = [8, 1007], strides = [1, 1]} : vector<8x1024xf32> to vector<8x1007xf32>
    %56 = tpu.concatenate %54, %55 in 1 : vector<8x17xf32>, vector<8x1007xf32> -> vector<8x1024xf32>
    %c0_20 = arith.constant 0 : index
    %c0_21 = arith.constant 0 : index
    %57 = vector.load %arg1[%c0_20, %c0_21] : memref<72x1024xf32, #tpu.memory_space<vmem>>, vector<8x1024xf32>
    %58 = arith.mulf %56, %57 : vector<8x1024xf32>
    %c0_22 = arith.constant 0 : index
    %c0_23 = arith.constant 0 : index
    %59 = vector.load %arg18[%c0_22, %c0_23] : memref<72x1024xf32, #tpu.memory_space<vmem>>, vector<8x1024xf32>
    tpu.vector_store %arg18[%c0_22, %c0_23], %58 {strides = array<i32>} : memref<72x1024xf32, #tpu.memory_space<vmem>>, vector<8x1024xf32>,
    %60 = vector.extract_strided_slice %53 {offsets = [0, 1008], sizes = [8, 16], strides = [1, 1]} : vector<8x1024xf32> to vector<8x16xf32>
    %61 = vector.extract_strided_slice %53 {offsets = [0, 0], sizes = [8, 1008], strides = [1, 1]} : vector<8x1024xf32> to vector<8x1008xf32>
    %62 = tpu.concatenate %60, %61 in 1 : vector<8x16xf32>, vector<8x1008xf32> -> vector<8x1024xf32>
    %c8_24 = arith.constant 8 : index
    %c0_25 = arith.constant 0 : index
    %63 = vector.load %arg1[%c8_24, %c0_25] : memref<72x1024xf32, #tpu.memory_space<vmem>>, vector<8x1024xf32>
    %64 = arith.mulf %62, %63 : vector<8x1024xf32>
    %c8_26 = arith.constant 8 : index
    %c0_27 = arith.constant 0 : index
    %65 = vector.load %arg18[%c8_26, %c0_27] : memref<72x1024xf32, #tpu.memory_space<vmem>>, vector<8x1024xf32>
    tpu.vector_store %arg18[%c8_26, %c0_27], %64 {strides = array<i32>} : memref<72x1024xf32, #tpu.memory_space<vmem>>, vector<8x1024xf32>,
    %66 = vector.extract_strided_slice %53 {offsets = [0, 1009], sizes = [8, 15], strides = [1, 1]} : vector<8x1024xf32> to vector<8x15xf32>
    %67 = vector.extract_strided_slice %53 {offsets = [0, 0], sizes = [8, 1009], strides = [1, 1]} : vector<8x1024xf32> to vector<8x1009xf32>
    %68 = tpu.concatenate %66, %67 in 1 : vector<8x15xf32>, vector<8x1009xf32> -> vector<8x1024xf32>
    %c16_28 = arith.constant 16 : index
    %c0_29 = arith.constant 0 : index
    %69 = vector.load %arg1[%c16_28, %c0_29] : memref<72x1024xf32, #tpu.memory_space<vmem>>, vector<8x1024xf32>
    %70 = arith.mulf %68, %69 : vector<8x1024xf32>
    %c16_30 = arith.constant 16 : index
    %c0_31 = arith.constant 0 : index
    %71 = vector.load %arg18[%c16_30, %c0_31] : memref<72x1024xf32, #tpu.memory_space<vmem>>, vector<8x1024xf32>
    tpu.vector_store %arg18[%c16_30, %c0_31], %70 {strides = array<i32>} : memref<72x1024xf32, #tpu.memory_space<vmem>>, vector<8x1024xf32>,
    %72 = vector.extract_strided_slice %53 {offsets = [0, 1023], sizes = [8, 1], strides = [1, 1]} : vector<8x1024xf32> to vector<8x1xf32>
    %73 = vector.extract_strided_slice %53 {offsets = [0, 0], sizes = [8, 1023], strides = [1, 1]} : vector<8x1024xf32> to vector<8x1023xf32>
    %74 = tpu.concatenate %72, %73 in 1 : vector<8x1xf32>, vector<8x1023xf32> -> vector<8x1024xf32>
    %c24_32 = arith.constant 24 : index
    %c0_33 = arith.constant 0 : index
    %75 = vector.load %arg1[%c24_32, %c0_33] : memref<72x1024xf32, #tpu.memory_space<vmem>>, vector<8x1024xf32>
    %76 = arith.mulf %74, %75 : vector<8x1024xf32>
    %c24_34 = arith.constant 24 : index
    %c0_35 = arith.constant 0 : index
    %77 = vector.load %arg18[%c24_34, %c0_35] : memref<72x1024xf32, #tpu.memory_space<vmem>>, vector<8x1024xf32>
    tpu.vector_store %arg18[%c24_34, %c0_35], %76 {strides = array<i32>} : memref<72x1024xf32, #tpu.memory_space<vmem>>, vector<8x1024xf32>,
    %c32_36 = arith.constant 32 : index
    %c0_37 = arith.constant 0 : index
    %78 = vector.load %arg1[%c32_36, %c0_37] : memref<72x1024xf32, #tpu.memory_space<vmem>>, vector<8x1024xf32>
    %79 = arith.mulf %53, %78 : vector<8x1024xf32>
    %c32_38 = arith.constant 32 : index
    %c0_39 = arith.constant 0 : index
    %80 = vector.load %arg18[%c32_38, %c0_39] : memref<72x1024xf32, #tpu.memory_space<vmem>>, vector<8x1024xf32>
    tpu.vector_store %arg18[%c32_38, %c0_39], %79 {strides = array<i32>} : memref<72x1024xf32, #tpu.memory_space<vmem>>, vector<8x1024xf32>,
    %81 = vector.extract_strided_slice %53 {offsets = [0, 1], sizes = [8, 1023], strides = [1, 1]} : vector<8x1024xf32> to vector<8x1023xf32>
    %82 = vector.extract_strided_slice %53 {offsets = [0, 0], sizes = [8, 1], strides = [1, 1]} : vector<8x1024xf32> to vector<8x1xf32>
    %83 = tpu.concatenate %81, %82 in 1 : vector<8x1023xf32>, vector<8x1xf32> -> vector<8x1024xf32>
    %c40_40 = arith.constant 40 : index
    %c0_41 = arith.constant 0 : index
    %84 = vector.load %arg1[%c40_40, %c0_41] : memref<72x1024xf32, #tpu.memory_space<vmem>>, vector<8x1024xf32>
    %85 = arith.mulf %83, %84 : vector<8x1024xf32>
    %c40_42 = arith.constant 40 : index
    %c0_43 = arith.constant 0 : index
    %86 = vector.load %arg18[%c40_42, %c0_43] : memref<72x1024xf32, #tpu.memory_space<vmem>>, vector<8x1024xf32>
    tpu.vector_store %arg18[%c40_42, %c0_43], %85 {strides = array<i32>} : memref<72x1024xf32, #tpu.memory_space<vmem>>, vector<8x1024xf32>,
    %87 = vector.extract_strided_slice %53 {offsets = [0, 15], sizes = [8, 1009], strides = [1, 1]} : vector<8x1024xf32> to vector<8x1009xf32>
    %88 = vector.extract_strided_slice %53 {offsets = [0, 0], sizes = [8, 15], strides = [1, 1]} : vector<8x1024xf32> to vector<8x15xf32>
    %89 = tpu.concatenate %87, %88 in 1 : vector<8x1009xf32>, vector<8x15xf32> -> vector<8x1024xf32>
    %c48_44 = arith.constant 48 : index
    %c0_45 = arith.constant 0 : index
    %90 = vector.load %arg1[%c48_44, %c0_45] : memref<72x1024xf32, #tpu.memory_space<vmem>>, vector<8x1024xf32>
    %91 = arith.mulf %89, %90 : vector<8x1024xf32>
    %c48_46 = arith.constant 48 : index
    %c0_47 = arith.constant 0 : index
    %92 = vector.load %arg18[%c48_46, %c0_47] : memref<72x1024xf32, #tpu.memory_space<vmem>>, vector<8x1024xf32>
    tpu.vector_store %arg18[%c48_46, %c0_47], %91 {strides = array<i32>} : memref<72x1024xf32, #tpu.memory_space<vmem>>, vector<8x1024xf32>,
    %93 = vector.extract_strided_slice %53 {offsets = [0, 16], sizes = [8, 1008], strides = [1, 1]} : vector<8x1024xf32> to vector<8x1008xf32>
    %94 = vector.extract_strided_slice %53 {offsets = [0, 0], sizes = [8, 16], strides = [1, 1]} : vector<8x1024xf32> to vector<8x16xf32>
    %95 = tpu.concatenate %93, %94 in 1 : vector<8x1008xf32>, vector<8x16xf32> -> vector<8x1024xf32>
    %c56_48 = arith.constant 56 : index
    %c0_49 = arith.constant 0 : index
    %96 = vector.load %arg1[%c56_48, %c0_49] : memref<72x1024xf32, #tpu.memory_space<vmem>>, vector<8x1024xf32>
    %97 = arith.mulf %95, %96 : vector<8x1024xf32>
    %c56_50 = arith.constant 56 : index
    %c0_51 = arith.constant 0 : index
    %98 = vector.load %arg18[%c56_50, %c0_51] : memref<72x1024xf32, #tpu.memory_space<vmem>>, vector<8x1024xf32>
    tpu.vector_store %arg18[%c56_50, %c0_51], %97 {strides = array<i32>} : memref<72x1024xf32, #tpu.memory_space<vmem>>, vector<8x1024xf32>,
    %99 = vector.extract_strided_slice %53 {offsets = [0, 17], sizes = [8, 1007], strides = [1, 1]} : vector<8x1024xf32> to vector<8x1007xf32>
    %100 = vector.extract_strided_slice %53 {offsets = [0, 0], sizes = [8, 17], strides = [1, 1]} : vector<8x1024xf32> to vector<8x17xf32>
    %101 = tpu.concatenate %99, %100 in 1 : vector<8x1007xf32>, vector<8x17xf32> -> vector<8x1024xf32>
    %c64_52 = arith.constant 64 : index
    %c0_53 = arith.constant 0 : index
    %102 = vector.load %arg1[%c64_52, %c0_53] : memref<72x1024xf32, #tpu.memory_space<vmem>>, vector<8x1024xf32>
    %103 = arith.mulf %101, %102 : vector<8x1024xf32>
    %c64_54 = arith.constant 64 : index
    %c0_55 = arith.constant 0 : index
    %104 = vector.load %arg18[%c64_54, %c0_55] : memref<72x1024xf32, #tpu.memory_space<vmem>>, vector<8x1024xf32>
    tpu.vector_store %arg18[%c64_54, %c0_55], %103 {strides = array<i32>} : memref<72x1024xf32, #tpu.memory_space<vmem>>, vector<8x1024xf32>,
    %c0_56 = arith.constant 0 : index
    %c0_57 = arith.constant 0 : index
    %105 = vector.load %arg6[%c0_56, %c0_57] : memref<8x72xf32, #tpu.memory_space<vmem>>, vector<8x72xf32>
    %c0_58 = arith.constant 0 : index
    %c0_59 = arith.constant 0 : index
    %106 = vector.load %arg18[%c0_58, %c0_59] : memref<72x1024xf32, #tpu.memory_space<vmem>>, vector<72x1024xf32>
    %cst_60 = arith.constant dense<0.000000e+00> : vector<8x1024xf32>
    %107 = tpu.matmul %105, %106, %cst_60 {dimension_numbers = #tpu.dot_dimension_numbers<[1], [0], [0], [1], [0, 0, 1, 1], [], []>} : vector<8x72xf32>, vector<72x1024xf32>, vector<8x1024xf32> -> vector<8x1024xf32>
    %c0_61 = arith.constant 0 : index
    %c0_62 = arith.constant 0 : index
    %108 = vector.load %arg7[%c0_61, %c0_62] : memref<8x1xf32, #tpu.memory_space<vmem>>, vector<8x1xf32>
    %109 = vector.broadcast %108 : vector<8x1xf32> to vector<8x1024xf32>
    %110 = arith.addf %107, %109 : vector<8x1024xf32>
    %cst_63 = arith.constant 0.000000e+00 : f32
    %111 = vector.broadcast %cst_63 : f32 to vector<8x1024xf32>
    %112 = arith.maximumf %110, %111 : vector<8x1024xf32>
    %113 = vector.extract_strided_slice %112 {offsets = [0, 1007], sizes = [8, 17], strides = [1, 1]} : vector<8x1024xf32> to vector<8x17xf32>
    %114 = vector.extract_strided_slice %112 {offsets = [0, 0], sizes = [8, 1007], strides = [1, 1]} : vector<8x1024xf32> to vector<8x1007xf32>
    %115 = tpu.concatenate %113, %114 in 1 : vector<8x17xf32>, vector<8x1007xf32> -> vector<8x1024xf32>
    %c0_64 = arith.constant 0 : index
    %c0_65 = arith.constant 0 : index
    %116 = vector.load %arg1[%c0_64, %c0_65] : memref<72x1024xf32, #tpu.memory_space<vmem>>, vector<8x1024xf32>
    %117 = arith.mulf %115, %116 : vector<8x1024xf32>
    %c0_66 = arith.constant 0 : index
    %c0_67 = arith.constant 0 : index
    %118 = vector.load %arg18[%c0_66, %c0_67] : memref<72x1024xf32, #tpu.memory_space<vmem>>, vector<8x1024xf32>
    tpu.vector_store %arg18[%c0_66, %c0_67], %117 {strides = array<i32>} : memref<72x1024xf32, #tpu.memory_space<vmem>>, vector<8x1024xf32>,
    %119 = vector.extract_strided_slice %112 {offsets = [0, 1008], sizes = [8, 16], strides = [1, 1]} : vector<8x1024xf32> to vector<8x16xf32>
    %120 = vector.extract_strided_slice %112 {offsets = [0, 0], sizes = [8, 1008], strides = [1, 1]} : vector<8x1024xf32> to vector<8x1008xf32>
    %121 = tpu.concatenate %119, %120 in 1 : vector<8x16xf32>, vector<8x1008xf32> -> vector<8x1024xf32>
    %c8_68 = arith.constant 8 : index
    %c0_69 = arith.constant 0 : index
    %122 = vector.load %arg1[%c8_68, %c0_69] : memref<72x1024xf32, #tpu.memory_space<vmem>>, vector<8x1024xf32>
    %123 = arith.mulf %121, %122 : vector<8x1024xf32>
    %c8_70 = arith.constant 8 : index
    %c0_71 = arith.constant 0 : index
    %124 = vector.load %arg18[%c8_70, %c0_71] : memref<72x1024xf32, #tpu.memory_space<vmem>>, vector<8x1024xf32>
    tpu.vector_store %arg18[%c8_70, %c0_71], %123 {strides = array<i32>} : memref<72x1024xf32, #tpu.memory_space<vmem>>, vector<8x1024xf32>,
    %125 = vector.extract_strided_slice %112 {offsets = [0, 1009], sizes = [8, 15], strides = [1, 1]} : vector<8x1024xf32> to vector<8x15xf32>
    %126 = vector.extract_strided_slice %112 {offsets = [0, 0], sizes = [8, 1009], strides = [1, 1]} : vector<8x1024xf32> to vector<8x1009xf32>
    %127 = tpu.concatenate %125, %126 in 1 : vector<8x15xf32>, vector<8x1009xf32> -> vector<8x1024xf32>
    %c16_72 = arith.constant 16 : index
    %c0_73 = arith.constant 0 : index
    %128 = vector.load %arg1[%c16_72, %c0_73] : memref<72x1024xf32, #tpu.memory_space<vmem>>, vector<8x1024xf32>
    %129 = arith.mulf %127, %128 : vector<8x1024xf32>
    %c16_74 = arith.constant 16 : index
    %c0_75 = arith.constant 0 : index
    %130 = vector.load %arg18[%c16_74, %c0_75] : memref<72x1024xf32, #tpu.memory_space<vmem>>, vector<8x1024xf32>
    tpu.vector_store %arg18[%c16_74, %c0_75], %129 {strides = array<i32>} : memref<72x1024xf32, #tpu.memory_space<vmem>>, vector<8x1024xf32>,
    %131 = vector.extract_strided_slice %112 {offsets = [0, 1023], sizes = [8, 1], strides = [1, 1]} : vector<8x1024xf32> to vector<8x1xf32>
    %132 = vector.extract_strided_slice %112 {offsets = [0, 0], sizes = [8, 1023], strides = [1, 1]} : vector<8x1024xf32> to vector<8x1023xf32>
    %133 = tpu.concatenate %131, %132 in 1 : vector<8x1xf32>, vector<8x1023xf32> -> vector<8x1024xf32>
    %c24_76 = arith.constant 24 : index
    %c0_77 = arith.constant 0 : index
    %134 = vector.load %arg1[%c24_76, %c0_77] : memref<72x1024xf32, #tpu.memory_space<vmem>>, vector<8x1024xf32>
    %135 = arith.mulf %133, %134 : vector<8x1024xf32>
    %c24_78 = arith.constant 24 : index
    %c0_79 = arith.constant 0 : index
    %136 = vector.load %arg18[%c24_78, %c0_79] : memref<72x1024xf32, #tpu.memory_space<vmem>>, vector<8x1024xf32>
    tpu.vector_store %arg18[%c24_78, %c0_79], %135 {strides = array<i32>} : memref<72x1024xf32, #tpu.memory_space<vmem>>, vector<8x1024xf32>,
    %c32_80 = arith.constant 32 : index
    %c0_81 = arith.constant 0 : index
    %137 = vector.load %arg1[%c32_80, %c0_81] : memref<72x1024xf32, #tpu.memory_space<vmem>>, vector<8x1024xf32>
    %138 = arith.mulf %112, %137 : vector<8x1024xf32>
    %c32_82 = arith.constant 32 : index
    %c0_83 = arith.constant 0 : index
    %139 = vector.load %arg18[%c32_82, %c0_83] : memref<72x1024xf32, #tpu.memory_space<vmem>>, vector<8x1024xf32>
    tpu.vector_store %arg18[%c32_82, %c0_83], %138 {strides = array<i32>} : memref<72x1024xf32, #tpu.memory_space<vmem>>, vector<8x1024xf32>,
    %140 = vector.extract_strided_slice %112 {offsets = [0, 1], sizes = [8, 1023], strides = [1, 1]} : vector<8x1024xf32> to vector<8x1023xf32>
    %141 = vector.extract_strided_slice %112 {offsets = [0, 0], sizes = [8, 1], strides = [1, 1]} : vector<8x1024xf32> to vector<8x1xf32>
    %142 = tpu.concatenate %140, %141 in 1 : vector<8x1023xf32>, vector<8x1xf32> -> vector<8x1024xf32>
    %c40_84 = arith.constant 40 : index
    %c0_85 = arith.constant 0 : index
    %143 = vector.load %arg1[%c40_84, %c0_85] : memref<72x1024xf32, #tpu.memory_space<vmem>>, vector<8x1024xf32>
    %144 = arith.mulf %142, %143 : vector<8x1024xf32>
    %c40_86 = arith.constant 40 : index
    %c0_87 = arith.constant 0 : index
    %145 = vector.load %arg18[%c40_86, %c0_87] : memref<72x1024xf32, #tpu.memory_space<vmem>>, vector<8x1024xf32>
    tpu.vector_store %arg18[%c40_86, %c0_87], %144 {strides = array<i32>} : memref<72x1024xf32, #tpu.memory_space<vmem>>, vector<8x1024xf32>,
    %146 = vector.extract_strided_slice %112 {offsets = [0, 15], sizes = [8, 1009], strides = [1, 1]} : vector<8x1024xf32> to vector<8x1009xf32>
    %147 = vector.extract_strided_slice %112 {offsets = [0, 0], sizes = [8, 15], strides = [1, 1]} : vector<8x1024xf32> to vector<8x15xf32>
    %148 = tpu.concatenate %146, %147 in 1 : vector<8x1009xf32>, vector<8x15xf32> -> vector<8x1024xf32>
    %c48_88 = arith.constant 48 : index
    %c0_89 = arith.constant 0 : index
    %149 = vector.load %arg1[%c48_88, %c0_89] : memref<72x1024xf32, #tpu.memory_space<vmem>>, vector<8x1024xf32>
    %150 = arith.mulf %148, %149 : vector<8x1024xf32>
    %c48_90 = arith.constant 48 : index
    %c0_91 = arith.constant 0 : index
    %151 = vector.load %arg18[%c48_90, %c0_91] : memref<72x1024xf32, #tpu.memory_space<vmem>>, vector<8x1024xf32>
    tpu.vector_store %arg18[%c48_90, %c0_91], %150 {strides = array<i32>} : memref<72x1024xf32, #tpu.memory_space<vmem>>, vector<8x1024xf32>,
    %152 = vector.extract_strided_slice %112 {offsets = [0, 16], sizes = [8, 1008], strides = [1, 1]} : vector<8x1024xf32> to vector<8x1008xf32>
    %153 = vector.extract_strided_slice %112 {offsets = [0, 0], sizes = [8, 16], strides = [1, 1]} : vector<8x1024xf32> to vector<8x16xf32>
    %154 = tpu.concatenate %152, %153 in 1 : vector<8x1008xf32>, vector<8x16xf32> -> vector<8x1024xf32>
    %c56_92 = arith.constant 56 : index
    %c0_93 = arith.constant 0 : index
    %155 = vector.load %arg1[%c56_92, %c0_93] : memref<72x1024xf32, #tpu.memory_space<vmem>>, vector<8x1024xf32>
    %156 = arith.mulf %154, %155 : vector<8x1024xf32>
    %c56_94 = arith.constant 56 : index
    %c0_95 = arith.constant 0 : index
    %157 = vector.load %arg18[%c56_94, %c0_95] : memref<72x1024xf32, #tpu.memory_space<vmem>>, vector<8x1024xf32>
    tpu.vector_store %arg18[%c56_94, %c0_95], %156 {strides = array<i32>} : memref<72x1024xf32, #tpu.memory_space<vmem>>, vector<8x1024xf32>,
    %158 = vector.extract_strided_slice %112 {offsets = [0, 17], sizes = [8, 1007], strides = [1, 1]} : vector<8x1024xf32> to vector<8x1007xf32>
    %159 = vector.extract_strided_slice %112 {offsets = [0, 0], sizes = [8, 17], strides = [1, 1]} : vector<8x1024xf32> to vector<8x17xf32>
    %160 = tpu.concatenate %158, %159 in 1 : vector<8x1007xf32>, vector<8x17xf32> -> vector<8x1024xf32>
    %c64_96 = arith.constant 64 : index
    %c0_97 = arith.constant 0 : index
    %161 = vector.load %arg1[%c64_96, %c0_97] : memref<72x1024xf32, #tpu.memory_space<vmem>>, vector<8x1024xf32>
    %162 = arith.mulf %160, %161 : vector<8x1024xf32>
    %c64_98 = arith.constant 64 : index
    %c0_99 = arith.constant 0 : index
    %163 = vector.load %arg18[%c64_98, %c0_99] : memref<72x1024xf32, #tpu.memory_space<vmem>>, vector<8x1024xf32>
    tpu.vector_store %arg18[%c64_98, %c0_99], %162 {strides = array<i32>} : memref<72x1024xf32, #tpu.memory_space<vmem>>, vector<8x1024xf32>,
    %c0_100 = arith.constant 0 : index
    %c0_101 = arith.constant 0 : index
    %164 = vector.load %arg8[%c0_100, %c0_101] : memref<1x72xf32, #tpu.memory_space<vmem>>, vector<1x72xf32>
    %c0_102 = arith.constant 0 : index
    %c0_103 = arith.constant 0 : index
    %165 = vector.load %arg18[%c0_102, %c0_103] : memref<72x1024xf32, #tpu.memory_space<vmem>>, vector<72x1024xf32>
    %cst_104 = arith.constant dense<0.000000e+00> : vector<1x1024xf32>
    %166 = tpu.matmul %164, %165, %cst_104 {dimension_numbers = #tpu.dot_dimension_numbers<[1], [0], [0], [1], [0, 0, 1, 1], [], []>} : vector<1x72xf32>, vector<72x1024xf32>, vector<1x1024xf32> -> vector<1x1024xf32>
    %c0_105 = arith.constant 0 : index
    %c0_106 = arith.constant 0 : index
    %167 = vector.load %arg9[%c0_105, %c0_106] : memref<1x1xf32, #tpu.memory_space<vmem>>, vector<1x1xf32>
    %168 = vector.broadcast %167 : vector<1x1xf32> to vector<1x1024xf32>
    %169 = arith.addf %166, %168 : vector<1x1024xf32>
    %cst_107 = arith.constant 5.000000e-01 : f32
    %170 = vector.broadcast %cst_107 : f32 to vector<1x1024xf32>
    %171 = arith.mulf %170, %169 : vector<1x1024xf32>
    %172 = math.tanh %171 : vector<1x1024xf32>
    %cst_108 = arith.constant 1.000000e+00 : f32
    %173 = vector.broadcast %cst_108 : f32 to vector<1x1024xf32>
    %174 = arith.addf %172, %173 : vector<1x1024xf32>
    %cst_109 = arith.constant 5.000000e-01 : f32
    %175 = vector.broadcast %cst_109 : f32 to vector<1x1024xf32>
    %176 = arith.mulf %175, %174 : vector<1x1024xf32>
    %c0_110 = arith.constant 0 : index
    %c0_111 = arith.constant 0 : index
    %c0_112 = arith.constant 0 : index
    %177 = vector.load %arg16[%c0_110, %c0_111, %c0_112] : memref<1x1x1024xf32, #tpu.memory_space<vmem>>, vector<1x1x1024xf32>
    %178 = vector.shape_cast %177 : vector<1x1x1024xf32> to vector<1x1024xf32>
    %179 = vector.shape_cast %176 : vector<1x1024xf32> to vector<1x1x1024xf32>
    tpu.vector_store %arg16[%c0_110, %c0_111, %c0_112], %179 {strides = array<i32>} : memref<1x1x1024xf32, #tpu.memory_space<vmem>>, vector<1x1x1024xf32>,
    %180 = tpu.concatenate %1, %176 in 0 : vector<1x1024xf32>, vector<1x1024xf32> -> vector<2x1024xf32>
    %181 = vector.extract_strided_slice %180 {offsets = [0, 1007], sizes = [2, 17], strides = [1, 1]} : vector<2x1024xf32> to vector<2x17xf32>
    %182 = vector.extract_strided_slice %180 {offsets = [0, 0], sizes = [2, 1007], strides = [1, 1]} : vector<2x1024xf32> to vector<2x1007xf32>
    %183 = tpu.concatenate %181, %182 in 1 : vector<2x17xf32>, vector<2x1007xf32> -> vector<2x1024xf32>
    %c0_113 = arith.constant 0 : index
    %c0_114 = arith.constant 0 : index
    %184 = vector.load %arg1[%c0_113, %c0_114] : memref<72x1024xf32, #tpu.memory_space<vmem>>, vector<2x1024xf32>
    %185 = arith.mulf %183, %184 : vector<2x1024xf32>
    %186 = vector.extract_strided_slice %180 {offsets = [0, 1008], sizes = [2, 16], strides = [1, 1]} : vector<2x1024xf32> to vector<2x16xf32>
    %187 = vector.extract_strided_slice %180 {offsets = [0, 0], sizes = [2, 1008], strides = [1, 1]} : vector<2x1024xf32> to vector<2x1008xf32>
    %188 = tpu.concatenate %186, %187 in 1 : vector<2x16xf32>, vector<2x1008xf32> -> vector<2x1024xf32>
    %c8_115 = arith.constant 8 : index
    %c0_116 = arith.constant 0 : index
    %189 = vector.load %arg1[%c8_115, %c0_116] : memref<72x1024xf32, #tpu.memory_space<vmem>>, vector<2x1024xf32>
    %190 = arith.mulf %188, %189 : vector<2x1024xf32>
    %191 = vector.extract_strided_slice %180 {offsets = [0, 1009], sizes = [2, 15], strides = [1, 1]} : vector<2x1024xf32> to vector<2x15xf32>
    %192 = vector.extract_strided_slice %180 {offsets = [0, 0], sizes = [2, 1009], strides = [1, 1]} : vector<2x1024xf32> to vector<2x1009xf32>
    %193 = tpu.concatenate %191, %192 in 1 : vector<2x15xf32>, vector<2x1009xf32> -> vector<2x1024xf32>
    %c16_117 = arith.constant 16 : index
    %c0_118 = arith.constant 0 : index
    %194 = vector.load %arg1[%c16_117, %c0_118] : memref<72x1024xf32, #tpu.memory_space<vmem>>, vector<2x1024xf32>
    %195 = arith.mulf %193, %194 : vector<2x1024xf32>
    %196 = vector.extract_strided_slice %180 {offsets = [0, 1023], sizes = [2, 1], strides = [1, 1]} : vector<2x1024xf32> to vector<2x1xf32>
    %197 = vector.extract_strided_slice %180 {offsets = [0, 0], sizes = [2, 1023], strides = [1, 1]} : vector<2x1024xf32> to vector<2x1023xf32>
    %198 = tpu.concatenate %196, %197 in 1 : vector<2x1xf32>, vector<2x1023xf32> -> vector<2x1024xf32>
    %c24_119 = arith.constant 24 : index
    %c0_120 = arith.constant 0 : index
    %199 = vector.load %arg1[%c24_119, %c0_120] : memref<72x1024xf32, #tpu.memory_space<vmem>>, vector<2x1024xf32>
    %200 = arith.mulf %198, %199 : vector<2x1024xf32>
    %c32_121 = arith.constant 32 : index
    %c0_122 = arith.constant 0 : index
    %201 = vector.load %arg1[%c32_121, %c0_122] : memref<72x1024xf32, #tpu.memory_space<vmem>>, vector<2x1024xf32>
    %202 = arith.mulf %180, %201 : vector<2x1024xf32>
    %203 = vector.extract_strided_slice %180 {offsets = [0, 1], sizes = [2, 1023], strides = [1, 1]} : vector<2x1024xf32> to vector<2x1023xf32>
    %204 = vector.extract_strided_slice %180 {offsets = [0, 0], sizes = [2, 1], strides = [1, 1]} : vector<2x1024xf32> to vector<2x1xf32>
    %205 = tpu.concatenate %203, %204 in 1 : vector<2x1023xf32>, vector<2x1xf32> -> vector<2x1024xf32>
    %c40_123 = arith.constant 40 : index
    %c0_124 = arith.constant 0 : index
    %206 = vector.load %arg1[%c40_123, %c0_124] : memref<72x1024xf32, #tpu.memory_space<vmem>>, vector<2x1024xf32>
    %207 = arith.mulf %205, %206 : vector<2x1024xf32>
    %208 = vector.extract_strided_slice %180 {offsets = [0, 15], sizes = [2, 1009], strides = [1, 1]} : vector<2x1024xf32> to vector<2x1009xf32>
    %209 = vector.extract_strided_slice %180 {offsets = [0, 0], sizes = [2, 15], strides = [1, 1]} : vector<2x1024xf32> to vector<2x15xf32>
    %210 = tpu.concatenate %208, %209 in 1 : vector<2x1009xf32>, vector<2x15xf32> -> vector<2x1024xf32>
    %c48_125 = arith.constant 48 : index
    %c0_126 = arith.constant 0 : index
    %211 = vector.load %arg1[%c48_125, %c0_126] : memref<72x1024xf32, #tpu.memory_space<vmem>>, vector<2x1024xf32>
    %212 = arith.mulf %210, %211 : vector<2x1024xf32>
    %213 = vector.extract_strided_slice %180 {offsets = [0, 16], sizes = [2, 1008], strides = [1, 1]} : vector<2x1024xf32> to vector<2x1008xf32>
    %214 = vector.extract_strided_slice %180 {offsets = [0, 0], sizes = [2, 16], strides = [1, 1]} : vector<2x1024xf32> to vector<2x16xf32>
    %215 = tpu.concatenate %213, %214 in 1 : vector<2x1008xf32>, vector<2x16xf32> -> vector<2x1024xf32>
    %c56_127 = arith.constant 56 : index
    %c0_128 = arith.constant 0 : index
    %216 = vector.load %arg1[%c56_127, %c0_128] : memref<72x1024xf32, #tpu.memory_space<vmem>>, vector<2x1024xf32>
    %217 = arith.mulf %215, %216 : vector<2x1024xf32>
    %218 = vector.extract_strided_slice %180 {offsets = [0, 17], sizes = [2, 1007], strides = [1, 1]} : vector<2x1024xf32> to vector<2x1007xf32>
    %219 = vector.extract_strided_slice %180 {offsets = [0, 0], sizes = [2, 17], strides = [1, 1]} : vector<2x1024xf32> to vector<2x17xf32>
    %220 = tpu.concatenate %218, %219 in 1 : vector<2x1007xf32>, vector<2x17xf32> -> vector<2x1024xf32>
    %c64_129 = arith.constant 64 : index
    %c0_130 = arith.constant 0 : index
    %221 = vector.load %arg1[%c64_129, %c0_130] : memref<72x1024xf32, #tpu.memory_space<vmem>>, vector<2x1024xf32>
    %222 = arith.mulf %220, %221 : vector<2x1024xf32>
    %223 = tpu.concatenate %185, %190, %195, %200, %202, %207, %212, %217, %222 in 0 : vector<2x1024xf32>, vector<2x1024xf32>, vector<2x1024xf32>, vector<2x1024xf32>, vector<2x1024xf32>, vector<2x1024xf32>, vector<2x1024xf32>, vector<2x1024xf32>, vector<2x1024xf32> -> vector<18x1024xf32>
    %c0_131 = arith.constant 0 : index
    %c0_132 = arith.constant 0 : index
    %224 = vector.load %arg10[%c0_131, %c0_132] : memref<8x18xf32, #tpu.memory_space<vmem>>, vector<8x18xf32>
    %cst_133 = arith.constant dense<0.000000e+00> : vector<8x1024xf32>
    %225 = tpu.matmul %224, %223, %cst_133 {dimension_numbers = #tpu.dot_dimension_numbers<[1], [0], [0], [1], [0, 0, 1, 1], [], []>} : vector<8x18xf32>, vector<18x1024xf32>, vector<8x1024xf32> -> vector<8x1024xf32>
    %c0_134 = arith.constant 0 : index
    %c0_135 = arith.constant 0 : index
    %226 = vector.load %arg11[%c0_134, %c0_135] : memref<8x1xf32, #tpu.memory_space<vmem>>, vector<8x1xf32>
    %227 = vector.broadcast %226 : vector<8x1xf32> to vector<8x1024xf32>
    %228 = arith.addf %225, %227 : vector<8x1024xf32>
    %cst_136 = arith.constant 0.000000e+00 : f32
    %229 = vector.broadcast %cst_136 : f32 to vector<8x1024xf32>
    %230 = arith.cmpf oge, %228, %229 : vector<8x1024xf32>
    %cst_137 = arith.constant 2.000000e-01 : f32
    %231 = vector.broadcast %cst_137 : f32 to vector<8x1024xf32>
    %232 = arith.mulf %231, %228 : vector<8x1024xf32>
    %233 = arith.select %230, %228, %232 : vector<8x1024xi1>, vector<8x1024xf32>
    %234 = vector.extract_strided_slice %233 {offsets = [0, 1007], sizes = [8, 17], strides = [1, 1]} : vector<8x1024xf32> to vector<8x17xf32>
    %235 = vector.extract_strided_slice %233 {offsets = [0, 0], sizes = [8, 1007], strides = [1, 1]} : vector<8x1024xf32> to vector<8x1007xf32>
    %236 = tpu.concatenate %234, %235 in 1 : vector<8x17xf32>, vector<8x1007xf32> -> vector<8x1024xf32>
    %c0_138 = arith.constant 0 : index
    %c0_139 = arith.constant 0 : index
    %237 = vector.load %arg1[%c0_138, %c0_139] : memref<72x1024xf32, #tpu.memory_space<vmem>>, vector<8x1024xf32>
    %238 = arith.mulf %236, %237 : vector<8x1024xf32>
    %c0_140 = arith.constant 0 : index
    %c0_141 = arith.constant 0 : index
    %239 = vector.load %arg18[%c0_140, %c0_141] : memref<72x1024xf32, #tpu.memory_space<vmem>>, vector<8x1024xf32>
    tpu.vector_store %arg18[%c0_140, %c0_141], %238 {strides = array<i32>} : memref<72x1024xf32, #tpu.memory_space<vmem>>, vector<8x1024xf32>,
    %240 = vector.extract_strided_slice %233 {offsets = [0, 1008], sizes = [8, 16], strides = [1, 1]} : vector<8x1024xf32> to vector<8x16xf32>
    %241 = vector.extract_strided_slice %233 {offsets = [0, 0], sizes = [8, 1008], strides = [1, 1]} : vector<8x1024xf32> to vector<8x1008xf32>
    %242 = tpu.concatenate %240, %241 in 1 : vector<8x16xf32>, vector<8x1008xf32> -> vector<8x1024xf32>
    %c8_142 = arith.constant 8 : index
    %c0_143 = arith.constant 0 : index
    %243 = vector.load %arg1[%c8_142, %c0_143] : memref<72x1024xf32, #tpu.memory_space<vmem>>, vector<8x1024xf32>
    %244 = arith.mulf %242, %243 : vector<8x1024xf32>
    %c8_144 = arith.constant 8 : index
    %c0_145 = arith.constant 0 : index
    %245 = vector.load %arg18[%c8_144, %c0_145] : memref<72x1024xf32, #tpu.memory_space<vmem>>, vector<8x1024xf32>
    tpu.vector_store %arg18[%c8_144, %c0_145], %244 {strides = array<i32>} : memref<72x1024xf32, #tpu.memory_space<vmem>>, vector<8x1024xf32>,
    %246 = vector.extract_strided_slice %233 {offsets = [0, 1009], sizes = [8, 15], strides = [1, 1]} : vector<8x1024xf32> to vector<8x15xf32>
    %247 = vector.extract_strided_slice %233 {offsets = [0, 0], sizes = [8, 1009], strides = [1, 1]} : vector<8x1024xf32> to vector<8x1009xf32>
    %248 = tpu.concatenate %246, %247 in 1 : vector<8x15xf32>, vector<8x1009xf32> -> vector<8x1024xf32>
    %c16_146 = arith.constant 16 : index
    %c0_147 = arith.constant 0 : index
    %249 = vector.load %arg1[%c16_146, %c0_147] : memref<72x1024xf32, #tpu.memory_space<vmem>>, vector<8x1024xf32>
    %250 = arith.mulf %248, %249 : vector<8x1024xf32>
    %c16_148 = arith.constant 16 : index
    %c0_149 = arith.constant 0 : index
    %251 = vector.load %arg18[%c16_148, %c0_149] : memref<72x1024xf32, #tpu.memory_space<vmem>>, vector<8x1024xf32>
    tpu.vector_store %arg18[%c16_148, %c0_149], %250 {strides = array<i32>} : memref<72x1024xf32, #tpu.memory_space<vmem>>, vector<8x1024xf32>,
    %252 = vector.extract_strided_slice %233 {offsets = [0, 1023], sizes = [8, 1], strides = [1, 1]} : vector<8x1024xf32> to vector<8x1xf32>
    %253 = vector.extract_strided_slice %233 {offsets = [0, 0], sizes = [8, 1023], strides = [1, 1]} : vector<8x1024xf32> to vector<8x1023xf32>
    %254 = tpu.concatenate %252, %253 in 1 : vector<8x1xf32>, vector<8x1023xf32> -> vector<8x1024xf32>
    %c24_150 = arith.constant 24 : index
    %c0_151 = arith.constant 0 : index
    %255 = vector.load %arg1[%c24_150, %c0_151] : memref<72x1024xf32, #tpu.memory_space<vmem>>, vector<8x1024xf32>
    %256 = arith.mulf %254, %255 : vector<8x1024xf32>
    %c24_152 = arith.constant 24 : index
    %c0_153 = arith.constant 0 : index
    %257 = vector.load %arg18[%c24_152, %c0_153] : memref<72x1024xf32, #tpu.memory_space<vmem>>, vector<8x1024xf32>
    tpu.vector_store %arg18[%c24_152, %c0_153], %256 {strides = array<i32>} : memref<72x1024xf32, #tpu.memory_space<vmem>>, vector<8x1024xf32>,
    %c32_154 = arith.constant 32 : index
    %c0_155 = arith.constant 0 : index
    %258 = vector.load %arg1[%c32_154, %c0_155] : memref<72x1024xf32, #tpu.memory_space<vmem>>, vector<8x1024xf32>
    %259 = arith.mulf %233, %258 : vector<8x1024xf32>
    %c32_156 = arith.constant 32 : index
    %c0_157 = arith.constant 0 : index
    %260 = vector.load %arg18[%c32_156, %c0_157] : memref<72x1024xf32, #tpu.memory_space<vmem>>, vector<8x1024xf32>
    tpu.vector_store %arg18[%c32_156, %c0_157], %259 {strides = array<i32>} : memref<72x1024xf32, #tpu.memory_space<vmem>>, vector<8x1024xf32>,
    %261 = vector.extract_strided_slice %233 {offsets = [0, 1], sizes = [8, 1023], strides = [1, 1]} : vector<8x1024xf32> to vector<8x1023xf32>
    %262 = vector.extract_strided_slice %233 {offsets = [0, 0], sizes = [8, 1], strides = [1, 1]} : vector<8x1024xf32> to vector<8x1xf32>
    %263 = tpu.concatenate %261, %262 in 1 : vector<8x1023xf32>, vector<8x1xf32> -> vector<8x1024xf32>
    %c40_158 = arith.constant 40 : index
    %c0_159 = arith.constant 0 : index
    %264 = vector.load %arg1[%c40_158, %c0_159] : memref<72x1024xf32, #tpu.memory_space<vmem>>, vector<8x1024xf32>
    %265 = arith.mulf %263, %264 : vector<8x1024xf32>
    %c40_160 = arith.constant 40 : index
    %c0_161 = arith.constant 0 : index
    %266 = vector.load %arg18[%c40_160, %c0_161] : memref<72x1024xf32, #tpu.memory_space<vmem>>, vector<8x1024xf32>
    tpu.vector_store %arg18[%c40_160, %c0_161], %265 {strides = array<i32>} : memref<72x1024xf32, #tpu.memory_space<vmem>>, vector<8x1024xf32>,
    %267 = vector.extract_strided_slice %233 {offsets = [0, 15], sizes = [8, 1009], strides = [1, 1]} : vector<8x1024xf32> to vector<8x1009xf32>
    %268 = vector.extract_strided_slice %233 {offsets = [0, 0], sizes = [8, 15], strides = [1, 1]} : vector<8x1024xf32> to vector<8x15xf32>
    %269 = tpu.concatenate %267, %268 in 1 : vector<8x1009xf32>, vector<8x15xf32> -> vector<8x1024xf32>
    %c48_162 = arith.constant 48 : index
    %c0_163 = arith.constant 0 : index
    %270 = vector.load %arg1[%c48_162, %c0_163] : memref<72x1024xf32, #tpu.memory_space<vmem>>, vector<8x1024xf32>
    %271 = arith.mulf %269, %270 : vector<8x1024xf32>
    %c48_164 = arith.constant 48 : index
    %c0_165 = arith.constant 0 : index
    %272 = vector.load %arg18[%c48_164, %c0_165] : memref<72x1024xf32, #tpu.memory_space<vmem>>, vector<8x1024xf32>
    tpu.vector_store %arg18[%c48_164, %c0_165], %271 {strides = array<i32>} : memref<72x1024xf32, #tpu.memory_space<vmem>>, vector<8x1024xf32>,
    %273 = vector.extract_strided_slice %233 {offsets = [0, 16], sizes = [8, 1008], strides = [1, 1]} : vector<8x1024xf32> to vector<8x1008xf32>
    %274 = vector.extract_strided_slice %233 {offsets = [0, 0], sizes = [8, 16], strides = [1, 1]} : vector<8x1024xf32> to vector<8x16xf32>
    %275 = tpu.concatenate %273, %274 in 1 : vector<8x1008xf32>, vector<8x16xf32> -> vector<8x1024xf32>
    %c56_166 = arith.constant 56 : index
    %c0_167 = arith.constant 0 : index
    %276 = vector.load %arg1[%c56_166, %c0_167] : memref<72x1024xf32, #tpu.memory_space<vmem>>, vector<8x1024xf32>
    %277 = arith.mulf %275, %276 : vector<8x1024xf32>
    %c56_168 = arith.constant 56 : index
    %c0_169 = arith.constant 0 : index
    %278 = vector.load %arg18[%c56_168, %c0_169] : memref<72x1024xf32, #tpu.memory_space<vmem>>, vector<8x1024xf32>
    tpu.vector_store %arg18[%c56_168, %c0_169], %277 {strides = array<i32>} : memref<72x1024xf32, #tpu.memory_space<vmem>>, vector<8x1024xf32>,
    %279 = vector.extract_strided_slice %233 {offsets = [0, 17], sizes = [8, 1007], strides = [1, 1]} : vector<8x1024xf32> to vector<8x1007xf32>
    %280 = vector.extract_strided_slice %233 {offsets = [0, 0], sizes = [8, 17], strides = [1, 1]} : vector<8x1024xf32> to vector<8x17xf32>
    %281 = tpu.concatenate %279, %280 in 1 : vector<8x1007xf32>, vector<8x17xf32> -> vector<8x1024xf32>
    %c64_170 = arith.constant 64 : index
    %c0_171 = arith.constant 0 : index
    %282 = vector.load %arg1[%c64_170, %c0_171] : memref<72x1024xf32, #tpu.memory_space<vmem>>, vector<8x1024xf32>
    %283 = arith.mulf %281, %282 : vector<8x1024xf32>
    %c64_172 = arith.constant 64 : index
    %c0_173 = arith.constant 0 : index
    %284 = vector.load %arg18[%c64_172, %c0_173] : memref<72x1024xf32, #tpu.memory_space<vmem>>, vector<8x1024xf32>
    tpu.vector_store %arg18[%c64_172, %c0_173], %283 {strides = array<i32>} : memref<72x1024xf32, #tpu.memory_space<vmem>>, vector<8x1024xf32>,
    %c0_174 = arith.constant 0 : index
    %c0_175 = arith.constant 0 : index
    %285 = vector.load %arg12[%c0_174, %c0_175] : memref<8x72xf32, #tpu.memory_space<vmem>>, vector<8x72xf32>
    %c0_176 = arith.constant 0 : index
    %c0_177 = arith.constant 0 : index
    %286 = vector.load %arg18[%c0_176, %c0_177] : memref<72x1024xf32, #tpu.memory_space<vmem>>, vector<72x1024xf32>
    %cst_178 = arith.constant dense<0.000000e+00> : vector<8x1024xf32>
    %287 = tpu.matmul %285, %286, %cst_178 {dimension_numbers = #tpu.dot_dimension_numbers<[1], [0], [0], [1], [0, 0, 1, 1], [], []>} : vector<8x72xf32>, vector<72x1024xf32>, vector<8x1024xf32> -> vector<8x1024xf32>
    %c0_179 = arith.constant 0 : index
    %c0_180 = arith.constant 0 : index
    %288 = vector.load %arg13[%c0_179, %c0_180] : memref<8x1xf32, #tpu.memory_space<vmem>>, vector<8x1xf32>
    %289 = vector.broadcast %288 : vector<8x1xf32> to vector<8x1024xf32>
    %290 = arith.addf %287, %289 : vector<8x1024xf32>
    %cst_181 = arith.constant 0.000000e+00 : f32
    %291 = vector.broadcast %cst_181 : f32 to vector<8x1024xf32>
    %292 = arith.cmpf oge, %290, %291 : vector<8x1024xf32>
    %cst_182 = arith.constant 2.000000e-01 : f32
    %293 = vector.broadcast %cst_182 : f32 to vector<8x1024xf32>
    %294 = arith.mulf %293, %290 : vector<8x1024xf32>
    %295 = arith.select %292, %290, %294 : vector<8x1024xi1>, vector<8x1024xf32>
    %296 = vector.extract_strided_slice %295 {offsets = [0, 1007], sizes = [8, 17], strides = [1, 1]} : vector<8x1024xf32> to vector<8x17xf32>
    %297 = vector.extract_strided_slice %295 {offsets = [0, 0], sizes = [8, 1007], strides = [1, 1]} : vector<8x1024xf32> to vector<8x1007xf32>
    %298 = tpu.concatenate %296, %297 in 1 : vector<8x17xf32>, vector<8x1007xf32> -> vector<8x1024xf32>
    %c0_183 = arith.constant 0 : index
    %c0_184 = arith.constant 0 : index
    %299 = vector.load %arg1[%c0_183, %c0_184] : memref<72x1024xf32, #tpu.memory_space<vmem>>, vector<8x1024xf32>
    %300 = arith.mulf %298, %299 : vector<8x1024xf32>
    %c0_185 = arith.constant 0 : index
    %c0_186 = arith.constant 0 : index
    %301 = vector.load %arg18[%c0_185, %c0_186] : memref<72x1024xf32, #tpu.memory_space<vmem>>, vector<8x1024xf32>
    tpu.vector_store %arg18[%c0_185, %c0_186], %300 {strides = array<i32>} : memref<72x1024xf32, #tpu.memory_space<vmem>>, vector<8x1024xf32>,
    %302 = vector.extract_strided_slice %295 {offsets = [0, 1008], sizes = [8, 16], strides = [1, 1]} : vector<8x1024xf32> to vector<8x16xf32>
    %303 = vector.extract_strided_slice %295 {offsets = [0, 0], sizes = [8, 1008], strides = [1, 1]} : vector<8x1024xf32> to vector<8x1008xf32>
    %304 = tpu.concatenate %302, %303 in 1 : vector<8x16xf32>, vector<8x1008xf32> -> vector<8x1024xf32>
    %c8_187 = arith.constant 8 : index
    %c0_188 = arith.constant 0 : index
    %305 = vector.load %arg1[%c8_187, %c0_188] : memref<72x1024xf32, #tpu.memory_space<vmem>>, vector<8x1024xf32>
    %306 = arith.mulf %304, %305 : vector<8x1024xf32>
    %c8_189 = arith.constant 8 : index
    %c0_190 = arith.constant 0 : index
    %307 = vector.load %arg18[%c8_189, %c0_190] : memref<72x1024xf32, #tpu.memory_space<vmem>>, vector<8x1024xf32>
    tpu.vector_store %arg18[%c8_189, %c0_190], %306 {strides = array<i32>} : memref<72x1024xf32, #tpu.memory_space<vmem>>, vector<8x1024xf32>,
    %308 = vector.extract_strided_slice %295 {offsets = [0, 1009], sizes = [8, 15], strides = [1, 1]} : vector<8x1024xf32> to vector<8x15xf32>
    %309 = vector.extract_strided_slice %295 {offsets = [0, 0], sizes = [8, 1009], strides = [1, 1]} : vector<8x1024xf32> to vector<8x1009xf32>
    %310 = tpu.concatenate %308, %309 in 1 : vector<8x15xf32>, vector<8x1009xf32> -> vector<8x1024xf32>
    %c16_191 = arith.constant 16 : index
    %c0_192 = arith.constant 0 : index
    %311 = vector.load %arg1[%c16_191, %c0_192] : memref<72x1024xf32, #tpu.memory_space<vmem>>, vector<8x1024xf32>
    %312 = arith.mulf %310, %311 : vector<8x1024xf32>
    %c16_193 = arith.constant 16 : index
    %c0_194 = arith.constant 0 : index
    %313 = vector.load %arg18[%c16_193, %c0_194] : memref<72x1024xf32, #tpu.memory_space<vmem>>, vector<8x1024xf32>
    tpu.vector_store %arg18[%c16_193, %c0_194], %312 {strides = array<i32>} : memref<72x1024xf32, #tpu.memory_space<vmem>>, vector<8x1024xf32>,
    %314 = vector.extract_strided_slice %295 {offsets = [0, 1023], sizes = [8, 1], strides = [1, 1]} : vector<8x1024xf32> to vector<8x1xf32>
    %315 = vector.extract_strided_slice %295 {offsets = [0, 0], sizes = [8, 1023], strides = [1, 1]} : vector<8x1024xf32> to vector<8x1023xf32>
    %316 = tpu.concatenate %314, %315 in 1 : vector<8x1xf32>, vector<8x1023xf32> -> vector<8x1024xf32>
    %c24_195 = arith.constant 24 : index
    %c0_196 = arith.constant 0 : index
    %317 = vector.load %arg1[%c24_195, %c0_196] : memref<72x1024xf32, #tpu.memory_space<vmem>>, vector<8x1024xf32>
    %318 = arith.mulf %316, %317 : vector<8x1024xf32>
    %c24_197 = arith.constant 24 : index
    %c0_198 = arith.constant 0 : index
    %319 = vector.load %arg18[%c24_197, %c0_198] : memref<72x1024xf32, #tpu.memory_space<vmem>>, vector<8x1024xf32>
    tpu.vector_store %arg18[%c24_197, %c0_198], %318 {strides = array<i32>} : memref<72x1024xf32, #tpu.memory_space<vmem>>, vector<8x1024xf32>,
    %c32_199 = arith.constant 32 : index
    %c0_200 = arith.constant 0 : index
    %320 = vector.load %arg1[%c32_199, %c0_200] : memref<72x1024xf32, #tpu.memory_space<vmem>>, vector<8x1024xf32>
    %321 = arith.mulf %295, %320 : vector<8x1024xf32>
    %c32_201 = arith.constant 32 : index
    %c0_202 = arith.constant 0 : index
    %322 = vector.load %arg18[%c32_201, %c0_202] : memref<72x1024xf32, #tpu.memory_space<vmem>>, vector<8x1024xf32>
    tpu.vector_store %arg18[%c32_201, %c0_202], %321 {strides = array<i32>} : memref<72x1024xf32, #tpu.memory_space<vmem>>, vector<8x1024xf32>,
    %323 = vector.extract_strided_slice %295 {offsets = [0, 1], sizes = [8, 1023], strides = [1, 1]} : vector<8x1024xf32> to vector<8x1023xf32>
    %324 = vector.extract_strided_slice %295 {offsets = [0, 0], sizes = [8, 1], strides = [1, 1]} : vector<8x1024xf32> to vector<8x1xf32>
    %325 = tpu.concatenate %323, %324 in 1 : vector<8x1023xf32>, vector<8x1xf32> -> vector<8x1024xf32>
    %c40_203 = arith.constant 40 : index
    %c0_204 = arith.constant 0 : index
    %326 = vector.load %arg1[%c40_203, %c0_204] : memref<72x1024xf32, #tpu.memory_space<vmem>>, vector<8x1024xf32>
    %327 = arith.mulf %325, %326 : vector<8x1024xf32>
    %c40_205 = arith.constant 40 : index
    %c0_206 = arith.constant 0 : index
    %328 = vector.load %arg18[%c40_205, %c0_206] : memref<72x1024xf32, #tpu.memory_space<vmem>>, vector<8x1024xf32>
    tpu.vector_store %arg18[%c40_205, %c0_206], %327 {strides = array<i32>} : memref<72x1024xf32, #tpu.memory_space<vmem>>, vector<8x1024xf32>,
    %329 = vector.extract_strided_slice %295 {offsets = [0, 15], sizes = [8, 1009], strides = [1, 1]} : vector<8x1024xf32> to vector<8x1009xf32>
    %330 = vector.extract_strided_slice %295 {offsets = [0, 0], sizes = [8, 15], strides = [1, 1]} : vector<8x1024xf32> to vector<8x15xf32>
    %331 = tpu.concatenate %329, %330 in 1 : vector<8x1009xf32>, vector<8x15xf32> -> vector<8x1024xf32>
    %c48_207 = arith.constant 48 : index
    %c0_208 = arith.constant 0 : index
    %332 = vector.load %arg1[%c48_207, %c0_208] : memref<72x1024xf32, #tpu.memory_space<vmem>>, vector<8x1024xf32>
    %333 = arith.mulf %331, %332 : vector<8x1024xf32>
    %c48_209 = arith.constant 48 : index
    %c0_210 = arith.constant 0 : index
    %334 = vector.load %arg18[%c48_209, %c0_210] : memref<72x1024xf32, #tpu.memory_space<vmem>>, vector<8x1024xf32>
    tpu.vector_store %arg18[%c48_209, %c0_210], %333 {strides = array<i32>} : memref<72x1024xf32, #tpu.memory_space<vmem>>, vector<8x1024xf32>,
    %335 = vector.extract_strided_slice %295 {offsets = [0, 16], sizes = [8, 1008], strides = [1, 1]} : vector<8x1024xf32> to vector<8x1008xf32>
    %336 = vector.extract_strided_slice %295 {offsets = [0, 0], sizes = [8, 16], strides = [1, 1]} : vector<8x1024xf32> to vector<8x16xf32>
    %337 = tpu.concatenate %335, %336 in 1 : vector<8x1008xf32>, vector<8x16xf32> -> vector<8x1024xf32>
    %c56_211 = arith.constant 56 : index
    %c0_212 = arith.constant 0 : index
    %338 = vector.load %arg1[%c56_211, %c0_212] : memref<72x1024xf32, #tpu.memory_space<vmem>>, vector<8x1024xf32>
    %339 = arith.mulf %337, %338 : vector<8x1024xf32>
    %c56_213 = arith.constant 56 : index
    %c0_214 = arith.constant 0 : index
    %340 = vector.load %arg18[%c56_213, %c0_214] : memref<72x1024xf32, #tpu.memory_space<vmem>>, vector<8x1024xf32>
    tpu.vector_store %arg18[%c56_213, %c0_214], %339 {strides = array<i32>} : memref<72x1024xf32, #tpu.memory_space<vmem>>, vector<8x1024xf32>,
    %341 = vector.extract_strided_slice %295 {offsets = [0, 17], sizes = [8, 1007], strides = [1, 1]} : vector<8x1024xf32> to vector<8x1007xf32>
    %342 = vector.extract_strided_slice %295 {offsets = [0, 0], sizes = [8, 17], strides = [1, 1]} : vector<8x1024xf32> to vector<8x17xf32>
    %343 = tpu.concatenate %341, %342 in 1 : vector<8x1007xf32>, vector<8x17xf32> -> vector<8x1024xf32>
    %c64_215 = arith.constant 64 : index
    %c0_216 = arith.constant 0 : index
    %344 = vector.load %arg1[%c64_215, %c0_216] : memref<72x1024xf32, #tpu.memory_space<vmem>>, vector<8x1024xf32>
    %345 = arith.mulf %343, %344 : vector<8x1024xf32>
    %c64_217 = arith.constant 64 : index
    %c0_218 = arith.constant 0 : index
    %346 = vector.load %arg18[%c64_217, %c0_218] : memref<72x1024xf32, #tpu.memory_space<vmem>>, vector<8x1024xf32>
    tpu.vector_store %arg18[%c64_217, %c0_218], %345 {strides = array<i32>} : memref<72x1024xf32, #tpu.memory_space<vmem>>, vector<8x1024xf32>,
    %c0_219 = arith.constant 0 : index
    %c0_220 = arith.constant 0 : index
    %347 = vector.load %arg14[%c0_219, %c0_220] : memref<1x72xf32, #tpu.memory_space<vmem>>, vector<1x72xf32>
    %c0_221 = arith.constant 0 : index
    %c0_222 = arith.constant 0 : index
    %348 = vector.load %arg18[%c0_221, %c0_222] : memref<72x1024xf32, #tpu.memory_space<vmem>>, vector<72x1024xf32>
    %cst_223 = arith.constant dense<0.000000e+00> : vector<1x1024xf32>
    %349 = tpu.matmul %347, %348, %cst_223 {dimension_numbers = #tpu.dot_dimension_numbers<[1], [0], [0], [1], [0, 0, 1, 1], [], []>} : vector<1x72xf32>, vector<72x1024xf32>, vector<1x1024xf32> -> vector<1x1024xf32>
    %c0_224 = arith.constant 0 : index
    %c0_225 = arith.constant 0 : index
    %350 = vector.load %arg15[%c0_224, %c0_225] : memref<1x1xf32, #tpu.memory_space<vmem>>, vector<1x1xf32>
    %351 = vector.broadcast %350 : vector<1x1xf32> to vector<1x1024xf32>
    %352 = arith.addf %349, %351 : vector<1x1024xf32>
    %353 = tpu.iota {dimensions = array<i32: 1>} : vector<1x128xi32>
    %cst_226 = arith.constant 0.000000e+00 : f32
    %354 = vector.broadcast %cst_226 : f32 to vector<1x128xf32>
    %355 = vector.extract_strided_slice %352 {offsets = [0, 0], sizes = [1, 256], strides = [1, 1]} : vector<1x1024xf32> to vector<1x256xf32>
    %cst_227 = arith.constant dense<0.000000e+00> : vector<1xf32>
    %356 = vector.multi_reduction <add>, %355, %cst_227 [1] : vector<1x256xf32> to vector<1xf32>
    %357 = vector.shape_cast %356 : vector<1xf32> to vector<1x1xf32>
    %cst_228 = arith.constant 3.906250e-03 : f32
    %358 = vector.broadcast %cst_228 : f32 to vector<1x1xf32>
    %359 = arith.mulf %357, %358 : vector<1x1xf32>
    %c0_i32 = arith.constant 0 : i32
    %360 = vector.broadcast %c0_i32 : i32 to vector<1x128xi32>
    %361 = arith.cmpi eq, %353, %360 : vector<1x128xi32>
    %362 = vector.shape_cast %359 : vector<1x1xf32> to vector<1x1xf32>
    %363 = vector.broadcast %362 : vector<1x1xf32> to vector<1x128xf32>
    %364 = arith.select %361, %363, %354 : vector<1x128xi1>, vector<1x128xf32>
    %365 = vector.extract_strided_slice %352 {offsets = [0, 256], sizes = [1, 256], strides = [1, 1]} : vector<1x1024xf32> to vector<1x256xf32>
    %cst_229 = arith.constant dense<0.000000e+00> : vector<1xf32>
    %366 = vector.multi_reduction <add>, %365, %cst_229 [1] : vector<1x256xf32> to vector<1xf32>
    %367 = vector.shape_cast %366 : vector<1xf32> to vector<1x1xf32>
    %cst_230 = arith.constant 3.906250e-03 : f32
    %368 = vector.broadcast %cst_230 : f32 to vector<1x1xf32>
    %369 = arith.mulf %367, %368 : vector<1x1xf32>
    %c1_i32 = arith.constant 1 : i32
    %370 = vector.broadcast %c1_i32 : i32 to vector<1x128xi32>
    %371 = arith.cmpi eq, %353, %370 : vector<1x128xi32>
    %372 = vector.shape_cast %369 : vector<1x1xf32> to vector<1x1xf32>
    %373 = vector.broadcast %372 : vector<1x1xf32> to vector<1x128xf32>
    %374 = arith.select %371, %373, %364 : vector<1x128xi1>, vector<1x128xf32>
    %375 = vector.extract_strided_slice %352 {offsets = [0, 512], sizes = [1, 256], strides = [1, 1]} : vector<1x1024xf32> to vector<1x256xf32>
    %cst_231 = arith.constant dense<0.000000e+00> : vector<1xf32>
    %376 = vector.multi_reduction <add>, %375, %cst_231 [1] : vector<1x256xf32> to vector<1xf32>
    %377 = vector.shape_cast %376 : vector<1xf32> to vector<1x1xf32>
    %cst_232 = arith.constant 3.906250e-03 : f32
    %378 = vector.broadcast %cst_232 : f32 to vector<1x1xf32>
    %379 = arith.mulf %377, %378 : vector<1x1xf32>
    %c2_i32 = arith.constant 2 : i32
    %380 = vector.broadcast %c2_i32 : i32 to vector<1x128xi32>
    %381 = arith.cmpi eq, %353, %380 : vector<1x128xi32>
    %382 = vector.shape_cast %379 : vector<1x1xf32> to vector<1x1xf32>
    %383 = vector.broadcast %382 : vector<1x1xf32> to vector<1x128xf32>
    %384 = arith.select %381, %383, %374 : vector<1x128xi1>, vector<1x128xf32>
    %385 = vector.extract_strided_slice %352 {offsets = [0, 768], sizes = [1, 256], strides = [1, 1]} : vector<1x1024xf32> to vector<1x256xf32>
    %cst_233 = arith.constant dense<0.000000e+00> : vector<1xf32>
    %386 = vector.multi_reduction <add>, %385, %cst_233 [1] : vector<1x256xf32> to vector<1xf32>
    %387 = vector.shape_cast %386 : vector<1xf32> to vector<1x1xf32>
    %cst_234 = arith.constant 3.906250e-03 : f32
    %388 = vector.broadcast %cst_234 : f32 to vector<1x1xf32>
    %389 = arith.mulf %387, %388 : vector<1x1xf32>
    %c3_i32 = arith.constant 3 : i32
    %390 = vector.broadcast %c3_i32 : i32 to vector<1x128xi32>
    %391 = arith.cmpi eq, %353, %390 : vector<1x128xi32>
    %392 = vector.shape_cast %389 : vector<1x1xf32> to vector<1x1xf32>
    %393 = vector.broadcast %392 : vector<1x1xf32> to vector<1x128xf32>
    %394 = arith.select %391, %393, %384 : vector<1x128xi1>, vector<1x128xf32>
    %c0_235 = arith.constant 0 : index
    %c0_236 = arith.constant 0 : index
    %c0_237 = arith.constant 0 : index
    %395 = vector.load %arg17[%c0_235, %c0_236, %c0_237] : memref<1x1x128xf32, #tpu.memory_space<vmem>>, vector<1x1x128xf32>
    %396 = vector.shape_cast %395 : vector<1x1x128xf32> to vector<1x128xf32>
    %397 = vector.shape_cast %394 : vector<1x128xf32> to vector<1x1x128xf32>
    tpu.vector_store %arg17[%c0_235, %c0_236, %c0_237], %397 {strides = array<i32>} : memref<1x1x128xf32, #tpu.memory_space<vmem>>, vector<1x1x128xf32>,
    return
  }
  func.func @transform_0(%arg0: i32) -> (i32, i32) {
    %c0_i32 = arith.constant 0 : i32
    %c0_i32_0 = arith.constant 0 : i32
    %c0_i32_1 = arith.constant 0 : i32
    return %c0_i32, %c0_i32_0 : i32, i32
  }
  func.func @transform_1(%arg0: i32) -> (i32, i32, i32) {
    %c0_i32 = arith.constant 0 : i32
    %c0_i32_0 = arith.constant 0 : i32
    %c0_i32_1 = arith.constant 0 : i32
    return %arg0, %c0_i32, %c0_i32_0 : i32, i32, i32
  }
  func.func @transform_2(%arg0: i32) -> (i32, i32, i32) {
    %c0_i32 = arith.constant 0 : i32
    %c0_i32_0 = arith.constant 0 : i32
    %c0_i32_1 = arith.constant 0 : i32
    return %arg0, %c0_i32, %c0_i32_0 : i32, i32, i32
  }
  func.func @transform_3(%arg0: i32) -> (i32, i32) {
    %c0_i32 = arith.constant 0 : i32
    %c0_i32_0 = arith.constant 0 : i32
    %c0_i32_1 = arith.constant 0 : i32
    return %c0_i32, %c0_i32_0 : i32, i32
  }
  func.func @transform_4(%arg0: i32) -> (i32, i32) {
    %c0_i32 = arith.constant 0 : i32
    %c0_i32_0 = arith.constant 0 : i32
    %c0_i32_1 = arith.constant 0 : i32
    return %c0_i32, %c0_i32_0 : i32, i32
  }
  func.func @transform_5(%arg0: i32) -> (i32, i32) {
    %c0_i32 = arith.constant 0 : i32
    %c0_i32_0 = arith.constant 0 : i32
    %c0_i32_1 = arith.constant 0 : i32
    return %c0_i32, %c0_i32_0 : i32, i32
  }
  func.func @transform_6(%arg0: i32) -> (i32, i32) {
    %c0_i32 = arith.constant 0 : i32
    %c0_i32_0 = arith.constant 0 : i32
    %c0_i32_1 = arith.constant 0 : i32
    return %c0_i32, %c0_i32_0 : i32, i32
  }
  func.func @transform_7(%arg0: i32) -> (i32, i32) {
    %c0_i32 = arith.constant 0 : i32
    %c0_i32_0 = arith.constant 0 : i32
    %c0_i32_1 = arith.constant 0 : i32
    return %c0_i32, %c0_i32_0 : i32, i32
  }
  func.func @transform_8(%arg0: i32) -> (i32, i32) {
    %c0_i32 = arith.constant 0 : i32
    %c0_i32_0 = arith.constant 0 : i32
    %c0_i32_1 = arith.constant 0 : i32
    return %c0_i32, %c0_i32_0 : i32, i32
  }
  func.func @transform_9(%arg0: i32) -> (i32, i32) {
    %c0_i32 = arith.constant 0 : i32
    %c0_i32_0 = arith.constant 0 : i32
    %c0_i32_1 = arith.constant 0 : i32
    return %c0_i32, %c0_i32_0 : i32, i32
  }
  func.func @transform_10(%arg0: i32) -> (i32, i32) {
    %c0_i32 = arith.constant 0 : i32
    %c0_i32_0 = arith.constant 0 : i32
    %c0_i32_1 = arith.constant 0 : i32
    return %c0_i32, %c0_i32_0 : i32, i32
  }
  func.func @transform_11(%arg0: i32) -> (i32, i32) {
    %c0_i32 = arith.constant 0 : i32
    %c0_i32_0 = arith.constant 0 : i32
    %c0_i32_1 = arith.constant 0 : i32
    return %c0_i32, %c0_i32_0 : i32, i32
  }
  func.func @transform_12(%arg0: i32) -> (i32, i32) {
    %c0_i32 = arith.constant 0 : i32
    %c0_i32_0 = arith.constant 0 : i32
    %c0_i32_1 = arith.constant 0 : i32
    return %c0_i32, %c0_i32_0 : i32, i32
  }
  func.func @transform_13(%arg0: i32) -> (i32, i32) {
    %c0_i32 = arith.constant 0 : i32
    %c0_i32_0 = arith.constant 0 : i32
    %c0_i32_1 = arith.constant 0 : i32
    return %c0_i32, %c0_i32_0 : i32, i32
  }
  func.func @transform_14(%arg0: i32) -> (i32, i32) {
    %c0_i32 = arith.constant 0 : i32
    %c0_i32_0 = arith.constant 0 : i32
    %c0_i32_1 = arith.constant 0 : i32
    return %c0_i32, %c0_i32_0 : i32, i32
  }
  func.func @transform_15(%arg0: i32) -> (i32, i32, i32) {
    %c0_i32 = arith.constant 0 : i32
    %c0_i32_0 = arith.constant 0 : i32
    %c0_i32_1 = arith.constant 0 : i32
    return %arg0, %c0_i32, %c0_i32_0 : i32, i32, i32
  }
  func.func @transform_16(%arg0: i32) -> (i32, i32, i32) {
    %c0_i32 = arith.constant 0 : i32
    %c0_i32_0 = arith.constant 0 : i32
    %c0_i32_1 = arith.constant 0 : i32
    return %arg0, %c0_i32, %c0_i32_0 : i32, i32, i32
  }
}

</mosaic_0001>

<llo_original>
// kernel: tpu_custom_call.1
$region0: #{tpu_custom_call.1}
  #allocation0 [shape = 'u32[]', space=smem, size = 0x4, offset = 0x4, fixed_abs, tag = 'smem constant byte address 0x4 - core index']
  #allocation1 [shape = 'u32[72,128]{1,0:T(1,128)}', space=vmem, size = 0x9000, scoped, tag = 'internal scratch']
  %s0 = inlined_call_operand.hbm [shape: f32[8,128], index: 0, kind: input, shape index: {}]
  %s1 = inlined_call_operand.hbm [shape: f32[8,128], index: 1, kind: output, shape index: {}]
  %s2 = sld [smem:[#allocation0]]
  $region18: #{tpu_custom_call.1} parent=0
    _
  %s4 = ssub.s32 1, %s2
  %s5 = scalar_select 0, %s4, %s2
  $region1: #{tpu_custom_call.1} parent=0
    #allocation2 [shape = 'u8[4096]{0}', space=vmem, size = 0x1000, scoped, tag = 'input window, operand 0, single buffered']
    #allocation3 [shape = 's32[1]{0}', space=sflag, size = 0x4, scoped, tag = 'scoped memory for tpu_custom_call.1']
    #allocation4 [shape = 's32[1]{0}', space=sflag, size = 0x4, scoped, tag = 'scoped memory for tpu_custom_call.1']
    #allocation5 [shape = 'u8[4096]{0}', space=vmem, size = 0x1000, scoped, tag = 'output window, operand 0, single buffered']
    %6 = vsyncpa [#allocation3], 0
    %7 = vsyncpa [#allocation4], 0
    // Predicated region
    $region2: #{tpu_custom_call.1} parent=1 // pred_check
      _
    $region3: #{tpu_custom_call.1} parent=1 // pred_check_branch
      %9 = sbr.rel (0) target = $region5
    $region4: #{tpu_custom_call.1} parent=1 // pred_region
      %11 = vsyncadd [#allocation3], 0
      %s13 = sshll.u32 %s0, 4
      %s14 = int_to_ptr.hbm [resolvable:$true] %s13
      %s15 = sshll.u32 [#allocation2], 4
      %s16 = int_to_ptr.vmem [resolvable:$true] %s15
      %18 = dma.hbm_to_vmem [thread:$0]  %s14, 128, %s16, [#allocation3]
    $region5: #{tpu_custom_call.1} parent=1 // pred_fallthru
      _
    // Predicated region
    $region6: #{tpu_custom_call.1} parent=1 // pred_check
      _
    $region7: #{tpu_custom_call.1} parent=1 // pred_check_branch
      %20 = sbr.rel (0) target = $region9
    $region8: #{tpu_custom_call.1} parent=1 // pred_region
      %22 = dma.done [#allocation3], 128
    $region9: #{tpu_custom_call.1} parent=1 // pred_fallthru
      _
    %v23 = vld [vmem:[#allocation2] sm:$0xff]
    %24 = vrot.lane.b32.xlu0 %v23, 1
    %v25 = vpop.permute.xlu0 %24
    %26 = vst [vmem:[#allocation5] sm:$0xff] %v25
    // Predicated region
    $region10: #{tpu_custom_call.1} parent=1 // pred_check
      _
    $region11: #{tpu_custom_call.1} parent=1 // pred_check_branch
      %28 = sbr.rel (0) target = $region13
    $region12: #{tpu_custom_call.1} parent=1 // pred_region
      %30 = vsyncadd [#allocation4], 0
      %s32 = sshll.u32 [#allocation5], 4
      %s33 = int_to_ptr.vmem [resolvable:$true] %s32
      %s34 = sshll.u32 %s1, 4
      %s35 = int_to_ptr.hbm [resolvable:$true] %s34
      %37 = dma.vmem_to_hbm [thread:$0]  %s33, 128, %s35, [#allocation4]
    $region13: #{tpu_custom_call.1} parent=1 // pred_fallthru
      _
    // Predicated region
    $region14: #{tpu_custom_call.1} parent=1 // pred_check
      _
    $region15: #{tpu_custom_call.1} parent=1 // pred_check_branch
      %39 = sbr.rel (0) target = $region17
    $region16: #{tpu_custom_call.1} parent=1 // pred_region
      %41 = dma.done [#allocation4], 128
    $region17: #{tpu_custom_call.1} parent=1 // pred_fallthru
      _
    %42 = vsyncpa [#allocation3], 1
    %43 = vsyncpa [#allocation4], 1

// kernel: squeeze.1
$region0: #{squeeze.1}
  %s0 = inlined_call_operand.vmem [shape: f32[2,4], index: 0, kind: input, shape index: {}]
  %s1 = inlined_call_operand.hbm [shape: f32[8], index: 1, kind: output, shape index: {}]
  $region1: #{squeeze.1} parent=0
    #allocation0 [shape = 'u8[512]{0}', space=vmem, size = 0x400, scoped, tag = 'operand span for operand 1']
    #allocation1 [shape = 's32[1]{0}', space=sflag, size = 0x4, scoped, tag = 'scoped memory for squeeze.1']
    #allocation2 [shape = 'u8[4096]{0}', space=vmem, size = 0x1000, scoped, tag = 'scoped mem for output reshape']
    #allocation3 [shape = 'u8[4096]{0}', space=vmem, size = 0x1000, scoped, tag = 'scoped mem for input reshape']
    %2 = vsyncpa [#allocation1], 0
    %s4 = ssub.s32 4, 1
    %v5 = vld [vmem:[%s0] sm:%s4]
    %6 = vst [vmem:[#allocation3] sm:%s4] %v5
    %v7 = vld [vmem:[#allocation3] sm:$0x1]
    %vm8 = vcmask 31744
    %9 = vst.msk [vmem:[#allocation2] sm:$0x1] %vm8, %v7
    %s10 = scalar_lea.vmem [#allocation3], 1
    %v11 = vld [vmem:[%s10] sm:$0x1]
    %12 = vrot.lane.b32.xlu0 %v11, 4
    %v13 = vpop.permute.xlu0 %12
    %vm14 = vcmask 64544
    %15 = vst.msk [vmem:[#allocation2] sm:$0x1] %vm14, %v13
    %s17 = ssub.s32 2, 1
    %v18 = vld [vmem:[#allocation2] sm:%s17]
    %s20 = ssub.s32 2, 1
    %21 = vst [vmem:[#allocation0] sm:%s20] %v18
    %23 = vsyncadd [#allocation1], 0
    %s25 = sshll.u32 [#allocation0], 4
    %s26 = int_to_ptr.vmem [resolvable:$true] %s25
    %s27 = sshll.u32 %s1, 4
    %s28 = int_to_ptr.hbm [resolvable:$true] %s27
    %30 = dma.vmem_to_hbm [thread:$0]  %s26, 16, %s28, [#allocation1]
    %32 = dma.done [#allocation1], 16
    %33 = vsyncpa [#allocation1], 1

// kernel: formant_discriminator_forward.1
$region0: #{formant_discriminator_forward.1}
  #allocation0 [shape = 'u32[]', space=smem, size = 0x4, offset = 0x4, fixed_abs, tag = 'smem constant byte address 0x4 - core index']
  #allocation1 [shape = 'u32[72,128]{1,0:T(1,128)}', space=vmem, size = 0x9000, scoped, tag = 'internal scratch']
  #allocation2 [shape = 'f32[72,1024]{1,0:T(8,128)}', space=vmem, size = 0x48000, scoped, tag = 'scratch operand']
  #allocation3 [shape = 'f32[1,1]{1,0:T(1,128)S(1)}', space=vmem, size = 0x200, scoped, tag = 'scoped memory for formant_discriminator_forward.1']
  #allocation4 [shape = 'f32[1,1]{1,0:T(1,128)S(1)}', space=vmem, size = 0x200, scoped, tag = 'scoped memory for formant_discriminator_forward.1']
  %s0 = inlined_call_operand.hbm [shape: f32[72,1024], index: 0, kind: input, shape index: {}]
  %s1 = inlined_call_operand.vmem [shape: f32[2,1,1024], index: 1, kind: input, shape index: {}]
  %s2 = inlined_call_operand.vmem [shape: f32[2,1,1024], index: 2, kind: input, shape index: {}]
  %s3 = inlined_call_operand.vmem [shape: f32[8,9], index: 3, kind: input, shape index: {}]
  %s4 = inlined_call_operand.vmem [shape: f32[8,1], index: 4, kind: input, shape index: {}]
  %s5 = inlined_call_operand.vmem [shape: f32[8,72], index: 5, kind: input, shape index: {}]
  %s6 = inlined_call_operand.vmem [shape: f32[8,1], index: 6, kind: input, shape index: {}]
  %s7 = inlined_call_operand.vmem [shape: f32[1,72], index: 7, kind: input, shape index: {}]
  %s8 = inlined_call_operand.<no memory space> [shape: f32[1,1], index: 8, kind: input, shape index: {}]
  %s9 = inlined_call_operand.vmem [shape: f32[8,18], index: 9, kind: input, shape index: {}]
  %s10 = inlined_call_operand.vmem [shape: f32[8,1], index: 10, kind: input, shape index: {}]
  %s11 = inlined_call_operand.vmem [shape: f32[8,72], index: 11, kind: input, shape index: {}]
  %s12 = inlined_call_operand.vmem [shape: f32[8,1], index: 12, kind: input, shape index: {}]
  %s13 = inlined_call_operand.vmem [shape: f32[1,72], index: 13, kind: input, shape index: {}]
  %s14 = inlined_call_operand.<no memory space> [shape: f32[1,1], index: 14, kind: input, shape index: {}]
  %s15 = inlined_call_operand.vmem [shape: f32[2,1,1024], index: 15, kind: output, shape index: {0}]
  %s16 = inlined_call_operand.vmem [shape: f32[2,1,128], index: 16, kind: output, shape index: {1}]
  %17 = xla_tuple %s15, %s16
  %s18 = sld [smem:[#allocation0]]
  $region105: #{formant_discriminator_forward.1} parent=0
    _
  %s20 = ssub.s32 1, %s18
  %s21 = scalar_select 0, %s20, %s18
  %v22 = vstv %s8
  %23 = vst [vmem:[#allocation3] sm:$0x1] %v22
  %v24 = vstv %s14
  %25 = vst [vmem:[#allocation4] sm:$0x1] %v24
  $region1: #{formant_discriminator_forward.1} parent=0
    #allocation5 [shape = 'u8[294912]{0}', space=vmem, size = 0x48000, scoped, tag = 'input window, operand 0, single buffered']
    #allocation6 [shape = 's32[2]{0}', space=sflag, size = 0x8, scoped, tag = 'scoped memory for formant_discriminator_forward.1']
    %26 = vsyncpa [#allocation6], 0
    loop: start=0, step=1, limit=4
    $region2: #{formant_discriminator_forward.1} parent=1 // loop_pre_header
      _
    $region3: #{formant_discriminator_forward.1} parent=1 // loop_header
      %s28 = sphi 0, %s32
      %p29 = scmp.ge.s32.totalorder %s28, 4
      %s36 = sphi 0, %s36
      %s38 = sphi 0, %s36
      %s39 = sphi 0, %s38
      %s53 = sphi 0, %s39
      %s59 = sphi 0, %s61
      %s62 = sphi 0, %s59
      %s63 = sphi 0, %s62
      %s79 = sphi 0, %s63
      %s85 = sphi 0, %s87
      %s88 = sphi 0, %s85
      %s89 = sphi 0, %s88
      %s105 = sphi 0, %s89
      %s109 = sphi 0, %s109
      %s111 = sphi 0, %s109
      %s112 = sphi 0, %s111
      %s126 = sphi 0, %s112
      %s130 = sphi 0, %s130
      %s132 = sphi 0, %s130
      %s133 = sphi 0, %s132
      %s147 = sphi 0, %s133
      %s151 = sphi 0, %s151
      %s153 = sphi 0, %s151
      %s154 = sphi 0, %s153
      %s168 = sphi 0, %s154
      %s172 = sphi 0, %s172
      %s174 = sphi 0, %s172
      %s175 = sphi 0, %s174
      %s189 = sphi 0, %s175
      %s193 = sphi 0, %s193
      %s195 = sphi 0, %s193
      %s196 = sphi 0, %s195
      %s210 = sphi 0, %s196
      %s214 = sphi 0, %s214
      %s216 = sphi 0, %s214
      %s217 = sphi 0, %s216
      %s231 = sphi 0, %s217
      %s235 = sphi 0, %s235
      %s237 = sphi 0, %s235
      %s238 = sphi 0, %s237
      %s252 = sphi 0, %s238
      %s256 = sphi 0, %s256
      %s258 = sphi 0, %s256
      %s259 = sphi 0, %s258
      %s273 = sphi 0, %s259
      %s277 = sphi 0, %s277
      %s279 = sphi 0, %s277
      %s280 = sphi 0, %s279
      %s294 = sphi 0, %s280
      %s298 = sphi 0, %s298
      %s300 = sphi 0, %s298
      %s301 = sphi 0, %s300
      %s315 = sphi 0, %s301
      %s319 = sphi 0, %s319
      %s321 = sphi 0, %s319
      %s322 = sphi 0, %s321
      %s336 = sphi 0, %s322
      %s340 = sphi 0, %s340
      %s342 = sphi 0, %s340
      %s343 = sphi 0, %s342
      %s357 = sphi 0, %s343
      %s363 = sphi 0, %s365
      %s366 = sphi 0, %s363
      %s367 = sphi 0, %s366
      %s383 = sphi 0, %s367
      %s389 = sphi 0, %s391
      %s392 = sphi 0, %s389
      %s393 = sphi 0, %s392
      %s409 = sphi 0, %s393
    $region4: #{formant_discriminator_forward.1} parent=1 // loop_header_branch
      %31 = sbr.rel (%p29) target = $region8
    $region5: #{formant_discriminator_forward.1} parent=1 // loop_body
      %s33 = ssub.s32 %s28, 1
      %s34 = ssub.s32 %s28, 2
      %s35 = sadd.s32 %s28, 1
      %s37 = sadd.s32 %s36, 1
      %p40 = scmp.eq.s32.totalorder %s28, 1
      %p41 = scmp.ne.s32.totalorder %s36, %s38
      %p42 = scmp.eq.s32.totalorder %s28, 0
      %p43 = por %p41, %p42
      %p44 = scmp.ne.s32.totalorder %s36, %s38
      %p45 = scmp.eq.s32.totalorder %s33, 1
      %p46 = por %p44, %p45
      %p47 = scmp.ne.s32.totalorder %s38, %s39
      %p48 = scmp.eq.s32.totalorder %s33, 0
      %p49 = por %p47, %p48
      %p50 = scmp.ne.s32.totalorder %s38, %s39
      %p51 = scmp.eq.s32.totalorder %s34, 1
      %p52 = por %p50, %p51
      %p54 = scmp.ne.s32.totalorder %s39, %s53
      %p55 = scmp.eq.s32.totalorder %s34, 0
      %p56 = por %p54, %p55
      %s57 = ssub.s32 %s28, %s35
      %p58 = scmp.eq.s32.totalorder %s57, 0
      %s60 = sadd.s32 %s59, 1
      %s61 = scalar_select %p58, %s59, %s60
      %p64 = pneg %p58
      %p65 = scmp.eq.s32.totalorder %s28, 1
      %p66 = por %p64, %p65
      %p67 = scmp.ne.s32.totalorder %s59, %s62
      %p68 = scmp.eq.s32.totalorder %s28, 0
      %p69 = por %p67, %p68
      %p70 = scmp.ne.s32.totalorder %s59, %s62
      %p71 = scmp.eq.s32.totalorder %s33, 1
      %p72 = por %p70, %p71
      %p73 = scmp.ne.s32.totalorder %s62, %s63
      %p74 = scmp.eq.s32.totalorder %s33, 0
      %p75 = por %p73, %p74
      %p76 = scmp.ne.s32.totalorder %s62, %s63
      %p77 = scmp.eq.s32.totalorder %s34, 1
      %p78 = por %p76, %p77
      %p80 = scmp.ne.s32.totalorder %s63, %s79
      %p81 = scmp.eq.s32.totalorder %s34, 0
      %p82 = por %p80, %p81
      %s83 = ssub.s32 %s28, %s35
      %p84 = scmp.eq.s32.totalorder %s83, 0
      %s86 = sadd.s32 %s85, 1
      %s87 = scalar_select %p84, %s85, %s86
      %p90 = pneg %p84
      %p91 = scmp.eq.s32.totalorder %s28, 1
      %p92 = por %p90, %p91
      %p93 = scmp.ne.s32.totalorder %s85, %s88
      %p94 = scmp.eq.s32.totalorder %s28, 0
      %p95 = por %p93, %p94
      %p96 = scmp.ne.s32.totalorder %s85, %s88
      %p97 = scmp.eq.s32.totalorder %s33, 1
      %p98 = por %p96, %p97
      %p99 = scmp.ne.s32.totalorder %s88, %s89
      %p100 = scmp.eq.s32.totalorder %s33, 0
      %p101 = por %p99, %p100
      %p102 = scmp.ne.s32.totalorder %s88, %s89
      %p103 = scmp.eq.s32.totalorder %s34, 1
      %p104 = por %p102, %p103
      %p106 = scmp.ne.s32.totalorder %s89, %s105
      %p107 = scmp.eq.s32.totalorder %s34, 0
      %p108 = por %p106, %p107
      %s110 = sadd.s32 %s109, 1
      %p113 = scmp.eq.s32.totalorder %s28, 1
      %p114 = scmp.ne.s32.totalorder %s109, %s111
      %p115 = scmp.eq.s32.totalorder %s28, 0
      %p116 = por %p114, %p115
      %p117 = scmp.ne.s32.totalorder %s109, %s111
      %p118 = scmp.eq.s32.totalorder %s33, 1
      %p119 = por %p117, %p118
      %p120 = scmp.ne.s32.totalorder %s111, %s112
      %p121 = scmp.eq.s32.totalorder %s33, 0
      %p122 = por %p120, %p121
      %p123 = scmp.ne.s32.totalorder %s111, %s112
      %p124 = scmp.eq.s32.totalorder %s34, 1
      %p125 = por %p123, %p124
      %p127 = scmp.ne.s32.totalorder %s112, %s126
      %p128 = scmp.eq.s32.totalorder %s34, 0
      %p129 = por %p127, %p128
      %s131 = sadd.s32 %s130, 1
      %p134 = scmp.eq.s32.totalorder %s28, 1
      %p135 = scmp.ne.s32.totalorder %s130, %s132
      %p136 = scmp.eq.s32.totalorder %s28, 0
      %p137 = por %p135, %p136
      %p138 = scmp.ne.s32.totalorder %s130, %s132
      %p139 = scmp.eq.s32.totalorder %s33, 1
      %p140 = por %p138, %p139
      %p141 = scmp.ne.s32.totalorder %s132, %s133
      %p142 = scmp.eq.s32.totalorder %s33, 0
      %p143 = por %p141, %p142
      %p144 = scmp.ne.s32.totalorder %s132, %s133
      %p145 = scmp.eq.s32.totalorder %s34, 1
      %p146 = por %p144, %p145
      %p148 = scmp.ne.s32.totalorder %s133, %s147
      %p149 = scmp.eq.s32.totalorder %s34, 0
      %p150 = por %p148, %p149
      %s152 = sadd.s32 %s151, 1
      %p155 = scmp.eq.s32.totalorder %s28, 1
      %p156 = scmp.ne.s32.totalorder %s151, %s153
      %p157 = scmp.eq.s32.totalorder %s28, 0
      %p158 = por %p156, %p157
      %p159 = scmp.ne.s32.totalorder %s151, %s153
      %p160 = scmp.eq.s32.totalorder %s33, 1
      %p161 = por %p159, %p160
      %p162 = scmp.ne.s32.totalorder %s153, %s154
      %p163 = scmp.eq.s32.totalorder %s33, 0
      %p164 = por %p162, %p163
      %p165 = scmp.ne.s32.totalorder %s153, %s154
      %p166 = scmp.eq.s32.totalorder %s34, 1
      %p167 = por %p165, %p166
      %p169 = scmp.ne.s32.totalorder %s154, %s168
      %p170 = scmp.eq.s32.totalorder %s34, 0
      %p171 = por %p169, %p170
      %s173 = sadd.s32 %s172, 1
      %p176 = scmp.eq.s32.totalorder %s28, 1
      %p177 = scmp.ne.s32.totalorder %s172, %s174
      %p178 = scmp.eq.s32.totalorder %s28, 0
      %p179 = por %p177, %p178
      %p180 = scmp.ne.s32.totalorder %s172, %s174
      %p181 = scmp.eq.s32.totalorder %s33, 1
      %p182 = por %p180, %p181
      %p183 = scmp.ne.s32.totalorder %s174, %s175
      %p184 = scmp.eq.s32.totalorder %s33, 0
      %p185 = por %p183, %p184
      %p186 = scmp.ne.s32.totalorder %s174, %s175
      %p187 = scmp.eq.s32.totalorder %s34, 1
      %p188 = por %p186, %p187
      %p190 = scmp.ne.s32.totalorder %s175, %s189
      %p191 = scmp.eq.s32.totalorder %s34, 0
      %p192 = por %p190, %p191
      %s194 = sadd.s32 %s193, 1
      %p197 = scmp.eq.s32.totalorder %s28, 1
      %p198 = scmp.ne.s32.totalorder %s193, %s195
      %p199 = scmp.eq.s32.totalorder %s28, 0
      %p200 = por %p198, %p199
      %p201 = scmp.ne.s32.totalorder %s193, %s195
      %p202 = scmp.eq.s32.totalorder %s33, 1
      %p203 = por %p201, %p202
      %p204 = scmp.ne.s32.totalorder %s195, %s196
      %p205 = scmp.eq.s32.totalorder %s33, 0
      %p206 = por %p204, %p205
      %p207 = scmp.ne.s32.totalorder %s195, %s196
      %p208 = scmp.eq.s32.totalorder %s34, 1
      %p209 = por %p207, %p208
      %p211 = scmp.ne.s32.totalorder %s196, %s210
      %p212 = scmp.eq.s32.totalorder %s34, 0
      %p213 = por %p211, %p212
      %s215 = sadd.s32 %s214, 1
      %p218 = scmp.eq.s32.totalorder %s28, 1
      %p219 = scmp.ne.s32.totalorder %s214, %s216
      %p220 = scmp.eq.s32.totalorder %s28, 0
      %p221 = por %p219, %p220
      %p222 = scmp.ne.s32.totalorder %s214, %s216
      %p223 = scmp.eq.s32.totalorder %s33, 1
      %p224 = por %p222, %p223
      %p225 = scmp.ne.s32.totalorder %s216, %s217
      %p226 = scmp.eq.s32.totalorder %s33, 0
      %p227 = por %p225, %p226
      %p228 = scmp.ne.s32.totalorder %s216, %s217
      %p229 = scmp.eq.s32.totalorder %s34, 1
      %p230 = por %p228, %p229
      %p232 = scmp.ne.s32.totalorder %s217, %s231
      %p233 = scmp.eq.s32.totalorder %s34, 0
      %p234 = por %p232, %p233
      %s236 = sadd.s32 %s235, 1
      %p239 = scmp.eq.s32.totalorder %s28, 1
      %p240 = scmp.ne.s32.totalorder %s235, %s237
      %p241 = scmp.eq.s32.totalorder %s28, 0
      %p242 = por %p240, %p241
      %p243 = scmp.ne.s32.totalorder %s235, %s237
      %p244 = scmp.eq.s32.totalorder %s33, 1
      %p245 = por %p243, %p244
      %p246 = scmp.ne.s32.totalorder %s237, %s238
      %p247 = scmp.eq.s32.totalorder %s33, 0
      %p248 = por %p246, %p247
      %p249 = scmp.ne.s32.totalorder %s237, %s238
      %p250 = scmp.eq.s32.totalorder %s34, 1
      %p251 = por %p249, %p250
      %p253 = scmp.ne.s32.totalorder %s238, %s252
      %p254 = scmp.eq.s32.totalorder %s34, 0
      %p255 = por %p253, %p254
      %s257 = sadd.s32 %s256, 1
      %p260 = scmp.eq.s32.totalorder %s28, 1
      %p261 = scmp.ne.s32.totalorder %s256, %s258
      %p262 = scmp.eq.s32.totalorder %s28, 0
      %p263 = por %p261, %p262
      %p264 = scmp.ne.s32.totalorder %s256, %s258
      %p265 = scmp.eq.s32.totalorder %s33, 1
      %p266 = por %p264, %p265
      %p267 = scmp.ne.s32.totalorder %s258, %s259
      %p268 = scmp.eq.s32.totalorder %s33, 0
      %p269 = por %p267, %p268
      %p270 = scmp.ne.s32.totalorder %s258, %s259
      %p271 = scmp.eq.s32.totalorder %s34, 1
      %p272 = por %p270, %p271
      %p274 = scmp.ne.s32.totalorder %s259, %s273
      %p275 = scmp.eq.s32.totalorder %s34, 0
      %p276 = por %p274, %p275
      %s278 = sadd.s32 %s277, 1
      %p281 = scmp.eq.s32.totalorder %s28, 1
      %p282 = scmp.ne.s32.totalorder %s277, %s279
      %p283 = scmp.eq.s32.totalorder %s28, 0
      %p284 = por %p282, %p283
      %p285 = scmp.ne.s32.totalorder %s277, %s279
      %p286 = scmp.eq.s32.totalorder %s33, 1
      %p287 = por %p285, %p286
      %p288 = scmp.ne.s32.totalorder %s279, %s280
      %p289 = scmp.eq.s32.totalorder %s33, 0
      %p290 = por %p288, %p289
      %p291 = scmp.ne.s32.totalorder %s279, %s280
      %p292 = scmp.eq.s32.totalorder %s34, 1
      %p293 = por %p291, %p292
      %p295 = scmp.ne.s32.totalorder %s280, %s294
      %p296 = scmp.eq.s32.totalorder %s34, 0
      %p297 = por %p295, %p296
      %s299 = sadd.s32 %s298, 1
      %p302 = scmp.eq.s32.totalorder %s28, 1
      %p303 = scmp.ne.s32.totalorder %s298, %s300
      %p304 = scmp.eq.s32.totalorder %s28, 0
      %p305 = por %p303, %p304
      %p306 = scmp.ne.s32.totalorder %s298, %s300
      %p307 = scmp.eq.s32.totalorder %s33, 1
      %p308 = por %p306, %p307
      %p309 = scmp.ne.s32.totalorder %s300, %s301
      %p310 = scmp.eq.s32.totalorder %s33, 0
      %p311 = por %p309, %p310
      %p312 = scmp.ne.s32.totalorder %s300, %s301
      %p313 = scmp.eq.s32.totalorder %s34, 1
      %p314 = por %p312, %p313
      %p316 = scmp.ne.s32.totalorder %s301, %s315
      %p317 = scmp.eq.s32.totalorder %s34, 0
      %p318 = por %p316, %p317
      %s320 = sadd.s32 %s319, 1
      %p323 = scmp.eq.s32.totalorder %s28, 1
      %p324 = scmp.ne.s32.totalorder %s319, %s321
      %p325 = scmp.eq.s32.totalorder %s28, 0
      %p326 = por %p324, %p325
      %p327 = scmp.ne.s32.totalorder %s319, %s321
      %p328 = scmp.eq.s32.totalorder %s33, 1
      %p329 = por %p327, %p328
      %p330 = scmp.ne.s32.totalorder %s321, %s322
      %p331 = scmp.eq.s32.totalorder %s33, 0
      %p332 = por %p330, %p331
      %p333 = scmp.ne.s32.totalorder %s321, %s322
      %p334 = scmp.eq.s32.totalorder %s34, 1
      %p335 = por %p333, %p334
      %p337 = scmp.ne.s32.totalorder %s322, %s336
      %p338 = scmp.eq.s32.totalorder %s34, 0
      %p339 = por %p337, %p338
      %s341 = sadd.s32 %s340, 1
      %p344 = scmp.eq.s32.totalorder %s28, 1
      %p345 = scmp.ne.s32.totalorder %s340, %s342
      %p346 = scmp.eq.s32.totalorder %s28, 0
      %p347 = por %p345, %p346
      %p348 = scmp.ne.s32.totalorder %s340, %s342
      %p349 = scmp.eq.s32.totalorder %s33, 1
      %p350 = por %p348, %p349
      %p351 = scmp.ne.s32.totalorder %s342, %s343
      %p352 = scmp.eq.s32.totalorder %s33, 0
      %p353 = por %p351, %p352
      %p354 = scmp.ne.s32.totalorder %s342, %s343
      %p355 = scmp.eq.s32.totalorder %s34, 1
      %p356 = por %p354, %p355
      %p358 = scmp.ne.s32.totalorder %s343, %s357
      %p359 = scmp.eq.s32.totalorder %s34, 0
      %p360 = por %p358, %p359
      %s361 = ssub.s32 %s28, %s35
      %p362 = scmp.eq.s32.totalorder %s361, 0
      %s364 = sadd.s32 %s363, 1
      %s365 = scalar_select %p362, %s363, %s364
      %p368 = pneg %p362
      %p369 = scmp.eq.s32.totalorder %s28, 1
      %p370 = por %p368, %p369
      %p371 = scmp.ne.s32.totalorder %s363, %s366
      %p372 = scmp.eq.s32.totalorder %s28, 0
      %p373 = por %p371, %p372
      %p374 = scmp.ne.s32.totalorder %s363, %s366
      %p375 = scmp.eq.s32.totalorder %s33, 1
      %p376 = por %p374, %p375
      %p377 = scmp.ne.s32.totalorder %s366, %s367
      %p378 = scmp.eq.s32.totalorder %s33, 0
      %p379 = por %p377, %p378
      %p380 = scmp.ne.s32.totalorder %s366, %s367
      %p381 = scmp.eq.s32.totalorder %s34, 1
      %p382 = por %p380, %p381
      %p384 = scmp.ne.s32.totalorder %s367, %s383
      %p385 = scmp.eq.s32.totalorder %s34, 0
      %p386 = por %p384, %p385
      %s387 = ssub.s32 %s28, %s35
      %p388 = scmp.eq.s32.totalorder %s387, 0
      %s390 = sadd.s32 %s389, 1
      %s391 = scalar_select %p388, %s389, %s390
      %p394 = pneg %p388
      %p395 = scmp.eq.s32.totalorder %s28, 1
      %p396 = por %p394, %p395
      %p397 = scmp.ne.s32.totalorder %s389, %s392
      %p398 = scmp.eq.s32.totalorder %s28, 0
      %p399 = por %p397, %p398
      %p400 = scmp.ne.s32.totalorder %s389, %s392
      %p401 = scmp.eq.s32.totalorder %s33, 1
      %p402 = por %p400, %p401
      %p403 = scmp.ne.s32.totalorder %s392, %s393
      %p404 = scmp.eq.s32.totalorder %s33, 0
      %p405 = por %p403, %p404
      %p406 = scmp.ne.s32.totalorder %s392, %s393
      %p407 = scmp.eq.s32.totalorder %s34, 1
      %p408 = por %p406, %p407
      %p410 = scmp.ne.s32.totalorder %s393, %s409
      %p411 = scmp.eq.s32.totalorder %s34, 0
      %p412 = por %p410, %p411
      %p413 = scmp.le.s32.totalorder 1, %s28
      %p414 = scmp.lt.s32.totalorder %s28, 3
      %p415 = pnand %p413, %p414
      %p416 = pneg %p415
      // Predicated region
      $region9: #{formant_discriminator_forward.1} parent=5 // pred_check
        _
      $region10: #{formant_discriminator_forward.1} parent=5 // pred_check_branch
        %418 = sbr.rel (%p415) target = $region12
      $region11: #{formant_discriminator_forward.1} parent=5 // pred_region
        %s419 = ssub.s32 %s28, 1
        // Predicated region
        $region13: #{formant_discriminator_forward.1} parent=11 // pred_check
          %p420 = pneg %p49
        $region14: #{formant_discriminator_forward.1} parent=11 // pred_check_branch
          %422 = sbr.rel (%p420) target = $region16
        $region15: #{formant_discriminator_forward.1} parent=11 // pred_region
          %424 = vsyncadd [#allocation6], 0
          %s425 = sshll.u32 %s0, 4
          %s426 = int_to_ptr.hbm [resolvable:$true] %s425
          %s427 = sshll.u32 [#allocation5], 4
          %s428 = int_to_ptr.vmem [resolvable:$true] %s427
          %433 = dma.hbm_to_vmem [thread:$0]  %s426, 9216, %s428, [#allocation6], 1024, 1024, 64
        $region16: #{formant_discriminator_forward.1} parent=11 // pred_fallthru
          _
        // Predicated region
        $region17: #{formant_discriminator_forward.1} parent=11 // pred_check
          %p434 = pneg %p122
        $region18: #{formant_discriminator_forward.1} parent=11 // pred_check_branch
          %436 = sbr.rel (%p434) target = $region20
        $region19: #{formant_discriminator_forward.1} parent=11 // pred_region
          _
        $region20: #{formant_discriminator_forward.1} parent=11 // pred_fallthru
          _
        // Predicated region
        $region21: #{formant_discriminator_forward.1} parent=11 // pred_check
          %p437 = pneg %p143
        $region22: #{formant_discriminator_forward.1} parent=11 // pred_check_branch
          %439 = sbr.rel (%p437) target = $region24
        $region23: #{formant_discriminator_forward.1} parent=11 // pred_region
          _
        $region24: #{formant_discriminator_forward.1} parent=11 // pred_fallthru
          _
        // Predicated region
        $region25: #{formant_discriminator_forward.1} parent=11 // pred_check
          %p440 = pneg %p164
        $region26: #{formant_discriminator_forward.1} parent=11 // pred_check_branch
          %442 = sbr.rel (%p440) target = $region28
        $region27: #{formant_discriminator_forward.1} parent=11 // pred_region
          _
        $region28: #{formant_discriminator_forward.1} parent=11 // pred_fallthru
          _
        // Predicated region
        $region29: #{formant_discriminator_forward.1} parent=11 // pred_check
          %p443 = pneg %p185
        $region30: #{formant_discriminator_forward.1} parent=11 // pred_check_branch
          %445 = sbr.rel (%p443) target = $region32
        $region31: #{formant_discriminator_forward.1} parent=11 // pred_region
          _
        $region32: #{formant_discriminator_forward.1} parent=11 // pred_fallthru
          _
        // Predicated region
        $region33: #{formant_discriminator_forward.1} parent=11 // pred_check
          %p446 = pneg %p206
        $region34: #{formant_discriminator_forward.1} parent=11 // pred_check_branch
          %448 = sbr.rel (%p446) target = $region36
        $region35: #{formant_discriminator_forward.1} parent=11 // pred_region
          _
        $region36: #{formant_discriminator_forward.1} parent=11 // pred_fallthru
          _
        // Predicated region
        $region37: #{formant_discriminator_forward.1} parent=11 // pred_check
          %p449 = pneg %p227
        $region38: #{formant_discriminator_forward.1} parent=11 // pred_check_branch
          %451 = sbr.rel (%p449) target = $region40
        $region39: #{formant_discriminator_forward.1} parent=11 // pred_region
          _
        $region40: #{formant_discriminator_forward.1} parent=11 // pred_fallthru
          _
        // Predicated region
        $region41: #{formant_discriminator_forward.1} parent=11 // pred_check
          %p452 = pneg %p248
        $region42: #{formant_discriminator_forward.1} parent=11 // pred_check_branch
          %454 = sbr.rel (%p452) target = $region44
        $region43: #{formant_discriminator_forward.1} parent=11 // pred_region
          _
        $region44: #{formant_discriminator_forward.1} parent=11 // pred_fallthru
          _
        // Predicated region
        $region45: #{formant_discriminator_forward.1} parent=11 // pred_check
          %p455 = pneg %p269
        $region46: #{formant_discriminator_forward.1} parent=11 // pred_check_branch
          %457 = sbr.rel (%p455) target = $region48
        $region47: #{formant_discriminator_forward.1} parent=11 // pred_region
          _
        $region48: #{formant_discriminator_forward.1} parent=11 // pred_fallthru
          _
        // Predicated region
        $region49: #{formant_discriminator_forward.1} parent=11 // pred_check
          %p458 = pneg %p290
        $region50: #{formant_discriminator_forward.1} parent=11 // pred_check_branch
          %460 = sbr.rel (%p458) target = $region52
        $region51: #{formant_discriminator_forward.1} parent=11 // pred_region
          _
        $region52: #{formant_discriminator_forward.1} parent=11 // pred_fallthru
          _
        // Predicated region
        $region53: #{formant_discriminator_forward.1} parent=11 // pred_check
          %p461 = pneg %p311
        $region54: #{formant_discriminator_forward.1} parent=11 // pred_check_branch
          %463 = sbr.rel (%p461) target = $region56
        $region55: #{formant_discriminator_forward.1} parent=11 // pred_region
          _
        $region56: #{formant_discriminator_forward.1} parent=11 // pred_fallthru
          _
        // Predicated region
        $region57: #{formant_discriminator_forward.1} parent=11 // pred_check
          %p464 = pneg %p332
        $region58: #{formant_discriminator_forward.1} parent=11 // pred_check_branch
          %466 = sbr.rel (%p464) target = $region60
        $region59: #{formant_discriminator_forward.1} parent=11 // pred_region
          _
        $region60: #{formant_discriminator_forward.1} parent=11 // pred_fallthru
          _
        // Predicated region
        $region61: #{formant_discriminator_forward.1} parent=11 // pred_check
          %p467 = pneg %p353
        $region62: #{formant_discriminator_forward.1} parent=11 // pred_check_branch
          %469 = sbr.rel (%p467) target = $region64
        $region63: #{formant_discriminator_forward.1} parent=11 // pred_region
          _
        $region64: #{formant_discriminator_forward.1} parent=11 // pred_fallthru
          _
      $region12: #{formant_discriminator_forward.1} parent=5 // pred_fallthru
        _
      %p470 = scmp.lt.s32.totalorder %s28, 2
      // Predicated region
      $region65: #{formant_discriminator_forward.1} parent=5 // pred_check
        %p471 = pneg %p470
      $region66: #{formant_discriminator_forward.1} parent=5 // pred_check_branch
        %473 = sbr.rel (%p471) target = $region68
      $region67: #{formant_discriminator_forward.1} parent=5 // pred_region
        // Predicated region
        $region69: #{formant_discriminator_forward.1} parent=67 // pred_check
          %p474 = pneg %p69
        $region70: #{formant_discriminator_forward.1} parent=67 // pred_check_branch
          %476 = sbr.rel (%p474) target = $region72
        $region71: #{formant_discriminator_forward.1} parent=67 // pred_region
          %p477 = scmp.lt.s32.totalorder %s28, 1
          %s478 = scalar_select %p477, %s28, 1
          %s479 = smul.addr %s478, 8
          %s480 = scalar_lea.vmem %s1, %s479
        $region72: #{formant_discriminator_forward.1} parent=67 // pred_fallthru
          _
        // Predicated region
        $region73: #{formant_discriminator_forward.1} parent=67 // pred_check
          %p481 = pneg %p95
        $region74: #{formant_discriminator_forward.1} parent=67 // pred_check_branch
          %483 = sbr.rel (%p481) target = $region76
        $region75: #{formant_discriminator_forward.1} parent=67 // pred_region
          %p484 = scmp.lt.s32.totalorder %s28, 1
          %s485 = scalar_select %p484, %s28, 1
          %s486 = smul.addr %s485, 8
          %s487 = scalar_lea.vmem %s2, %s486
        $region76: #{formant_discriminator_forward.1} parent=67 // pred_fallthru
          _
      $region68: #{formant_discriminator_forward.1} parent=5 // pred_fallthru
        _
      %p488 = scmp.le.s32.totalorder 1, %s28
      %p489 = scmp.lt.s32.totalorder %s28, 3
      %p490 = pnand %p488, %p489
      %p491 = pneg %p490
      // Predicated region
      $region77: #{formant_discriminator_forward.1} parent=5 // pred_check
        _
      $region78: #{formant_discriminator_forward.1} parent=5 // pred_check_branch
        %493 = sbr.rel (%p490) target = $region80
      $region79: #{formant_discriminator_forward.1} parent=5 // pred_region
        %s494 = ssub.s32 %s28, 1
        // Predicated region
        $region81: #{formant_discriminator_forward.1} parent=79 // pred_check
          %p495 = pneg %p49
        $region82: #{formant_discriminator_forward.1} parent=79 // pred_check_branch
          %497 = sbr.rel (%p495) target = $region84
        $region83: #{formant_discriminator_forward.1} parent=79 // pred_region
          %499 = dma.done [#allocation6], 9216
        $region84: #{formant_discriminator_forward.1} parent=79 // pred_fallthru
          _
        %p500 = pneg %p49
        %p501 = pneg %p46
        %p502 = scmp.lt.s32.totalorder %s33, 1
        %s503 = scalar_select %p502, %s33, 1
        %s504 = smul.addr %s503, 8
        %s505 = scalar_lea.vmem %s1, %s504
        %p506 = pneg %p75
        %p507 = pneg %p72
        %p508 = scmp.lt.s32.totalorder %s33, 1
        %s509 = scalar_select %p508, %s33, 1
        %s510 = smul.addr %s509, 8
        %s511 = scalar_lea.vmem %s2, %s510
        %p512 = pneg %p101
        %p513 = pneg %p98
        %p514 = pneg %p122
        %p515 = pneg %p119
        %p516 = pneg %p143
        %p517 = pneg %p140
        %p518 = pneg %p164
        %p519 = pneg %p161
        %p520 = pneg %p185
        %p521 = pneg %p182
        %p522 = pneg %p206
        %p523 = pneg %p203
        %p524 = pneg %p227
        %p525 = pneg %p224
        %p526 = pneg %p248
        %p527 = pneg %p245
        %p528 = pneg %p269
        %p529 = pneg %p266
        %p530 = pneg %p290
        %p531 = pneg %p287
        %p532 = pneg %p311
        %p533 = pneg %p308
        %p534 = pneg %p332
        %p535 = pneg %p329
        %p536 = pneg %p353
        %p537 = pneg %p350
        %p538 = pneg %p379
        %p539 = pneg %p376
        %p540 = scmp.lt.s32.totalorder %s33, 1
        %s541 = scalar_select %p540, %s33, 1
        %s542 = smul.addr %s541, 8
        %s543 = scalar_lea.vmem %s15, %s542
        %p544 = pneg %p405
        %p545 = pneg %p402
        %p546 = scmp.lt.s32.totalorder %s33, 1
        %s547 = scalar_select %p546, %s33, 1
        %s548 = scalar_lea.vmem %s16, %s547
        %p549 = scmp.lt.s32.totalorder %s33, 1
        %s550 = scalar_select %p549, %s33, 1
        %s551 = smul.addr %s550, 8
        %s552 = scalar_lea.vmem %s1, %s551
        %p553 = scmp.lt.s32.totalorder %s33, 1
        %s554 = scalar_select %p553, %s33, 1
        %s555 = smul.addr %s554, 8
        %s556 = scalar_lea.vmem %s2, %s555
        %p557 = scmp.lt.s32.totalorder %s33, 1
        %s558 = scalar_select %p557, %s33, 1
        %s559 = smul.addr %s558, 8
        %s560 = scalar_lea.vmem %s15, %s559
        %p561 = scmp.lt.s32.totalorder %s33, 1
        %s562 = scalar_select %p561, %s33, 1
        %s563 = scalar_lea.vmem %s16, %s562
        %v564 = vld [vmem:[%s552] sm:$0xff]
        %v565 = vld [vmem:[%s556] sm:$0xff]
        %v567 = vperm.slane %v565, 7
        %568 = vrot.lane.b32.xlu0 %v567, 17
        %v569 = vpop.permute.xlu0 %568
        %v571 = vperm.slane %v565, 0
        %v572 = vperm.slane %v565, 1
        %v573 = vperm.slane %v565, 2
        %v574 = vperm.slane %v565, 3
        %v575 = vperm.slane %v565, 4
        %v576 = vperm.slane %v565, 5
        %v577 = vperm.slane %v565, 6
        %578 = vrot.lane.b32.xlu0 %v571, 17
        %v579 = vpop.permute.xlu0 %578
        %580 = vrot.lane.b32.xlu0 %v572, 17
        %v581 = vpop.permute.xlu0 %580
        %582 = vrot.lane.b32.xlu0 %v573, 17
        %v583 = vpop.permute.xlu0 %582
        %584 = vrot.lane.b32.xlu0 %v574, 17
        %v585 = vpop.permute.xlu0 %584
        %586 = vrot.lane.b32.xlu0 %v575, 17
        %v587 = vpop.permute.xlu0 %586
        %588 = vrot.lane.b32.xlu0 %v576, 17
        %v589 = vpop.permute.xlu0 %588
        %590 = vrot.lane.b32.xlu0 %v577, 17
        %v591 = vpop.permute.xlu0 %590
        %vm592 = vcmask 138240
        %v593 = vsel %vm592, %v579, %v581
        %v594 = vsel %vm592, %v581, %v583
        %v595 = vsel %vm592, %v583, %v585
        %v596 = vsel %vm592, %v585, %v587
        %v597 = vsel %vm592, %v587, %v589
        %v598 = vsel %vm592, %v589, %v591
        %v599 = vsel %vm592, %v591, %v569
        %v608 = vsel %vm592, %v569, %v579
        %v609 = vld [vmem:[#allocation5] ss:$8 sm:$0xf]
        %v610 = vld [vmem:[#allocation5] ss:$8 sm:$0xf0]
        %v611 = vor.u32 %v609, %v610
        %v613 = vperm.slane %v611, 0
        %v614 = vperm.slane %v611, 1
        %v615 = vperm.slane %v611, 2
        %v616 = vperm.slane %v611, 3
        %v617 = vperm.slane %v611, 4
        %v618 = vperm.slane %v611, 5
        %v619 = vperm.slane %v611, 6
        %v620 = vperm.slane %v611, 7
        %v629 = vmul.f32 %v608, %v613
        %v630 = vmul.f32 %v593, %v614
        %v631 = vmul.f32 %v594, %v615
        %v632 = vmul.f32 %v595, %v616
        %v633 = vmul.f32 %v596, %v617
        %v634 = vmul.f32 %v597, %v618
        %v635 = vmul.f32 %v598, %v619
        %v636 = vmul.f32 %v599, %v620
        %637 = vrot.lane.b32.xlu0 %v567, 16
        %v638 = vpop.permute.xlu0 %637
        %640 = vrot.lane.b32.xlu0 %v571, 16
        %v641 = vpop.permute.xlu0 %640
        %642 = vrot.lane.b32.xlu0 %v572, 16
        %v643 = vpop.permute.xlu0 %642
        %644 = vrot.lane.b32.xlu0 %v573, 16
        %v645 = vpop.permute.xlu0 %644
        %646 = vrot.lane.b32.xlu0 %v574, 16
        %v647 = vpop.permute.xlu0 %646
        %648 = vrot.lane.b32.xlu0 %v575, 16
        %v649 = vpop.permute.xlu0 %648
        %650 = vrot.lane.b32.xlu0 %v576, 16
        %v651 = vpop.permute.xlu0 %650
        %652 = vrot.lane.b32.xlu0 %v577, 16
        %v653 = vpop.permute.xlu0 %652
        %vm654 = vcmask 130048
        %v655 = vsel %vm654, %v641, %v643
        %v656 = vsel %vm654, %v643, %v645
        %v657 = vsel %vm654, %v645, %v647
        %v658 = vsel %vm654, %v647, %v649
        %v659 = vsel %vm654, %v649, %v651
        %v660 = vsel %vm654, %v651, %v653
        %v661 = vsel %vm654, %v653, %v638
        %v670 = vsel %vm654, %v638, %v641
        %s671 = scalar_lea.vmem [#allocation5], 64
        %v672 = vld [vmem:[%s671] ss:$8 sm:$0xf]
        %v673 = vld [vmem:[%s671] ss:$8 sm:$0xf0]
        %v674 = vor.u32 %v672, %v673
        %v676 = vperm.slane %v674, 0
        %v677 = vperm.slane %v674, 1
        %v678 = vperm.slane %v674, 2
        %v679 = vperm.slane %v674, 3
        %v680 = vperm.slane %v674, 4
        %v681 = vperm.slane %v674, 5
        %v682 = vperm.slane %v674, 6
        %v683 = vperm.slane %v674, 7
        %v692 = vmul.f32 %v670, %v676
        %v693 = vmul.f32 %v655, %v677
        %v694 = vmul.f32 %v656, %v678
        %v695 = vmul.f32 %v657, %v679
        %v696 = vmul.f32 %v658, %v680
        %v697 = vmul.f32 %v659, %v681
        %v698 = vmul.f32 %v660, %v682
        %v699 = vmul.f32 %v661, %v683
        %700 = vrot.lane.b32.xlu0 %v567, 15
        %v701 = vpop.permute.xlu0 %700
        %703 = vrot.lane.b32.xlu0 %v571, 15
        %v704 = vpop.permute.xlu0 %703
        %705 = vrot.lane.b32.xlu0 %v572, 15
        %v706 = vpop.permute.xlu0 %705
        %707 = vrot.lane.b32.xlu0 %v573, 15
        %v708 = vpop.permute.xlu0 %707
        %709 = vrot.lane.b32.xlu0 %v574, 15
        %v710 = vpop.permute.xlu0 %709
        %711 = vrot.lane.b32.xlu0 %v575, 15
        %v712 = vpop.permute.xlu0 %711
        %713 = vrot.lane.b32.xlu0 %v576, 15
        %v714 = vpop.permute.xlu0 %713
        %715 = vrot.lane.b32.xlu0 %v577, 15
        %v716 = vpop.permute.xlu0 %715
        %vm717 = vcmask 121856
        %v718 = vsel %vm717, %v704, %v706
        %v719 = vsel %vm717, %v706, %v708
        %v720 = vsel %vm717, %v708, %v710
        %v721 = vsel %vm717, %v710, %v712
        %v722 = vsel %vm717, %v712, %v714
        %v723 = vsel %vm717, %v714, %v716
        %v724 = vsel %vm717, %v716, %v701
        %v733 = vsel %vm717, %v701, %v704
        %s734 = scalar_lea.vmem [#allocation5], 128
        %v735 = vld [vmem:[%s734] ss:$8 sm:$0xf]
        %v736 = vld [vmem:[%s734] ss:$8 sm:$0xf0]
        %v737 = vor.u32 %v735, %v736
        %v739 = vperm.slane %v737, 0
        %v740 = vperm.slane %v737, 1
        %v741 = vperm.slane %v737, 2
        %v742 = vperm.slane %v737, 3
        %v743 = vperm.slane %v737, 4
        %v744 = vperm.slane %v737, 5
        %v745 = vperm.slane %v737, 6
        %v746 = vperm.slane %v737, 7
        %v755 = vmul.f32 %v733, %v739
        %v756 = vmul.f32 %v718, %v740
        %v757 = vmul.f32 %v719, %v741
        %v758 = vmul.f32 %v720, %v742
        %v759 = vmul.f32 %v721, %v743
        %v760 = vmul.f32 %v722, %v744
        %v761 = vmul.f32 %v723, %v745
        %v762 = vmul.f32 %v724, %v746
        %763 = vrot.lane.b32.xlu0 %v567, 1
        %v764 = vpop.permute.xlu0 %763
        %766 = vrot.lane.b32.xlu0 %v571, 1
        %v767 = vpop.permute.xlu0 %766
        %768 = vrot.lane.b32.xlu0 %v572, 1
        %v769 = vpop.permute.xlu0 %768
        %770 = vrot.lane.b32.xlu0 %v573, 1
        %v771 = vpop.permute.xlu0 %770
        %772 = vrot.lane.b32.xlu0 %v574, 1
        %v773 = vpop.permute.xlu0 %772
        %774 = vrot.lane.b32.xlu0 %v575, 1
        %v775 = vpop.permute.xlu0 %774
        %776 = vrot.lane.b32.xlu0 %v576, 1
        %v777 = vpop.permute.xlu0 %776
        %778 = vrot.lane.b32.xlu0 %v577, 1
        %v779 = vpop.permute.xlu0 %778
        %vm780 = vcmask 7168
        %v781 = vsel %vm780, %v767, %v769
        %v782 = vsel %vm780, %v769, %v771
        %v783 = vsel %vm780, %v771, %v773
        %v784 = vsel %vm780, %v773, %v775
        %v785 = vsel %vm780, %v775, %v777
        %v786 = vsel %vm780, %v777, %v779
        %v787 = vsel %vm780, %v779, %v764
        %v796 = vsel %vm780, %v764, %v767
        %s797 = scalar_lea.vmem [#allocation5], 192
        %v798 = vld [vmem:[%s797] ss:$8 sm:$0xf]
        %v799 = vld [vmem:[%s797] ss:$8 sm:$0xf0]
        %v800 = vor.u32 %v798, %v799
        %v802 = vperm.slane %v800, 0
        %v803 = vperm.slane %v800, 1
        %v804 = vperm.slane %v800, 2
        %v805 = vperm.slane %v800, 3
        %v806 = vperm.slane %v800, 4
        %v807 = vperm.slane %v800, 5
        %v808 = vperm.slane %v800, 6
        %v809 = vperm.slane %v800, 7
        %v818 = vmul.f32 %v796, %v802
        %v819 = vmul.f32 %v781, %v803
        %v820 = vmul.f32 %v782, %v804
        %v821 = vmul.f32 %v783, %v805
        %v822 = vmul.f32 %v784, %v806
        %v823 = vmul.f32 %v785, %v807
        %v824 = vmul.f32 %v786, %v808
        %v825 = vmul.f32 %v787, %v809
        %s826 = scalar_lea.vmem [#allocation5], 256
        %v827 = vld [vmem:[%s826] ss:$8 sm:$0xf]
        %v828 = vld [vmem:[%s826] ss:$8 sm:$0xf0]
        %v829 = vor.u32 %v827, %v828
        %v830 = vmul.f32 %v565, %v829
        %831 = vrot.lane.b32.xlu0 %v571, 127
        %v832 = vpop.permute.xlu0 %831
        %833 = vrot.lane.b32.xlu0 %v572, 127
        %v834 = vpop.permute.xlu0 %833
        %835 = vrot.lane.b32.xlu0 %v573, 127
        %v836 = vpop.permute.xlu0 %835
        %837 = vrot.lane.b32.xlu0 %v574, 127
        %v838 = vpop.permute.xlu0 %837
        %839 = vrot.lane.b32.xlu0 %v575, 127
        %v840 = vpop.permute.xlu0 %839
        %841 = vrot.lane.b32.xlu0 %v576, 127
        %v842 = vpop.permute.xlu0 %841
        %843 = vrot.lane.b32.xlu0 %v577, 127
        %v844 = vpop.permute.xlu0 %843
        %845 = vrot.lane.b32.xlu0 %v567, 127
        %v846 = vpop.permute.xlu0 %845
        %vm847 = vcmask 1039360
        %v848 = vsel %vm847, %v832, %v834
        %v849 = vsel %vm847, %v834, %v836
        %v850 = vsel %vm847, %v836, %v838
        %v851 = vsel %vm847, %v838, %v840
        %v852 = vsel %vm847, %v840, %v842
        %v853 = vsel %vm847, %v842, %v844
        %v854 = vsel %vm847, %v844, %v846
        %v864 = vsel %vm847, %v846, %v832
        %s865 = scalar_lea.vmem [#allocation5], 320
        %v866 = vld [vmem:[%s865] ss:$8 sm:$0xf]
        %v867 = vld [vmem:[%s865] ss:$8 sm:$0xf0]
        %v868 = vor.u32 %v866, %v867
        %v870 = vperm.slane %v868, 0
        %v871 = vperm.slane %v868, 1
        %v872 = vperm.slane %v868, 2
        %v873 = vperm.slane %v868, 3
        %v874 = vperm.slane %v868, 4
        %v875 = vperm.slane %v868, 5
        %v876 = vperm.slane %v868, 6
        %v877 = vperm.slane %v868, 7
        %v886 = vmul.f32 %v848, %v870
        %v887 = vmul.f32 %v849, %v871
        %v888 = vmul.f32 %v850, %v872
        %v889 = vmul.f32 %v851, %v873
        %v890 = vmul.f32 %v852, %v874
        %v891 = vmul.f32 %v853, %v875
        %v892 = vmul.f32 %v854, %v876
        %v893 = vmul.f32 %v864, %v877
        %894 = vrot.lane.b32.xlu0 %v571, 113
        %v895 = vpop.permute.xlu0 %894
        %896 = vrot.lane.b32.xlu0 %v572, 113
        %v897 = vpop.permute.xlu0 %896
        %898 = vrot.lane.b32.xlu0 %v573, 113
        %v899 = vpop.permute.xlu0 %898
        %900 = vrot.lane.b32.xlu0 %v574, 113
        %v901 = vpop.permute.xlu0 %900
        %902 = vrot.lane.b32.xlu0 %v575, 113
        %v903 = vpop.permute.xlu0 %902
        %904 = vrot.lane.b32.xlu0 %v576, 113
        %v905 = vpop.permute.xlu0 %904
        %906 = vrot.lane.b32.xlu0 %v577, 113
        %v907 = vpop.permute.xlu0 %906
        %908 = vrot.lane.b32.xlu0 %v567, 113
        %v909 = vpop.permute.xlu0 %908
        %vm910 = vcmask 924672
        %v911 = vsel %vm910, %v895, %v897
        %v912 = vsel %vm910, %v897, %v899
        %v913 = vsel %vm910, %v899, %v901
        %v914 = vsel %vm910, %v901, %v903
        %v915 = vsel %vm910, %v903, %v905
        %v916 = vsel %vm910, %v905, %v907
        %v917 = vsel %vm910, %v907, %v909
        %v927 = vsel %vm910, %v909, %v895
        %s928 = scalar_lea.vmem [#allocation5], 384
        %v929 = vld [vmem:[%s928] ss:$8 sm:$0xf]
        %v930 = vld [vmem:[%s928] ss:$8 sm:$0xf0]
        %v931 = vor.u32 %v929, %v930
        %v933 = vperm.slane %v931, 0
        %v934 = vperm.slane %v931, 1
        %v935 = vperm.slane %v931, 2
        %v936 = vperm.slane %v931, 3
        %v937 = vperm.slane %v931, 4
        %v938 = vperm.slane %v931, 5
        %v939 = vperm.slane %v931, 6
        %v940 = vperm.slane %v931, 7
        %v949 = vmul.f32 %v911, %v933
        %v950 = vmul.f32 %v912, %v934
        %v951 = vmul.f32 %v913, %v935
        %v952 = vmul.f32 %v914, %v936
        %v953 = vmul.f32 %v915, %v937
        %v954 = vmul.f32 %v916, %v938
        %v955 = vmul.f32 %v917, %v939
        %v956 = vmul.f32 %v927, %v940
        %957 = vrot.lane.b32.xlu0 %v571, 112
        %v958 = vpop.permute.xlu0 %957
        %959 = vrot.lane.b32.xlu0 %v572, 112
        %v960 = vpop.permute.xlu0 %959
        %961 = vrot.lane.b32.xlu0 %v573, 112
        %v962 = vpop.permute.xlu0 %961
        %963 = vrot.lane.b32.xlu0 %v574, 112
        %v964 = vpop.permute.xlu0 %963
        %965 = vrot.lane.b32.xlu0 %v575, 112
        %v966 = vpop.permute.xlu0 %965
        %967 = vrot.lane.b32.xlu0 %v576, 112
        %v968 = vpop.permute.xlu0 %967
        %969 = vrot.lane.b32.xlu0 %v577, 112
        %v970 = vpop.permute.xlu0 %969
        %971 = vrot.lane.b32.xlu0 %v567, 112
        %v972 = vpop.permute.xlu0 %971
        %vm973 = vcmask 916480
        %v974 = vsel %vm973, %v958, %v960
        %v975 = vsel %vm973, %v960, %v962
        %v976 = vsel %vm973, %v962, %v964
        %v977 = vsel %vm973, %v964, %v966
        %v978 = vsel %vm973, %v966, %v968
        %v979 = vsel %vm973, %v968, %v970
        %v980 = vsel %vm973, %v970, %v972
        %v990 = vsel %vm973, %v972, %v958
        %s991 = scalar_lea.vmem [#allocation5], 448
        %v992 = vld [vmem:[%s991] ss:$8 sm:$0xf]
        %v993 = vld [vmem:[%s991] ss:$8 sm:$0xf0]
        %v994 = vor.u32 %v992, %v993
        %v996 = vperm.slane %v994, 0
        %v997 = vperm.slane %v994, 1
        %v998 = vperm.slane %v994, 2
        %v999 = vperm.slane %v994, 3
        %v1000 = vperm.slane %v994, 4
        %v1001 = vperm.slane %v994, 5
        %v1002 = vperm.slane %v994, 6
        %v1003 = vperm.slane %v994, 7
        %v1012 = vmul.f32 %v974, %v996
        %v1013 = vmul.f32 %v975, %v997
        %v1014 = vmul.f32 %v976, %v998
        %v1015 = vmul.f32 %v977, %v999
        %v1016 = vmul.f32 %v978, %v1000
        %v1017 = vmul.f32 %v979, %v1001
        %v1018 = vmul.f32 %v980, %v1002
        %v1019 = vmul.f32 %v990, %v1003
        %1020 = vrot.lane.b32.xlu0 %v571, 111
        %v1021 = vpop.permute.xlu0 %1020
        %1022 = vrot.lane.b32.xlu0 %v572, 111
        %v1023 = vpop.permute.xlu0 %1022
        %1024 = vrot.lane.b32.xlu0 %v573, 111
        %v1025 = vpop.permute.xlu0 %1024
        %1026 = vrot.lane.b32.xlu0 %v574, 111
        %v1027 = vpop.permute.xlu0 %1026
        %1028 = vrot.lane.b32.xlu0 %v575, 111
        %v1029 = vpop.permute.xlu0 %1028
        %1030 = vrot.lane.b32.xlu0 %v576, 111
        %v1031 = vpop.permute.xlu0 %1030
        %1032 = vrot.lane.b32.xlu0 %v577, 111
        %v1033 = vpop.permute.xlu0 %1032
        %1034 = vrot.lane.b32.xlu0 %v567, 111
        %v1035 = vpop.permute.xlu0 %1034
        %vm1036 = vcmask 908288
        %v1037 = vsel %vm1036, %v1021, %v1023
        %v1038 = vsel %vm1036, %v1023, %v1025
        %v1039 = vsel %vm1036, %v1025, %v1027
        %v1040 = vsel %vm1036, %v1027, %v1029
        %v1041 = vsel %vm1036, %v1029, %v1031
        %v1042 = vsel %vm1036, %v1031, %v1033
        %v1043 = vsel %vm1036, %v1033, %v1035
        %v1053 = vsel %vm1036, %v1035, %v1021
        %s1054 = scalar_lea.vmem [#allocation5], 512
        %v1055 = vld [vmem:[%s1054] ss:$8 sm:$0xf]
        %v1056 = vld [vmem:[%s1054] ss:$8 sm:$0xf0]
        %v1057 = vor.u32 %v1055, %v1056
        %v1059 = vperm.slane %v1057, 0
        %v1060 = vperm.slane %v1057, 1
        %v1061 = vperm.slane %v1057, 2
        %v1062 = vperm.slane %v1057, 3
        %v1063 = vperm.slane %v1057, 4
        %v1064 = vperm.slane %v1057, 5
        %v1065 = vperm.slane %v1057, 6
        %v1066 = vperm.slane %v1057, 7
        %v1075 = vmul.f32 %v1037, %v1059
        %v1076 = vmul.f32 %v1038, %v1060
        %v1077 = vmul.f32 %v1039, %v1061
        %v1078 = vmul.f32 %v1040, %v1062
        %v1079 = vmul.f32 %v1041, %v1063
        %v1080 = vmul.f32 %v1042, %v1064
        %v1081 = vmul.f32 %v1043, %v1065
        %v1082 = vmul.f32 %v1053, %v1066
        %v1091 = vrot.slane %v692, 7
        %v1092 = vrot.slane %v693, 7
        %v1093 = vrot.slane %v694, 7
        %v1094 = vrot.slane %v695, 7
        %v1095 = vrot.slane %v696, 7
        %v1096 = vrot.slane %v697, 7
        %v1097 = vrot.slane %v698, 7
        %v1098 = vrot.slane %v699, 7
        %v1115 = vrot.slane %v755, 6
        %v1116 = vrot.slane %v756, 6
        %v1117 = vrot.slane %v757, 6
        %v1118 = vrot.slane %v758, 6
        %v1119 = vrot.slane %v759, 6
        %v1120 = vrot.slane %v760, 6
        %v1121 = vrot.slane %v761, 6
        %v1122 = vrot.slane %v762, 6
        %v1139 = vrot.slane %v818, 5
        %v1140 = vrot.slane %v819, 5
        %v1141 = vrot.slane %v820, 5
        %v1142 = vrot.slane %v821, 5
        %v1143 = vrot.slane %v822, 5
        %v1144 = vrot.slane %v823, 5
        %v1145 = vrot.slane %v824, 5
        %v1146 = vrot.slane %v825, 5
        %v1156 = vperm.slane %v830, 0
        %v1157 = vperm.slane %v830, 1
        %v1158 = vperm.slane %v830, 2
        %v1159 = vperm.slane %v830, 3
        %v1160 = vperm.slane %v830, 4
        %v1161 = vperm.slane %v830, 5
        %v1162 = vperm.slane %v830, 6
        %v1163 = vperm.slane %v830, 7
        %v1180 = vrot.slane %v886, 3
        %v1181 = vrot.slane %v887, 3
        %v1182 = vrot.slane %v888, 3
        %v1183 = vrot.slane %v889, 3
        %v1184 = vrot.slane %v890, 3
        %v1185 = vrot.slane %v891, 3
        %v1186 = vrot.slane %v892, 3
        %v1187 = vrot.slane %v893, 3
        %v1204 = vrot.slane %v949, 2
        %v1205 = vrot.slane %v950, 2
        %v1206 = vrot.slane %v951, 2
        %v1207 = vrot.slane %v952, 2
        %v1208 = vrot.slane %v953, 2
        %v1209 = vrot.slane %v954, 2
        %v1210 = vrot.slane %v955, 2
        %v1211 = vrot.slane %v956, 2
        %v1228 = vrot.slane %v1012, 1
        %v1229 = vrot.slane %v1013, 1
        %v1230 = vrot.slane %v1014, 1
        %v1231 = vrot.slane %v1015, 1
        %v1232 = vrot.slane %v1016, 1
        %v1233 = vrot.slane %v1017, 1
        %v1234 = vrot.slane %v1018, 1
        %v1235 = vrot.slane %v1019, 1
        %vm1244 = vcmask 1040384
        %v1245 = vsel %vm1244, %v629, %v1091
        %v1246 = vsel %vm1244, %v630, %v1092
        %v1247 = vsel %vm1244, %v631, %v1093
        %v1248 = vsel %vm1244, %v632, %v1094
        %v1249 = vsel %vm1244, %v633, %v1095
        %v1250 = vsel %vm1244, %v634, %v1096
        %v1251 = vsel %vm1244, %v635, %v1097
        %v1252 = vsel %vm1244, %v636, %v1098
        %vm1253 = vcmask 1041408
        %v1254 = vsel %vm1253, %v1245, %v1115
        %v1255 = vsel %vm1253, %v1246, %v1116
        %v1256 = vsel %vm1253, %v1247, %v1117
        %v1257 = vsel %vm1253, %v1248, %v1118
        %v1258 = vsel %vm1253, %v1249, %v1119
        %v1259 = vsel %vm1253, %v1250, %v1120
        %v1260 = vsel %vm1253, %v1251, %v1121
        %v1261 = vsel %vm1253, %v1252, %v1122
        %vm1262 = vcmask 1042432
        %v1263 = vsel %vm1262, %v1254, %v1139
        %v1264 = vsel %vm1262, %v1255, %v1140
        %v1265 = vsel %vm1262, %v1256, %v1141
        %v1266 = vsel %vm1262, %v1257, %v1142
        %v1267 = vsel %vm1262, %v1258, %v1143
        %v1268 = vsel %vm1262, %v1259, %v1144
        %v1269 = vsel %vm1262, %v1260, %v1145
        %v1270 = vsel %vm1262, %v1261, %v1146
        %vm1271 = vcmask 1043456
        %v1272 = vsel %vm1271, %v1263, %v1156
        %v1273 = vsel %vm1271, %v1264, %v1157
        %v1274 = vsel %vm1271, %v1265, %v1158
        %v1275 = vsel %vm1271, %v1266, %v1159
        %v1276 = vsel %vm1271, %v1267, %v1160
        %v1277 = vsel %vm1271, %v1268, %v1161
        %v1278 = vsel %vm1271, %v1269, %v1162
        %v1279 = vsel %vm1271, %v1270, %v1163
        %vm1280 = vcmask 1044480
        %v1281 = vsel %vm1280, %v1272, %v1180
        %v1282 = vsel %vm1280, %v1273, %v1181
        %v1283 = vsel %vm1280, %v1274, %v1182
        %v1284 = vsel %vm1280, %v1275, %v1183
        %v1285 = vsel %vm1280, %v1276, %v1184
        %v1286 = vsel %vm1280, %v1277, %v1185
        %v1287 = vsel %vm1280, %v1278, %v1186
        %v1288 = vsel %vm1280, %v1279, %v1187
        %vm1289 = vcmask 1045504
        %v1290 = vsel %vm1289, %v1281, %v1204
        %v1291 = vsel %vm1289, %v1282, %v1205
        %v1292 = vsel %vm1289, %v1283, %v1206
        %v1293 = vsel %vm1289, %v1284, %v1207
        %v1294 = vsel %vm1289, %v1285, %v1208
        %v1295 = vsel %vm1289, %v1286, %v1209
        %v1296 = vsel %vm1289, %v1287, %v1210
        %v1297 = vsel %vm1289, %v1288, %v1211
        %vm1298 = vcmask 1046528
        %v1299 = vsel %vm1298, %v1290, %v1228
        %v1300 = vsel %vm1298, %v1291, %v1229
        %v1301 = vsel %vm1298, %v1292, %v1230
        %v1302 = vsel %vm1298, %v1293, %v1231
        %v1303 = vsel %vm1298, %v1294, %v1232
        %v1304 = vsel %vm1298, %v1295, %v1233
        %v1305 = vsel %vm1298, %v1296, %v1234
        %v1306 = vsel %vm1298, %v1297, %v1235
        %v1307 = vld [vmem:[%s3] sm:$0xff]
        %v1308 = vld [vmem:[%s4] sm:$0xff]
        %1310 = vset.pattern.permute.xlu0 0
        %1311 = vperm.xlu0 %1310, %v1308
        %v1312 = vpop.permute.xlu0 %1311
        %vm1314 = vcmask 72704
        %v1316 = vsel %vm1314, %v1307, 0
        %v1319 = vsel %vm1244, %v1075, 0
        %v1322 = vsel %vm1244, %v1076, 0
        %v1325 = vsel %vm1244, %v1077, 0
        %v1328 = vsel %vm1244, %v1078, 0
        %v1331 = vsel %vm1244, %v1079, 0
        %v1334 = vsel %vm1244, %v1080, 0
        %v1337 = vsel %vm1244, %v1081, 0
        %v1340 = vsel %vm1244, %v1082, 0
        %1342 = vmatpush.msra.mxu0 0.0
        %1343 = vmatpush.msra.mxu0 0.0
        %1344 = vmatpush.msra.mxu0 0.0
        %1345 = vmatpush.msra.mxu0 0.0
        %1346 = vmatpush.msra.mxu0 0.0
        %1347 = vmatpush.msra.mxu0 0.0
        %1348 = vmatpush.msra.mxu0 0.0
        %1349 = vmatpush.msra.mxu0 0.0
        %1350 = vmatpush.msra.mxu0 0.0
        %1351 = vmatpush.msra.mxu0 0.0
        %1352 = vmatpush.msra.mxu0 0.0
        %1353 = vmatpush.msra.mxu0 0.0
        %1354 = vmatpush.msra.mxu0 0.0
        %1355 = vmatpush.msra.mxu0 0.0
        %1356 = vmatpush.msra.mxu0 %v1319
        %1357 = vmatpush.msra.mxu0 %v1299
        %1358 = vmatmul.f32.gmra.mxu0 %v1316
        %v1359 = vpop.f32.mrf.mxu0
        %v1360 = vadd.f32 %v1312, %v1359
        %1361 = vdwg.mxu0
        %1362 = vmatpush.msra.mxu0 0.0
        %1363 = vmatpush.msra.mxu0 0.0
        %1364 = vmatpush.msra.mxu0 0.0
        %1365 = vmatpush.msra.mxu0 0.0
        %1366 = vmatpush.msra.mxu0 0.0
        %1367 = vmatpush.msra.mxu0 0.0
        %1368 = vmatpush.msra.mxu0 0.0
        %1369 = vmatpush.msra.mxu0 0.0
        %1370 = vmatpush.msra.mxu0 0.0
        %1371 = vmatpush.msra.mxu0 0.0
        %1372 = vmatpush.msra.mxu0 0.0
        %1373 = vmatpush.msra.mxu0 0.0
        %1374 = vmatpush.msra.mxu0 0.0
        %1375 = vmatpush.msra.mxu0 0.0
        %1376 = vmatpush.msra.mxu0 %v1322
        %1377 = vmatpush.msra.mxu0 %v1300
        %1378 = vmatmul.f32.gmra.mxu0 %v1316
        %v1379 = vpop.f32.mrf.mxu0
        %v1380 = vadd.f32 %v1312, %v1379
        %1381 = vdwg.mxu0
        %1382 = vmatpush.msra.mxu0 0.0
        %1383 = vmatpush.msra.mxu0 0.0
        %1384 = vmatpush.msra.mxu0 0.0
        %1385 = vmatpush.msra.mxu0 0.0
        %1386 = vmatpush.msra.mxu0 0.0
        %1387 = vmatpush.msra.mxu0 0.0
        %1388 = vmatpush.msra.mxu0 0.0
        %1389 = vmatpush.msra.mxu0 0.0
        %1390 = vmatpush.msra.mxu0 0.0
        %1391 = vmatpush.msra.mxu0 0.0
        %1392 = vmatpush.msra.mxu0 0.0
        %1393 = vmatpush.msra.mxu0 0.0
        %1394 = vmatpush.msra.mxu0 0.0
        %1395 = vmatpush.msra.mxu0 0.0
        %1396 = vmatpush.msra.mxu0 %v1325
        %1397 = vmatpush.msra.mxu0 %v1301
        %1398 = vmatmul.f32.gmra.mxu0 %v1316
        %v1399 = vpop.f32.mrf.mxu0
        %v1400 = vadd.f32 %v1312, %v1399
        %1401 = vdwg.mxu0
        %1402 = vmatpush.msra.mxu0 0.0
        %1403 = vmatpush.msra.mxu0 0.0
        %1404 = vmatpush.msra.mxu0 0.0
        %1405 = vmatpush.msra.mxu0 0.0
        %1406 = vmatpush.msra.mxu0 0.0
        %1407 = vmatpush.msra.mxu0 0.0
        %1408 = vmatpush.msra.mxu0 0.0
        %1409 = vmatpush.msra.mxu0 0.0
        %1410 = vmatpush.msra.mxu0 0.0
        %1411 = vmatpush.msra.mxu0 0.0
        %1412 = vmatpush.msra.mxu0 0.0
        %1413 = vmatpush.msra.mxu0 0.0
        %1414 = vmatpush.msra.mxu0 0.0
        %1415 = vmatpush.msra.mxu0 0.0
        %1416 = vmatpush.msra.mxu0 %v1328
        %1417 = vmatpush.msra.mxu0 %v1302
        %1418 = vmatmul.f32.gmra.mxu0 %v1316
        %v1419 = vpop.f32.mrf.mxu0
        %v1420 = vadd.f32 %v1312, %v1419
        %1421 = vdwg.mxu0
        %1422 = vmatpush.msra.mxu0 0.0
        %1423 = vmatpush.msra.mxu0 0.0
        %1424 = vmatpush.msra.mxu0 0.0
        %1425 = vmatpush.msra.mxu0 0.0
        %1426 = vmatpush.msra.mxu0 0.0
        %1427 = vmatpush.msra.mxu0 0.0
        %1428 = vmatpush.msra.mxu0 0.0
        %1429 = vmatpush.msra.mxu0 0.0
        %1430 = vmatpush.msra.mxu0 0.0
        %1431 = vmatpush.msra.mxu0 0.0
        %1432 = vmatpush.msra.mxu0 0.0
        %1433 = vmatpush.msra.mxu0 0.0
        %1434 = vmatpush.msra.mxu0 0.0
        %1435 = vmatpush.msra.mxu0 0.0
        %1436 = vmatpush.msra.mxu0 %v1331
        %1437 = vmatpush.msra.mxu0 %v1303
        %1438 = vmatmul.f32.gmra.mxu0 %v1316
        %v1439 = vpop.f32.mrf.mxu0
        %v1440 = vadd.f32 %v1312, %v1439
        %1441 = vdwg.mxu0
        %1442 = vmatpush.msra.mxu0 0.0
        %1443 = vmatpush.msra.mxu0 0.0
        %1444 = vmatpush.msra.mxu0 0.0
        %1445 = vmatpush.msra.mxu0 0.0
        %1446 = vmatpush.msra.mxu0 0.0
        %1447 = vmatpush.msra.mxu0 0.0
        %1448 = vmatpush.msra.mxu0 0.0
        %1449 = vmatpush.msra.mxu0 0.0
        %1450 = vmatpush.msra.mxu0 0.0
        %1451 = vmatpush.msra.mxu0 0.0
        %1452 = vmatpush.msra.mxu0 0.0
        %1453 = vmatpush.msra.mxu0 0.0
        %1454 = vmatpush.msra.mxu0 0.0
        %1455 = vmatpush.msra.mxu0 0.0
        %1456 = vmatpush.msra.mxu0 %v1334
        %1457 = vmatpush.msra.mxu0 %v1304
        %1458 = vmatmul.f32.gmra.mxu0 %v1316
        %v1459 = vpop.f32.mrf.mxu0
        %v1460 = vadd.f32 %v1312, %v1459
        %1461 = vdwg.mxu0
        %1462 = vmatpush.msra.mxu0 0.0
        %1463 = vmatpush.msra.mxu0 0.0
        %1464 = vmatpush.msra.mxu0 0.0
        %1465 = vmatpush.msra.mxu0 0.0
        %1466 = vmatpush.msra.mxu0 0.0
        %1467 = vmatpush.msra.mxu0 0.0
        %1468 = vmatpush.msra.mxu0 0.0
        %1469 = vmatpush.msra.mxu0 0.0
        %1470 = vmatpush.msra.mxu0 0.0
        %1471 = vmatpush.msra.mxu0 0.0
        %1472 = vmatpush.msra.mxu0 0.0
        %1473 = vmatpush.msra.mxu0 0.0
        %1474 = vmatpush.msra.mxu0 0.0
        %1475 = vmatpush.msra.mxu0 0.0
        %1476 = vmatpush.msra.mxu0 %v1337
        %1477 = vmatpush.msra.mxu0 %v1305
        %1478 = vmatmul.f32.gmra.mxu0 %v1316
        %v1479 = vpop.f32.mrf.mxu0
        %v1480 = vadd.f32 %v1312, %v1479
        %1481 = vdwg.mxu0
        %1482 = vmatpush.msra.mxu0 0.0
        %1483 = vmatpush.msra.mxu0 0.0
        %1484 = vmatpush.msra.mxu0 0.0
        %1485 = vmatpush.msra.mxu0 0.0
        %1486 = vmatpush.msra.mxu0 0.0
        %1487 = vmatpush.msra.mxu0 0.0
        %1488 = vmatpush.msra.mxu0 0.0
        %1489 = vmatpush.msra.mxu0 0.0
        %1490 = vmatpush.msra.mxu0 0.0
        %1491 = vmatpush.msra.mxu0 0.0
        %1492 = vmatpush.msra.mxu0 0.0
        %1493 = vmatpush.msra.mxu0 0.0
        %1494 = vmatpush.msra.mxu0 0.0
        %1495 = vmatpush.msra.mxu0 0.0
        %1496 = vmatpush.msra.mxu0 %v1340
        %1497 = vmatpush.msra.mxu0 %v1306
        %1498 = vmatmul.f32.gmra.mxu0 %v1316
        %v1499 = vpop.f32.mrf.mxu0
        %v1500 = vadd.f32 %v1312, %v1499
        %1501 = vdwg.mxu0
        %v1502 = vmax.f32 %v1360, 0.0
        %v1503 = vmax.f32 %v1380, 0.0
        %v1504 = vmax.f32 %v1400, 0.0
        %v1505 = vmax.f32 %v1420, 0.0
        %v1506 = vmax.f32 %v1440, 0.0
        %v1507 = vmax.f32 %v1460, 0.0
        %v1508 = vmax.f32 %v1480, 0.0
        %v1509 = vmax.f32 %v1500, 0.0
        %1511 = vrot.lane.b32.xlu0 %v1509, 17
        %v1512 = vpop.permute.xlu0 %1511
        %1521 = vrot.lane.b32.xlu0 %v1502, 17
        %v1522 = vpop.permute.xlu0 %1521
        %1523 = vrot.lane.b32.xlu0 %v1503, 17
        %v1524 = vpop.permute.xlu0 %1523
        %1525 = vrot.lane.b32.xlu0 %v1504, 17
        %v1526 = vpop.permute.xlu0 %1525
        %1527 = vrot.lane.b32.xlu0 %v1505, 17
        %v1528 = vpop.permute.xlu0 %1527
        %1529 = vrot.lane.b32.xlu0 %v1506, 17
        %v1530 = vpop.permute.xlu0 %1529
        %1531 = vrot.lane.b32.xlu0 %v1507, 17
        %v1532 = vpop.permute.xlu0 %1531
        %1533 = vrot.lane.b32.xlu0 %v1508, 17
        %v1534 = vpop.permute.xlu0 %1533
        %v1535 = vsel %vm592, %v1522, %v1524
        %v1536 = vsel %vm592, %v1524, %v1526
        %v1537 = vsel %vm592, %v1526, %v1528
        %v1538 = vsel %vm592, %v1528, %v1530
        %v1539 = vsel %vm592, %v1530, %v1532
        %v1540 = vsel %vm592, %v1532, %v1534
        %v1541 = vsel %vm592, %v1534, %v1512
        %v1550 = vsel %vm592, %v1512, %v1522
        %v1551 = vld [vmem:[#allocation5] sm:$0xff]
        %v1552 = vld [vmem:[#allocation5 + $0x8] sm:$0xff]
        %v1553 = vld [vmem:[#allocation5 + $0x10] sm:$0xff]
        %v1554 = vld [vmem:[#allocation5 + $0x18] sm:$0xff]
        %v1555 = vld [vmem:[#allocation5 + $0x20] sm:$0xff]
        %v1556 = vld [vmem:[#allocation5 + $0x28] sm:$0xff]
        %v1557 = vld [vmem:[#allocation5 + $0x30] sm:$0xff]
        %v1558 = vld [vmem:[#allocation5 + $0x38] sm:$0xff]
        %v1559 = vmul.f32 %v1550, %v1551
        %v1560 = vmul.f32 %v1535, %v1552
        %v1561 = vmul.f32 %v1536, %v1553
        %v1562 = vmul.f32 %v1537, %v1554
        %v1563 = vmul.f32 %v1538, %v1555
        %v1564 = vmul.f32 %v1539, %v1556
        %v1565 = vmul.f32 %v1540, %v1557
        %v1566 = vmul.f32 %v1541, %v1558
        %1567 = vst [vmem:[#allocation2] sm:$0xff] %v1559
        %1568 = vst [vmem:[#allocation2 + $0x8] sm:$0xff] %v1560
        %1569 = vst [vmem:[#allocation2 + $0x10] sm:$0xff] %v1561
        %1570 = vst [vmem:[#allocation2 + $0x18] sm:$0xff] %v1562
        %1571 = vst [vmem:[#allocation2 + $0x20] sm:$0xff] %v1563
        %1572 = vst [vmem:[#allocation2 + $0x28] sm:$0xff] %v1564
        %1573 = vst [vmem:[#allocation2 + $0x30] sm:$0xff] %v1565
        %1574 = vst [vmem:[#allocation2 + $0x38] sm:$0xff] %v1566
        %1575 = vrot.lane.b32.xlu0 %v1509, 16
        %v1576 = vpop.permute.xlu0 %1575
        %1578 = vrot.lane.b32.xlu0 %v1502, 16
        %v1579 = vpop.permute.xlu0 %1578
        %1580 = vrot.lane.b32.xlu0 %v1503, 16
        %v1581 = vpop.permute.xlu0 %1580
        %1582 = vrot.lane.b32.xlu0 %v1504, 16
        %v1583 = vpop.permute.xlu0 %1582
        %1584 = vrot.lane.b32.xlu0 %v1505, 16
        %v1585 = vpop.permute.xlu0 %1584
        %1586 = vrot.lane.b32.xlu0 %v1506, 16
        %v1587 = vpop.permute.xlu0 %1586
        %1588 = vrot.lane.b32.xlu0 %v1507, 16
        %v1589 = vpop.permute.xlu0 %1588
        %1590 = vrot.lane.b32.xlu0 %v1508, 16
        %v1591 = vpop.permute.xlu0 %1590
        %v1592 = vsel %vm654, %v1579, %v1581
        %v1593 = vsel %vm654, %v1581, %v1583
        %v1594 = vsel %vm654, %v1583, %v1585
        %v1595 = vsel %vm654, %v1585, %v1587
        %v1596 = vsel %vm654, %v1587, %v1589
        %v1597 = vsel %vm654, %v1589, %v1591
        %v1598 = vsel %vm654, %v1591, %v1576
        %v1607 = vsel %vm654, %v1576, %v1579
        %v1608 = vld [vmem:[#allocation5 + $0x40] sm:$0xff]
        %v1609 = vld [vmem:[#allocation5 + $0x48] sm:$0xff]
        %v1610 = vld [vmem:[#allocation5 + $0x50] sm:$0xff]
        %v1611 = vld [vmem:[#allocation5 + $0x58] sm:$0xff]
        %v1612 = vld [vmem:[#allocation5 + $0x60] sm:$0xff]
        %v1613 = vld [vmem:[#allocation5 + $0x68] sm:$0xff]
        %v1614 = vld [vmem:[#allocation5 + $0x70] sm:$0xff]
        %v1615 = vld [vmem:[#allocation5 + $0x78] sm:$0xff]
        %v1616 = vmul.f32 %v1607, %v1608
        %v1617 = vmul.f32 %v1592, %v1609
        %v1618 = vmul.f32 %v1593, %v1610
        %v1619 = vmul.f32 %v1594, %v1611
        %v1620 = vmul.f32 %v1595, %v1612
        %v1621 = vmul.f32 %v1596, %v1613
        %v1622 = vmul.f32 %v1597, %v1614
        %v1623 = vmul.f32 %v1598, %v1615
        %1624 = vst [vmem:[#allocation2 + $0x40] sm:$0xff] %v1616
        %1625 = vst [vmem:[#allocation2 + $0x48] sm:$0xff] %v1617
        %1626 = vst [vmem:[#allocation2 + $0x50] sm:$0xff] %v1618
        %1627 = vst [vmem:[#allocation2 + $0x58] sm:$0xff] %v1619
        %1628 = vst [vmem:[#allocation2 + $0x60] sm:$0xff] %v1620
        %1629 = vst [vmem:[#allocation2 + $0x68] sm:$0xff] %v1621
        %1630 = vst [vmem:[#allocation2 + $0x70] sm:$0xff] %v1622
        %1631 = vst [vmem:[#allocation2 + $0x78] sm:$0xff] %v1623
        %1632 = vrot.lane.b32.xlu0 %v1509, 15
        %v1633 = vpop.permute.xlu0 %1632
        %1635 = vrot.lane.b32.xlu0 %v1502, 15
        %v1636 = vpop.permute.xlu0 %1635
        %1637 = vrot.lane.b32.xlu0 %v1503, 15
        %v1638 = vpop.permute.xlu0 %1637
        %1639 = vrot.lane.b32.xlu0 %v1504, 15
        %v1640 = vpop.permute.xlu0 %1639
        %1641 = vrot.lane.b32.xlu0 %v1505, 15
        %v1642 = vpop.permute.xlu0 %1641
        %1643 = vrot.lane.b32.xlu0 %v1506, 15
        %v1644 = vpop.permute.xlu0 %1643
        %1645 = vrot.lane.b32.xlu0 %v1507, 15
        %v1646 = vpop.permute.xlu0 %1645
        %1647 = vrot.lane.b32.xlu0 %v1508, 15
        %v1648 = vpop.permute.xlu0 %1647
        %v1649 = vsel %vm717, %v1636, %v1638
        %v1650 = vsel %vm717, %v1638, %v1640
        %v1651 = vsel %vm717, %v1640, %v1642
        %v1652 = vsel %vm717, %v1642, %v1644
        %v1653 = vsel %vm717, %v1644, %v1646
        %v1654 = vsel %vm717, %v1646, %v1648
        %v1655 = vsel %vm717, %v1648, %v1633
        %v1664 = vsel %vm717, %v1633, %v1636
        %v1665 = vld [vmem:[#allocation5 + $0x80] sm:$0xff]
        %v1666 = vld [vmem:[#allocation5 + $0x88] sm:$0xff]
        %v1667 = vld [vmem:[#allocation5 + $0x90] sm:$0xff]
        %v1668 = vld [vmem:[#allocation5 + $0x98] sm:$0xff]
        %v1669 = vld [vmem:[#allocation5 + $0xa0] sm:$0xff]
        %v1670 = vld [vmem:[#allocation5 + $0xa8] sm:$0xff]
        %v1671 = vld [vmem:[#allocation5 + $0xb0] sm:$0xff]
        %v1672 = vld [vmem:[#allocation5 + $0xb8] sm:$0xff]
        %v1673 = vmul.f32 %v1664, %v1665
        %v1674 = vmul.f32 %v1649, %v1666
        %v1675 = vmul.f32 %v1650, %v1667
        %v1676 = vmul.f32 %v1651, %v1668
        %v1677 = vmul.f32 %v1652, %v1669
        %v1678 = vmul.f32 %v1653, %v1670
        %v1679 = vmul.f32 %v1654, %v1671
        %v1680 = vmul.f32 %v1655, %v1672
        %1681 = vst [vmem:[#allocation2 + $0x80] sm:$0xff] %v1673
        %1682 = vst [vmem:[#allocation2 + $0x88] sm:$0xff] %v1674
        %1683 = vst [vmem:[#allocation2 + $0x90] sm:$0xff] %v1675
        %1684 = vst [vmem:[#allocation2 + $0x98] sm:$0xff] %v1676
        %1685 = vst [vmem:[#allocation2 + $0xa0] sm:$0xff] %v1677
        %1686 = vst [vmem:[#allocation2 + $0xa8] sm:$0xff] %v1678
        %1687 = vst [vmem:[#allocation2 + $0xb0] sm:$0xff] %v1679
        %1688 = vst [vmem:[#allocation2 + $0xb8] sm:$0xff] %v1680
        %1689 = vrot.lane.b32.xlu0 %v1509, 1
        %v1690 = vpop.permute.xlu0 %1689
        %1692 = vrot.lane.b32.xlu0 %v1502, 1
        %v1693 = vpop.permute.xlu0 %1692
        %1694 = vrot.lane.b32.xlu0 %v1503, 1
        %v1695 = vpop.permute.xlu0 %1694
        %1696 = vrot.lane.b32.xlu0 %v1504, 1
        %v1697 = vpop.permute.xlu0 %1696
        %1698 = vrot.lane.b32.xlu0 %v1505, 1
        %v1699 = vpop.permute.xlu0 %1698
        %1700 = vrot.lane.b32.xlu0 %v1506, 1
        %v1701 = vpop.permute.xlu0 %1700
        %1702 = vrot.lane.b32.xlu0 %v1507, 1
        %v1703 = vpop.permute.xlu0 %1702
        %1704 = vrot.lane.b32.xlu0 %v1508, 1
        %v1705 = vpop.permute.xlu0 %1704
        %v1706 = vsel %vm780, %v1693, %v1695
        %v1707 = vsel %vm780, %v1695, %v1697
        %v1708 = vsel %vm780, %v1697, %v1699
        %v1709 = vsel %vm780, %v1699, %v1701
        %v1710 = vsel %vm780, %v1701, %v1703
        %v1711 = vsel %vm780, %v1703, %v1705
        %v1712 = vsel %vm780, %v1705, %v1690
        %v1721 = vsel %vm780, %v1690, %v1693
        %v1722 = vld [vmem:[#allocation5 + $0xc0] sm:$0xff]
        %v1723 = vld [vmem:[#allocation5 + $0xc8] sm:$0xff]
        %v1724 = vld [vmem:[#allocation5 + $0xd0] sm:$0xff]
        %v1725 = vld [vmem:[#allocation5 + $0xd8] sm:$0xff]
        %v1726 = vld [vmem:[#allocation5 + $0xe0] sm:$0xff]
        %v1727 = vld [vmem:[#allocation5 + $0xe8] sm:$0xff]
        %v1728 = vld [vmem:[#allocation5 + $0xf0] sm:$0xff]
        %v1729 = vld [vmem:[#allocation5 + $0xf8] sm:$0xff]
        %v1730 = vmul.f32 %v1721, %v1722
        %v1731 = vmul.f32 %v1706, %v1723
        %v1732 = vmul.f32 %v1707, %v1724
        %v1733 = vmul.f32 %v1708, %v1725
        %v1734 = vmul.f32 %v1709, %v1726
        %v1735 = vmul.f32 %v1710, %v1727
        %v1736 = vmul.f32 %v1711, %v1728
        %v1737 = vmul.f32 %v1712, %v1729
        %1738 = vst [vmem:[#allocation2 + $0xc0] sm:$0xff] %v1730
        %1739 = vst [vmem:[#allocation2 + $0xc8] sm:$0xff] %v1731
        %1740 = vst [vmem:[#allocation2 + $0xd0] sm:$0xff] %v1732
        %1741 = vst [vmem:[#allocation2 + $0xd8] sm:$0xff] %v1733
        %1742 = vst [vmem:[#allocation2 + $0xe0] sm:$0xff] %v1734
        %1743 = vst [vmem:[#allocation2 + $0xe8] sm:$0xff] %v1735
        %1744 = vst [vmem:[#allocation2 + $0xf0] sm:$0xff] %v1736
        %1745 = vst [vmem:[#allocation2 + $0xf8] sm:$0xff] %v1737
        %v1746 = vld [vmem:[#allocation5 + $0x100] sm:$0xff]
        %v1747 = vld [vmem:[#allocation5 + $0x108] sm:$0xff]
        %v1748 = vld [vmem:[#allocation5 + $0x110] sm:$0xff]
        %v1749 = vld [vmem:[#allocation5 + $0x118] sm:$0xff]
        %v1750 = vld [vmem:[#allocation5 + $0x120] sm:$0xff]
        %v1751 = vld [vmem:[#allocation5 + $0x128] sm:$0xff]
        %v1752 = vld [vmem:[#allocation5 + $0x130] sm:$0xff]
        %v1753 = vld [vmem:[#allocation5 + $0x138] sm:$0xff]
        %v1754 = vmul.f32 %v1502, %v1746
        %v1755 = vmul.f32 %v1503, %v1747
        %v1756 = vmul.f32 %v1504, %v1748
        %v1757 = vmul.f32 %v1505, %v1749
        %v1758 = vmul.f32 %v1506, %v1750
        %v1759 = vmul.f32 %v1507, %v1751
        %v1760 = vmul.f32 %v1508, %v1752
        %v1761 = vmul.f32 %v1509, %v1753
        %1762 = vst [vmem:[#allocation2 + $0x100] sm:$0xff] %v1754
        %1763 = vst [vmem:[#allocation2 + $0x108] sm:$0xff] %v1755
        %1764 = vst [vmem:[#allocation2 + $0x110] sm:$0xff] %v1756
        %1765 = vst [vmem:[#allocation2 + $0x118] sm:$0xff] %v1757
        %1766 = vst [vmem:[#allocation2 + $0x120] sm:$0xff] %v1758
        %1767 = vst [vmem:[#allocation2 + $0x128] sm:$0xff] %v1759
        %1768 = vst [vmem:[#allocation2 + $0x130] sm:$0xff] %v1760
        %1769 = vst [vmem:[#allocation2 + $0x138] sm:$0xff] %v1761
        %1770 = vrot.lane.b32.xlu0 %v1502, 127
        %v1771 = vpop.permute.xlu0 %1770
        %1772 = vrot.lane.b32.xlu0 %v1503, 127
        %v1773 = vpop.permute.xlu0 %1772
        %1774 = vrot.lane.b32.xlu0 %v1504, 127
        %v1775 = vpop.permute.xlu0 %1774
        %1776 = vrot.lane.b32.xlu0 %v1505, 127
        %v1777 = vpop.permute.xlu0 %1776
        %1778 = vrot.lane.b32.xlu0 %v1506, 127
        %v1779 = vpop.permute.xlu0 %1778
        %1780 = vrot.lane.b32.xlu0 %v1507, 127
        %v1781 = vpop.permute.xlu0 %1780
        %1782 = vrot.lane.b32.xlu0 %v1508, 127
        %v1783 = vpop.permute.xlu0 %1782
        %1784 = vrot.lane.b32.xlu0 %v1509, 127
        %v1785 = vpop.permute.xlu0 %1784
        %v1786 = vsel %vm847, %v1771, %v1773
        %v1787 = vsel %vm847, %v1773, %v1775
        %v1788 = vsel %vm847, %v1775, %v1777
        %v1789 = vsel %vm847, %v1777, %v1779
        %v1790 = vsel %vm847, %v1779, %v1781
        %v1791 = vsel %vm847, %v1781, %v1783
        %v1792 = vsel %vm847, %v1783, %v1785
        %v1802 = vsel %vm847, %v1785, %v1771
        %v1803 = vld [vmem:[#allocation5 + $0x140] sm:$0xff]
        %v1804 = vld [vmem:[#allocation5 + $0x148] sm:$0xff]
        %v1805 = vld [vmem:[#allocation5 + $0x150] sm:$0xff]
        %v1806 = vld [vmem:[#allocation5 + $0x158] sm:$0xff]
        %v1807 = vld [vmem:[#allocation5 + $0x160] sm:$0xff]
        %v1808 = vld [vmem:[#allocation5 + $0x168] sm:$0xff]
        %v1809 = vld [vmem:[#allocation5 + $0x170] sm:$0xff]
        %v1810 = vld [vmem:[#allocation5 + $0x178] sm:$0xff]
        %v1811 = vmul.f32 %v1786, %v1803
        %v1812 = vmul.f32 %v1787, %v1804
        %v1813 = vmul.f32 %v1788, %v1805
        %v1814 = vmul.f32 %v1789, %v1806
        %v1815 = vmul.f32 %v1790, %v1807
        %v1816 = vmul.f32 %v1791, %v1808
        %v1817 = vmul.f32 %v1792, %v1809
        %v1818 = vmul.f32 %v1802, %v1810
        %1819 = vst [vmem:[#allocation2 + $0x140] sm:$0xff] %v1811
        %1820 = vst [vmem:[#allocation2 + $0x148] sm:$0xff] %v1812
        %1821 = vst [vmem:[#allocation2 + $0x150] sm:$0xff] %v1813
        %1822 = vst [vmem:[#allocation2 + $0x158] sm:$0xff] %v1814
        %1823 = vst [vmem:[#allocation2 + $0x160] sm:$0xff] %v1815
        %1824 = vst [vmem:[#allocation2 + $0x168] sm:$0xff] %v1816
        %1825 = vst [vmem:[#allocation2 + $0x170] sm:$0xff] %v1817
        %1826 = vst [vmem:[#allocation2 + $0x178] sm:$0xff] %v1818
        %1827 = vrot.lane.b32.xlu0 %v1502, 113
        %v1828 = vpop.permute.xlu0 %1827
        %1829 = vrot.lane.b32.xlu0 %v1503, 113
        %v1830 = vpop.permute.xlu0 %1829
        %1831 = vrot.lane.b32.xlu0 %v1504, 113
        %v1832 = vpop.permute.xlu0 %1831
        %1833 = vrot.lane.b32.xlu0 %v1505, 113
        %v1834 = vpop.permute.xlu0 %1833
        %1835 = vrot.lane.b32.xlu0 %v1506, 113
        %v1836 = vpop.permute.xlu0 %1835
        %1837 = vrot.lane.b32.xlu0 %v1507, 113
        %v1838 = vpop.permute.xlu0 %1837
        %1839 = vrot.lane.b32.xlu0 %v1508, 113
        %v1840 = vpop.permute.xlu0 %1839
        %1841 = vrot.lane.b32.xlu0 %v1509, 113
        %v1842 = vpop.permute.xlu0 %1841
        %v1843 = vsel %vm910, %v1828, %v1830
        %v1844 = vsel %vm910, %v1830, %v1832
        %v1845 = vsel %vm910, %v1832, %v1834
        %v1846 = vsel %vm910, %v1834, %v1836
        %v1847 = vsel %vm910, %v1836, %v1838
        %v1848 = vsel %vm910, %v1838, %v1840
        %v1849 = vsel %vm910, %v1840, %v1842
        %v1859 = vsel %vm910, %v1842, %v1828
        %v1860 = vld [vmem:[#allocation5 + $0x180] sm:$0xff]
        %v1861 = vld [vmem:[#allocation5 + $0x188] sm:$0xff]
        %v1862 = vld [vmem:[#allocation5 + $0x190] sm:$0xff]
        %v1863 = vld [vmem:[#allocation5 + $0x198] sm:$0xff]
        %v1864 = vld [vmem:[#allocation5 + $0x1a0] sm:$0xff]
        %v1865 = vld [vmem:[#allocation5 + $0x1a8] sm:$0xff]
        %v1866 = vld [vmem:[#allocation5 + $0x1b0] sm:$0xff]
        %v1867 = vld [vmem:[#allocation5 + $0x1b8] sm:$0xff]
        %v1868 = vmul.f32 %v1843, %v1860
        %v1869 = vmul.f32 %v1844, %v1861
        %v1870 = vmul.f32 %v1845, %v1862
        %v1871 = vmul.f32 %v1846, %v1863
        %v1872 = vmul.f32 %v1847, %v1864
        %v1873 = vmul.f32 %v1848, %v1865
        %v1874 = vmul.f32 %v1849, %v1866
        %v1875 = vmul.f32 %v1859, %v1867
        %1876 = vst [vmem:[#allocation2 + $0x180] sm:$0xff] %v1868
        %1877 = vst [vmem:[#allocation2 + $0x188] sm:$0xff] %v1869
        %1878 = vst [vmem:[#allocation2 + $0x190] sm:$0xff] %v1870
        %1879 = vst [vmem:[#allocation2 + $0x198] sm:$0xff] %v1871
        %1880 = vst [vmem:[#allocation2 + $0x1a0] sm:$0xff] %v1872
        %1881 = vst [vmem:[#allocation2 + $0x1a8] sm:$0xff] %v1873
        %1882 = vst [vmem:[#allocation2 + $0x1b0] sm:$0xff] %v1874
        %1883 = vst [vmem:[#allocation2 + $0x1b8] sm:$0xff] %v1875
        %1884 = vrot.lane.b32.xlu0 %v1502, 112
        %v1885 = vpop.permute.xlu0 %1884
        %1886 = vrot.lane.b32.xlu0 %v1503, 112
        %v1887 = vpop.permute.xlu0 %1886
        %1888 = vrot.lane.b32.xlu0 %v1504, 112
        %v1889 = vpop.permute.xlu0 %1888
        %1890 = vrot.lane.b32.xlu0 %v1505, 112
        %v1891 = vpop.permute.xlu0 %1890
        %1892 = vrot.lane.b32.xlu0 %v1506, 112
        %v1893 = vpop.permute.xlu0 %1892
        %1894 = vrot.lane.b32.xlu0 %v1507, 112
        %v1895 = vpop.permute.xlu0 %1894
        %1896 = vrot.lane.b32.xlu0 %v1508, 112
        %v1897 = vpop.permute.xlu0 %1896
        %1898 = vrot.lane.b32.xlu0 %v1509, 112
        %v1899 = vpop.permute.xlu0 %1898
        %v1900 = vsel %vm973, %v1885, %v1887
        %v1901 = vsel %vm973, %v1887, %v1889
        %v1902 = vsel %vm973, %v1889, %v1891
        %v1903 = vsel %vm973, %v1891, %v1893
        %v1904 = vsel %vm973, %v1893, %v1895
        %v1905 = vsel %vm973, %v1895, %v1897
        %v1906 = vsel %vm973, %v1897, %v1899
        %v1916 = vsel %vm973, %v1899, %v1885
        %v1917 = vld [vmem:[#allocation5 + $0x1c0] sm:$0xff]
        %v1918 = vld [vmem:[#allocation5 + $0x1c8] sm:$0xff]
        %v1919 = vld [vmem:[#allocation5 + $0x1d0] sm:$0xff]
        %v1920 = vld [vmem:[#allocation5 + $0x1d8] sm:$0xff]
        %v1921 = vld [vmem:[#allocation5 + $0x1e0] sm:$0xff]
        %v1922 = vld [vmem:[#allocation5 + $0x1e8] sm:$0xff]
        %v1923 = vld [vmem:[#allocation5 + $0x1f0] sm:$0xff]
        %v1924 = vld [vmem:[#allocation5 + $0x1f8] sm:$0xff]
        %v1925 = vmul.f32 %v1900, %v1917
        %v1926 = vmul.f32 %v1901, %v1918
        %v1927 = vmul.f32 %v1902, %v1919
        %v1928 = vmul.f32 %v1903, %v1920
        %v1929 = vmul.f32 %v1904, %v1921
        %v1930 = vmul.f32 %v1905, %v1922
        %v1931 = vmul.f32 %v1906, %v1923
        %v1932 = vmul.f32 %v1916, %v1924
        %1933 = vst [vmem:[#allocation2 + $0x1c0] sm:$0xff] %v1925
        %1934 = vst [vmem:[#allocation2 + $0x1c8] sm:$0xff] %v1926
        %1935 = vst [vmem:[#allocation2 + $0x1d0] sm:$0xff] %v1927
        %1936 = vst [vmem:[#allocation2 + $0x1d8] sm:$0xff] %v1928
        %1937 = vst [vmem:[#allocation2 + $0x1e0] sm:$0xff] %v1929
        %1938 = vst [vmem:[#allocation2 + $0x1e8] sm:$0xff] %v1930
        %1939 = vst [vmem:[#allocation2 + $0x1f0] sm:$0xff] %v1931
        %1940 = vst [vmem:[#allocation2 + $0x1f8] sm:$0xff] %v1932
        %1941 = vrot.lane.b32.xlu0 %v1502, 111
        %v1942 = vpop.permute.xlu0 %1941
        %1943 = vrot.lane.b32.xlu0 %v1503, 111
        %v1944 = vpop.permute.xlu0 %1943
        %1945 = vrot.lane.b32.xlu0 %v1504, 111
        %v1946 = vpop.permute.xlu0 %1945
        %1947 = vrot.lane.b32.xlu0 %v1505, 111
        %v1948 = vpop.permute.xlu0 %1947
        %1949 = vrot.lane.b32.xlu0 %v1506, 111
        %v1950 = vpop.permute.xlu0 %1949
        %1951 = vrot.lane.b32.xlu0 %v1507, 111
        %v1952 = vpop.permute.xlu0 %1951
        %1953 = vrot.lane.b32.xlu0 %v1508, 111
        %v1954 = vpop.permute.xlu0 %1953
        %1955 = vrot.lane.b32.xlu0 %v1509, 111
        %v1956 = vpop.permute.xlu0 %1955
        %v1957 = vsel %vm1036, %v1942, %v1944
        %v1958 = vsel %vm1036, %v1944, %v1946
        %v1959 = vsel %vm1036, %v1946, %v1948
        %v1960 = vsel %vm1036, %v1948, %v1950
        %v1961 = vsel %vm1036, %v1950, %v1952
        %v1962 = vsel %vm1036, %v1952, %v1954
        %v1963 = vsel %vm1036, %v1954, %v1956
        %v1973 = vsel %vm1036, %v1956, %v1942
        %v1974 = vld [vmem:[#allocation5 + $0x200] sm:$0xff]
        %v1975 = vld [vmem:[#allocation5 + $0x208] sm:$0xff]
        %v1976 = vld [vmem:[#allocation5 + $0x210] sm:$0xff]
        %v1977 = vld [vmem:[#allocation5 + $0x218] sm:$0xff]
        %v1978 = vld [vmem:[#allocation5 + $0x220] sm:$0xff]
        %v1979 = vld [vmem:[#allocation5 + $0x228] sm:$0xff]
        %v1980 = vld [vmem:[#allocation5 + $0x230] sm:$0xff]
        %v1981 = vld [vmem:[#allocation5 + $0x238] sm:$0xff]
        %v1982 = vmul.f32 %v1957, %v1974
        %v1983 = vmul.f32 %v1958, %v1975
        %v1984 = vmul.f32 %v1959, %v1976
        %v1985 = vmul.f32 %v1960, %v1977
        %v1986 = vmul.f32 %v1961, %v1978
        %v1987 = vmul.f32 %v1962, %v1979
        %v1988 = vmul.f32 %v1963, %v1980
        %v1989 = vmul.f32 %v1973, %v1981
        %1990 = vst [vmem:[#allocation2 + $0x200] sm:$0xff] %v1982
        %1991 = vst [vmem:[#allocation2 + $0x208] sm:$0xff] %v1983
        %1992 = vst [vmem:[#allocation2 + $0x210] sm:$0xff] %v1984
        %1993 = vst [vmem:[#allocation2 + $0x218] sm:$0xff] %v1985
        %1994 = vst [vmem:[#allocation2 + $0x220] sm:$0xff] %v1986
        %1995 = vst [vmem:[#allocation2 + $0x228] sm:$0xff] %v1987
        %1996 = vst [vmem:[#allocation2 + $0x230] sm:$0xff] %v1988
        %1997 = vst [vmem:[#allocation2 + $0x238] sm:$0xff] %v1989
        %v1998 = vld [vmem:[%s5] sm:$0xff]
        %v1999 = vld [vmem:[#allocation2] sm:$0xff]
        %v2000 = vld [vmem:[#allocation2 + $0x8] sm:$0xff]
        %v2001 = vld [vmem:[#allocation2 + $0x10] sm:$0xff]
        %v2002 = vld [vmem:[#allocation2 + $0x18] sm:$0xff]
        %v2003 = vld [vmem:[#allocation2 + $0x20] sm:$0xff]
        %v2004 = vld [vmem:[#allocation2 + $0x28] sm:$0xff]
        %v2005 = vld [vmem:[#allocation2 + $0x30] sm:$0xff]
        %v2006 = vld [vmem:[#allocation2 + $0x38] sm:$0xff]
        %v2007 = vld [vmem:[#allocation2 + $0x40] sm:$0xff]
        %v2008 = vld [vmem:[#allocation2 + $0x48] sm:$0xff]
        %v2009 = vld [vmem:[#allocation2 + $0x50] sm:$0xff]
        %v2010 = vld [vmem:[#allocation2 + $0x58] sm:$0xff]
        %v2011 = vld [vmem:[#allocation2 + $0x60] sm:$0xff]
        %v2012 = vld [vmem:[#allocation2 + $0x68] sm:$0xff]
        %v2013 = vld [vmem:[#allocation2 + $0x70] sm:$0xff]
        %v2014 = vld [vmem:[#allocation2 + $0x78] sm:$0xff]
        %v2015 = vld [vmem:[#allocation2 + $0x80] sm:$0xff]
        %v2016 = vld [vmem:[#allocation2 + $0x88] sm:$0xff]
        %v2017 = vld [vmem:[#allocation2 + $0x90] sm:$0xff]
        %v2018 = vld [vmem:[#allocation2 + $0x98] sm:$0xff]
        %v2019 = vld [vmem:[#allocation2 + $0xa0] sm:$0xff]
        %v2020 = vld [vmem:[#allocation2 + $0xa8] sm:$0xff]
        %v2021 = vld [vmem:[#allocation2 + $0xb0] sm:$0xff]
        %v2022 = vld [vmem:[#allocation2 + $0xb8] sm:$0xff]
        %v2023 = vld [vmem:[#allocation2 + $0xc0] sm:$0xff]
        %v2024 = vld [vmem:[#allocation2 + $0xc8] sm:$0xff]
        %v2025 = vld [vmem:[#allocation2 + $0xd0] sm:$0xff]
        %v2026 = vld [vmem:[#allocation2 + $0xd8] sm:$0xff]
        %v2027 = vld [vmem:[#allocation2 + $0xe0] sm:$0xff]
        %v2028 = vld [vmem:[#allocation2 + $0xe8] sm:$0xff]
        %v2029 = vld [vmem:[#allocation2 + $0xf0] sm:$0xff]
        %v2030 = vld [vmem:[#allocation2 + $0xf8] sm:$0xff]
        %v2031 = vld [vmem:[#allocation2 + $0x100] sm:$0xff]
        %v2032 = vld [vmem:[#allocation2 + $0x108] sm:$0xff]
        %v2033 = vld [vmem:[#allocation2 + $0x110] sm:$0xff]
        %v2034 = vld [vmem:[#allocation2 + $0x118] sm:$0xff]
        %v2035 = vld [vmem:[#allocation2 + $0x120] sm:$0xff]
        %v2036 = vld [vmem:[#allocation2 + $0x128] sm:$0xff]
        %v2037 = vld [vmem:[#allocation2 + $0x130] sm:$0xff]
        %v2038 = vld [vmem:[#allocation2 + $0x138] sm:$0xff]
        %v2039 = vld [vmem:[#allocation2 + $0x140] sm:$0xff]
        %v2040 = vld [vmem:[#allocation2 + $0x148] sm:$0xff]
        %v2041 = vld [vmem:[#allocation2 + $0x150] sm:$0xff]
        %v2042 = vld [vmem:[#allocation2 + $0x158] sm:$0xff]
        %v2043 = vld [vmem:[#allocation2 + $0x160] sm:$0xff]
        %v2044 = vld [vmem:[#allocation2 + $0x168] sm:$0xff]
        %v2045 = vld [vmem:[#allocation2 + $0x170] sm:$0xff]
        %v2046 = vld [vmem:[#allocation2 + $0x178] sm:$0xff]
        %v2047 = vld [vmem:[#allocation2 + $0x180] sm:$0xff]
        %v2048 = vld [vmem:[#allocation2 + $0x188] sm:$0xff]
        %v2049 = vld [vmem:[#allocation2 + $0x190] sm:$0xff]
        %v2050 = vld [vmem:[#allocation2 + $0x198] sm:$0xff]
        %v2051 = vld [vmem:[#allocation2 + $0x1a0] sm:$0xff]
        %v2052 = vld [vmem:[#allocation2 + $0x1a8] sm:$0xff]
        %v2053 = vld [vmem:[#allocation2 + $0x1b0] sm:$0xff]
        %v2054 = vld [vmem:[#allocation2 + $0x1b8] sm:$0xff]
        %v2055 = vld [vmem:[#allocation2 + $0x1c0] sm:$0xff]
        %v2056 = vld [vmem:[#allocation2 + $0x1c8] sm:$0xff]
        %v2057 = vld [vmem:[#allocation2 + $0x1d0] sm:$0xff]
        %v2058 = vld [vmem:[#allocation2 + $0x1d8] sm:$0xff]
        %v2059 = vld [vmem:[#allocation2 + $0x1e0] sm:$0xff]
        %v2060 = vld [vmem:[#allocation2 + $0x1e8] sm:$0xff]
        %v2061 = vld [vmem:[#allocation2 + $0x1f0] sm:$0xff]
        %v2062 = vld [vmem:[#allocation2 + $0x1f8] sm:$0xff]
        %v2063 = vld [vmem:[#allocation2 + $0x200] sm:$0xff]
        %v2064 = vld [vmem:[#allocation2 + $0x208] sm:$0xff]
        %v2065 = vld [vmem:[#allocation2 + $0x210] sm:$0xff]
        %v2066 = vld [vmem:[#allocation2 + $0x218] sm:$0xff]
        %v2067 = vld [vmem:[#allocation2 + $0x220] sm:$0xff]
        %v2068 = vld [vmem:[#allocation2 + $0x228] sm:$0xff]
        %v2069 = vld [vmem:[#allocation2 + $0x230] sm:$0xff]
        %v2070 = vld [vmem:[#allocation2 + $0x238] sm:$0xff]
        %v2071 = vld [vmem:[%s6] sm:$0xff]
        %2073 = vset.pattern.permute.xlu0 0
        %2074 = vperm.xlu0 %2073, %v2071
        %v2075 = vpop.permute.xlu0 %2074
        %vm2077 = vcmask 588800
        %v2079 = vsel %vm2077, %v1998, 0
        %2081 = vmatpush.msra.mxu0 0.0
        %2082 = vmatpush.msra.mxu0 0.0
        %2083 = vmatpush.msra.mxu0 0.0
        %2084 = vmatpush.msra.mxu0 0.0
        %2085 = vmatpush.msra.mxu0 0.0
        %2086 = vmatpush.msra.mxu0 0.0
        %2087 = vmatpush.msra.mxu0 0.0
        %2088 = vmatpush.msra.mxu0 %v2063
        %2089 = vmatpush.msra.mxu0 %v2055
        %2090 = vmatpush.msra.mxu0 %v2047
        %2091 = vmatpush.msra.mxu0 %v2039
        %2092 = vmatpush.msra.mxu0 %v2031
        %2093 = vmatpush.msra.mxu0 %v2023
        %2094 = vmatpush.msra.mxu0 %v2015
        %2095 = vmatpush.msra.mxu0 %v2007
        %2096 = vmatpush.msra.mxu0 %v1999
        %2097 = vmatmul.f32.gmra.mxu0 %v2079
        %v2098 = vpop.f32.mrf.mxu0
        %v2099 = vadd.f32 %v2075, %v2098
        %2100 = vdwg.mxu0
        %2101 = vmatpush.msra.mxu0 0.0
        %2102 = vmatpush.msra.mxu0 0.0
        %2103 = vmatpush.msra.mxu0 0.0
        %2104 = vmatpush.msra.mxu0 0.0
        %2105 = vmatpush.msra.mxu0 0.0
        %2106 = vmatpush.msra.mxu0 0.0
        %2107 = vmatpush.msra.mxu0 0.0
        %2108 = vmatpush.msra.mxu0 %v2064
        %2109 = vmatpush.msra.mxu0 %v2056
        %2110 = vmatpush.msra.mxu0 %v2048
        %2111 = vmatpush.msra.mxu0 %v2040
        %2112 = vmatpush.msra.mxu0 %v2032
        %2113 = vmatpush.msra.mxu0 %v2024
        %2114 = vmatpush.msra.mxu0 %v2016
        %2115 = vmatpush.msra.mxu0 %v2008
        %2116 = vmatpush.msra.mxu0 %v2000
        %2117 = vmatmul.f32.gmra.mxu0 %v2079
        %v2118 = vpop.f32.mrf.mxu0
        %v2119 = vadd.f32 %v2075, %v2118
        %2120 = vdwg.mxu0
        %2121 = vmatpush.msra.mxu0 0.0
        %2122 = vmatpush.msra.mxu0 0.0
        %2123 = vmatpush.msra.mxu0 0.0
        %2124 = vmatpush.msra.mxu0 0.0
        %2125 = vmatpush.msra.mxu0 0.0
        %2126 = vmatpush.msra.mxu0 0.0
        %2127 = vmatpush.msra.mxu0 0.0
        %2128 = vmatpush.msra.mxu0 %v2065
        %2129 = vmatpush.msra.mxu0 %v2057
        %2130 = vmatpush.msra.mxu0 %v2049
        %2131 = vmatpush.msra.mxu0 %v2041
        %2132 = vmatpush.msra.mxu0 %v2033
        %2133 = vmatpush.msra.mxu0 %v2025
        %2134 = vmatpush.msra.mxu0 %v2017
        %2135 = vmatpush.msra.mxu0 %v2009
        %2136 = vmatpush.msra.mxu0 %v2001
        %2137 = vmatmul.f32.gmra.mxu0 %v2079
        %v2138 = vpop.f32.mrf.mxu0
        %v2139 = vadd.f32 %v2075, %v2138
        %2140 = vdwg.mxu0
        %2141 = vmatpush.msra.mxu0 0.0
        %2142 = vmatpush.msra.mxu0 0.0
        %2143 = vmatpush.msra.mxu0 0.0
        %2144 = vmatpush.msra.mxu0 0.0
        %2145 = vmatpush.msra.mxu0 0.0
        %2146 = vmatpush.msra.mxu0 0.0
        %2147 = vmatpush.msra.mxu0 0.0
        %2148 = vmatpush.msra.mxu0 %v2066
        %2149 = vmatpush.msra.mxu0 %v2058
        %2150 = vmatpush.msra.mxu0 %v2050
        %2151 = vmatpush.msra.mxu0 %v2042
        %2152 = vmatpush.msra.mxu0 %v2034
        %2153 = vmatpush.msra.mxu0 %v2026
        %2154 = vmatpush.msra.mxu0 %v2018
        %2155 = vmatpush.msra.mxu0 %v2010
        %2156 = vmatpush.msra.mxu0 %v2002
        %2157 = vmatmul.f32.gmra.mxu0 %v2079
        %v2158 = vpop.f32.mrf.mxu0
        %v2159 = vadd.f32 %v2075, %v2158
        %2160 = vdwg.mxu0
        %2161 = vmatpush.msra.mxu0 0.0
        %2162 = vmatpush.msra.mxu0 0.0
        %2163 = vmatpush.msra.mxu0 0.0
        %2164 = vmatpush.msra.mxu0 0.0
        %2165 = vmatpush.msra.mxu0 0.0
        %2166 = vmatpush.msra.mxu0 0.0
        %2167 = vmatpush.msra.mxu0 0.0
        %2168 = vmatpush.msra.mxu0 %v2067
        %2169 = vmatpush.msra.mxu0 %v2059
        %2170 = vmatpush.msra.mxu0 %v2051
        %2171 = vmatpush.msra.mxu0 %v2043
        %2172 = vmatpush.msra.mxu0 %v2035
        %2173 = vmatpush.msra.mxu0 %v2027
        %2174 = vmatpush.msra.mxu0 %v2019
        %2175 = vmatpush.msra.mxu0 %v2011
        %2176 = vmatpush.msra.mxu0 %v2003
        %2177 = vmatmul.f32.gmra.mxu0 %v2079
        %v2178 = vpop.f32.mrf.mxu0
        %v2179 = vadd.f32 %v2075, %v2178
        %2180 = vdwg.mxu0
        %2181 = vmatpush.msra.mxu0 0.0
        %2182 = vmatpush.msra.mxu0 0.0
        %2183 = vmatpush.msra.mxu0 0.0
        %2184 = vmatpush.msra.mxu0 0.0
        %2185 = vmatpush.msra.mxu0 0.0
        %2186 = vmatpush.msra.mxu0 0.0
        %2187 = vmatpush.msra.mxu0 0.0
        %2188 = vmatpush.msra.mxu0 %v2068
        %2189 = vmatpush.msra.mxu0 %v2060
        %2190 = vmatpush.msra.mxu0 %v2052
        %2191 = vmatpush.msra.mxu0 %v2044
        %2192 = vmatpush.msra.mxu0 %v2036
        %2193 = vmatpush.msra.mxu0 %v2028
        %2194 = vmatpush.msra.mxu0 %v2020
        %2195 = vmatpush.msra.mxu0 %v2012
        %2196 = vmatpush.msra.mxu0 %v2004
        %2197 = vmatmul.f32.gmra.mxu0 %v2079
        %v2198 = vpop.f32.mrf.mxu0
        %v2199 = vadd.f32 %v2075, %v2198
        %2200 = vdwg.mxu0
        %2201 = vmatpush.msra.mxu0 0.0
        %2202 = vmatpush.msra.mxu0 0.0
        %2203 = vmatpush.msra.mxu0 0.0
        %2204 = vmatpush.msra.mxu0 0.0
        %2205 = vmatpush.msra.mxu0 0.0
        %2206 = vmatpush.msra.mxu0 0.0
        %2207 = vmatpush.msra.mxu0 0.0
        %2208 = vmatpush.msra.mxu0 %v2069
        %2209 = vmatpush.msra.mxu0 %v2061
        %2210 = vmatpush.msra.mxu0 %v2053
        %2211 = vmatpush.msra.mxu0 %v2045
        %2212 = vmatpush.msra.mxu0 %v2037
        %2213 = vmatpush.msra.mxu0 %v2029
        %2214 = vmatpush.msra.mxu0 %v2021
        %2215 = vmatpush.msra.mxu0 %v2013
        %2216 = vmatpush.msra.mxu0 %v2005
        %2217 = vmatmul.f32.gmra.mxu0 %v2079
        %v2218 = vpop.f32.mrf.mxu0
        %v2219 = vadd.f32 %v2075, %v2218
        %2220 = vdwg.mxu0
        %2221 = vmatpush.msra.mxu0 0.0
        %2222 = vmatpush.msra.mxu0 0.0
        %2223 = vmatpush.msra.mxu0 0.0
        %2224 = vmatpush.msra.mxu0 0.0
        %2225 = vmatpush.msra.mxu0 0.0
        %2226 = vmatpush.msra.mxu0 0.0
        %2227 = vmatpush.msra.mxu0 0.0
        %2228 = vmatpush.msra.mxu0 %v2070
        %2229 = vmatpush.msra.mxu0 %v2062
        %2230 = vmatpush.msra.mxu0 %v2054
        %2231 = vmatpush.msra.mxu0 %v2046
        %2232 = vmatpush.msra.mxu0 %v2038
        %2233 = vmatpush.msra.mxu0 %v2030
        %2234 = vmatpush.msra.mxu0 %v2022
        %2235 = vmatpush.msra.mxu0 %v2014
        %2236 = vmatpush.msra.mxu0 %v2006
        %2237 = vmatmul.f32.gmra.mxu0 %v2079
        %v2238 = vpop.f32.mrf.mxu0
        %v2239 = vadd.f32 %v2075, %v2238
        %2240 = vdwg.mxu0
        %v2241 = vmax.f32 %v2099, 0.0
        %v2242 = vmax.f32 %v2119, 0.0
        %v2243 = vmax.f32 %v2139, 0.0
        %v2244 = vmax.f32 %v2159, 0.0
        %v2245 = vmax.f32 %v2179, 0.0
        %v2246 = vmax.f32 %v2199, 0.0
        %v2247 = vmax.f32 %v2219, 0.0
        %v2248 = vmax.f32 %v2239, 0.0
        %2250 = vrot.lane.b32.xlu0 %v2248, 17
        %v2251 = vpop.permute.xlu0 %2250
        %2260 = vrot.lane.b32.xlu0 %v2241, 17
        %v2261 = vpop.permute.xlu0 %2260
        %2262 = vrot.lane.b32.xlu0 %v2242, 17
        %v2263 = vpop.permute.xlu0 %2262
        %2264 = vrot.lane.b32.xlu0 %v2243, 17
        %v2265 = vpop.permute.xlu0 %2264
        %2266 = vrot.lane.b32.xlu0 %v2244, 17
        %v2267 = vpop.permute.xlu0 %2266
        %2268 = vrot.lane.b32.xlu0 %v2245, 17
        %v2269 = vpop.permute.xlu0 %2268
        %2270 = vrot.lane.b32.xlu0 %v2246, 17
        %v2271 = vpop.permute.xlu0 %2270
        %2272 = vrot.lane.b32.xlu0 %v2247, 17
        %v2273 = vpop.permute.xlu0 %2272
        %v2274 = vsel %vm592, %v2261, %v2263
        %v2275 = vsel %vm592, %v2263, %v2265
        %v2276 = vsel %vm592, %v2265, %v2267
        %v2277 = vsel %vm592, %v2267, %v2269
        %v2278 = vsel %vm592, %v2269, %v2271
        %v2279 = vsel %vm592, %v2271, %v2273
        %v2280 = vsel %vm592, %v2273, %v2251
        %v2289 = vsel %vm592, %v2251, %v2261
        %v2290 = vld [vmem:[#allocation5] sm:$0xff]
        %v2291 = vld [vmem:[#allocation5 + $0x8] sm:$0xff]
        %v2292 = vld [vmem:[#allocation5 + $0x10] sm:$0xff]
        %v2293 = vld [vmem:[#allocation5 + $0x18] sm:$0xff]
        %v2294 = vld [vmem:[#allocation5 + $0x20] sm:$0xff]
        %v2295 = vld [vmem:[#allocation5 + $0x28] sm:$0xff]
        %v2296 = vld [vmem:[#allocation5 + $0x30] sm:$0xff]
        %v2297 = vld [vmem:[#allocation5 + $0x38] sm:$0xff]
        %v2298 = vmul.f32 %v2289, %v2290
        %v2299 = vmul.f32 %v2274, %v2291
        %v2300 = vmul.f32 %v2275, %v2292
        %v2301 = vmul.f32 %v2276, %v2293
        %v2302 = vmul.f32 %v2277, %v2294
        %v2303 = vmul.f32 %v2278, %v2295
        %v2304 = vmul.f32 %v2279, %v2296
        %v2305 = vmul.f32 %v2280, %v2297
        %2306 = vst [vmem:[#allocation2] sm:$0xff] %v2298
        %2307 = vst [vmem:[#allocation2 + $0x8] sm:$0xff] %v2299
        %2308 = vst [vmem:[#allocation2 + $0x10] sm:$0xff] %v2300
        %2309 = vst [vmem:[#allocation2 + $0x18] sm:$0xff] %v2301
        %2310 = vst [vmem:[#allocation2 + $0x20] sm:$0xff] %v2302
        %2311 = vst [vmem:[#allocation2 + $0x28] sm:$0xff] %v2303
        %2312 = vst [vmem:[#allocation2 + $0x30] sm:$0xff] %v2304
        %2313 = vst [vmem:[#allocation2 + $0x38] sm:$0xff] %v2305
        %2314 = vrot.lane.b32.xlu0 %v2248, 16
        %v2315 = vpop.permute.xlu0 %2314
        %2317 = vrot.lane.b32.xlu0 %v2241, 16
        %v2318 = vpop.permute.xlu0 %2317
        %2319 = vrot.lane.b32.xlu0 %v2242, 16
        %v2320 = vpop.permute.xlu0 %2319
        %2321 = vrot.lane.b32.xlu0 %v2243, 16
        %v2322 = vpop.permute.xlu0 %2321
        %2323 = vrot.lane.b32.xlu0 %v2244, 16
        %v2324 = vpop.permute.xlu0 %2323
        %2325 = vrot.lane.b32.xlu0 %v2245, 16
        %v2326 = vpop.permute.xlu0 %2325
        %2327 = vrot.lane.b32.xlu0 %v2246, 16
        %v2328 = vpop.permute.xlu0 %2327
        %2329 = vrot.lane.b32.xlu0 %v2247, 16
        %v2330 = vpop.permute.xlu0 %2329
        %v2331 = vsel %vm654, %v2318, %v2320
        %v2332 = vsel %vm654, %v2320, %v2322
        %v2333 = vsel %vm654, %v2322, %v2324
        %v2334 = vsel %vm654, %v2324, %v2326
        %v2335 = vsel %vm654, %v2326, %v2328
        %v2336 = vsel %vm654, %v2328, %v2330
        %v2337 = vsel %vm654, %v2330, %v2315
        %v2346 = vsel %vm654, %v2315, %v2318
        %v2347 = vld [vmem:[#allocation5 + $0x40] sm:$0xff]
        %v2348 = vld [vmem:[#allocation5 + $0x48] sm:$0xff]
        %v2349 = vld [vmem:[#allocation5 + $0x50] sm:$0xff]
        %v2350 = vld [vmem:[#allocation5 + $0x58] sm:$0xff]
        %v2351 = vld [vmem:[#allocation5 + $0x60] sm:$0xff]
        %v2352 = vld [vmem:[#allocation5 + $0x68] sm:$0xff]
        %v2353 = vld [vmem:[#allocation5 + $0x70] sm:$0xff]
        %v2354 = vld [vmem:[#allocation5 + $0x78] sm:$0xff]
        %v2355 = vmul.f32 %v2346, %v2347
        %v2356 = vmul.f32 %v2331, %v2348
        %v2357 = vmul.f32 %v2332, %v2349
        %v2358 = vmul.f32 %v2333, %v2350
        %v2359 = vmul.f32 %v2334, %v2351
        %v2360 = vmul.f32 %v2335, %v2352
        %v2361 = vmul.f32 %v2336, %v2353
        %v2362 = vmul.f32 %v2337, %v2354
        %2363 = vst [vmem:[#allocation2 + $0x40] sm:$0xff] %v2355
        %2364 = vst [vmem:[#allocation2 + $0x48] sm:$0xff] %v2356
        %2365 = vst [vmem:[#allocation2 + $0x50] sm:$0xff] %v2357
        %2366 = vst [vmem:[#allocation2 + $0x58] sm:$0xff] %v2358
        %2367 = vst [vmem:[#allocation2 + $0x60] sm:$0xff] %v2359
        %2368 = vst [vmem:[#allocation2 + $0x68] sm:$0xff] %v2360
        %2369 = vst [vmem:[#allocation2 + $0x70] sm:$0xff] %v2361
        %2370 = vst [vmem:[#allocation2 + $0x78] sm:$0xff] %v2362
        %2371 = vrot.lane.b32.xlu0 %v2248, 15
        %v2372 = vpop.permute.xlu0 %2371
        %2374 = vrot.lane.b32.xlu0 %v2241, 15
        %v2375 = vpop.permute.xlu0 %2374
        %2376 = vrot.lane.b32.xlu0 %v2242, 15
        %v2377 = vpop.permute.xlu0 %2376
        %2378 = vrot.lane.b32.xlu0 %v2243, 15
        %v2379 = vpop.permute.xlu0 %2378
        %2380 = vrot.lane.b32.xlu0 %v2244, 15
        %v2381 = vpop.permute.xlu0 %2380
        %2382 = vrot.lane.b32.xlu0 %v2245, 15
        %v2383 = vpop.permute.xlu0 %2382
        %2384 = vrot.lane.b32.xlu0 %v2246, 15
        %v2385 = vpop.permute.xlu0 %2384
        %2386 = vrot.lane.b32.xlu0 %v2247, 15
        %v2387 = vpop.permute.xlu0 %2386
        %v2388 = vsel %vm717, %v2375, %v2377
        %v2389 = vsel %vm717, %v2377, %v2379
        %v2390 = vsel %vm717, %v2379, %v2381
        %v2391 = vsel %vm717, %v2381, %v2383
        %v2392 = vsel %vm717, %v2383, %v2385
        %v2393 = vsel %vm717, %v2385, %v2387
        %v2394 = vsel %vm717, %v2387, %v2372
        %v2403 = vsel %vm717, %v2372, %v2375
        %v2404 = vld [vmem:[#allocation5 + $0x80] sm:$0xff]
        %v2405 = vld [vmem:[#allocation5 + $0x88] sm:$0xff]
        %v2406 = vld [vmem:[#allocation5 + $0x90] sm:$0xff]
        %v2407 = vld [vmem:[#allocation5 + $0x98] sm:$0xff]
        %v2408 = vld [vmem:[#allocation5 + $0xa0] sm:$0xff]
        %v2409 = vld [vmem:[#allocation5 + $0xa8] sm:$0xff]
        %v2410 = vld [vmem:[#allocation5 + $0xb0] sm:$0xff]
        %v2411 = vld [vmem:[#allocation5 + $0xb8] sm:$0xff]
        %v2412 = vmul.f32 %v2403, %v2404
        %v2413 = vmul.f32 %v2388, %v2405
        %v2414 = vmul.f32 %v2389, %v2406
        %v2415 = vmul.f32 %v2390, %v2407
        %v2416 = vmul.f32 %v2391, %v2408
        %v2417 = vmul.f32 %v2392, %v2409
        %v2418 = vmul.f32 %v2393, %v2410
        %v2419 = vmul.f32 %v2394, %v2411
        %2420 = vst [vmem:[#allocation2 + $0x80] sm:$0xff] %v2412
        %2421 = vst [vmem:[#allocation2 + $0x88] sm:$0xff] %v2413
        %2422 = vst [vmem:[#allocation2 + $0x90] sm:$0xff] %v2414
        %2423 = vst [vmem:[#allocation2 + $0x98] sm:$0xff] %v2415
        %2424 = vst [vmem:[#allocation2 + $0xa0] sm:$0xff] %v2416
        %2425 = vst [vmem:[#allocation2 + $0xa8] sm:$0xff] %v2417
        %2426 = vst [vmem:[#allocation2 + $0xb0] sm:$0xff] %v2418
        %2427 = vst [vmem:[#allocation2 + $0xb8] sm:$0xff] %v2419
        %2428 = vrot.lane.b32.xlu0 %v2248, 1
        %v2429 = vpop.permute.xlu0 %2428
        %2431 = vrot.lane.b32.xlu0 %v2241, 1
        %v2432 = vpop.permute.xlu0 %2431
        %2433 = vrot.lane.b32.xlu0 %v2242, 1
        %v2434 = vpop.permute.xlu0 %2433
        %2435 = vrot.lane.b32.xlu0 %v2243, 1
        %v2436 = vpop.permute.xlu0 %2435
        %2437 = vrot.lane.b32.xlu0 %v2244, 1
        %v2438 = vpop.permute.xlu0 %2437
        %2439 = vrot.lane.b32.xlu0 %v2245, 1
        %v2440 = vpop.permute.xlu0 %2439
        %2441 = vrot.lane.b32.xlu0 %v2246, 1
        %v2442 = vpop.permute.xlu0 %2441
        %2443 = vrot.lane.b32.xlu0 %v2247, 1
        %v2444 = vpop.permute.xlu0 %2443
        %v2445 = vsel %vm780, %v2432, %v2434
        %v2446 = vsel %vm780, %v2434, %v2436
        %v2447 = vsel %vm780, %v2436, %v2438
        %v2448 = vsel %vm780, %v2438, %v2440
        %v2449 = vsel %vm780, %v2440, %v2442
        %v2450 = vsel %vm780, %v2442, %v2444
        %v2451 = vsel %vm780, %v2444, %v2429
        %v2460 = vsel %vm780, %v2429, %v2432
        %v2461 = vld [vmem:[#allocation5 + $0xc0] sm:$0xff]
        %v2462 = vld [vmem:[#allocation5 + $0xc8] sm:$0xff]
        %v2463 = vld [vmem:[#allocation5 + $0xd0] sm:$0xff]
        %v2464 = vld [vmem:[#allocation5 + $0xd8] sm:$0xff]
        %v2465 = vld [vmem:[#allocation5 + $0xe0] sm:$0xff]
        %v2466 = vld [vmem:[#allocation5 + $0xe8] sm:$0xff]
        %v2467 = vld [vmem:[#allocation5 + $0xf0] sm:$0xff]
        %v2468 = vld [vmem:[#allocation5 + $0xf8] sm:$0xff]
        %v2469 = vmul.f32 %v2460, %v2461
        %v2470 = vmul.f32 %v2445, %v2462
        %v2471 = vmul.f32 %v2446, %v2463
        %v2472 = vmul.f32 %v2447, %v2464
        %v2473 = vmul.f32 %v2448, %v2465
        %v2474 = vmul.f32 %v2449, %v2466
        %v2475 = vmul.f32 %v2450, %v2467
        %v2476 = vmul.f32 %v2451, %v2468
        %2477 = vst [vmem:[#allocation2 + $0xc0] sm:$0xff] %v2469
        %2478 = vst [vmem:[#allocation2 + $0xc8] sm:$0xff] %v2470
        %2479 = vst [vmem:[#allocation2 + $0xd0] sm:$0xff] %v2471
        %2480 = vst [vmem:[#allocation2 + $0xd8] sm:$0xff] %v2472
        %2481 = vst [vmem:[#allocation2 + $0xe0] sm:$0xff] %v2473
        %2482 = vst [vmem:[#allocation2 + $0xe8] sm:$0xff] %v2474
        %2483 = vst [vmem:[#allocation2 + $0xf0] sm:$0xff] %v2475
        %2484 = vst [vmem:[#allocation2 + $0xf8] sm:$0xff] %v2476
        %v2485 = vld [vmem:[#allocation5 + $0x100] sm:$0xff]
        %v2486 = vld [vmem:[#allocation5 + $0x108] sm:$0xff]
        %v2487 = vld [vmem:[#allocation5 + $0x110] sm:$0xff]
        %v2488 = vld [vmem:[#allocation5 + $0x118] sm:$0xff]
        %v2489 = vld [vmem:[#allocation5 + $0x120] sm:$0xff]
        %v2490 = vld [vmem:[#allocation5 + $0x128] sm:$0xff]
        %v2491 = vld [vmem:[#allocation5 + $0x130] sm:$0xff]
        %v2492 = vld [vmem:[#allocation5 + $0x138] sm:$0xff]
        %v2493 = vmul.f32 %v2241, %v2485
        %v2494 = vmul.f32 %v2242, %v2486
        %v2495 = vmul.f32 %v2243, %v2487
        %v2496 = vmul.f32 %v2244, %v2488
        %v2497 = vmul.f32 %v2245, %v2489
        %v2498 = vmul.f32 %v2246, %v2490
        %v2499 = vmul.f32 %v2247, %v2491
        %v2500 = vmul.f32 %v2248, %v2492
        %2501 = vst [vmem:[#allocation2 + $0x100] sm:$0xff] %v2493
        %2502 = vst [vmem:[#allocation2 + $0x108] sm:$0xff] %v2494
        %2503 = vst [vmem:[#allocation2 + $0x110] sm:$0xff] %v2495
        %2504 = vst [vmem:[#allocation2 + $0x118] sm:$0xff] %v2496
        %2505 = vst [vmem:[#allocation2 + $0x120] sm:$0xff] %v2497
        %2506 = vst [vmem:[#allocation2 + $0x128] sm:$0xff] %v2498
        %2507 = vst [vmem:[#allocation2 + $0x130] sm:$0xff] %v2499
        %2508 = vst [vmem:[#allocation2 + $0x138] sm:$0xff] %v2500
        %2509 = vrot.lane.b32.xlu0 %v2241, 127
        %v2510 = vpop.permute.xlu0 %2509
        %2511 = vrot.lane.b32.xlu0 %v2242, 127
        %v2512 = vpop.permute.xlu0 %2511
        %2513 = vrot.lane.b32.xlu0 %v2243, 127
        %v2514 = vpop.permute.xlu0 %2513
        %2515 = vrot.lane.b32.xlu0 %v2244, 127
        %v2516 = vpop.permute.xlu0 %2515
        %2517 = vrot.lane.b32.xlu0 %v2245, 127
        %v2518 = vpop.permute.xlu0 %2517
        %2519 = vrot.lane.b32.xlu0 %v2246, 127
        %v2520 = vpop.permute.xlu0 %2519
        %2521 = vrot.lane.b32.xlu0 %v2247, 127
        %v2522 = vpop.permute.xlu0 %2521
        %2523 = vrot.lane.b32.xlu0 %v2248, 127
        %v2524 = vpop.permute.xlu0 %2523
        %v2525 = vsel %vm847, %v2510, %v2512
        %v2526 = vsel %vm847, %v2512, %v2514
        %v2527 = vsel %vm847, %v2514, %v2516
        %v2528 = vsel %vm847, %v2516, %v2518
        %v2529 = vsel %vm847, %v2518, %v2520
        %v2530 = vsel %vm847, %v2520, %v2522
        %v2531 = vsel %vm847, %v2522, %v2524
        %v2541 = vsel %vm847, %v2524, %v2510
        %v2542 = vld [vmem:[#allocation5 + $0x140] sm:$0xff]
        %v2543 = vld [vmem:[#allocation5 + $0x148] sm:$0xff]
        %v2544 = vld [vmem:[#allocation5 + $0x150] sm:$0xff]
        %v2545 = vld [vmem:[#allocation5 + $0x158] sm:$0xff]
        %v2546 = vld [vmem:[#allocation5 + $0x160] sm:$0xff]
        %v2547 = vld [vmem:[#allocation5 + $0x168] sm:$0xff]
        %v2548 = vld [vmem:[#allocation5 + $0x170] sm:$0xff]
        %v2549 = vld [vmem:[#allocation5 + $0x178] sm:$0xff]
        %v2550 = vmul.f32 %v2525, %v2542
        %v2551 = vmul.f32 %v2526, %v2543
        %v2552 = vmul.f32 %v2527, %v2544
        %v2553 = vmul.f32 %v2528, %v2545
        %v2554 = vmul.f32 %v2529, %v2546
        %v2555 = vmul.f32 %v2530, %v2547
        %v2556 = vmul.f32 %v2531, %v2548
        %v2557 = vmul.f32 %v2541, %v2549
        %2558 = vst [vmem:[#allocation2 + $0x140] sm:$0xff] %v2550
        %2559 = vst [vmem:[#allocation2 + $0x148] sm:$0xff] %v2551
        %2560 = vst [vmem:[#allocation2 + $0x150] sm:$0xff] %v2552
        %2561 = vst [vmem:[#allocation2 + $0x158] sm:$0xff] %v2553
        %2562 = vst [vmem:[#allocation2 + $0x160] sm:$0xff] %v2554
        %2563 = vst [vmem:[#allocation2 + $0x168] sm:$0xff] %v2555
        %2564 = vst [vmem:[#allocation2 + $0x170] sm:$0xff] %v2556
        %2565 = vst [vmem:[#allocation2 + $0x178] sm:$0xff] %v2557
        %2566 = vrot.lane.b32.xlu0 %v2241, 113
        %v2567 = vpop.permute.xlu0 %2566
        %2568 = vrot.lane.b32.xlu0 %v2242, 113
        %v2569 = vpop.permute.xlu0 %2568
        %2570 = vrot.lane.b32.xlu0 %v2243, 113
        %v2571 = vpop.permute.xlu0 %2570
        %2572 = vrot.lane.b32.xlu0 %v2244, 113
        %v2573 = vpop.permute.xlu0 %2572
        %2574 = vrot.lane.b32.xlu0 %v2245, 113
        %v2575 = vpop.permute.xlu0 %2574
        %2576 = vrot.lane.b32.xlu0 %v2246, 113
        %v2577 = vpop.permute.xlu0 %2576
        %2578 = vrot.lane.b32.xlu0 %v2247, 113
        %v2579 = vpop.permute.xlu0 %2578
        %2580 = vrot.lane.b32.xlu0 %v2248, 113
        %v2581 = vpop.permute.xlu0 %2580
        %v2582 = vsel %vm910, %v2567, %v2569
        %v2583 = vsel %vm910, %v2569, %v2571
        %v2584 = vsel %vm910, %v2571, %v2573
        %v2585 = vsel %vm910, %v2573, %v2575
        %v2586 = vsel %vm910, %v2575, %v2577
        %v2587 = vsel %vm910, %v2577, %v2579
        %v2588 = vsel %vm910, %v2579, %v2581
        %v2598 = vsel %vm910, %v2581, %v2567
        %v2599 = vld [vmem:[#allocation5 + $0x180] sm:$0xff]
        %v2600 = vld [vmem:[#allocation5 + $0x188] sm:$0xff]
        %v2601 = vld [vmem:[#allocation5 + $0x190] sm:$0xff]
        %v2602 = vld [vmem:[#allocation5 + $0x198] sm:$0xff]
        %v2603 = vld [vmem:[#allocation5 + $0x1a0] sm:$0xff]
        %v2604 = vld [vmem:[#allocation5 + $0x1a8] sm:$0xff]
        %v2605 = vld [vmem:[#allocation5 + $0x1b0] sm:$0xff]
        %v2606 = vld [vmem:[#allocation5 + $0x1b8] sm:$0xff]
        %v2607 = vmul.f32 %v2582, %v2599
        %v2608 = vmul.f32 %v2583, %v2600
        %v2609 = vmul.f32 %v2584, %v2601
        %v2610 = vmul.f32 %v2585, %v2602
        %v2611 = vmul.f32 %v2586, %v2603
        %v2612 = vmul.f32 %v2587, %v2604
        %v2613 = vmul.f32 %v2588, %v2605
        %v2614 = vmul.f32 %v2598, %v2606
        %2615 = vst [vmem:[#allocation2 + $0x180] sm:$0xff] %v2607
        %2616 = vst [vmem:[#allocation2 + $0x188] sm:$0xff] %v2608
        %2617 = vst [vmem:[#allocation2 + $0x190] sm:$0xff] %v2609
        %2618 = vst [vmem:[#allocation2 + $0x198] sm:$0xff] %v2610
        %2619 = vst [vmem:[#allocation2 + $0x1a0] sm:$0xff] %v2611
        %2620 = vst [vmem:[#allocation2 + $0x1a8] sm:$0xff] %v2612
        %2621 = vst [vmem:[#allocation2 + $0x1b0] sm:$0xff] %v2613
        %2622 = vst [vmem:[#allocation2 + $0x1b8] sm:$0xff] %v2614
        %2623 = vrot.lane.b32.xlu0 %v2241, 112
        %v2624 = vpop.permute.xlu0 %2623
        %2625 = vrot.lane.b32.xlu0 %v2242, 112
        %v2626 = vpop.permute.xlu0 %2625
        %2627 = vrot.lane.b32.xlu0 %v2243, 112
        %v2628 = vpop.permute.xlu0 %2627
        %2629 = vrot.lane.b32.xlu0 %v2244, 112
        %v2630 = vpop.permute.xlu0 %2629
        %2631 = vrot.lane.b32.xlu0 %v2245, 112
        %v2632 = vpop.permute.xlu0 %2631
        %2633 = vrot.lane.b32.xlu0 %v2246, 112
        %v2634 = vpop.permute.xlu0 %2633
        %2635 = vrot.lane.b32.xlu0 %v2247, 112
        %v2636 = vpop.permute.xlu0 %2635
        %2637 = vrot.lane.b32.xlu0 %v2248, 112
        %v2638 = vpop.permute.xlu0 %2637
        %v2639 = vsel %vm973, %v2624, %v2626
        %v2640 = vsel %vm973, %v2626, %v2628
        %v2641 = vsel %vm973, %v2628, %v2630
        %v2642 = vsel %vm973, %v2630, %v2632
        %v2643 = vsel %vm973, %v2632, %v2634
        %v2644 = vsel %vm973, %v2634, %v2636
        %v2645 = vsel %vm973, %v2636, %v2638
        %v2655 = vsel %vm973, %v2638, %v2624
        %v2656 = vld [vmem:[#allocation5 + $0x1c0] sm:$0xff]
        %v2657 = vld [vmem:[#allocation5 + $0x1c8] sm:$0xff]
        %v2658 = vld [vmem:[#allocation5 + $0x1d0] sm:$0xff]
        %v2659 = vld [vmem:[#allocation5 + $0x1d8] sm:$0xff]
        %v2660 = vld [vmem:[#allocation5 + $0x1e0] sm:$0xff]
        %v2661 = vld [vmem:[#allocation5 + $0x1e8] sm:$0xff]
        %v2662 = vld [vmem:[#allocation5 + $0x1f0] sm:$0xff]
        %v2663 = vld [vmem:[#allocation5 + $0x1f8] sm:$0xff]
        %v2664 = vmul.f32 %v2639, %v2656
        %v2665 = vmul.f32 %v2640, %v2657
        %v2666 = vmul.f32 %v2641, %v2658
        %v2667 = vmul.f32 %v2642, %v2659
        %v2668 = vmul.f32 %v2643, %v2660
        %v2669 = vmul.f32 %v2644, %v2661
        %v2670 = vmul.f32 %v2645, %v2662
        %v2671 = vmul.f32 %v2655, %v2663
        %2672 = vst [vmem:[#allocation2 + $0x1c0] sm:$0xff] %v2664
        %2673 = vst [vmem:[#allocation2 + $0x1c8] sm:$0xff] %v2665
        %2674 = vst [vmem:[#allocation2 + $0x1d0] sm:$0xff] %v2666
        %2675 = vst [vmem:[#allocation2 + $0x1d8] sm:$0xff] %v2667
        %2676 = vst [vmem:[#allocation2 + $0x1e0] sm:$0xff] %v2668
        %2677 = vst [vmem:[#allocation2 + $0x1e8] sm:$0xff] %v2669
        %2678 = vst [vmem:[#allocation2 + $0x1f0] sm:$0xff] %v2670
        %2679 = vst [vmem:[#allocation2 + $0x1f8] sm:$0xff] %v2671
        %2680 = vrot.lane.b32.xlu0 %v2241, 111
        %v2681 = vpop.permute.xlu0 %2680
        %2682 = vrot.lane.b32.xlu0 %v2242, 111
        %v2683 = vpop.permute.xlu0 %2682
        %2684 = vrot.lane.b32.xlu0 %v2243, 111
        %v2685 = vpop.permute.xlu0 %2684
        %2686 = vrot.lane.b32.xlu0 %v2244, 111
        %v2687 = vpop.permute.xlu0 %2686
        %2688 = vrot.lane.b32.xlu0 %v2245, 111
        %v2689 = vpop.permute.xlu0 %2688
        %2690 = vrot.lane.b32.xlu0 %v2246, 111
        %v2691 = vpop.permute.xlu0 %2690
        %2692 = vrot.lane.b32.xlu0 %v2247, 111
        %v2693 = vpop.permute.xlu0 %2692
        %2694 = vrot.lane.b32.xlu0 %v2248, 111
        %v2695 = vpop.permute.xlu0 %2694
        %v2696 = vsel %vm1036, %v2681, %v2683
        %v2697 = vsel %vm1036, %v2683, %v2685
        %v2698 = vsel %vm1036, %v2685, %v2687
        %v2699 = vsel %vm1036, %v2687, %v2689
        %v2700 = vsel %vm1036, %v2689, %v2691
        %v2701 = vsel %vm1036, %v2691, %v2693
        %v2702 = vsel %vm1036, %v2693, %v2695
        %v2712 = vsel %vm1036, %v2695, %v2681
        %v2713 = vld [vmem:[#allocation5 + $0x200] sm:$0xff]
        %v2714 = vld [vmem:[#allocation5 + $0x208] sm:$0xff]
        %v2715 = vld [vmem:[#allocation5 + $0x210] sm:$0xff]
        %v2716 = vld [vmem:[#allocation5 + $0x218] sm:$0xff]
        %v2717 = vld [vmem:[#allocation5 + $0x220] sm:$0xff]
        %v2718 = vld [vmem:[#allocation5 + $0x228] sm:$0xff]
        %v2719 = vld [vmem:[#allocation5 + $0x230] sm:$0xff]
        %v2720 = vld [vmem:[#allocation5 + $0x238] sm:$0xff]
        %v2721 = vmul.f32 %v2696, %v2713
        %v2722 = vmul.f32 %v2697, %v2714
        %v2723 = vmul.f32 %v2698, %v2715
        %v2724 = vmul.f32 %v2699, %v2716
        %v2725 = vmul.f32 %v2700, %v2717
        %v2726 = vmul.f32 %v2701, %v2718
        %v2727 = vmul.f32 %v2702, %v2719
        %v2728 = vmul.f32 %v2712, %v2720
        %2729 = vst [vmem:[#allocation2 + $0x200] sm:$0xff] %v2721
        %2730 = vst [vmem:[#allocation2 + $0x208] sm:$0xff] %v2722
        %2731 = vst [vmem:[#allocation2 + $0x210] sm:$0xff] %v2723
        %2732 = vst [vmem:[#allocation2 + $0x218] sm:$0xff] %v2724
        %2733 = vst [vmem:[#allocation2 + $0x220] sm:$0xff] %v2725
        %2734 = vst [vmem:[#allocation2 + $0x228] sm:$0xff] %v2726
        %2735 = vst [vmem:[#allocation2 + $0x230] sm:$0xff] %v2727
        %2736 = vst [vmem:[#allocation2 + $0x238] sm:$0xff] %v2728
        %v2737 = vld [vmem:[%s7] sm:$0x1]
        %v2738 = vld [vmem:[#allocation2] sm:$0xff]
        %v2739 = vld [vmem:[#allocation2 + $0x8] sm:$0xff]
        %v2740 = vld [vmem:[#allocation2 + $0x10] sm:$0xff]
        %v2741 = vld [vmem:[#allocation2 + $0x18] sm:$0xff]
        %v2742 = vld [vmem:[#allocation2 + $0x20] sm:$0xff]
        %v2743 = vld [vmem:[#allocation2 + $0x28] sm:$0xff]
        %v2744 = vld [vmem:[#allocation2 + $0x30] sm:$0xff]
        %v2745 = vld [vmem:[#allocation2 + $0x38] sm:$0xff]
        %v2746 = vld [vmem:[#allocation2 + $0x40] sm:$0xff]
        %v2747 = vld [vmem:[#allocation2 + $0x48] sm:$0xff]
        %v2748 = vld [vmem:[#allocation2 + $0x50] sm:$0xff]
        %v2749 = vld [vmem:[#allocation2 + $0x58] sm:$0xff]
        %v2750 = vld [vmem:[#allocation2 + $0x60] sm:$0xff]
        %v2751 = vld [vmem:[#allocation2 + $0x68] sm:$0xff]
        %v2752 = vld [vmem:[#allocation2 + $0x70] sm:$0xff]
        %v2753 = vld [vmem:[#allocation2 + $0x78] sm:$0xff]
        %v2754 = vld [vmem:[#allocation2 + $0x80] sm:$0xff]
        %v2755 = vld [vmem:[#allocation2 + $0x88] sm:$0xff]
        %v2756 = vld [vmem:[#allocation2 + $0x90] sm:$0xff]
        %v2757 = vld [vmem:[#allocation2 + $0x98] sm:$0xff]
        %v2758 = vld [vmem:[#allocation2 + $0xa0] sm:$0xff]
        %v2759 = vld [vmem:[#allocation2 + $0xa8] sm:$0xff]
        %v2760 = vld [vmem:[#allocation2 + $0xb0] sm:$0xff]
        %v2761 = vld [vmem:[#allocation2 + $0xb8] sm:$0xff]
        %v2762 = vld [vmem:[#allocation2 + $0xc0] sm:$0xff]
        %v2763 = vld [vmem:[#allocation2 + $0xc8] sm:$0xff]
        %v2764 = vld [vmem:[#allocation2 + $0xd0] sm:$0xff]
        %v2765 = vld [vmem:[#allocation2 + $0xd8] sm:$0xff]
        %v2766 = vld [vmem:[#allocation2 + $0xe0] sm:$0xff]
        %v2767 = vld [vmem:[#allocation2 + $0xe8] sm:$0xff]
        %v2768 = vld [vmem:[#allocation2 + $0xf0] sm:$0xff]
        %v2769 = vld [vmem:[#allocation2 + $0xf8] sm:$0xff]
        %v2770 = vld [vmem:[#allocation2 + $0x100] sm:$0xff]
        %v2771 = vld [vmem:[#allocation2 + $0x108] sm:$0xff]
        %v2772 = vld [vmem:[#allocation2 + $0x110] sm:$0xff]
        %v2773 = vld [vmem:[#allocation2 + $0x118] sm:$0xff]
        %v2774 = vld [vmem:[#allocation2 + $0x120] sm:$0xff]
        %v2775 = vld [vmem:[#allocation2 + $0x128] sm:$0xff]
        %v2776 = vld [vmem:[#allocation2 + $0x130] sm:$0xff]
        %v2777 = vld [vmem:[#allocation2 + $0x138] sm:$0xff]
        %v2778 = vld [vmem:[#allocation2 + $0x140] sm:$0xff]
        %v2779 = vld [vmem:[#allocation2 + $0x148] sm:$0xff]
        %v2780 = vld [vmem:[#allocation2 + $0x150] sm:$0xff]
        %v2781 = vld [vmem:[#allocation2 + $0x158] sm:$0xff]
        %v2782 = vld [vmem:[#allocation2 + $0x160] sm:$0xff]
        %v2783 = vld [vmem:[#allocation2 + $0x168] sm:$0xff]
        %v2784 = vld [vmem:[#allocation2 + $0x170] sm:$0xff]
        %v2785 = vld [vmem:[#allocation2 + $0x178] sm:$0xff]
        %v2786 = vld [vmem:[#allocation2 + $0x180] sm:$0xff]
        %v2787 = vld [vmem:[#allocation2 + $0x188] sm:$0xff]
        %v2788 = vld [vmem:[#allocation2 + $0x190] sm:$0xff]
        %v2789 = vld [vmem:[#allocation2 + $0x198] sm:$0xff]
        %v2790 = vld [vmem:[#allocation2 + $0x1a0] sm:$0xff]
        %v2791 = vld [vmem:[#allocation2 + $0x1a8] sm:$0xff]
        %v2792 = vld [vmem:[#allocation2 + $0x1b0] sm:$0xff]
        %v2793 = vld [vmem:[#allocation2 + $0x1b8] sm:$0xff]
        %v2794 = vld [vmem:[#allocation2 + $0x1c0] sm:$0xff]
        %v2795 = vld [vmem:[#allocation2 + $0x1c8] sm:$0xff]
        %v2796 = vld [vmem:[#allocation2 + $0x1d0] sm:$0xff]
        %v2797 = vld [vmem:[#allocation2 + $0x1d8] sm:$0xff]
        %v2798 = vld [vmem:[#allocation2 + $0x1e0] sm:$0xff]
        %v2799 = vld [vmem:[#allocation2 + $0x1e8] sm:$0xff]
        %v2800 = vld [vmem:[#allocation2 + $0x1f0] sm:$0xff]
        %v2801 = vld [vmem:[#allocation2 + $0x1f8] sm:$0xff]
        %v2802 = vld [vmem:[#allocation2 + $0x200] sm:$0xff]
        %v2803 = vld [vmem:[#allocation2 + $0x208] sm:$0xff]
        %v2804 = vld [vmem:[#allocation2 + $0x210] sm:$0xff]
        %v2805 = vld [vmem:[#allocation2 + $0x218] sm:$0xff]
        %v2806 = vld [vmem:[#allocation2 + $0x220] sm:$0xff]
        %v2807 = vld [vmem:[#allocation2 + $0x228] sm:$0xff]
        %v2808 = vld [vmem:[#allocation2 + $0x230] sm:$0xff]
        %v2809 = vld [vmem:[#allocation2 + $0x238] sm:$0xff]
        %v2810 = vld [vmem:[#allocation3] sm:$0x1]
        %2812 = vset.pattern.permute.xlu0 0
        %2813 = vperm.xlu0 %2812, %v2810
        %v2814 = vpop.permute.xlu0 %2813
        %v2816 = vperm.slane %v2814, 0
        %v2818 = vsel %vm2077, %v2737, 0
        %2820 = vmatpush.msra.mxu0 0.0
        %2821 = vmatpush.msra.mxu0 0.0
        %2822 = vmatpush.msra.mxu0 0.0
        %2823 = vmatpush.msra.mxu0 0.0
        %2824 = vmatpush.msra.mxu0 0.0
        %2825 = vmatpush.msra.mxu0 0.0
        %2826 = vmatpush.msra.mxu0 0.0
        %2827 = vmatpush.msra.mxu0 %v2802
        %2828 = vmatpush.msra.mxu0 %v2794
        %2829 = vmatpush.msra.mxu0 %v2786
        %2830 = vmatpush.msra.mxu0 %v2778
        %2831 = vmatpush.msra.mxu0 %v2770
        %2832 = vmatpush.msra.mxu0 %v2762
        %2833 = vmatpush.msra.mxu0 %v2754
        %2834 = vmatpush.msra.mxu0 %v2746
        %2835 = vmatpush.msra.mxu0 %v2738
        %2836 = vmatmul.f32.gmra.mxu0 %v2818
        %v2837 = vpop.f32.mrf.mxu0
        %v2838 = vadd.f32 %v2816, %v2837
        %2839 = vdwg.mxu0
        %2840 = vmatpush.msra.mxu0 0.0
        %2841 = vmatpush.msra.mxu0 0.0
        %2842 = vmatpush.msra.mxu0 0.0
        %2843 = vmatpush.msra.mxu0 0.0
        %2844 = vmatpush.msra.mxu0 0.0
        %2845 = vmatpush.msra.mxu0 0.0
        %2846 = vmatpush.msra.mxu0 0.0
        %2847 = vmatpush.msra.mxu0 %v2803
        %2848 = vmatpush.msra.mxu0 %v2795
        %2849 = vmatpush.msra.mxu0 %v2787
        %2850 = vmatpush.msra.mxu0 %v2779
        %2851 = vmatpush.msra.mxu0 %v2771
        %2852 = vmatpush.msra.mxu0 %v2763
        %2853 = vmatpush.msra.mxu0 %v2755
        %2854 = vmatpush.msra.mxu0 %v2747
        %2855 = vmatpush.msra.mxu0 %v2739
        %2856 = vmatmul.f32.gmra.mxu0 %v2818
        %v2857 = vpop.f32.mrf.mxu0
        %v2858 = vadd.f32 %v2816, %v2857
        %2859 = vdwg.mxu0
        %2860 = vmatpush.msra.mxu0 0.0
        %2861 = vmatpush.msra.mxu0 0.0
        %2862 = vmatpush.msra.mxu0 0.0
        %2863 = vmatpush.msra.mxu0 0.0
        %2864 = vmatpush.msra.mxu0 0.0
        %2865 = vmatpush.msra.mxu0 0.0
        %2866 = vmatpush.msra.mxu0 0.0
        %2867 = vmatpush.msra.mxu0 %v2804
        %2868 = vmatpush.msra.mxu0 %v2796
        %2869 = vmatpush.msra.mxu0 %v2788
        %2870 = vmatpush.msra.mxu0 %v2780
        %2871 = vmatpush.msra.mxu0 %v2772
        %2872 = vmatpush.msra.mxu0 %v2764
        %2873 = vmatpush.msra.mxu0 %v2756
        %2874 = vmatpush.msra.mxu0 %v2748
        %2875 = vmatpush.msra.mxu0 %v2740
        %2876 = vmatmul.f32.gmra.mxu0 %v2818
        %v2877 = vpop.f32.mrf.mxu0
        %v2878 = vadd.f32 %v2816, %v2877
        %2879 = vdwg.mxu0
        %2880 = vmatpush.msra.mxu0 0.0
        %2881 = vmatpush.msra.mxu0 0.0
        %2882 = vmatpush.msra.mxu0 0.0
        %2883 = vmatpush.msra.mxu0 0.0
        %2884 = vmatpush.msra.mxu0 0.0
        %2885 = vmatpush.msra.mxu0 0.0
        %2886 = vmatpush.msra.mxu0 0.0
        %2887 = vmatpush.msra.mxu0 %v2805
        %2888 = vmatpush.msra.mxu0 %v2797
        %2889 = vmatpush.msra.mxu0 %v2789
        %2890 = vmatpush.msra.mxu0 %v2781
        %2891 = vmatpush.msra.mxu0 %v2773
        %2892 = vmatpush.msra.mxu0 %v2765
        %2893 = vmatpush.msra.mxu0 %v2757
        %2894 = vmatpush.msra.mxu0 %v2749
        %2895 = vmatpush.msra.mxu0 %v2741
        %2896 = vmatmul.f32.gmra.mxu0 %v2818
        %v2897 = vpop.f32.mrf.mxu0
        %v2898 = vadd.f32 %v2816, %v2897
        %2899 = vdwg.mxu0
        %2900 = vmatpush.msra.mxu0 0.0
        %2901 = vmatpush.msra.mxu0 0.0
        %2902 = vmatpush.msra.mxu0 0.0
        %2903 = vmatpush.msra.mxu0 0.0
        %2904 = vmatpush.msra.mxu0 0.0
        %2905 = vmatpush.msra.mxu0 0.0
        %2906 = vmatpush.msra.mxu0 0.0
        %2907 = vmatpush.msra.mxu0 %v2806
        %2908 = vmatpush.msra.mxu0 %v2798
        %2909 = vmatpush.msra.mxu0 %v2790
        %2910 = vmatpush.msra.mxu0 %v2782
        %2911 = vmatpush.msra.mxu0 %v2774
        %2912 = vmatpush.msra.mxu0 %v2766
        %2913 = vmatpush.msra.mxu0 %v2758
        %2914 = vmatpush.msra.mxu0 %v2750
        %2915 = vmatpush.msra.mxu0 %v2742
        %2916 = vmatmul.f32.gmra.mxu0 %v2818
        %v2917 = vpop.f32.mrf.mxu0
        %v2918 = vadd.f32 %v2816, %v2917
        %2919 = vdwg.mxu0
        %2920 = vmatpush.msra.mxu0 0.0
        %2921 = vmatpush.msra.mxu0 0.0
        %2922 = vmatpush.msra.mxu0 0.0
        %2923 = vmatpush.msra.mxu0 0.0
        %2924 = vmatpush.msra.mxu0 0.0
        %2925 = vmatpush.msra.mxu0 0.0
        %2926 = vmatpush.msra.mxu0 0.0
        %2927 = vmatpush.msra.mxu0 %v2807
        %2928 = vmatpush.msra.mxu0 %v2799
        %2929 = vmatpush.msra.mxu0 %v2791
        %2930 = vmatpush.msra.mxu0 %v2783
        %2931 = vmatpush.msra.mxu0 %v2775
        %2932 = vmatpush.msra.mxu0 %v2767
        %2933 = vmatpush.msra.mxu0 %v2759
        %2934 = vmatpush.msra.mxu0 %v2751
        %2935 = vmatpush.msra.mxu0 %v2743
        %2936 = vmatmul.f32.gmra.mxu0 %v2818
        %v2937 = vpop.f32.mrf.mxu0
        %v2938 = vadd.f32 %v2816, %v2937
        %2939 = vdwg.mxu0
        %2940 = vmatpush.msra.mxu0 0.0
        %2941 = vmatpush.msra.mxu0 0.0
        %2942 = vmatpush.msra.mxu0 0.0
        %2943 = vmatpush.msra.mxu0 0.0
        %2944 = vmatpush.msra.mxu0 0.0
        %2945 = vmatpush.msra.mxu0 0.0
        %2946 = vmatpush.msra.mxu0 0.0
        %2947 = vmatpush.msra.mxu0 %v2808
        %2948 = vmatpush.msra.mxu0 %v2800
        %2949 = vmatpush.msra.mxu0 %v2792
        %2950 = vmatpush.msra.mxu0 %v2784
        %2951 = vmatpush.msra.mxu0 %v2776
        %2952 = vmatpush.msra.mxu0 %v2768
        %2953 = vmatpush.msra.mxu0 %v2760
        %2954 = vmatpush.msra.mxu0 %v2752
        %2955 = vmatpush.msra.mxu0 %v2744
        %2956 = vmatmul.f32.gmra.mxu0 %v2818
        %v2957 = vpop.f32.mrf.mxu0
        %v2958 = vadd.f32 %v2816, %v2957
        %2959 = vdwg.mxu0
        %2960 = vmatpush.msra.mxu0 0.0
        %2961 = vmatpush.msra.mxu0 0.0
        %2962 = vmatpush.msra.mxu0 0.0
        %2963 = vmatpush.msra.mxu0 0.0
        %2964 = vmatpush.msra.mxu0 0.0
        %2965 = vmatpush.msra.mxu0 0.0
        %2966 = vmatpush.msra.mxu0 0.0
        %2967 = vmatpush.msra.mxu0 %v2809
        %2968 = vmatpush.msra.mxu0 %v2801
        %2969 = vmatpush.msra.mxu0 %v2793
        %2970 = vmatpush.msra.mxu0 %v2785
        %2971 = vmatpush.msra.mxu0 %v2777
        %2972 = vmatpush.msra.mxu0 %v2769
        %2973 = vmatpush.msra.mxu0 %v2761
        %2974 = vmatpush.msra.mxu0 %v2753
        %2975 = vmatpush.msra.mxu0 %v2745
        %2976 = vmatmul.f32.gmra.mxu0 %v2818
        %v2977 = vpop.f32.mrf.mxu0
        %v2978 = vadd.f32 %v2816, %v2977
        %2979 = vdwg.mxu0
        %v2980 = vmul.f32 %v2838, 0.5
        %v2981 = vmul.f32 %v2858, 0.5
        %v2982 = vmul.f32 %v2878, 0.5
        %v2983 = vmul.f32 %v2898, 0.5
        %v2984 = vmul.f32 %v2918, 0.5
        %v2985 = vmul.f32 %v2938, 0.5
        %v2986 = vmul.f32 %v2958, 0.5
        %v2987 = vmul.f32 %v2978, 0.5
        %v2988 = vtanh.pop %v2980
        %v2989 = vtanh.pop %v2981
        %v2990 = vtanh.pop %v2982
        %v2991 = vtanh.pop %v2983
        %v2992 = vtanh.pop %v2984
        %v2993 = vtanh.pop %v2985
        %v2994 = vtanh.pop %v2986
        %v2995 = vtanh.pop %v2987
        %v2996 = vadd.f32 %v2988, 1.0
        %v2997 = vadd.f32 %v2989, 1.0
        %v2998 = vadd.f32 %v2990, 1.0
        %v2999 = vadd.f32 %v2991, 1.0
        %v3000 = vadd.f32 %v2992, 1.0
        %v3001 = vadd.f32 %v2993, 1.0
        %v3002 = vadd.f32 %v2994, 1.0
        %v3003 = vadd.f32 %v2995, 1.0
        %v3004 = vmul.f32 %v2996, 0.5
        %v3005 = vmul.f32 %v2997, 0.5
        %v3006 = vmul.f32 %v2998, 0.5
        %v3007 = vmul.f32 %v2999, 0.5
        %v3008 = vmul.f32 %v3000, 0.5
        %v3009 = vmul.f32 %v3001, 0.5
        %v3010 = vmul.f32 %v3002, 0.5
        %v3011 = vmul.f32 %v3003, 0.5
        %v3020 = vrot.slane %v3005, 7
        %v3021 = vrot.slane %v3006, 6
        %v3022 = vrot.slane %v3007, 5
        %v3023 = vrot.slane %v3008, 4
        %v3024 = vrot.slane %v3009, 3
        %v3025 = vrot.slane %v3010, 2
        %v3026 = vrot.slane %v3011, 1
        %v3027 = vsel %vm1244, %v3004, %v3020
        %vm3028 = vcmask 1042434
        %v3029 = vsel %vm3028, %v3021, %v3022
        %v3030 = vsel %vm1253, %v3027, %v3029
        %vm3031 = vcmask 1044484
        %v3032 = vsel %vm3031, %v3023, %v3024
        %vm3033 = vcmask 1046534
        %v3034 = vsel %vm3033, %v3025, %v3026
        %vm3035 = vcmask 1045508
        %v3036 = vsel %vm3035, %v3032, %v3034
        %v3037 = vsel %vm1271, %v3030, %v3036
        %3039 = vst [vmem:[%s560] sm:$0xff] %v3037
        %v3041 = vperm.slane %v564, 0
        %v3042 = vperm.slane %v564, 1
        %v3043 = vperm.slane %v564, 2
        %v3044 = vperm.slane %v564, 3
        %v3045 = vperm.slane %v564, 4
        %v3046 = vperm.slane %v564, 5
        %v3047 = vperm.slane %v564, 6
        %v3048 = vperm.slane %v564, 7
        %v3057 = vrot.slane %v3004, 7
        %v3058 = vrot.slane %v3006, 7
        %v3059 = vrot.slane %v3007, 7
        %v3060 = vrot.slane %v3008, 7
        %v3061 = vrot.slane %v3009, 7
        %v3062 = vrot.slane %v3010, 7
        %v3063 = vrot.slane %v3011, 7
        %v3072 = vsel %vm1244, %v3041, %v3057
        %v3073 = vsel %vm1244, %v3042, %v3020
        %v3074 = vsel %vm1244, %v3043, %v3058
        %v3075 = vsel %vm1244, %v3044, %v3059
        %v3076 = vsel %vm1244, %v3045, %v3060
        %v3077 = vsel %vm1244, %v3046, %v3061
        %v3078 = vsel %vm1244, %v3047, %v3062
        %v3079 = vsel %vm1244, %v3048, %v3063
        %3081 = vrot.lane.b32.xlu0 %v3079, 17
        %v3082 = vpop.permute.xlu0 %3081
        %3091 = vrot.lane.b32.xlu0 %v3072, 17
        %v3092 = vpop.permute.xlu0 %3091
        %3093 = vrot.lane.b32.xlu0 %v3073, 17
        %v3094 = vpop.permute.xlu0 %3093
        %3095 = vrot.lane.b32.xlu0 %v3074, 17
        %v3096 = vpop.permute.xlu0 %3095
        %3097 = vrot.lane.b32.xlu0 %v3075, 17
        %v3098 = vpop.permute.xlu0 %3097
        %3099 = vrot.lane.b32.xlu0 %v3076, 17
        %v3100 = vpop.permute.xlu0 %3099
        %3101 = vrot.lane.b32.xlu0 %v3077, 17
        %v3102 = vpop.permute.xlu0 %3101
        %3103 = vrot.lane.b32.xlu0 %v3078, 17
        %v3104 = vpop.permute.xlu0 %3103
        %v3105 = vsel %vm592, %v3092, %v3094
        %v3106 = vsel %vm592, %v3094, %v3096
        %v3107 = vsel %vm592, %v3096, %v3098
        %v3108 = vsel %vm592, %v3098, %v3100
        %v3109 = vsel %vm592, %v3100, %v3102
        %v3110 = vsel %vm592, %v3102, %v3104
        %v3111 = vsel %vm592, %v3104, %v3082
        %v3120 = vsel %vm592, %v3082, %v3092
        %v3121 = vld [vmem:[#allocation5] sm:$0x3]
        %v3122 = vld [vmem:[#allocation5 + $0x8] sm:$0x3]
        %v3123 = vld [vmem:[#allocation5 + $0x10] sm:$0x3]
        %v3124 = vld [vmem:[#allocation5 + $0x18] sm:$0x3]
        %v3125 = vld [vmem:[#allocation5 + $0x20] sm:$0x3]
        %v3126 = vld [vmem:[#allocation5 + $0x28] sm:$0x3]
        %v3127 = vld [vmem:[#allocation5 + $0x30] sm:$0x3]
        %v3128 = vld [vmem:[#allocation5 + $0x38] sm:$0x3]
        %v3129 = vmul.f32 %v3120, %v3121
        %v3130 = vmul.f32 %v3105, %v3122
        %v3131 = vmul.f32 %v3106, %v3123
        %v3132 = vmul.f32 %v3107, %v3124
        %v3133 = vmul.f32 %v3108, %v3125
        %v3134 = vmul.f32 %v3109, %v3126
        %v3135 = vmul.f32 %v3110, %v3127
        %v3136 = vmul.f32 %v3111, %v3128
        %3137 = vrot.lane.b32.xlu0 %v3079, 16
        %v3138 = vpop.permute.xlu0 %3137
        %3140 = vrot.lane.b32.xlu0 %v3072, 16
        %v3141 = vpop.permute.xlu0 %3140
        %3142 = vrot.lane.b32.xlu0 %v3073, 16
        %v3143 = vpop.permute.xlu0 %3142
        %3144 = vrot.lane.b32.xlu0 %v3074, 16
        %v3145 = vpop.permute.xlu0 %3144
        %3146 = vrot.lane.b32.xlu0 %v3075, 16
        %v3147 = vpop.permute.xlu0 %3146
        %3148 = vrot.lane.b32.xlu0 %v3076, 16
        %v3149 = vpop.permute.xlu0 %3148
        %3150 = vrot.lane.b32.xlu0 %v3077, 16
        %v3151 = vpop.permute.xlu0 %3150
        %3152 = vrot.lane.b32.xlu0 %v3078, 16
        %v3153 = vpop.permute.xlu0 %3152
        %v3154 = vsel %vm654, %v3141, %v3143
        %v3155 = vsel %vm654, %v3143, %v3145
        %v3156 = vsel %vm654, %v3145, %v3147
        %v3157 = vsel %vm654, %v3147, %v3149
        %v3158 = vsel %vm654, %v3149, %v3151
        %v3159 = vsel %vm654, %v3151, %v3153
        %v3160 = vsel %vm654, %v3153, %v3138
        %v3169 = vsel %vm654, %v3138, %v3141
        %v3170 = vld [vmem:[#allocation5 + $0x40] sm:$0x3]
        %v3171 = vld [vmem:[#allocation5 + $0x48] sm:$0x3]
        %v3172 = vld [vmem:[#allocation5 + $0x50] sm:$0x3]
        %v3173 = vld [vmem:[#allocation5 + $0x58] sm:$0x3]
        %v3174 = vld [vmem:[#allocation5 + $0x60] sm:$0x3]
        %v3175 = vld [vmem:[#allocation5 + $0x68] sm:$0x3]
        %v3176 = vld [vmem:[#allocation5 + $0x70] sm:$0x3]
        %v3177 = vld [vmem:[#allocation5 + $0x78] sm:$0x3]
        %v3178 = vmul.f32 %v3169, %v3170
        %v3179 = vmul.f32 %v3154, %v3171
        %v3180 = vmul.f32 %v3155, %v3172
        %v3181 = vmul.f32 %v3156, %v3173
        %v3182 = vmul.f32 %v3157, %v3174
        %v3183 = vmul.f32 %v3158, %v3175
        %v3184 = vmul.f32 %v3159, %v3176
        %v3185 = vmul.f32 %v3160, %v3177
        %3186 = vrot.lane.b32.xlu0 %v3079, 15
        %v3187 = vpop.permute.xlu0 %3186
        %3189 = vrot.lane.b32.xlu0 %v3072, 15
        %v3190 = vpop.permute.xlu0 %3189
        %3191 = vrot.lane.b32.xlu0 %v3073, 15
        %v3192 = vpop.permute.xlu0 %3191
        %3193 = vrot.lane.b32.xlu0 %v3074, 15
        %v3194 = vpop.permute.xlu0 %3193
        %3195 = vrot.lane.b32.xlu0 %v3075, 15
        %v3196 = vpop.permute.xlu0 %3195
        %3197 = vrot.lane.b32.xlu0 %v3076, 15
        %v3198 = vpop.permute.xlu0 %3197
        %3199 = vrot.lane.b32.xlu0 %v3077, 15
        %v3200 = vpop.permute.xlu0 %3199
        %3201 = vrot.lane.b32.xlu0 %v3078, 15
        %v3202 = vpop.permute.xlu0 %3201
        %v3203 = vsel %vm717, %v3190, %v3192
        %v3204 = vsel %vm717, %v3192, %v3194
        %v3205 = vsel %vm717, %v3194, %v3196
        %v3206 = vsel %vm717, %v3196, %v3198
        %v3207 = vsel %vm717, %v3198, %v3200
        %v3208 = vsel %vm717, %v3200, %v3202
        %v3209 = vsel %vm717, %v3202, %v3187
        %v3218 = vsel %vm717, %v3187, %v3190
        %v3219 = vld [vmem:[#allocation5 + $0x80] sm:$0x3]
        %v3220 = vld [vmem:[#allocation5 + $0x88] sm:$0x3]
        %v3221 = vld [vmem:[#allocation5 + $0x90] sm:$0x3]
        %v3222 = vld [vmem:[#allocation5 + $0x98] sm:$0x3]
        %v3223 = vld [vmem:[#allocation5 + $0xa0] sm:$0x3]
        %v3224 = vld [vmem:[#allocation5 + $0xa8] sm:$0x3]
        %v3225 = vld [vmem:[#allocation5 + $0xb0] sm:$0x3]
        %v3226 = vld [vmem:[#allocation5 + $0xb8] sm:$0x3]
        %v3227 = vmul.f32 %v3218, %v3219
        %v3228 = vmul.f32 %v3203, %v3220
        %v3229 = vmul.f32 %v3204, %v3221
        %v3230 = vmul.f32 %v3205, %v3222
        %v3231 = vmul.f32 %v3206, %v3223
        %v3232 = vmul.f32 %v3207, %v3224
        %v3233 = vmul.f32 %v3208, %v3225
        %v3234 = vmul.f32 %v3209, %v3226
        %3235 = vrot.lane.b32.xlu0 %v3079, 1
        %v3236 = vpop.permute.xlu0 %3235
        %3238 = vrot.lane.b32.xlu0 %v3072, 1
        %v3239 = vpop.permute.xlu0 %3238
        %3240 = vrot.lane.b32.xlu0 %v3073, 1
        %v3241 = vpop.permute.xlu0 %3240
        %3242 = vrot.lane.b32.xlu0 %v3074, 1
        %v3243 = vpop.permute.xlu0 %3242
        %3244 = vrot.lane.b32.xlu0 %v3075, 1
        %v3245 = vpop.permute.xlu0 %3244
        %3246 = vrot.lane.b32.xlu0 %v3076, 1
        %v3247 = vpop.permute.xlu0 %3246
        %3248 = vrot.lane.b32.xlu0 %v3077, 1
        %v3249 = vpop.permute.xlu0 %3248
        %3250 = vrot.lane.b32.xlu0 %v3078, 1
        %v3251 = vpop.permute.xlu0 %3250
        %v3252 = vsel %vm780, %v3239, %v3241
        %v3253 = vsel %vm780, %v3241, %v3243
        %v3254 = vsel %vm780, %v3243, %v3245
        %v3255 = vsel %vm780, %v3245, %v3247
        %v3256 = vsel %vm780, %v3247, %v3249
        %v3257 = vsel %vm780, %v3249, %v3251
        %v3258 = vsel %vm780, %v3251, %v3236
        %v3267 = vsel %vm780, %v3236, %v3239
        %v3268 = vld [vmem:[#allocation5 + $0xc0] sm:$0x3]
        %v3269 = vld [vmem:[#allocation5 + $0xc8] sm:$0x3]
        %v3270 = vld [vmem:[#allocation5 + $0xd0] sm:$0x3]
        %v3271 = vld [vmem:[#allocation5 + $0xd8] sm:$0x3]
        %v3272 = vld [vmem:[#allocation5 + $0xe0] sm:$0x3]
        %v3273 = vld [vmem:[#allocation5 + $0xe8] sm:$0x3]
        %v3274 = vld [vmem:[#allocation5 + $0xf0] sm:$0x3]
        %v3275 = vld [vmem:[#allocation5 + $0xf8] sm:$0x3]
        %v3276 = vmul.f32 %v3267, %v3268
        %v3277 = vmul.f32 %v3252, %v3269
        %v3278 = vmul.f32 %v3253, %v3270
        %v3279 = vmul.f32 %v3254, %v3271
        %v3280 = vmul.f32 %v3255, %v3272
        %v3281 = vmul.f32 %v3256, %v3273
        %v3282 = vmul.f32 %v3257, %v3274
        %v3283 = vmul.f32 %v3258, %v3275
        %v3284 = vld [vmem:[#allocation5 + $0x100] sm:$0x3]
        %v3285 = vld [vmem:[#allocation5 + $0x108] sm:$0x3]
        %v3286 = vld [vmem:[#allocation5 + $0x110] sm:$0x3]
        %v3287 = vld [vmem:[#allocation5 + $0x118] sm:$0x3]
        %v3288 = vld [vmem:[#allocation5 + $0x120] sm:$0x3]
        %v3289 = vld [vmem:[#allocation5 + $0x128] sm:$0x3]
        %v3290 = vld [vmem:[#allocation5 + $0x130] sm:$0x3]
        %v3291 = vld [vmem:[#allocation5 + $0x138] sm:$0x3]
        %v3292 = vmul.f32 %v3072, %v3284
        %v3293 = vmul.f32 %v3073, %v3285
        %v3294 = vmul.f32 %v3074, %v3286
        %v3295 = vmul.f32 %v3075, %v3287
        %v3296 = vmul.f32 %v3076, %v3288
        %v3297 = vmul.f32 %v3077, %v3289
        %v3298 = vmul.f32 %v3078, %v3290
        %v3299 = vmul.f32 %v3079, %v3291
        %3300 = vrot.lane.b32.xlu0 %v3072, 127
        %v3301 = vpop.permute.xlu0 %3300
        %3302 = vrot.lane.b32.xlu0 %v3073, 127
        %v3303 = vpop.permute.xlu0 %3302
        %3304 = vrot.lane.b32.xlu0 %v3074, 127
        %v3305 = vpop.permute.xlu0 %3304
        %3306 = vrot.lane.b32.xlu0 %v3075, 127
        %v3307 = vpop.permute.xlu0 %3306
        %3308 = vrot.lane.b32.xlu0 %v3076, 127
        %v3309 = vpop.permute.xlu0 %3308
        %3310 = vrot.lane.b32.xlu0 %v3077, 127
        %v3311 = vpop.permute.xlu0 %3310
        %3312 = vrot.lane.b32.xlu0 %v3078, 127
        %v3313 = vpop.permute.xlu0 %3312
        %3314 = vrot.lane.b32.xlu0 %v3079, 127
        %v3315 = vpop.permute.xlu0 %3314
        %v3316 = vsel %vm847, %v3301, %v3303
        %v3317 = vsel %vm847, %v3303, %v3305
        %v3318 = vsel %vm847, %v3305, %v3307
        %v3319 = vsel %vm847, %v3307, %v3309
        %v3320 = vsel %vm847, %v3309, %v3311
        %v3321 = vsel %vm847, %v3311, %v3313
        %v3322 = vsel %vm847, %v3313, %v3315
        %v3332 = vsel %vm847, %v3315, %v3301
        %v3333 = vld [vmem:[#allocation5 + $0x140] sm:$0x3]
        %v3334 = vld [vmem:[#allocation5 + $0x148] sm:$0x3]
        %v3335 = vld [vmem:[#allocation5 + $0x150] sm:$0x3]
        %v3336 = vld [vmem:[#allocation5 + $0x158] sm:$0x3]
        %v3337 = vld [vmem:[#allocation5 + $0x160] sm:$0x3]
        %v3338 = vld [vmem:[#allocation5 + $0x168] sm:$0x3]
        %v3339 = vld [vmem:[#allocation5 + $0x170] sm:$0x3]
        %v3340 = vld [vmem:[#allocation5 + $0x178] sm:$0x3]
        %v3341 = vmul.f32 %v3316, %v3333
        %v3342 = vmul.f32 %v3317, %v3334
        %v3343 = vmul.f32 %v3318, %v3335
        %v3344 = vmul.f32 %v3319, %v3336
        %v3345 = vmul.f32 %v3320, %v3337
        %v3346 = vmul.f32 %v3321, %v3338
        %v3347 = vmul.f32 %v3322, %v3339
        %v3348 = vmul.f32 %v3332, %v3340
        %3349 = vrot.lane.b32.xlu0 %v3072, 113
        %v3350 = vpop.permute.xlu0 %3349
        %3351 = vrot.lane.b32.xlu0 %v3073, 113
        %v3352 = vpop.permute.xlu0 %3351
        %3353 = vrot.lane.b32.xlu0 %v3074, 113
        %v3354 = vpop.permute.xlu0 %3353
        %3355 = vrot.lane.b32.xlu0 %v3075, 113
        %v3356 = vpop.permute.xlu0 %3355
        %3357 = vrot.lane.b32.xlu0 %v3076, 113
        %v3358 = vpop.permute.xlu0 %3357
        %3359 = vrot.lane.b32.xlu0 %v3077, 113
        %v3360 = vpop.permute.xlu0 %3359
        %3361 = vrot.lane.b32.xlu0 %v3078, 113
        %v3362 = vpop.permute.xlu0 %3361
        %3363 = vrot.lane.b32.xlu0 %v3079, 113
        %v3364 = vpop.permute.xlu0 %3363
        %v3365 = vsel %vm910, %v3350, %v3352
        %v3366 = vsel %vm910, %v3352, %v3354
        %v3367 = vsel %vm910, %v3354, %v3356
        %v3368 = vsel %vm910, %v3356, %v3358
        %v3369 = vsel %vm910, %v3358, %v3360
        %v3370 = vsel %vm910, %v3360, %v3362
        %v3371 = vsel %vm910, %v3362, %v3364
        %v3381 = vsel %vm910, %v3364, %v3350
        %v3382 = vld [vmem:[#allocation5 + $0x180] sm:$0x3]
        %v3383 = vld [vmem:[#allocation5 + $0x188] sm:$0x3]
        %v3384 = vld [vmem:[#allocation5 + $0x190] sm:$0x3]
        %v3385 = vld [vmem:[#allocation5 + $0x198] sm:$0x3]
        %v3386 = vld [vmem:[#allocation5 + $0x1a0] sm:$0x3]
        %v3387 = vld [vmem:[#allocation5 + $0x1a8] sm:$0x3]
        %v3388 = vld [vmem:[#allocation5 + $0x1b0] sm:$0x3]
        %v3389 = vld [vmem:[#allocation5 + $0x1b8] sm:$0x3]
        %v3390 = vmul.f32 %v3365, %v3382
        %v3391 = vmul.f32 %v3366, %v3383
        %v3392 = vmul.f32 %v3367, %v3384
        %v3393 = vmul.f32 %v3368, %v3385
        %v3394 = vmul.f32 %v3369, %v3386
        %v3395 = vmul.f32 %v3370, %v3387
        %v3396 = vmul.f32 %v3371, %v3388
        %v3397 = vmul.f32 %v3381, %v3389
        %3398 = vrot.lane.b32.xlu0 %v3072, 112
        %v3399 = vpop.permute.xlu0 %3398
        %3400 = vrot.lane.b32.xlu0 %v3073, 112
        %v3401 = vpop.permute.xlu0 %3400
        %3402 = vrot.lane.b32.xlu0 %v3074, 112
        %v3403 = vpop.permute.xlu0 %3402
        %3404 = vrot.lane.b32.xlu0 %v3075, 112
        %v3405 = vpop.permute.xlu0 %3404
        %3406 = vrot.lane.b32.xlu0 %v3076, 112
        %v3407 = vpop.permute.xlu0 %3406
        %3408 = vrot.lane.b32.xlu0 %v3077, 112
        %v3409 = vpop.permute.xlu0 %3408
        %3410 = vrot.lane.b32.xlu0 %v3078, 112
        %v3411 = vpop.permute.xlu0 %3410
        %3412 = vrot.lane.b32.xlu0 %v3079, 112
        %v3413 = vpop.permute.xlu0 %3412
        %v3414 = vsel %vm973, %v3399, %v3401
        %v3415 = vsel %vm973, %v3401, %v3403
        %v3416 = vsel %vm973, %v3403, %v3405
        %v3417 = vsel %vm973, %v3405, %v3407
        %v3418 = vsel %vm973, %v3407, %v3409
        %v3419 = vsel %vm973, %v3409, %v3411
        %v3420 = vsel %vm973, %v3411, %v3413
        %v3430 = vsel %vm973, %v3413, %v3399
        %v3431 = vld [vmem:[#allocation5 + $0x1c0] sm:$0x3]
        %v3432 = vld [vmem:[#allocation5 + $0x1c8] sm:$0x3]
        %v3433 = vld [vmem:[#allocation5 + $0x1d0] sm:$0x3]
        %v3434 = vld [vmem:[#allocation5 + $0x1d8] sm:$0x3]
        %v3435 = vld [vmem:[#allocation5 + $0x1e0] sm:$0x3]
        %v3436 = vld [vmem:[#allocation5 + $0x1e8] sm:$0x3]
        %v3437 = vld [vmem:[#allocation5 + $0x1f0] sm:$0x3]
        %v3438 = vld [vmem:[#allocation5 + $0x1f8] sm:$0x3]
        %v3439 = vmul.f32 %v3414, %v3431
        %v3440 = vmul.f32 %v3415, %v3432
        %v3441 = vmul.f32 %v3416, %v3433
        %v3442 = vmul.f32 %v3417, %v3434
        %v3443 = vmul.f32 %v3418, %v3435
        %v3444 = vmul.f32 %v3419, %v3436
        %v3445 = vmul.f32 %v3420, %v3437
        %v3446 = vmul.f32 %v3430, %v3438
        %3447 = vrot.lane.b32.xlu0 %v3072, 111
        %v3448 = vpop.permute.xlu0 %3447
        %3449 = vrot.lane.b32.xlu0 %v3073, 111
        %v3450 = vpop.permute.xlu0 %3449
        %3451 = vrot.lane.b32.xlu0 %v3074, 111
        %v3452 = vpop.permute.xlu0 %3451
        %3453 = vrot.lane.b32.xlu0 %v3075, 111
        %v3454 = vpop.permute.xlu0 %3453
        %3455 = vrot.lane.b32.xlu0 %v3076, 111
        %v3456 = vpop.permute.xlu0 %3455
        %3457 = vrot.lane.b32.xlu0 %v3077, 111
        %v3458 = vpop.permute.xlu0 %3457
        %3459 = vrot.lane.b32.xlu0 %v3078, 111
        %v3460 = vpop.permute.xlu0 %3459
        %3461 = vrot.lane.b32.xlu0 %v3079, 111
        %v3462 = vpop.permute.xlu0 %3461
        %v3463 = vsel %vm1036, %v3448, %v3450
        %v3464 = vsel %vm1036, %v3450, %v3452
        %v3465 = vsel %vm1036, %v3452, %v3454
        %v3466 = vsel %vm1036, %v3454, %v3456
        %v3467 = vsel %vm1036, %v3456, %v3458
        %v3468 = vsel %vm1036, %v3458, %v3460
        %v3469 = vsel %vm1036, %v3460, %v3462
        %v3479 = vsel %vm1036, %v3462, %v3448
        %v3480 = vld [vmem:[#allocation5 + $0x200] sm:$0x3]
        %v3481 = vld [vmem:[#allocation5 + $0x208] sm:$0x3]
        %v3482 = vld [vmem:[#allocation5 + $0x210] sm:$0x3]
        %v3483 = vld [vmem:[#allocation5 + $0x218] sm:$0x3]
        %v3484 = vld [vmem:[#allocation5 + $0x220] sm:$0x3]
        %v3485 = vld [vmem:[#allocation5 + $0x228] sm:$0x3]
        %v3486 = vld [vmem:[#allocation5 + $0x230] sm:$0x3]
        %v3487 = vld [vmem:[#allocation5 + $0x238] sm:$0x3]
        %v3488 = vmul.f32 %v3463, %v3480
        %v3489 = vmul.f32 %v3464, %v3481
        %v3490 = vmul.f32 %v3465, %v3482
        %v3491 = vmul.f32 %v3466, %v3483
        %v3492 = vmul.f32 %v3467, %v3484
        %v3493 = vmul.f32 %v3468, %v3485
        %v3494 = vmul.f32 %v3469, %v3486
        %v3495 = vmul.f32 %v3479, %v3487
        %v3504 = vrot.slane %v3178, 6
        %v3505 = vrot.slane %v3179, 6
        %v3506 = vrot.slane %v3180, 6
        %v3507 = vrot.slane %v3181, 6
        %v3508 = vrot.slane %v3182, 6
        %v3509 = vrot.slane %v3183, 6
        %v3510 = vrot.slane %v3184, 6
        %v3511 = vrot.slane %v3185, 6
        %v3528 = vrot.slane %v3227, 4
        %v3529 = vrot.slane %v3228, 4
        %v3530 = vrot.slane %v3229, 4
        %v3531 = vrot.slane %v3230, 4
        %v3532 = vrot.slane %v3231, 4
        %v3533 = vrot.slane %v3232, 4
        %v3534 = vrot.slane %v3233, 4
        %v3535 = vrot.slane %v3234, 4
        %v3552 = vrot.slane %v3276, 2
        %v3553 = vrot.slane %v3277, 2
        %v3554 = vrot.slane %v3278, 2
        %v3555 = vrot.slane %v3279, 2
        %v3556 = vrot.slane %v3280, 2
        %v3557 = vrot.slane %v3281, 2
        %v3558 = vrot.slane %v3282, 2
        %v3559 = vrot.slane %v3283, 2
        %v3576 = vrot.slane %v3341, 6
        %v3577 = vrot.slane %v3342, 6
        %v3578 = vrot.slane %v3343, 6
        %v3579 = vrot.slane %v3344, 6
        %v3580 = vrot.slane %v3345, 6
        %v3581 = vrot.slane %v3346, 6
        %v3582 = vrot.slane %v3347, 6
        %v3583 = vrot.slane %v3348, 6
        %v3600 = vrot.slane %v3390, 4
        %v3601 = vrot.slane %v3391, 4
        %v3602 = vrot.slane %v3392, 4
        %v3603 = vrot.slane %v3393, 4
        %v3604 = vrot.slane %v3394, 4
        %v3605 = vrot.slane %v3395, 4
        %v3606 = vrot.slane %v3396, 4
        %v3607 = vrot.slane %v3397, 4
        %v3624 = vrot.slane %v3439, 2
        %v3625 = vrot.slane %v3440, 2
        %v3626 = vrot.slane %v3441, 2
        %v3627 = vrot.slane %v3442, 2
        %v3628 = vrot.slane %v3443, 2
        %v3629 = vrot.slane %v3444, 2
        %v3630 = vrot.slane %v3445, 2
        %v3631 = vrot.slane %v3446, 2
        %v3640 = vsel %vm1253, %v3129, %v3504
        %v3641 = vsel %vm1253, %v3130, %v3505
        %v3642 = vsel %vm1253, %v3131, %v3506
        %v3643 = vsel %vm1253, %v3132, %v3507
        %v3644 = vsel %vm1253, %v3133, %v3508
        %v3645 = vsel %vm1253, %v3134, %v3509
        %v3646 = vsel %vm1253, %v3135, %v3510
        %v3647 = vsel %vm1253, %v3136, %v3511
        %v3648 = vsel %vm1271, %v3640, %v3528
        %v3649 = vsel %vm1271, %v3641, %v3529
        %v3650 = vsel %vm1271, %v3642, %v3530
        %v3651 = vsel %vm1271, %v3643, %v3531
        %v3652 = vsel %vm1271, %v3644, %v3532
        %v3653 = vsel %vm1271, %v3645, %v3533
        %v3654 = vsel %vm1271, %v3646, %v3534
        %v3655 = vsel %vm1271, %v3647, %v3535
        %v3656 = vsel %vm1289, %v3648, %v3552
        %v3657 = vsel %vm1289, %v3649, %v3553
        %v3658 = vsel %vm1289, %v3650, %v3554
        %v3659 = vsel %vm1289, %v3651, %v3555
        %v3660 = vsel %vm1289, %v3652, %v3556
        %v3661 = vsel %vm1289, %v3653, %v3557
        %v3662 = vsel %vm1289, %v3654, %v3558
        %v3663 = vsel %vm1289, %v3655, %v3559
        %v3664 = vsel %vm1253, %v3292, %v3576
        %v3665 = vsel %vm1253, %v3293, %v3577
        %v3666 = vsel %vm1253, %v3294, %v3578
        %v3667 = vsel %vm1253, %v3295, %v3579
        %v3668 = vsel %vm1253, %v3296, %v3580
        %v3669 = vsel %vm1253, %v3297, %v3581
        %v3670 = vsel %vm1253, %v3298, %v3582
        %v3671 = vsel %vm1253, %v3299, %v3583
        %v3672 = vsel %vm1271, %v3664, %v3600
        %v3673 = vsel %vm1271, %v3665, %v3601
        %v3674 = vsel %vm1271, %v3666, %v3602
        %v3675 = vsel %vm1271, %v3667, %v3603
        %v3676 = vsel %vm1271, %v3668, %v3604
        %v3677 = vsel %vm1271, %v3669, %v3605
        %v3678 = vsel %vm1271, %v3670, %v3606
        %v3679 = vsel %vm1271, %v3671, %v3607
        %v3680 = vsel %vm1289, %v3672, %v3624
        %v3681 = vsel %vm1289, %v3673, %v3625
        %v3682 = vsel %vm1289, %v3674, %v3626
        %v3683 = vsel %vm1289, %v3675, %v3627
        %v3684 = vsel %vm1289, %v3676, %v3628
        %v3685 = vsel %vm1289, %v3677, %v3629
        %v3686 = vsel %vm1289, %v3678, %v3630
        %v3687 = vsel %vm1289, %v3679, %v3631
        %v3688 = vld [vmem:[%s9] sm:$0xff]
        %v3689 = vld [vmem:[%s10] sm:$0xff]
        %3691 = vset.pattern.permute.xlu0 0
        %3692 = vperm.xlu0 %3691, %v3689
        %v3693 = vpop.permute.xlu0 %3692
        %vm3695 = vcmask 146432
        %v3697 = vsel %vm3695, %v3688, 0
        %v3700 = vsel %vm1253, %v3488, 0
        %v3703 = vsel %vm1253, %v3489, 0
        %v3706 = vsel %vm1253, %v3490, 0
        %v3709 = vsel %vm1253, %v3491, 0
        %v3712 = vsel %vm1253, %v3492, 0
        %v3715 = vsel %vm1253, %v3493, 0
        %v3718 = vsel %vm1253, %v3494, 0
        %v3721 = vsel %vm1253, %v3495, 0
        %3723 = vmatpush.msra.mxu0 0.0
        %3724 = vmatpush.msra.mxu0 0.0
        %3725 = vmatpush.msra.mxu0 0.0
        %3726 = vmatpush.msra.mxu0 0.0
        %3727 = vmatpush.msra.mxu0 0.0
        %3728 = vmatpush.msra.mxu0 0.0
        %3729 = vmatpush.msra.mxu0 0.0
        %3730 = vmatpush.msra.mxu0 0.0
        %3731 = vmatpush.msra.mxu0 0.0
        %3732 = vmatpush.msra.mxu0 0.0
        %3733 = vmatpush.msra.mxu0 0.0
        %3734 = vmatpush.msra.mxu0 0.0
        %3735 = vmatpush.msra.mxu0 0.0
        %3736 = vmatpush.msra.mxu0 %v3700
        %3737 = vmatpush.msra.mxu0 %v3680
        %3738 = vmatpush.msra.mxu0 %v3656
        %3739 = vmatmul.f32.gmra.mxu0 %v3697
        %v3740 = vpop.f32.mrf.mxu0
        %v3741 = vadd.f32 %v3693, %v3740
        %3742 = vdwg.mxu0
        %3743 = vmatpush.msra.mxu0 0.0
        %3744 = vmatpush.msra.mxu0 0.0
        %3745 = vmatpush.msra.mxu0 0.0
        %3746 = vmatpush.msra.mxu0 0.0
        %3747 = vmatpush.msra.mxu0 0.0
        %3748 = vmatpush.msra.mxu0 0.0
        %3749 = vmatpush.msra.mxu0 0.0
        %3750 = vmatpush.msra.mxu0 0.0
        %3751 = vmatpush.msra.mxu0 0.0
        %3752 = vmatpush.msra.mxu0 0.0
        %3753 = vmatpush.msra.mxu0 0.0
        %3754 = vmatpush.msra.mxu0 0.0
        %3755 = vmatpush.msra.mxu0 0.0
        %3756 = vmatpush.msra.mxu0 %v3703
        %3757 = vmatpush.msra.mxu0 %v3681
        %3758 = vmatpush.msra.mxu0 %v3657
        %3759 = vmatmul.f32.gmra.mxu0 %v3697
        %v3760 = vpop.f32.mrf.mxu0
        %v3761 = vadd.f32 %v3693, %v3760
        %3762 = vdwg.mxu0
        %3763 = vmatpush.msra.mxu0 0.0
        %3764 = vmatpush.msra.mxu0 0.0
        %3765 = vmatpush.msra.mxu0 0.0
        %3766 = vmatpush.msra.mxu0 0.0
        %3767 = vmatpush.msra.mxu0 0.0
        %3768 = vmatpush.msra.mxu0 0.0
        %3769 = vmatpush.msra.mxu0 0.0
        %3770 = vmatpush.msra.mxu0 0.0
        %3771 = vmatpush.msra.mxu0 0.0
        %3772 = vmatpush.msra.mxu0 0.0
        %3773 = vmatpush.msra.mxu0 0.0
        %3774 = vmatpush.msra.mxu0 0.0
        %3775 = vmatpush.msra.mxu0 0.0
        %3776 = vmatpush.msra.mxu0 %v3706
        %3777 = vmatpush.msra.mxu0 %v3682
        %3778 = vmatpush.msra.mxu0 %v3658
        %3779 = vmatmul.f32.gmra.mxu0 %v3697
        %v3780 = vpop.f32.mrf.mxu0
        %v3781 = vadd.f32 %v3693, %v3780
        %3782 = vdwg.mxu0
        %3783 = vmatpush.msra.mxu0 0.0
        %3784 = vmatpush.msra.mxu0 0.0
        %3785 = vmatpush.msra.mxu0 0.0
        %3786 = vmatpush.msra.mxu0 0.0
        %3787 = vmatpush.msra.mxu0 0.0
        %3788 = vmatpush.msra.mxu0 0.0
        %3789 = vmatpush.msra.mxu0 0.0
        %3790 = vmatpush.msra.mxu0 0.0
        %3791 = vmatpush.msra.mxu0 0.0
        %3792 = vmatpush.msra.mxu0 0.0
        %3793 = vmatpush.msra.mxu0 0.0
        %3794 = vmatpush.msra.mxu0 0.0
        %3795 = vmatpush.msra.mxu0 0.0
        %3796 = vmatpush.msra.mxu0 %v3709
        %3797 = vmatpush.msra.mxu0 %v3683
        %3798 = vmatpush.msra.mxu0 %v3659
        %3799 = vmatmul.f32.gmra.mxu0 %v3697
        %v3800 = vpop.f32.mrf.mxu0
        %v3801 = vadd.f32 %v3693, %v3800
        %3802 = vdwg.mxu0
        %3803 = vmatpush.msra.mxu0 0.0
        %3804 = vmatpush.msra.mxu0 0.0
        %3805 = vmatpush.msra.mxu0 0.0
        %3806 = vmatpush.msra.mxu0 0.0
        %3807 = vmatpush.msra.mxu0 0.0
        %3808 = vmatpush.msra.mxu0 0.0
        %3809 = vmatpush.msra.mxu0 0.0
        %3810 = vmatpush.msra.mxu0 0.0
        %3811 = vmatpush.msra.mxu0 0.0
        %3812 = vmatpush.msra.mxu0 0.0
        %3813 = vmatpush.msra.mxu0 0.0
        %3814 = vmatpush.msra.mxu0 0.0
        %3815 = vmatpush.msra.mxu0 0.0
        %3816 = vmatpush.msra.mxu0 %v3712
        %3817 = vmatpush.msra.mxu0 %v3684
        %3818 = vmatpush.msra.mxu0 %v3660
        %3819 = vmatmul.f32.gmra.mxu0 %v3697
        %v3820 = vpop.f32.mrf.mxu0
        %v3821 = vadd.f32 %v3693, %v3820
        %3822 = vdwg.mxu0
        %3823 = vmatpush.msra.mxu0 0.0
        %3824 = vmatpush.msra.mxu0 0.0
        %3825 = vmatpush.msra.mxu0 0.0
        %3826 = vmatpush.msra.mxu0 0.0
        %3827 = vmatpush.msra.mxu0 0.0
        %3828 = vmatpush.msra.mxu0 0.0
        %3829 = vmatpush.msra.mxu0 0.0
        %3830 = vmatpush.msra.mxu0 0.0
        %3831 = vmatpush.msra.mxu0 0.0
        %3832 = vmatpush.msra.mxu0 0.0
        %3833 = vmatpush.msra.mxu0 0.0
        %3834 = vmatpush.msra.mxu0 0.0
        %3835 = vmatpush.msra.mxu0 0.0
        %3836 = vmatpush.msra.mxu0 %v3715
        %3837 = vmatpush.msra.mxu0 %v3685
        %3838 = vmatpush.msra.mxu0 %v3661
        %3839 = vmatmul.f32.gmra.mxu0 %v3697
        %v3840 = vpop.f32.mrf.mxu0
        %v3841 = vadd.f32 %v3693, %v3840
        %3842 = vdwg.mxu0
        %3843 = vmatpush.msra.mxu0 0.0
        %3844 = vmatpush.msra.mxu0 0.0
        %3845 = vmatpush.msra.mxu0 0.0
        %3846 = vmatpush.msra.mxu0 0.0
        %3847 = vmatpush.msra.mxu0 0.0
        %3848 = vmatpush.msra.mxu0 0.0
        %3849 = vmatpush.msra.mxu0 0.0
        %3850 = vmatpush.msra.mxu0 0.0
        %3851 = vmatpush.msra.mxu0 0.0
        %3852 = vmatpush.msra.mxu0 0.0
        %3853 = vmatpush.msra.mxu0 0.0
        %3854 = vmatpush.msra.mxu0 0.0
        %3855 = vmatpush.msra.mxu0 0.0
        %3856 = vmatpush.msra.mxu0 %v3718
        %3857 = vmatpush.msra.mxu0 %v3686
        %3858 = vmatpush.msra.mxu0 %v3662
        %3859 = vmatmul.f32.gmra.mxu0 %v3697
        %v3860 = vpop.f32.mrf.mxu0
        %v3861 = vadd.f32 %v3693, %v3860
        %3862 = vdwg.mxu0
        %3863 = vmatpush.msra.mxu0 0.0
        %3864 = vmatpush.msra.mxu0 0.0
        %3865 = vmatpush.msra.mxu0 0.0
        %3866 = vmatpush.msra.mxu0 0.0
        %3867 = vmatpush.msra.mxu0 0.0
        %3868 = vmatpush.msra.mxu0 0.0
        %3869 = vmatpush.msra.mxu0 0.0
        %3870 = vmatpush.msra.mxu0 0.0
        %3871 = vmatpush.msra.mxu0 0.0
        %3872 = vmatpush.msra.mxu0 0.0
        %3873 = vmatpush.msra.mxu0 0.0
        %3874 = vmatpush.msra.mxu0 0.0
        %3875 = vmatpush.msra.mxu0 0.0
        %3876 = vmatpush.msra.mxu0 %v3721
        %3877 = vmatpush.msra.mxu0 %v3687
        %3878 = vmatpush.msra.mxu0 %v3663
        %3879 = vmatmul.f32.gmra.mxu0 %v3697
        %v3880 = vpop.f32.mrf.mxu0
        %v3881 = vadd.f32 %v3693, %v3880
        %3882 = vdwg.mxu0
        %vm3883 = vcmp.ge.f32.partialorder %v3741, 0.0
        %vm3884 = vcmp.ge.f32.partialorder %v3761, 0.0
        %vm3885 = vcmp.ge.f32.partialorder %v3781, 0.0
        %vm3886 = vcmp.ge.f32.partialorder %v3801, 0.0
        %vm3887 = vcmp.ge.f32.partialorder %v3821, 0.0
        %vm3888 = vcmp.ge.f32.partialorder %v3841, 0.0
        %vm3889 = vcmp.ge.f32.partialorder %v3861, 0.0
        %vm3890 = vcmp.ge.f32.partialorder %v3881, 0.0
        %v3891 = vmul.f32 %v3741, 0.2
        %v3892 = vmul.f32 %v3761, 0.2
        %v3893 = vmul.f32 %v3781, 0.2
        %v3894 = vmul.f32 %v3801, 0.2
        %v3895 = vmul.f32 %v3821, 0.2
        %v3896 = vmul.f32 %v3841, 0.2
        %v3897 = vmul.f32 %v3861, 0.2
        %v3898 = vmul.f32 %v3881, 0.2
        %v3899 = vsel %vm3883, %v3741, %v3891
        %v3900 = vsel %vm3884, %v3761, %v3892
        %v3901 = vsel %vm3885, %v3781, %v3893
        %v3902 = vsel %vm3886, %v3801, %v3894
        %v3903 = vsel %vm3887, %v3821, %v3895
        %v3904 = vsel %vm3888, %v3841, %v3896
        %v3905 = vsel %vm3889, %v3861, %v3897
        %v3906 = vsel %vm3890, %v3881, %v3898
        %3908 = vrot.lane.b32.xlu0 %v3906, 17
        %v3909 = vpop.permute.xlu0 %3908
        %3918 = vrot.lane.b32.xlu0 %v3899, 17
        %v3919 = vpop.permute.xlu0 %3918
        %3920 = vrot.lane.b32.xlu0 %v3900, 17
        %v3921 = vpop.permute.xlu0 %3920
        %3922 = vrot.lane.b32.xlu0 %v3901, 17
        %v3923 = vpop.permute.xlu0 %3922
        %3924 = vrot.lane.b32.xlu0 %v3902, 17
        %v3925 = vpop.permute.xlu0 %3924
        %3926 = vrot.lane.b32.xlu0 %v3903, 17
        %v3927 = vpop.permute.xlu0 %3926
        %3928 = vrot.lane.b32.xlu0 %v3904, 17
        %v3929 = vpop.permute.xlu0 %3928
        %3930 = vrot.lane.b32.xlu0 %v3905, 17
        %v3931 = vpop.permute.xlu0 %3930
        %v3932 = vsel %vm592, %v3919, %v3921
        %v3933 = vsel %vm592, %v3921, %v3923
        %v3934 = vsel %vm592, %v3923, %v3925
        %v3935 = vsel %vm592, %v3925, %v3927
        %v3936 = vsel %vm592, %v3927, %v3929
        %v3937 = vsel %vm592, %v3929, %v3931
        %v3938 = vsel %vm592, %v3931, %v3909
        %v3947 = vsel %vm592, %v3909, %v3919
        %v3948 = vld [vmem:[#allocation5] sm:$0xff]
        %v3949 = vld [vmem:[#allocation5 + $0x8] sm:$0xff]
        %v3950 = vld [vmem:[#allocation5 + $0x10] sm:$0xff]
        %v3951 = vld [vmem:[#allocation5 + $0x18] sm:$0xff]
        %v3952 = vld [vmem:[#allocation5 + $0x20] sm:$0xff]
        %v3953 = vld [vmem:[#allocation5 + $0x28] sm:$0xff]
        %v3954 = vld [vmem:[#allocation5 + $0x30] sm:$0xff]
        %v3955 = vld [vmem:[#allocation5 + $0x38] sm:$0xff]
        %v3956 = vmul.f32 %v3947, %v3948
        %v3957 = vmul.f32 %v3932, %v3949
        %v3958 = vmul.f32 %v3933, %v3950
        %v3959 = vmul.f32 %v3934, %v3951
        %v3960 = vmul.f32 %v3935, %v3952
        %v3961 = vmul.f32 %v3936, %v3953
        %v3962 = vmul.f32 %v3937, %v3954
        %v3963 = vmul.f32 %v3938, %v3955
        %3964 = vst [vmem:[#allocation2] sm:$0xff] %v3956
        %3965 = vst [vmem:[#allocation2 + $0x8] sm:$0xff] %v3957
        %3966 = vst [vmem:[#allocation2 + $0x10] sm:$0xff] %v3958
        %3967 = vst [vmem:[#allocation2 + $0x18] sm:$0xff] %v3959
        %3968 = vst [vmem:[#allocation2 + $0x20] sm:$0xff] %v3960
        %3969 = vst [vmem:[#allocation2 + $0x28] sm:$0xff] %v3961
        %3970 = vst [vmem:[#allocation2 + $0x30] sm:$0xff] %v3962
        %3971 = vst [vmem:[#allocation2 + $0x38] sm:$0xff] %v3963
        %3972 = vrot.lane.b32.xlu0 %v3906, 16
        %v3973 = vpop.permute.xlu0 %3972
        %3975 = vrot.lane.b32.xlu0 %v3899, 16
        %v3976 = vpop.permute.xlu0 %3975
        %3977 = vrot.lane.b32.xlu0 %v3900, 16
        %v3978 = vpop.permute.xlu0 %3977
        %3979 = vrot.lane.b32.xlu0 %v3901, 16
        %v3980 = vpop.permute.xlu0 %3979
        %3981 = vrot.lane.b32.xlu0 %v3902, 16
        %v3982 = vpop.permute.xlu0 %3981
        %3983 = vrot.lane.b32.xlu0 %v3903, 16
        %v3984 = vpop.permute.xlu0 %3983
        %3985 = vrot.lane.b32.xlu0 %v3904, 16
        %v3986 = vpop.permute.xlu0 %3985
        %3987 = vrot.lane.b32.xlu0 %v3905, 16
        %v3988 = vpop.permute.xlu0 %3987
        %v3989 = vsel %vm654, %v3976, %v3978
        %v3990 = vsel %vm654, %v3978, %v3980
        %v3991 = vsel %vm654, %v3980, %v3982
        %v3992 = vsel %vm654, %v3982, %v3984
        %v3993 = vsel %vm654, %v3984, %v3986
        %v3994 = vsel %vm654, %v3986, %v3988
        %v3995 = vsel %vm654, %v3988, %v3973
        %v4004 = vsel %vm654, %v3973, %v3976
        %v4005 = vld [vmem:[#allocation5 + $0x40] sm:$0xff]
        %v4006 = vld [vmem:[#allocation5 + $0x48] sm:$0xff]
        %v4007 = vld [vmem:[#allocation5 + $0x50] sm:$0xff]
        %v4008 = vld [vmem:[#allocation5 + $0x58] sm:$0xff]
        %v4009 = vld [vmem:[#allocation5 + $0x60] sm:$0xff]
        %v4010 = vld [vmem:[#allocation5 + $0x68] sm:$0xff]
        %v4011 = vld [vmem:[#allocation5 + $0x70] sm:$0xff]
        %v4012 = vld [vmem:[#allocation5 + $0x78] sm:$0xff]
        %v4013 = vmul.f32 %v4004, %v4005
        %v4014 = vmul.f32 %v3989, %v4006
        %v4015 = vmul.f32 %v3990, %v4007
        %v4016 = vmul.f32 %v3991, %v4008
        %v4017 = vmul.f32 %v3992, %v4009
        %v4018 = vmul.f32 %v3993, %v4010
        %v4019 = vmul.f32 %v3994, %v4011
        %v4020 = vmul.f32 %v3995, %v4012
        %4021 = vst [vmem:[#allocation2 + $0x40] sm:$0xff] %v4013
        %4022 = vst [vmem:[#allocation2 + $0x48] sm:$0xff] %v4014
        %4023 = vst [vmem:[#allocation2 + $0x50] sm:$0xff] %v4015
        %4024 = vst [vmem:[#allocation2 + $0x58] sm:$0xff] %v4016
        %4025 = vst [vmem:[#allocation2 + $0x60] sm:$0xff] %v4017
        %4026 = vst [vmem:[#allocation2 + $0x68] sm:$0xff] %v4018
        %4027 = vst [vmem:[#allocation2 + $0x70] sm:$0xff] %v4019
        %4028 = vst [vmem:[#allocation2 + $0x78] sm:$0xff] %v4020
        %4029 = vrot.lane.b32.xlu0 %v3906, 15
        %v4030 = vpop.permute.xlu0 %4029
        %4032 = vrot.lane.b32.xlu0 %v3899, 15
        %v4033 = vpop.permute.xlu0 %4032
        %4034 = vrot.lane.b32.xlu0 %v3900, 15
        %v4035 = vpop.permute.xlu0 %4034
        %4036 = vrot.lane.b32.xlu0 %v3901, 15
        %v4037 = vpop.permute.xlu0 %4036
        %4038 = vrot.lane.b32.xlu0 %v3902, 15
        %v4039 = vpop.permute.xlu0 %4038
        %4040 = vrot.lane.b32.xlu0 %v3903, 15
        %v4041 = vpop.permute.xlu0 %4040
        %4042 = vrot.lane.b32.xlu0 %v3904, 15
        %v4043 = vpop.permute.xlu0 %4042
        %4044 = vrot.lane.b32.xlu0 %v3905, 15
        %v4045 = vpop.permute.xlu0 %4044
        %v4046 = vsel %vm717, %v4033, %v4035
        %v4047 = vsel %vm717, %v4035, %v4037
        %v4048 = vsel %vm717, %v4037, %v4039
        %v4049 = vsel %vm717, %v4039, %v4041
        %v4050 = vsel %vm717, %v4041, %v4043
        %v4051 = vsel %vm717, %v4043, %v4045
        %v4052 = vsel %vm717, %v4045, %v4030
        %v4061 = vsel %vm717, %v4030, %v4033
        %v4062 = vld [vmem:[#allocation5 + $0x80] sm:$0xff]
        %v4063 = vld [vmem:[#allocation5 + $0x88] sm:$0xff]
        %v4064 = vld [vmem:[#allocation5 + $0x90] sm:$0xff]
        %v4065 = vld [vmem:[#allocation5 + $0x98] sm:$0xff]
        %v4066 = vld [vmem:[#allocation5 + $0xa0] sm:$0xff]
        %v4067 = vld [vmem:[#allocation5 + $0xa8] sm:$0xff]
        %v4068 = vld [vmem:[#allocation5 + $0xb0] sm:$0xff]
        %v4069 = vld [vmem:[#allocation5 + $0xb8] sm:$0xff]
        %v4070 = vmul.f32 %v4061, %v4062
        %v4071 = vmul.f32 %v4046, %v4063
        %v4072 = vmul.f32 %v4047, %v4064
        %v4073 = vmul.f32 %v4048, %v4065
        %v4074 = vmul.f32 %v4049, %v4066
        %v4075 = vmul.f32 %v4050, %v4067
        %v4076 = vmul.f32 %v4051, %v4068
        %v4077 = vmul.f32 %v4052, %v4069
        %4078 = vst [vmem:[#allocation2 + $0x80] sm:$0xff] %v4070
        %4079 = vst [vmem:[#allocation2 + $0x88] sm:$0xff] %v4071
        %4080 = vst [vmem:[#allocation2 + $0x90] sm:$0xff] %v4072
        %4081 = vst [vmem:[#allocation2 + $0x98] sm:$0xff] %v4073
        %4082 = vst [vmem:[#allocation2 + $0xa0] sm:$0xff] %v4074
        %4083 = vst [vmem:[#allocation2 + $0xa8] sm:$0xff] %v4075
        %4084 = vst [vmem:[#allocation2 + $0xb0] sm:$0xff] %v4076
        %4085 = vst [vmem:[#allocation2 + $0xb8] sm:$0xff] %v4077
        %4086 = vrot.lane.b32.xlu0 %v3906, 1
        %v4087 = vpop.permute.xlu0 %4086
        %4089 = vrot.lane.b32.xlu0 %v3899, 1
        %v4090 = vpop.permute.xlu0 %4089
        %4091 = vrot.lane.b32.xlu0 %v3900, 1
        %v4092 = vpop.permute.xlu0 %4091
        %4093 = vrot.lane.b32.xlu0 %v3901, 1
        %v4094 = vpop.permute.xlu0 %4093
        %4095 = vrot.lane.b32.xlu0 %v3902, 1
        %v4096 = vpop.permute.xlu0 %4095
        %4097 = vrot.lane.b32.xlu0 %v3903, 1
        %v4098 = vpop.permute.xlu0 %4097
        %4099 = vrot.lane.b32.xlu0 %v3904, 1
        %v4100 = vpop.permute.xlu0 %4099
        %4101 = vrot.lane.b32.xlu0 %v3905, 1
        %v4102 = vpop.permute.xlu0 %4101
        %v4103 = vsel %vm780, %v4090, %v4092
        %v4104 = vsel %vm780, %v4092, %v4094
        %v4105 = vsel %vm780, %v4094, %v4096
        %v4106 = vsel %vm780, %v4096, %v4098
        %v4107 = vsel %vm780, %v4098, %v4100
        %v4108 = vsel %vm780, %v4100, %v4102
        %v4109 = vsel %vm780, %v4102, %v4087
        %v4118 = vsel %vm780, %v4087, %v4090
        %v4119 = vld [vmem:[#allocation5 + $0xc0] sm:$0xff]
        %v4120 = vld [vmem:[#allocation5 + $0xc8] sm:$0xff]
        %v4121 = vld [vmem:[#allocation5 + $0xd0] sm:$0xff]
        %v4122 = vld [vmem:[#allocation5 + $0xd8] sm:$0xff]
        %v4123 = vld [vmem:[#allocation5 + $0xe0] sm:$0xff]
        %v4124 = vld [vmem:[#allocation5 + $0xe8] sm:$0xff]
        %v4125 = vld [vmem:[#allocation5 + $0xf0] sm:$0xff]
        %v4126 = vld [vmem:[#allocation5 + $0xf8] sm:$0xff]
        %v4127 = vmul.f32 %v4118, %v4119
        %v4128 = vmul.f32 %v4103, %v4120
        %v4129 = vmul.f32 %v4104, %v4121
        %v4130 = vmul.f32 %v4105, %v4122
        %v4131 = vmul.f32 %v4106, %v4123
        %v4132 = vmul.f32 %v4107, %v4124
        %v4133 = vmul.f32 %v4108, %v4125
        %v4134 = vmul.f32 %v4109, %v4126
        %4135 = vst [vmem:[#allocation2 + $0xc0] sm:$0xff] %v4127
        %4136 = vst [vmem:[#allocation2 + $0xc8] sm:$0xff] %v4128
        %4137 = vst [vmem:[#allocation2 + $0xd0] sm:$0xff] %v4129
        %4138 = vst [vmem:[#allocation2 + $0xd8] sm:$0xff] %v4130
        %4139 = vst [vmem:[#allocation2 + $0xe0] sm:$0xff] %v4131
        %4140 = vst [vmem:[#allocation2 + $0xe8] sm:$0xff] %v4132
        %4141 = vst [vmem:[#allocation2 + $0xf0] sm:$0xff] %v4133
        %4142 = vst [vmem:[#allocation2 + $0xf8] sm:$0xff] %v4134
        %v4143 = vld [vmem:[#allocation5 + $0x100] sm:$0xff]
        %v4144 = vld [vmem:[#allocation5 + $0x108] sm:$0xff]
        %v4145 = vld [vmem:[#allocation5 + $0x110] sm:$0xff]
        %v4146 = vld [vmem:[#allocation5 + $0x118] sm:$0xff]
        %v4147 = vld [vmem:[#allocation5 + $0x120] sm:$0xff]
        %v4148 = vld [vmem:[#allocation5 + $0x128] sm:$0xff]
        %v4149 = vld [vmem:[#allocation5 + $0x130] sm:$0xff]
        %v4150 = vld [vmem:[#allocation5 + $0x138] sm:$0xff]
        %v4151 = vmul.f32 %v3899, %v4143
        %v4152 = vmul.f32 %v3900, %v4144
        %v4153 = vmul.f32 %v3901, %v4145
        %v4154 = vmul.f32 %v3902, %v4146
        %v4155 = vmul.f32 %v3903, %v4147
        %v4156 = vmul.f32 %v3904, %v4148
        %v4157 = vmul.f32 %v3905, %v4149
        %v4158 = vmul.f32 %v3906, %v4150
        %4159 = vst [vmem:[#allocation2 + $0x100] sm:$0xff] %v4151
        %4160 = vst [vmem:[#allocation2 + $0x108] sm:$0xff] %v4152
        %4161 = vst [vmem:[#allocation2 + $0x110] sm:$0xff] %v4153
        %4162 = vst [vmem:[#allocation2 + $0x118] sm:$0xff] %v4154
        %4163 = vst [vmem:[#allocation2 + $0x120] sm:$0xff] %v4155
        %4164 = vst [vmem:[#allocation2 + $0x128] sm:$0xff] %v4156
        %4165 = vst [vmem:[#allocation2 + $0x130] sm:$0xff] %v4157
        %4166 = vst [vmem:[#allocation2 + $0x138] sm:$0xff] %v4158
        %4167 = vrot.lane.b32.xlu0 %v3899, 127
        %v4168 = vpop.permute.xlu0 %4167
        %4169 = vrot.lane.b32.xlu0 %v3900, 127
        %v4170 = vpop.permute.xlu0 %4169
        %4171 = vrot.lane.b32.xlu0 %v3901, 127
        %v4172 = vpop.permute.xlu0 %4171
        %4173 = vrot.lane.b32.xlu0 %v3902, 127
        %v4174 = vpop.permute.xlu0 %4173
        %4175 = vrot.lane.b32.xlu0 %v3903, 127
        %v4176 = vpop.permute.xlu0 %4175
        %4177 = vrot.lane.b32.xlu0 %v3904, 127
        %v4178 = vpop.permute.xlu0 %4177
        %4179 = vrot.lane.b32.xlu0 %v3905, 127
        %v4180 = vpop.permute.xlu0 %4179
        %4181 = vrot.lane.b32.xlu0 %v3906, 127
        %v4182 = vpop.permute.xlu0 %4181
        %v4183 = vsel %vm847, %v4168, %v4170
        %v4184 = vsel %vm847, %v4170, %v4172
        %v4185 = vsel %vm847, %v4172, %v4174
        %v4186 = vsel %vm847, %v4174, %v4176
        %v4187 = vsel %vm847, %v4176, %v4178
        %v4188 = vsel %vm847, %v4178, %v4180
        %v4189 = vsel %vm847, %v4180, %v4182
        %v4199 = vsel %vm847, %v4182, %v4168
        %v4200 = vld [vmem:[#allocation5 + $0x140] sm:$0xff]
        %v4201 = vld [vmem:[#allocation5 + $0x148] sm:$0xff]
        %v4202 = vld [vmem:[#allocation5 + $0x150] sm:$0xff]
        %v4203 = vld [vmem:[#allocation5 + $0x158] sm:$0xff]
        %v4204 = vld [vmem:[#allocation5 + $0x160] sm:$0xff]
        %v4205 = vld [vmem:[#allocation5 + $0x168] sm:$0xff]
        %v4206 = vld [vmem:[#allocation5 + $0x170] sm:$0xff]
        %v4207 = vld [vmem:[#allocation5 + $0x178] sm:$0xff]
        %v4208 = vmul.f32 %v4183, %v4200
        %v4209 = vmul.f32 %v4184, %v4201
        %v4210 = vmul.f32 %v4185, %v4202
        %v4211 = vmul.f32 %v4186, %v4203
        %v4212 = vmul.f32 %v4187, %v4204
        %v4213 = vmul.f32 %v4188, %v4205
        %v4214 = vmul.f32 %v4189, %v4206
        %v4215 = vmul.f32 %v4199, %v4207
        %4216 = vst [vmem:[#allocation2 + $0x140] sm:$0xff] %v4208
        %4217 = vst [vmem:[#allocation2 + $0x148] sm:$0xff] %v4209
        %4218 = vst [vmem:[#allocation2 + $0x150] sm:$0xff] %v4210
        %4219 = vst [vmem:[#allocation2 + $0x158] sm:$0xff] %v4211
        %4220 = vst [vmem:[#allocation2 + $0x160] sm:$0xff] %v4212
        %4221 = vst [vmem:[#allocation2 + $0x168] sm:$0xff] %v4213
        %4222 = vst [vmem:[#allocation2 + $0x170] sm:$0xff] %v4214
        %4223 = vst [vmem:[#allocation2 + $0x178] sm:$0xff] %v4215
        %4224 = vrot.lane.b32.xlu0 %v3899, 113
        %v4225 = vpop.permute.xlu0 %4224
        %4226 = vrot.lane.b32.xlu0 %v3900, 113
        %v4227 = vpop.permute.xlu0 %4226
        %4228 = vrot.lane.b32.xlu0 %v3901, 113
        %v4229 = vpop.permute.xlu0 %4228
        %4230 = vrot.lane.b32.xlu0 %v3902, 113
        %v4231 = vpop.permute.xlu0 %4230
        %4232 = vrot.lane.b32.xlu0 %v3903, 113
        %v4233 = vpop.permute.xlu0 %4232
        %4234 = vrot.lane.b32.xlu0 %v3904, 113
        %v4235 = vpop.permute.xlu0 %4234
        %4236 = vrot.lane.b32.xlu0 %v3905, 113
        %v4237 = vpop.permute.xlu0 %4236
        %4238 = vrot.lane.b32.xlu0 %v3906, 113
        %v4239 = vpop.permute.xlu0 %4238
        %v4240 = vsel %vm910, %v4225, %v4227
        %v4241 = vsel %vm910, %v4227, %v4229
        %v4242 = vsel %vm910, %v4229, %v4231
        %v4243 = vsel %vm910, %v4231, %v4233
        %v4244 = vsel %vm910, %v4233, %v4235
        %v4245 = vsel %vm910, %v4235, %v4237
        %v4246 = vsel %vm910, %v4237, %v4239
        %v4256 = vsel %vm910, %v4239, %v4225
        %v4257 = vld [vmem:[#allocation5 + $0x180] sm:$0xff]
        %v4258 = vld [vmem:[#allocation5 + $0x188] sm:$0xff]
        %v4259 = vld [vmem:[#allocation5 + $0x190] sm:$0xff]
        %v4260 = vld [vmem:[#allocation5 + $0x198] sm:$0xff]
        %v4261 = vld [vmem:[#allocation5 + $0x1a0] sm:$0xff]
        %v4262 = vld [vmem:[#allocation5 + $0x1a8] sm:$0xff]
        %v4263 = vld [vmem:[#allocation5 + $0x1b0] sm:$0xff]
        %v4264 = vld [vmem:[#allocation5 + $0x1b8] sm:$0xff]
        %v4265 = vmul.f32 %v4240, %v4257
        %v4266 = vmul.f32 %v4241, %v4258
        %v4267 = vmul.f32 %v4242, %v4259
        %v4268 = vmul.f32 %v4243, %v4260
        %v4269 = vmul.f32 %v4244, %v4261
        %v4270 = vmul.f32 %v4245, %v4262
        %v4271 = vmul.f32 %v4246, %v4263
        %v4272 = vmul.f32 %v4256, %v4264
        %4273 = vst [vmem:[#allocation2 + $0x180] sm:$0xff] %v4265
        %4274 = vst [vmem:[#allocation2 + $0x188] sm:$0xff] %v4266
        %4275 = vst [vmem:[#allocation2 + $0x190] sm:$0xff] %v4267
        %4276 = vst [vmem:[#allocation2 + $0x198] sm:$0xff] %v4268
        %4277 = vst [vmem:[#allocation2 + $0x1a0] sm:$0xff] %v4269
        %4278 = vst [vmem:[#allocation2 + $0x1a8] sm:$0xff] %v4270
        %4279 = vst [vmem:[#allocation2 + $0x1b0] sm:$0xff] %v4271
        %4280 = vst [vmem:[#allocation2 + $0x1b8] sm:$0xff] %v4272
        %4281 = vrot.lane.b32.xlu0 %v3899, 112
        %v4282 = vpop.permute.xlu0 %4281
        %4283 = vrot.lane.b32.xlu0 %v3900, 112
        %v4284 = vpop.permute.xlu0 %4283
        %4285 = vrot.lane.b32.xlu0 %v3901, 112
        %v4286 = vpop.permute.xlu0 %4285
        %4287 = vrot.lane.b32.xlu0 %v3902, 112
        %v4288 = vpop.permute.xlu0 %4287
        %4289 = vrot.lane.b32.xlu0 %v3903, 112
        %v4290 = vpop.permute.xlu0 %4289
        %4291 = vrot.lane.b32.xlu0 %v3904, 112
        %v4292 = vpop.permute.xlu0 %4291
        %4293 = vrot.lane.b32.xlu0 %v3905, 112
        %v4294 = vpop.permute.xlu0 %4293
        %4295 = vrot.lane.b32.xlu0 %v3906, 112
        %v4296 = vpop.permute.xlu0 %4295
        %v4297 = vsel %vm973, %v4282, %v4284
        %v4298 = vsel %vm973, %v4284, %v4286
        %v4299 = vsel %vm973, %v4286, %v4288
        %v4300 = vsel %vm973, %v4288, %v4290
        %v4301 = vsel %vm973, %v4290, %v4292
        %v4302 = vsel %vm973, %v4292, %v4294
        %v4303 = vsel %vm973, %v4294, %v4296
        %v4313 = vsel %vm973, %v4296, %v4282
        %v4314 = vld [vmem:[#allocation5 + $0x1c0] sm:$0xff]
        %v4315 = vld [vmem:[#allocation5 + $0x1c8] sm:$0xff]
        %v4316 = vld [vmem:[#allocation5 + $0x1d0] sm:$0xff]
        %v4317 = vld [vmem:[#allocation5 + $0x1d8] sm:$0xff]
        %v4318 = vld [vmem:[#allocation5 + $0x1e0] sm:$0xff]
        %v4319 = vld [vmem:[#allocation5 + $0x1e8] sm:$0xff]
        %v4320 = vld [vmem:[#allocation5 + $0x1f0] sm:$0xff]
        %v4321 = vld [vmem:[#allocation5 + $0x1f8] sm:$0xff]
        %v4322 = vmul.f32 %v4297, %v4314
        %v4323 = vmul.f32 %v4298, %v4315
        %v4324 = vmul.f32 %v4299, %v4316
        %v4325 = vmul.f32 %v4300, %v4317
        %v4326 = vmul.f32 %v4301, %v4318
        %v4327 = vmul.f32 %v4302, %v4319
        %v4328 = vmul.f32 %v4303, %v4320
        %v4329 = vmul.f32 %v4313, %v4321
        %4330 = vst [vmem:[#allocation2 + $0x1c0] sm:$0xff] %v4322
        %4331 = vst [vmem:[#allocation2 + $0x1c8] sm:$0xff] %v4323
        %4332 = vst [vmem:[#allocation2 + $0x1d0] sm:$0xff] %v4324
        %4333 = vst [vmem:[#allocation2 + $0x1d8] sm:$0xff] %v4325
        %4334 = vst [vmem:[#allocation2 + $0x1e0] sm:$0xff] %v4326
        %4335 = vst [vmem:[#allocation2 + $0x1e8] sm:$0xff] %v4327
        %4336 = vst [vmem:[#allocation2 + $0x1f0] sm:$0xff] %v4328
        %4337 = vst [vmem:[#allocation2 + $0x1f8] sm:$0xff] %v4329
        %4338 = vrot.lane.b32.xlu0 %v3899, 111
        %v4339 = vpop.permute.xlu0 %4338
        %4340 = vrot.lane.b32.xlu0 %v3900, 111
        %v4341 = vpop.permute.xlu0 %4340
        %4342 = vrot.lane.b32.xlu0 %v3901, 111
        %v4343 = vpop.permute.xlu0 %4342
        %4344 = vrot.lane.b32.xlu0 %v3902, 111
        %v4345 = vpop.permute.xlu0 %4344
        %4346 = vrot.lane.b32.xlu0 %v3903, 111
        %v4347 = vpop.permute.xlu0 %4346
        %4348 = vrot.lane.b32.xlu0 %v3904, 111
        %v4349 = vpop.permute.xlu0 %4348
        %4350 = vrot.lane.b32.xlu0 %v3905, 111
        %v4351 = vpop.permute.xlu0 %4350
        %4352 = vrot.lane.b32.xlu0 %v3906, 111
        %v4353 = vpop.permute.xlu0 %4352
        %v4354 = vsel %vm1036, %v4339, %v4341
        %v4355 = vsel %vm1036, %v4341, %v4343
        %v4356 = vsel %vm1036, %v4343, %v4345
        %v4357 = vsel %vm1036, %v4345, %v4347
        %v4358 = vsel %vm1036, %v4347, %v4349
        %v4359 = vsel %vm1036, %v4349, %v4351
        %v4360 = vsel %vm1036, %v4351, %v4353
        %v4370 = vsel %vm1036, %v4353, %v4339
        %v4371 = vld [vmem:[#allocation5 + $0x200] sm:$0xff]
        %v4372 = vld [vmem:[#allocation5 + $0x208] sm:$0xff]
        %v4373 = vld [vmem:[#allocation5 + $0x210] sm:$0xff]
        %v4374 = vld [vmem:[#allocation5 + $0x218] sm:$0xff]
        %v4375 = vld [vmem:[#allocation5 + $0x220] sm:$0xff]
        %v4376 = vld [vmem:[#allocation5 + $0x228] sm:$0xff]
        %v4377 = vld [vmem:[#allocation5 + $0x230] sm:$0xff]
        %v4378 = vld [vmem:[#allocation5 + $0x238] sm:$0xff]
        %v4379 = vmul.f32 %v4354, %v4371
        %v4380 = vmul.f32 %v4355, %v4372
        %v4381 = vmul.f32 %v4356, %v4373
        %v4382 = vmul.f32 %v4357, %v4374
        %v4383 = vmul.f32 %v4358, %v4375
        %v4384 = vmul.f32 %v4359, %v4376
        %v4385 = vmul.f32 %v4360, %v4377
        %v4386 = vmul.f32 %v4370, %v4378
        %4387 = vst [vmem:[#allocation2 + $0x200] sm:$0xff] %v4379
        %4388 = vst [vmem:[#allocation2 + $0x208] sm:$0xff] %v4380
        %4389 = vst [vmem:[#allocation2 + $0x210] sm:$0xff] %v4381
        %4390 = vst [vmem:[#allocation2 + $0x218] sm:$0xff] %v4382
        %4391 = vst [vmem:[#allocation2 + $0x220] sm:$0xff] %v4383
        %4392 = vst [vmem:[#allocation2 + $0x228] sm:$0xff] %v4384
        %4393 = vst [vmem:[#allocation2 + $0x230] sm:$0xff] %v4385
        %4394 = vst [vmem:[#allocation2 + $0x238] sm:$0xff] %v4386
        %v4395 = vld [vmem:[%s11] sm:$0xff]
        %v4396 = vld [vmem:[#allocation2] sm:$0xff]
        %v4397 = vld [vmem:[#allocation2 + $0x8] sm:$0xff]
        %v4398 = vld [vmem:[#allocation2 + $0x10] sm:$0xff]
        %v4399 = vld [vmem:[#allocation2 + $0x18] sm:$0xff]
        %v4400 = vld [vmem:[#allocation2 + $0x20] sm:$0xff]
        %v4401 = vld [vmem:[#allocation2 + $0x28] sm:$0xff]
        %v4402 = vld [vmem:[#allocation2 + $0x30] sm:$0xff]
        %v4403 = vld [vmem:[#allocation2 + $0x38] sm:$0xff]
        %v4404 = vld [vmem:[#allocation2 + $0x40] sm:$0xff]
        %v4405 = vld [vmem:[#allocation2 + $0x48] sm:$0xff]
        %v4406 = vld [vmem:[#allocation2 + $0x50] sm:$0xff]
        %v4407 = vld [vmem:[#allocation2 + $0x58] sm:$0xff]
        %v4408 = vld [vmem:[#allocation2 + $0x60] sm:$0xff]
        %v4409 = vld [vmem:[#allocation2 + $0x68] sm:$0xff]
        %v4410 = vld [vmem:[#allocation2 + $0x70] sm:$0xff]
        %v4411 = vld [vmem:[#allocation2 + $0x78] sm:$0xff]
        %v4412 = vld [vmem:[#allocation2 + $0x80] sm:$0xff]
        %v4413 = vld [vmem:[#allocation2 + $0x88] sm:$0xff]
        %v4414 = vld [vmem:[#allocation2 + $0x90] sm:$0xff]
        %v4415 = vld [vmem:[#allocation2 + $0x98] sm:$0xff]
        %v4416 = vld [vmem:[#allocation2 + $0xa0] sm:$0xff]
        %v4417 = vld [vmem:[#allocation2 + $0xa8] sm:$0xff]
        %v4418 = vld [vmem:[#allocation2 + $0xb0] sm:$0xff]
        %v4419 = vld [vmem:[#allocation2 + $0xb8] sm:$0xff]
        %v4420 = vld [vmem:[#allocation2 + $0xc0] sm:$0xff]
        %v4421 = vld [vmem:[#allocation2 + $0xc8] sm:$0xff]
        %v4422 = vld [vmem:[#allocation2 + $0xd0] sm:$0xff]
        %v4423 = vld [vmem:[#allocation2 + $0xd8] sm:$0xff]
        %v4424 = vld [vmem:[#allocation2 + $0xe0] sm:$0xff]
        %v4425 = vld [vmem:[#allocation2 + $0xe8] sm:$0xff]
        %v4426 = vld [vmem:[#allocation2 + $0xf0] sm:$0xff]
        %v4427 = vld [vmem:[#allocation2 + $0xf8] sm:$0xff]
        %v4428 = vld [vmem:[#allocation2 + $0x100] sm:$0xff]
        %v4429 = vld [vmem:[#allocation2 + $0x108] sm:$0xff]
        %v4430 = vld [vmem:[#allocation2 + $0x110] sm:$0xff]
        %v4431 = vld [vmem:[#allocation2 + $0x118] sm:$0xff]
        %v4432 = vld [vmem:[#allocation2 + $0x120] sm:$0xff]
        %v4433 = vld [vmem:[#allocation2 + $0x128] sm:$0xff]
        %v4434 = vld [vmem:[#allocation2 + $0x130] sm:$0xff]
        %v4435 = vld [vmem:[#allocation2 + $0x138] sm:$0xff]
        %v4436 = vld [vmem:[#allocation2 + $0x140] sm:$0xff]
        %v4437 = vld [vmem:[#allocation2 + $0x148] sm:$0xff]
        %v4438 = vld [vmem:[#allocation2 + $0x150] sm:$0xff]
        %v4439 = vld [vmem:[#allocation2 + $0x158] sm:$0xff]
        %v4440 = vld [vmem:[#allocation2 + $0x160] sm:$0xff]
        %v4441 = vld [vmem:[#allocation2 + $0x168] sm:$0xff]
        %v4442 = vld [vmem:[#allocation2 + $0x170] sm:$0xff]
        %v4443 = vld [vmem:[#allocation2 + $0x178] sm:$0xff]
        %v4444 = vld [vmem:[#allocation2 + $0x180] sm:$0xff]
        %v4445 = vld [vmem:[#allocation2 + $0x188] sm:$0xff]
        %v4446 = vld [vmem:[#allocation2 + $0x190] sm:$0xff]
        %v4447 = vld [vmem:[#allocation2 + $0x198] sm:$0xff]
        %v4448 = vld [vmem:[#allocation2 + $0x1a0] sm:$0xff]
        %v4449 = vld [vmem:[#allocation2 + $0x1a8] sm:$0xff]
        %v4450 = vld [vmem:[#allocation2 + $0x1b0] sm:$0xff]
        %v4451 = vld [vmem:[#allocation2 + $0x1b8] sm:$0xff]
        %v4452 = vld [vmem:[#allocation2 + $0x1c0] sm:$0xff]
        %v4453 = vld [vmem:[#allocation2 + $0x1c8] sm:$0xff]
        %v4454 = vld [vmem:[#allocation2 + $0x1d0] sm:$0xff]
        %v4455 = vld [vmem:[#allocation2 + $0x1d8] sm:$0xff]
        %v4456 = vld [vmem:[#allocation2 + $0x1e0] sm:$0xff]
        %v4457 = vld [vmem:[#allocation2 + $0x1e8] sm:$0xff]
        %v4458 = vld [vmem:[#allocation2 + $0x1f0] sm:$0xff]
        %v4459 = vld [vmem:[#allocation2 + $0x1f8] sm:$0xff]
        %v4460 = vld [vmem:[#allocation2 + $0x200] sm:$0xff]
        %v4461 = vld [vmem:[#allocation2 + $0x208] sm:$0xff]
        %v4462 = vld [vmem:[#allocation2 + $0x210] sm:$0xff]
        %v4463 = vld [vmem:[#allocation2 + $0x218] sm:$0xff]
        %v4464 = vld [vmem:[#allocation2 + $0x220] sm:$0xff]
        %v4465 = vld [vmem:[#allocation2 + $0x228] sm:$0xff]
        %v4466 = vld [vmem:[#allocation2 + $0x230] sm:$0xff]
        %v4467 = vld [vmem:[#allocation2 + $0x238] sm:$0xff]
        %v4468 = vld [vmem:[%s12] sm:$0xff]
        %4470 = vset.pattern.permute.xlu0 0
        %4471 = vperm.xlu0 %4470, %v4468
        %v4472 = vpop.permute.xlu0 %4471
        %v4475 = vsel %vm2077, %v4395, 0
        %4477 = vmatpush.msra.mxu0 0.0
        %4478 = vmatpush.msra.mxu0 0.0
        %4479 = vmatpush.msra.mxu0 0.0
        %4480 = vmatpush.msra.mxu0 0.0
        %4481 = vmatpush.msra.mxu0 0.0
        %4482 = vmatpush.msra.mxu0 0.0
        %4483 = vmatpush.msra.mxu0 0.0
        %4484 = vmatpush.msra.mxu0 %v4460
        %4485 = vmatpush.msra.mxu0 %v4452
        %4486 = vmatpush.msra.mxu0 %v4444
        %4487 = vmatpush.msra.mxu0 %v4436
        %4488 = vmatpush.msra.mxu0 %v4428
        %4489 = vmatpush.msra.mxu0 %v4420
        %4490 = vmatpush.msra.mxu0 %v4412
        %4491 = vmatpush.msra.mxu0 %v4404
        %4492 = vmatpush.msra.mxu0 %v4396
        %4493 = vmatmul.f32.gmra.mxu0 %v4475
        %v4494 = vpop.f32.mrf.mxu0
        %v4495 = vadd.f32 %v4472, %v4494
        %4496 = vdwg.mxu0
        %4497 = vmatpush.msra.mxu0 0.0
        %4498 = vmatpush.msra.mxu0 0.0
        %4499 = vmatpush.msra.mxu0 0.0
        %4500 = vmatpush.msra.mxu0 0.0
        %4501 = vmatpush.msra.mxu0 0.0
        %4502 = vmatpush.msra.mxu0 0.0
        %4503 = vmatpush.msra.mxu0 0.0
        %4504 = vmatpush.msra.mxu0 %v4461
        %4505 = vmatpush.msra.mxu0 %v4453
        %4506 = vmatpush.msra.mxu0 %v4445
        %4507 = vmatpush.msra.mxu0 %v4437
        %4508 = vmatpush.msra.mxu0 %v4429
        %4509 = vmatpush.msra.mxu0 %v4421
        %4510 = vmatpush.msra.mxu0 %v4413
        %4511 = vmatpush.msra.mxu0 %v4405
        %4512 = vmatpush.msra.mxu0 %v4397
        %4513 = vmatmul.f32.gmra.mxu0 %v4475
        %v4514 = vpop.f32.mrf.mxu0
        %v4515 = vadd.f32 %v4472, %v4514
        %4516 = vdwg.mxu0
        %4517 = vmatpush.msra.mxu0 0.0
        %4518 = vmatpush.msra.mxu0 0.0
        %4519 = vmatpush.msra.mxu0 0.0
        %4520 = vmatpush.msra.mxu0 0.0
        %4521 = vmatpush.msra.mxu0 0.0
        %4522 = vmatpush.msra.mxu0 0.0
        %4523 = vmatpush.msra.mxu0 0.0
        %4524 = vmatpush.msra.mxu0 %v4462
        %4525 = vmatpush.msra.mxu0 %v4454
        %4526 = vmatpush.msra.mxu0 %v4446
        %4527 = vmatpush.msra.mxu0 %v4438
        %4528 = vmatpush.msra.mxu0 %v4430
        %4529 = vmatpush.msra.mxu0 %v4422
        %4530 = vmatpush.msra.mxu0 %v4414
        %4531 = vmatpush.msra.mxu0 %v4406
        %4532 = vmatpush.msra.mxu0 %v4398
        %4533 = vmatmul.f32.gmra.mxu0 %v4475
        %v4534 = vpop.f32.mrf.mxu0
        %v4535 = vadd.f32 %v4472, %v4534
        %4536 = vdwg.mxu0
        %4537 = vmatpush.msra.mxu0 0.0
        %4538 = vmatpush.msra.mxu0 0.0
        %4539 = vmatpush.msra.mxu0 0.0
        %4540 = vmatpush.msra.mxu0 0.0
        %4541 = vmatpush.msra.mxu0 0.0
        %4542 = vmatpush.msra.mxu0 0.0
        %4543 = vmatpush.msra.mxu0 0.0
        %4544 = vmatpush.msra.mxu0 %v4463
        %4545 = vmatpush.msra.mxu0 %v4455
        %4546 = vmatpush.msra.mxu0 %v4447
        %4547 = vmatpush.msra.mxu0 %v4439
        %4548 = vmatpush.msra.mxu0 %v4431
        %4549 = vmatpush.msra.mxu0 %v4423
        %4550 = vmatpush.msra.mxu0 %v4415
        %4551 = vmatpush.msra.mxu0 %v4407
        %4552 = vmatpush.msra.mxu0 %v4399
        %4553 = vmatmul.f32.gmra.mxu0 %v4475
        %v4554 = vpop.f32.mrf.mxu0
        %v4555 = vadd.f32 %v4472, %v4554
        %4556 = vdwg.mxu0
        %4557 = vmatpush.msra.mxu0 0.0
        %4558 = vmatpush.msra.mxu0 0.0
        %4559 = vmatpush.msra.mxu0 0.0
        %4560 = vmatpush.msra.mxu0 0.0
        %4561 = vmatpush.msra.mxu0 0.0
        %4562 = vmatpush.msra.mxu0 0.0
        %4563 = vmatpush.msra.mxu0 0.0
        %4564 = vmatpush.msra.mxu0 %v4464
        %4565 = vmatpush.msra.mxu0 %v4456
        %4566 = vmatpush.msra.mxu0 %v4448
        %4567 = vmatpush.msra.mxu0 %v4440
        %4568 = vmatpush.msra.mxu0 %v4432
        %4569 = vmatpush.msra.mxu0 %v4424
        %4570 = vmatpush.msra.mxu0 %v4416
        %4571 = vmatpush.msra.mxu0 %v4408
        %4572 = vmatpush.msra.mxu0 %v4400
        %4573 = vmatmul.f32.gmra.mxu0 %v4475
        %v4574 = vpop.f32.mrf.mxu0
        %v4575 = vadd.f32 %v4472, %v4574
        %4576 = vdwg.mxu0
        %4577 = vmatpush.msra.mxu0 0.0
        %4578 = vmatpush.msra.mxu0 0.0
        %4579 = vmatpush.msra.mxu0 0.0
        %4580 = vmatpush.msra.mxu0 0.0
        %4581 = vmatpush.msra.mxu0 0.0
        %4582 = vmatpush.msra.mxu0 0.0
        %4583 = vmatpush.msra.mxu0 0.0
        %4584 = vmatpush.msra.mxu0 %v4465
        %4585 = vmatpush.msra.mxu0 %v4457
        %4586 = vmatpush.msra.mxu0 %v4449
        %4587 = vmatpush.msra.mxu0 %v4441
        %4588 = vmatpush.msra.mxu0 %v4433
        %4589 = vmatpush.msra.mxu0 %v4425
        %4590 = vmatpush.msra.mxu0 %v4417
        %4591 = vmatpush.msra.mxu0 %v4409
        %4592 = vmatpush.msra.mxu0 %v4401
        %4593 = vmatmul.f32.gmra.mxu0 %v4475
        %v4594 = vpop.f32.mrf.mxu0
        %v4595 = vadd.f32 %v4472, %v4594
        %4596 = vdwg.mxu0
        %4597 = vmatpush.msra.mxu0 0.0
        %4598 = vmatpush.msra.mxu0 0.0
        %4599 = vmatpush.msra.mxu0 0.0
        %4600 = vmatpush.msra.mxu0 0.0
        %4601 = vmatpush.msra.mxu0 0.0
        %4602 = vmatpush.msra.mxu0 0.0
        %4603 = vmatpush.msra.mxu0 0.0
        %4604 = vmatpush.msra.mxu0 %v4466
        %4605 = vmatpush.msra.mxu0 %v4458
        %4606 = vmatpush.msra.mxu0 %v4450
        %4607 = vmatpush.msra.mxu0 %v4442
        %4608 = vmatpush.msra.mxu0 %v4434
        %4609 = vmatpush.msra.mxu0 %v4426
        %4610 = vmatpush.msra.mxu0 %v4418
        %4611 = vmatpush.msra.mxu0 %v4410
        %4612 = vmatpush.msra.mxu0 %v4402
        %4613 = vmatmul.f32.gmra.mxu0 %v4475
        %v4614 = vpop.f32.mrf.mxu0
        %v4615 = vadd.f32 %v4472, %v4614
        %4616 = vdwg.mxu0
        %4617 = vmatpush.msra.mxu0 0.0
        %4618 = vmatpush.msra.mxu0 0.0
        %4619 = vmatpush.msra.mxu0 0.0
        %4620 = vmatpush.msra.mxu0 0.0
        %4621 = vmatpush.msra.mxu0 0.0
        %4622 = vmatpush.msra.mxu0 0.0
        %4623 = vmatpush.msra.mxu0 0.0
        %4624 = vmatpush.msra.mxu0 %v4467
        %4625 = vmatpush.msra.mxu0 %v4459
        %4626 = vmatpush.msra.mxu0 %v4451
        %4627 = vmatpush.msra.mxu0 %v4443
        %4628 = vmatpush.msra.mxu0 %v4435
        %4629 = vmatpush.msra.mxu0 %v4427
        %4630 = vmatpush.msra.mxu0 %v4419
        %4631 = vmatpush.msra.mxu0 %v4411
        %4632 = vmatpush.msra.mxu0 %v4403
        %4633 = vmatmul.f32.gmra.mxu0 %v4475
        %v4634 = vpop.f32.mrf.mxu0
        %v4635 = vadd.f32 %v4472, %v4634
        %4636 = vdwg.mxu0
        %vm4637 = vcmp.ge.f32.partialorder %v4495, 0.0
        %vm4638 = vcmp.ge.f32.partialorder %v4515, 0.0
        %vm4639 = vcmp.ge.f32.partialorder %v4535, 0.0
        %vm4640 = vcmp.ge.f32.partialorder %v4555, 0.0
        %vm4641 = vcmp.ge.f32.partialorder %v4575, 0.0
        %vm4642 = vcmp.ge.f32.partialorder %v4595, 0.0
        %vm4643 = vcmp.ge.f32.partialorder %v4615, 0.0
        %vm4644 = vcmp.ge.f32.partialorder %v4635, 0.0
        %v4645 = vmul.f32 %v4495, 0.2
        %v4646 = vmul.f32 %v4515, 0.2
        %v4647 = vmul.f32 %v4535, 0.2
        %v4648 = vmul.f32 %v4555, 0.2
        %v4649 = vmul.f32 %v4575, 0.2
        %v4650 = vmul.f32 %v4595, 0.2
        %v4651 = vmul.f32 %v4615, 0.2
        %v4652 = vmul.f32 %v4635, 0.2
        %v4653 = vsel %vm4637, %v4495, %v4645
        %v4654 = vsel %vm4638, %v4515, %v4646
        %v4655 = vsel %vm4639, %v4535, %v4647
        %v4656 = vsel %vm4640, %v4555, %v4648
        %v4657 = vsel %vm4641, %v4575, %v4649
        %v4658 = vsel %vm4642, %v4595, %v4650
        %v4659 = vsel %vm4643, %v4615, %v4651
        %v4660 = vsel %vm4644, %v4635, %v4652
        %4662 = vrot.lane.b32.xlu0 %v4660, 17
        %v4663 = vpop.permute.xlu0 %4662
        %4672 = vrot.lane.b32.xlu0 %v4653, 17
        %v4673 = vpop.permute.xlu0 %4672
        %4674 = vrot.lane.b32.xlu0 %v4654, 17
        %v4675 = vpop.permute.xlu0 %4674
        %4676 = vrot.lane.b32.xlu0 %v4655, 17
        %v4677 = vpop.permute.xlu0 %4676
        %4678 = vrot.lane.b32.xlu0 %v4656, 17
        %v4679 = vpop.permute.xlu0 %4678
        %4680 = vrot.lane.b32.xlu0 %v4657, 17
        %v4681 = vpop.permute.xlu0 %4680
        %4682 = vrot.lane.b32.xlu0 %v4658, 17
        %v4683 = vpop.permute.xlu0 %4682
        %4684 = vrot.lane.b32.xlu0 %v4659, 17
        %v4685 = vpop.permute.xlu0 %4684
        %v4686 = vsel %vm592, %v4673, %v4675
        %v4687 = vsel %vm592, %v4675, %v4677
        %v4688 = vsel %vm592, %v4677, %v4679
        %v4689 = vsel %vm592, %v4679, %v4681
        %v4690 = vsel %vm592, %v4681, %v4683
        %v4691 = vsel %vm592, %v4683, %v4685
        %v4692 = vsel %vm592, %v4685, %v4663
        %v4701 = vsel %vm592, %v4663, %v4673
        %v4702 = vld [vmem:[#allocation5] sm:$0xff]
        %v4703 = vld [vmem:[#allocation5 + $0x8] sm:$0xff]
        %v4704 = vld [vmem:[#allocation5 + $0x10] sm:$0xff]
        %v4705 = vld [vmem:[#allocation5 + $0x18] sm:$0xff]
        %v4706 = vld [vmem:[#allocation5 + $0x20] sm:$0xff]
        %v4707 = vld [vmem:[#allocation5 + $0x28] sm:$0xff]
        %v4708 = vld [vmem:[#allocation5 + $0x30] sm:$0xff]
        %v4709 = vld [vmem:[#allocation5 + $0x38] sm:$0xff]
        %v4710 = vmul.f32 %v4701, %v4702
        %v4711 = vmul.f32 %v4686, %v4703
        %v4712 = vmul.f32 %v4687, %v4704
        %v4713 = vmul.f32 %v4688, %v4705
        %v4714 = vmul.f32 %v4689, %v4706
        %v4715 = vmul.f32 %v4690, %v4707
        %v4716 = vmul.f32 %v4691, %v4708
        %v4717 = vmul.f32 %v4692, %v4709
        %4718 = vst [vmem:[#allocation2] sm:$0xff] %v4710
        %4719 = vst [vmem:[#allocation2 + $0x8] sm:$0xff] %v4711
        %4720 = vst [vmem:[#allocation2 + $0x10] sm:$0xff] %v4712
        %4721 = vst [vmem:[#allocation2 + $0x18] sm:$0xff] %v4713
        %4722 = vst [vmem:[#allocation2 + $0x20] sm:$0xff] %v4714
        %4723 = vst [vmem:[#allocation2 + $0x28] sm:$0xff] %v4715
        %4724 = vst [vmem:[#allocation2 + $0x30] sm:$0xff] %v4716
        %4725 = vst [vmem:[#allocation2 + $0x38] sm:$0xff] %v4717
        %4726 = vrot.lane.b32.xlu0 %v4660, 16
        %v4727 = vpop.permute.xlu0 %4726
        %4729 = vrot.lane.b32.xlu0 %v4653, 16
        %v4730 = vpop.permute.xlu0 %4729
        %4731 = vrot.lane.b32.xlu0 %v4654, 16
        %v4732 = vpop.permute.xlu0 %4731
        %4733 = vrot.lane.b32.xlu0 %v4655, 16
        %v4734 = vpop.permute.xlu0 %4733
        %4735 = vrot.lane.b32.xlu0 %v4656, 16
        %v4736 = vpop.permute.xlu0 %4735
        %4737 = vrot.lane.b32.xlu0 %v4657, 16
        %v4738 = vpop.permute.xlu0 %4737
        %4739 = vrot.lane.b32.xlu0 %v4658, 16
        %v4740 = vpop.permute.xlu0 %4739
        %4741 = vrot.lane.b32.xlu0 %v4659, 16
        %v4742 = vpop.permute.xlu0 %4741
        %v4743 = vsel %vm654, %v4730, %v4732
        %v4744 = vsel %vm654, %v4732, %v4734
        %v4745 = vsel %vm654, %v4734, %v4736
        %v4746 = vsel %vm654, %v4736, %v4738
        %v4747 = vsel %vm654, %v4738, %v4740
        %v4748 = vsel %vm654, %v4740, %v4742
        %v4749 = vsel %vm654, %v4742, %v4727
        %v4758 = vsel %vm654, %v4727, %v4730
        %v4759 = vld [vmem:[#allocation5 + $0x40] sm:$0xff]
        %v4760 = vld [vmem:[#allocation5 + $0x48] sm:$0xff]
        %v4761 = vld [vmem:[#allocation5 + $0x50] sm:$0xff]
        %v4762 = vld [vmem:[#allocation5 + $0x58] sm:$0xff]
        %v4763 = vld [vmem:[#allocation5 + $0x60] sm:$0xff]
        %v4764 = vld [vmem:[#allocation5 + $0x68] sm:$0xff]
        %v4765 = vld [vmem:[#allocation5 + $0x70] sm:$0xff]
        %v4766 = vld [vmem:[#allocation5 + $0x78] sm:$0xff]
        %v4767 = vmul.f32 %v4758, %v4759
        %v4768 = vmul.f32 %v4743, %v4760
        %v4769 = vmul.f32 %v4744, %v4761
        %v4770 = vmul.f32 %v4745, %v4762
        %v4771 = vmul.f32 %v4746, %v4763
        %v4772 = vmul.f32 %v4747, %v4764
        %v4773 = vmul.f32 %v4748, %v4765
        %v4774 = vmul.f32 %v4749, %v4766
        %4775 = vst [vmem:[#allocation2 + $0x40] sm:$0xff] %v4767
        %4776 = vst [vmem:[#allocation2 + $0x48] sm:$0xff] %v4768
        %4777 = vst [vmem:[#allocation2 + $0x50] sm:$0xff] %v4769
        %4778 = vst [vmem:[#allocation2 + $0x58] sm:$0xff] %v4770
        %4779 = vst [vmem:[#allocation2 + $0x60] sm:$0xff] %v4771
        %4780 = vst [vmem:[#allocation2 + $0x68] sm:$0xff] %v4772
        %4781 = vst [vmem:[#allocation2 + $0x70] sm:$0xff] %v4773
        %4782 = vst [vmem:[#allocation2 + $0x78] sm:$0xff] %v4774
        %4783 = vrot.lane.b32.xlu0 %v4660, 15
        %v4784 = vpop.permute.xlu0 %4783
        %4786 = vrot.lane.b32.xlu0 %v4653, 15
        %v4787 = vpop.permute.xlu0 %4786
        %4788 = vrot.lane.b32.xlu0 %v4654, 15
        %v4789 = vpop.permute.xlu0 %4788
        %4790 = vrot.lane.b32.xlu0 %v4655, 15
        %v4791 = vpop.permute.xlu0 %4790
        %4792 = vrot.lane.b32.xlu0 %v4656, 15
        %v4793 = vpop.permute.xlu0 %4792
        %4794 = vrot.lane.b32.xlu0 %v4657, 15
        %v4795 = vpop.permute.xlu0 %4794
        %4796 = vrot.lane.b32.xlu0 %v4658, 15
        %v4797 = vpop.permute.xlu0 %4796
        %4798 = vrot.lane.b32.xlu0 %v4659, 15
        %v4799 = vpop.permute.xlu0 %4798
        %v4800 = vsel %vm717, %v4787, %v4789
        %v4801 = vsel %vm717, %v4789, %v4791
        %v4802 = vsel %vm717, %v4791, %v4793
        %v4803 = vsel %vm717, %v4793, %v4795
        %v4804 = vsel %vm717, %v4795, %v4797
        %v4805 = vsel %vm717, %v4797, %v4799
        %v4806 = vsel %vm717, %v4799, %v4784
        %v4815 = vsel %vm717, %v4784, %v4787
        %v4816 = vld [vmem:[#allocation5 + $0x80] sm:$0xff]
        %v4817 = vld [vmem:[#allocation5 + $0x88] sm:$0xff]
        %v4818 = vld [vmem:[#allocation5 + $0x90] sm:$0xff]
        %v4819 = vld [vmem:[#allocation5 + $0x98] sm:$0xff]
        %v4820 = vld [vmem:[#allocation5 + $0xa0] sm:$0xff]
        %v4821 = vld [vmem:[#allocation5 + $0xa8] sm:$0xff]
        %v4822 = vld [vmem:[#allocation5 + $0xb0] sm:$0xff]
        %v4823 = vld [vmem:[#allocation5 + $0xb8] sm:$0xff]
        %v4824 = vmul.f32 %v4815, %v4816
        %v4825 = vmul.f32 %v4800, %v4817
        %v4826 = vmul.f32 %v4801, %v4818
        %v4827 = vmul.f32 %v4802, %v4819
        %v4828 = vmul.f32 %v4803, %v4820
        %v4829 = vmul.f32 %v4804, %v4821
        %v4830 = vmul.f32 %v4805, %v4822
        %v4831 = vmul.f32 %v4806, %v4823
        %4832 = vst [vmem:[#allocation2 + $0x80] sm:$0xff] %v4824
        %4833 = vst [vmem:[#allocation2 + $0x88] sm:$0xff] %v4825
        %4834 = vst [vmem:[#allocation2 + $0x90] sm:$0xff] %v4826
        %4835 = vst [vmem:[#allocation2 + $0x98] sm:$0xff] %v4827
        %4836 = vst [vmem:[#allocation2 + $0xa0] sm:$0xff] %v4828
        %4837 = vst [vmem:[#allocation2 + $0xa8] sm:$0xff] %v4829
        %4838 = vst [vmem:[#allocation2 + $0xb0] sm:$0xff] %v4830
        %4839 = vst [vmem:[#allocation2 + $0xb8] sm:$0xff] %v4831
        %4840 = vrot.lane.b32.xlu0 %v4660, 1
        %v4841 = vpop.permute.xlu0 %4840
        %4843 = vrot.lane.b32.xlu0 %v4653, 1
        %v4844 = vpop.permute.xlu0 %4843
        %4845 = vrot.lane.b32.xlu0 %v4654, 1
        %v4846 = vpop.permute.xlu0 %4845
        %4847 = vrot.lane.b32.xlu0 %v4655, 1
        %v4848 = vpop.permute.xlu0 %4847
        %4849 = vrot.lane.b32.xlu0 %v4656, 1
        %v4850 = vpop.permute.xlu0 %4849
        %4851 = vrot.lane.b32.xlu0 %v4657, 1
        %v4852 = vpop.permute.xlu0 %4851
        %4853 = vrot.lane.b32.xlu0 %v4658, 1
        %v4854 = vpop.permute.xlu0 %4853
        %4855 = vrot.lane.b32.xlu0 %v4659, 1
        %v4856 = vpop.permute.xlu0 %4855
        %v4857 = vsel %vm780, %v4844, %v4846
        %v4858 = vsel %vm780, %v4846, %v4848
        %v4859 = vsel %vm780, %v4848, %v4850
        %v4860 = vsel %vm780, %v4850, %v4852
        %v4861 = vsel %vm780, %v4852, %v4854
        %v4862 = vsel %vm780, %v4854, %v4856
        %v4863 = vsel %vm780, %v4856, %v4841
        %v4872 = vsel %vm780, %v4841, %v4844
        %v4873 = vld [vmem:[#allocation5 + $0xc0] sm:$0xff]
        %v4874 = vld [vmem:[#allocation5 + $0xc8] sm:$0xff]
        %v4875 = vld [vmem:[#allocation5 + $0xd0] sm:$0xff]
        %v4876 = vld [vmem:[#allocation5 + $0xd8] sm:$0xff]
        %v4877 = vld [vmem:[#allocation5 + $0xe0] sm:$0xff]
        %v4878 = vld [vmem:[#allocation5 + $0xe8] sm:$0xff]
        %v4879 = vld [vmem:[#allocation5 + $0xf0] sm:$0xff]
        %v4880 = vld [vmem:[#allocation5 + $0xf8] sm:$0xff]
        %v4881 = vmul.f32 %v4872, %v4873
        %v4882 = vmul.f32 %v4857, %v4874
        %v4883 = vmul.f32 %v4858, %v4875
        %v4884 = vmul.f32 %v4859, %v4876
        %v4885 = vmul.f32 %v4860, %v4877
        %v4886 = vmul.f32 %v4861, %v4878
        %v4887 = vmul.f32 %v4862, %v4879
        %v4888 = vmul.f32 %v4863, %v4880
        %4889 = vst [vmem:[#allocation2 + $0xc0] sm:$0xff] %v4881
        %4890 = vst [vmem:[#allocation2 + $0xc8] sm:$0xff] %v4882
        %4891 = vst [vmem:[#allocation2 + $0xd0] sm:$0xff] %v4883
        %4892 = vst [vmem:[#allocation2 + $0xd8] sm:$0xff] %v4884
        %4893 = vst [vmem:[#allocation2 + $0xe0] sm:$0xff] %v4885
        %4894 = vst [vmem:[#allocation2 + $0xe8] sm:$0xff] %v4886
        %4895 = vst [vmem:[#allocation2 + $0xf0] sm:$0xff] %v4887
        %4896 = vst [vmem:[#allocation2 + $0xf8] sm:$0xff] %v4888
        %v4897 = vld [vmem:[#allocation5 + $0x100] sm:$0xff]
        %v4898 = vld [vmem:[#allocation5 + $0x108] sm:$0xff]
        %v4899 = vld [vmem:[#allocation5 + $0x110] sm:$0xff]
        %v4900 = vld [vmem:[#allocation5 + $0x118] sm:$0xff]
        %v4901 = vld [vmem:[#allocation5 + $0x120] sm:$0xff]
        %v4902 = vld [vmem:[#allocation5 + $0x128] sm:$0xff]
        %v4903 = vld [vmem:[#allocation5 + $0x130] sm:$0xff]
        %v4904 = vld [vmem:[#allocation5 + $0x138] sm:$0xff]
        %v4905 = vmul.f32 %v4653, %v4897
        %v4906 = vmul.f32 %v4654, %v4898
        %v4907 = vmul.f32 %v4655, %v4899
        %v4908 = vmul.f32 %v4656, %v4900
        %v4909 = vmul.f32 %v4657, %v4901
        %v4910 = vmul.f32 %v4658, %v4902
        %v4911 = vmul.f32 %v4659, %v4903
        %v4912 = vmul.f32 %v4660, %v4904
        %4913 = vst [vmem:[#allocation2 + $0x100] sm:$0xff] %v4905
        %4914 = vst [vmem:[#allocation2 + $0x108] sm:$0xff] %v4906
        %4915 = vst [vmem:[#allocation2 + $0x110] sm:$0xff] %v4907
        %4916 = vst [vmem:[#allocation2 + $0x118] sm:$0xff] %v4908
        %4917 = vst [vmem:[#allocation2 + $0x120] sm:$0xff] %v4909
        %4918 = vst [vmem:[#allocation2 + $0x128] sm:$0xff] %v4910
        %4919 = vst [vmem:[#allocation2 + $0x130] sm:$0xff] %v4911
        %4920 = vst [vmem:[#allocation2 + $0x138] sm:$0xff] %v4912
        %4921 = vrot.lane.b32.xlu0 %v4653, 127
        %v4922 = vpop.permute.xlu0 %4921
        %4923 = vrot.lane.b32.xlu0 %v4654, 127
        %v4924 = vpop.permute.xlu0 %4923
        %4925 = vrot.lane.b32.xlu0 %v4655, 127
        %v4926 = vpop.permute.xlu0 %4925
        %4927 = vrot.lane.b32.xlu0 %v4656, 127
        %v4928 = vpop.permute.xlu0 %4927
        %4929 = vrot.lane.b32.xlu0 %v4657, 127
        %v4930 = vpop.permute.xlu0 %4929
        %4931 = vrot.lane.b32.xlu0 %v4658, 127
        %v4932 = vpop.permute.xlu0 %4931
        %4933 = vrot.lane.b32.xlu0 %v4659, 127
        %v4934 = vpop.permute.xlu0 %4933
        %4935 = vrot.lane.b32.xlu0 %v4660, 127
        %v4936 = vpop.permute.xlu0 %4935
        %v4937 = vsel %vm847, %v4922, %v4924
        %v4938 = vsel %vm847, %v4924, %v4926
        %v4939 = vsel %vm847, %v4926, %v4928
        %v4940 = vsel %vm847, %v4928, %v4930
        %v4941 = vsel %vm847, %v4930, %v4932
        %v4942 = vsel %vm847, %v4932, %v4934
        %v4943 = vsel %vm847, %v4934, %v4936
        %v4953 = vsel %vm847, %v4936, %v4922
        %v4954 = vld [vmem:[#allocation5 + $0x140] sm:$0xff]
        %v4955 = vld [vmem:[#allocation5 + $0x148] sm:$0xff]
        %v4956 = vld [vmem:[#allocation5 + $0x150] sm:$0xff]
        %v4957 = vld [vmem:[#allocation5 + $0x158] sm:$0xff]
        %v4958 = vld [vmem:[#allocation5 + $0x160] sm:$0xff]
        %v4959 = vld [vmem:[#allocation5 + $0x168] sm:$0xff]
        %v4960 = vld [vmem:[#allocation5 + $0x170] sm:$0xff]
        %v4961 = vld [vmem:[#allocation5 + $0x178] sm:$0xff]
        %v4962 = vmul.f32 %v4937, %v4954
        %v4963 = vmul.f32 %v4938, %v4955
        %v4964 = vmul.f32 %v4939, %v4956
        %v4965 = vmul.f32 %v4940, %v4957
        %v4966 = vmul.f32 %v4941, %v4958
        %v4967 = vmul.f32 %v4942, %v4959
        %v4968 = vmul.f32 %v4943, %v4960
        %v4969 = vmul.f32 %v4953, %v4961
        %4970 = vst [vmem:[#allocation2 + $0x140] sm:$0xff] %v4962
        %4971 = vst [vmem:[#allocation2 + $0x148] sm:$0xff] %v4963
        %4972 = vst [vmem:[#allocation2 + $0x150] sm:$0xff] %v4964
        %4973 = vst [vmem:[#allocation2 + $0x158] sm:$0xff] %v4965
        %4974 = vst [vmem:[#allocation2 + $0x160] sm:$0xff] %v4966
        %4975 = vst [vmem:[#allocation2 + $0x168] sm:$0xff] %v4967
        %4976 = vst [vmem:[#allocation2 + $0x170] sm:$0xff] %v4968
        %4977 = vst [vmem:[#allocation2 + $0x178] sm:$0xff] %v4969
        %4978 = vrot.lane.b32.xlu0 %v4653, 113
        %v4979 = vpop.permute.xlu0 %4978
        %4980 = vrot.lane.b32.xlu0 %v4654, 113
        %v4981 = vpop.permute.xlu0 %4980
        %4982 = vrot.lane.b32.xlu0 %v4655, 113
        %v4983 = vpop.permute.xlu0 %4982
        %4984 = vrot.lane.b32.xlu0 %v4656, 113
        %v4985 = vpop.permute.xlu0 %4984
        %4986 = vrot.lane.b32.xlu0 %v4657, 113
        %v4987 = vpop.permute.xlu0 %4986
        %4988 = vrot.lane.b32.xlu0 %v4658, 113
        %v4989 = vpop.permute.xlu0 %4988
        %4990 = vrot.lane.b32.xlu0 %v4659, 113
        %v4991 = vpop.permute.xlu0 %4990
        %4992 = vrot.lane.b32.xlu0 %v4660, 113
        %v4993 = vpop.permute.xlu0 %4992
        %v4994 = vsel %vm910, %v4979, %v4981
        %v4995 = vsel %vm910, %v4981, %v4983
        %v4996 = vsel %vm910, %v4983, %v4985
        %v4997 = vsel %vm910, %v4985, %v4987
        %v4998 = vsel %vm910, %v4987, %v4989
        %v4999 = vsel %vm910, %v4989, %v4991
        %v5000 = vsel %vm910, %v4991, %v4993
        %v5010 = vsel %vm910, %v4993, %v4979
        %v5011 = vld [vmem:[#allocation5 + $0x180] sm:$0xff]
        %v5012 = vld [vmem:[#allocation5 + $0x188] sm:$0xff]
        %v5013 = vld [vmem:[#allocation5 + $0x190] sm:$0xff]
        %v5014 = vld [vmem:[#allocation5 + $0x198] sm:$0xff]
        %v5015 = vld [vmem:[#allocation5 + $0x1a0] sm:$0xff]
        %v5016 = vld [vmem:[#allocation5 + $0x1a8] sm:$0xff]
        %v5017 = vld [vmem:[#allocation5 + $0x1b0] sm:$0xff]
        %v5018 = vld [vmem:[#allocation5 + $0x1b8] sm:$0xff]
        %v5019 = vmul.f32 %v4994, %v5011
        %v5020 = vmul.f32 %v4995, %v5012
        %v5021 = vmul.f32 %v4996, %v5013
        %v5022 = vmul.f32 %v4997, %v5014
        %v5023 = vmul.f32 %v4998, %v5015
        %v5024 = vmul.f32 %v4999, %v5016
        %v5025 = vmul.f32 %v5000, %v5017
        %v5026 = vmul.f32 %v5010, %v5018
        %5027 = vst [vmem:[#allocation2 + $0x180] sm:$0xff] %v5019
        %5028 = vst [vmem:[#allocation2 + $0x188] sm:$0xff] %v5020
        %5029 = vst [vmem:[#allocation2 + $0x190] sm:$0xff] %v5021
        %5030 = vst [vmem:[#allocation2 + $0x198] sm:$0xff] %v5022
        %5031 = vst [vmem:[#allocation2 + $0x1a0] sm:$0xff] %v5023
        %5032 = vst [vmem:[#allocation2 + $0x1a8] sm:$0xff] %v5024
        %5033 = vst [vmem:[#allocation2 + $0x1b0] sm:$0xff] %v5025
        %5034 = vst [vmem:[#allocation2 + $0x1b8] sm:$0xff] %v5026
        %5035 = vrot.lane.b32.xlu0 %v4653, 112
        %v5036 = vpop.permute.xlu0 %5035
        %5037 = vrot.lane.b32.xlu0 %v4654, 112
        %v5038 = vpop.permute.xlu0 %5037
        %5039 = vrot.lane.b32.xlu0 %v4655, 112
        %v5040 = vpop.permute.xlu0 %5039
        %5041 = vrot.lane.b32.xlu0 %v4656, 112
        %v5042 = vpop.permute.xlu0 %5041
        %5043 = vrot.lane.b32.xlu0 %v4657, 112
        %v5044 = vpop.permute.xlu0 %5043
        %5045 = vrot.lane.b32.xlu0 %v4658, 112
        %v5046 = vpop.permute.xlu0 %5045
        %5047 = vrot.lane.b32.xlu0 %v4659, 112
        %v5048 = vpop.permute.xlu0 %5047
        %5049 = vrot.lane.b32.xlu0 %v4660, 112
        %v5050 = vpop.permute.xlu0 %5049
        %v5051 = vsel %vm973, %v5036, %v5038
        %v5052 = vsel %vm973, %v5038, %v5040
        %v5053 = vsel %vm973, %v5040, %v5042
        %v5054 = vsel %vm973, %v5042, %v5044
        %v5055 = vsel %vm973, %v5044, %v5046
        %v5056 = vsel %vm973, %v5046, %v5048
        %v5057 = vsel %vm973, %v5048, %v5050
        %v5067 = vsel %vm973, %v5050, %v5036
        %v5068 = vld [vmem:[#allocation5 + $0x1c0] sm:$0xff]
        %v5069 = vld [vmem:[#allocation5 + $0x1c8] sm:$0xff]
        %v5070 = vld [vmem:[#allocation5 + $0x1d0] sm:$0xff]
        %v5071 = vld [vmem:[#allocation5 + $0x1d8] sm:$0xff]
        %v5072 = vld [vmem:[#allocation5 + $0x1e0] sm:$0xff]
        %v5073 = vld [vmem:[#allocation5 + $0x1e8] sm:$0xff]
        %v5074 = vld [vmem:[#allocation5 + $0x1f0] sm:$0xff]
        %v5075 = vld [vmem:[#allocation5 + $0x1f8] sm:$0xff]
        %v5076 = vmul.f32 %v5051, %v5068
        %v5077 = vmul.f32 %v5052, %v5069
        %v5078 = vmul.f32 %v5053, %v5070
        %v5079 = vmul.f32 %v5054, %v5071
        %v5080 = vmul.f32 %v5055, %v5072
        %v5081 = vmul.f32 %v5056, %v5073
        %v5082 = vmul.f32 %v5057, %v5074
        %v5083 = vmul.f32 %v5067, %v5075
        %5084 = vst [vmem:[#allocation2 + $0x1c0] sm:$0xff] %v5076
        %5085 = vst [vmem:[#allocation2 + $0x1c8] sm:$0xff] %v5077
        %5086 = vst [vmem:[#allocation2 + $0x1d0] sm:$0xff] %v5078
        %5087 = vst [vmem:[#allocation2 + $0x1d8] sm:$0xff] %v5079
        %5088 = vst [vmem:[#allocation2 + $0x1e0] sm:$0xff] %v5080
        %5089 = vst [vmem:[#allocation2 + $0x1e8] sm:$0xff] %v5081
        %5090 = vst [vmem:[#allocation2 + $0x1f0] sm:$0xff] %v5082
        %5091 = vst [vmem:[#allocation2 + $0x1f8] sm:$0xff] %v5083
        %5092 = vrot.lane.b32.xlu0 %v4653, 111
        %v5093 = vpop.permute.xlu0 %5092
        %5094 = vrot.lane.b32.xlu0 %v4654, 111
        %v5095 = vpop.permute.xlu0 %5094
        %5096 = vrot.lane.b32.xlu0 %v4655, 111
        %v5097 = vpop.permute.xlu0 %5096
        %5098 = vrot.lane.b32.xlu0 %v4656, 111
        %v5099 = vpop.permute.xlu0 %5098
        %5100 = vrot.lane.b32.xlu0 %v4657, 111
        %v5101 = vpop.permute.xlu0 %5100
        %5102 = vrot.lane.b32.xlu0 %v4658, 111
        %v5103 = vpop.permute.xlu0 %5102
        %5104 = vrot.lane.b32.xlu0 %v4659, 111
        %v5105 = vpop.permute.xlu0 %5104
        %5106 = vrot.lane.b32.xlu0 %v4660, 111
        %v5107 = vpop.permute.xlu0 %5106
        %v5108 = vsel %vm1036, %v5093, %v5095
        %v5109 = vsel %vm1036, %v5095, %v5097
        %v5110 = vsel %vm1036, %v5097, %v5099
        %v5111 = vsel %vm1036, %v5099, %v5101
        %v5112 = vsel %vm1036, %v5101, %v5103
        %v5113 = vsel %vm1036, %v5103, %v5105
        %v5114 = vsel %vm1036, %v5105, %v5107
        %v5124 = vsel %vm1036, %v5107, %v5093
        %v5125 = vld [vmem:[#allocation5 + $0x200] sm:$0xff]
        %v5126 = vld [vmem:[#allocation5 + $0x208] sm:$0xff]
        %v5127 = vld [vmem:[#allocation5 + $0x210] sm:$0xff]
        %v5128 = vld [vmem:[#allocation5 + $0x218] sm:$0xff]
        %v5129 = vld [vmem:[#allocation5 + $0x220] sm:$0xff]
        %v5130 = vld [vmem:[#allocation5 + $0x228] sm:$0xff]
        %v5131 = vld [vmem:[#allocation5 + $0x230] sm:$0xff]
        %v5132 = vld [vmem:[#allocation5 + $0x238] sm:$0xff]
        %v5133 = vmul.f32 %v5108, %v5125
        %v5134 = vmul.f32 %v5109, %v5126
        %v5135 = vmul.f32 %v5110, %v5127
        %v5136 = vmul.f32 %v5111, %v5128
        %v5137 = vmul.f32 %v5112, %v5129
        %v5138 = vmul.f32 %v5113, %v5130
        %v5139 = vmul.f32 %v5114, %v5131
        %v5140 = vmul.f32 %v5124, %v5132
        %5141 = vst [vmem:[#allocation2 + $0x200] sm:$0xff] %v5133
        %5142 = vst [vmem:[#allocation2 + $0x208] sm:$0xff] %v5134
        %5143 = vst [vmem:[#allocation2 + $0x210] sm:$0xff] %v5135
        %5144 = vst [vmem:[#allocation2 + $0x218] sm:$0xff] %v5136
        %5145 = vst [vmem:[#allocation2 + $0x220] sm:$0xff] %v5137
        %5146 = vst [vmem:[#allocation2 + $0x228] sm:$0xff] %v5138
        %5147 = vst [vmem:[#allocation2 + $0x230] sm:$0xff] %v5139
        %5148 = vst [vmem:[#allocation2 + $0x238] sm:$0xff] %v5140
        %v5149 = vld [vmem:[%s13] sm:$0x1]
        %v5150 = vld [vmem:[#allocation2] sm:$0xff]
        %v5151 = vld [vmem:[#allocation2 + $0x8] sm:$0xff]
        %v5152 = vld [vmem:[#allocation2 + $0x10] sm:$0xff]
        %v5153 = vld [vmem:[#allocation2 + $0x18] sm:$0xff]
        %v5154 = vld [vmem:[#allocation2 + $0x20] sm:$0xff]
        %v5155 = vld [vmem:[#allocation2 + $0x28] sm:$0xff]
        %v5156 = vld [vmem:[#allocation2 + $0x30] sm:$0xff]
        %v5157 = vld [vmem:[#allocation2 + $0x38] sm:$0xff]
        %v5158 = vld [vmem:[#allocation2 + $0x40] sm:$0xff]
        %v5159 = vld [vmem:[#allocation2 + $0x48] sm:$0xff]
        %v5160 = vld [vmem:[#allocation2 + $0x50] sm:$0xff]
        %v5161 = vld [vmem:[#allocation2 + $0x58] sm:$0xff]
        %v5162 = vld [vmem:[#allocation2 + $0x60] sm:$0xff]
        %v5163 = vld [vmem:[#allocation2 + $0x68] sm:$0xff]
        %v5164 = vld [vmem:[#allocation2 + $0x70] sm:$0xff]
        %v5165 = vld [vmem:[#allocation2 + $0x78] sm:$0xff]
        %v5166 = vld [vmem:[#allocation2 + $0x80] sm:$0xff]
        %v5167 = vld [vmem:[#allocation2 + $0x88] sm:$0xff]
        %v5168 = vld [vmem:[#allocation2 + $0x90] sm:$0xff]
        %v5169 = vld [vmem:[#allocation2 + $0x98] sm:$0xff]
        %v5170 = vld [vmem:[#allocation2 + $0xa0] sm:$0xff]
        %v5171 = vld [vmem:[#allocation2 + $0xa8] sm:$0xff]
        %v5172 = vld [vmem:[#allocation2 + $0xb0] sm:$0xff]
        %v5173 = vld [vmem:[#allocation2 + $0xb8] sm:$0xff]
        %v5174 = vld [vmem:[#allocation2 + $0xc0] sm:$0xff]
        %v5175 = vld [vmem:[#allocation2 + $0xc8] sm:$0xff]
        %v5176 = vld [vmem:[#allocation2 + $0xd0] sm:$0xff]
        %v5177 = vld [vmem:[#allocation2 + $0xd8] sm:$0xff]
        %v5178 = vld [vmem:[#allocation2 + $0xe0] sm:$0xff]
        %v5179 = vld [vmem:[#allocation2 + $0xe8] sm:$0xff]
        %v5180 = vld [vmem:[#allocation2 + $0xf0] sm:$0xff]
        %v5181 = vld [vmem:[#allocation2 + $0xf8] sm:$0xff]
        %v5182 = vld [vmem:[#allocation2 + $0x100] sm:$0xff]
        %v5183 = vld [vmem:[#allocation2 + $0x108] sm:$0xff]
        %v5184 = vld [vmem:[#allocation2 + $0x110] sm:$0xff]
        %v5185 = vld [vmem:[#allocation2 + $0x118] sm:$0xff]
        %v5186 = vld [vmem:[#allocation2 + $0x120] sm:$0xff]
        %v5187 = vld [vmem:[#allocation2 + $0x128] sm:$0xff]
        %v5188 = vld [vmem:[#allocation2 + $0x130] sm:$0xff]
        %v5189 = vld [vmem:[#allocation2 + $0x138] sm:$0xff]
        %v5190 = vld [vmem:[#allocation2 + $0x140] sm:$0xff]
        %v5191 = vld [vmem:[#allocation2 + $0x148] sm:$0xff]
        %v5192 = vld [vmem:[#allocation2 + $0x150] sm:$0xff]
        %v5193 = vld [vmem:[#allocation2 + $0x158] sm:$0xff]
        %v5194 = vld [vmem:[#allocation2 + $0x160] sm:$0xff]
        %v5195 = vld [vmem:[#allocation2 + $0x168] sm:$0xff]
        %v5196 = vld [vmem:[#allocation2 + $0x170] sm:$0xff]
        %v5197 = vld [vmem:[#allocation2 + $0x178] sm:$0xff]
        %v5198 = vld [vmem:[#allocation2 + $0x180] sm:$0xff]
        %v5199 = vld [vmem:[#allocation2 + $0x188] sm:$0xff]
        %v5200 = vld [vmem:[#allocation2 + $0x190] sm:$0xff]
        %v5201 = vld [vmem:[#allocation2 + $0x198] sm:$0xff]
        %v5202 = vld [vmem:[#allocation2 + $0x1a0] sm:$0xff]
        %v5203 = vld [vmem:[#allocation2 + $0x1a8] sm:$0xff]
        %v5204 = vld [vmem:[#allocation2 + $0x1b0] sm:$0xff]
        %v5205 = vld [vmem:[#allocation2 + $0x1b8] sm:$0xff]
        %v5206 = vld [vmem:[#allocation2 + $0x1c0] sm:$0xff]
        %v5207 = vld [vmem:[#allocation2 + $0x1c8] sm:$0xff]
        %v5208 = vld [vmem:[#allocation2 + $0x1d0] sm:$0xff]
        %v5209 = vld [vmem:[#allocation2 + $0x1d8] sm:$0xff]
        %v5210 = vld [vmem:[#allocation2 + $0x1e0] sm:$0xff]
        %v5211 = vld [vmem:[#allocation2 + $0x1e8] sm:$0xff]
        %v5212 = vld [vmem:[#allocation2 + $0x1f0] sm:$0xff]
        %v5213 = vld [vmem:[#allocation2 + $0x1f8] sm:$0xff]
        %v5214 = vld [vmem:[#allocation2 + $0x200] sm:$0xff]
        %v5215 = vld [vmem:[#allocation2 + $0x208] sm:$0xff]
        %v5216 = vld [vmem:[#allocation2 + $0x210] sm:$0xff]
        %v5217 = vld [vmem:[#allocation2 + $0x218] sm:$0xff]
        %v5218 = vld [vmem:[#allocation2 + $0x220] sm:$0xff]
        %v5219 = vld [vmem:[#allocation2 + $0x228] sm:$0xff]
        %v5220 = vld [vmem:[#allocation2 + $0x230] sm:$0xff]
        %v5221 = vld [vmem:[#allocation2 + $0x238] sm:$0xff]
        %v5222 = vld [vmem:[#allocation4] sm:$0x1]
        %5224 = vset.pattern.permute.xlu0 0
        %5225 = vperm.xlu0 %5224, %v5222
        %v5226 = vpop.permute.xlu0 %5225
        %v5228 = vperm.slane %v5226, 0
        %v5230 = vsel %vm2077, %v5149, 0
        %5232 = vmatpush.msra.mxu0 0.0
        %5233 = vmatpush.msra.mxu0 0.0
        %5234 = vmatpush.msra.mxu0 0.0
        %5235 = vmatpush.msra.mxu0 0.0
        %5236 = vmatpush.msra.mxu0 0.0
        %5237 = vmatpush.msra.mxu0 0.0
        %5238 = vmatpush.msra.mxu0 0.0
        %5239 = vmatpush.msra.mxu0 %v5214
        %5240 = vmatpush.msra.mxu0 %v5206
        %5241 = vmatpush.msra.mxu0 %v5198
        %5242 = vmatpush.msra.mxu0 %v5190
        %5243 = vmatpush.msra.mxu0 %v5182
        %5244 = vmatpush.msra.mxu0 %v5174
        %5245 = vmatpush.msra.mxu0 %v5166
        %5246 = vmatpush.msra.mxu0 %v5158
        %5247 = vmatpush.msra.mxu0 %v5150
        %5248 = vmatmul.f32.gmra.mxu0 %v5230
        %v5249 = vpop.f32.mrf.mxu0
        %v5250 = vadd.f32 %v5228, %v5249
        %5251 = vdwg.mxu0
        %5252 = vmatpush.msra.mxu0 0.0
        %5253 = vmatpush.msra.mxu0 0.0
        %5254 = vmatpush.msra.mxu0 0.0
        %5255 = vmatpush.msra.mxu0 0.0
        %5256 = vmatpush.msra.mxu0 0.0
        %5257 = vmatpush.msra.mxu0 0.0
        %5258 = vmatpush.msra.mxu0 0.0
        %5259 = vmatpush.msra.mxu0 %v5215
        %5260 = vmatpush.msra.mxu0 %v5207
        %5261 = vmatpush.msra.mxu0 %v5199
        %5262 = vmatpush.msra.mxu0 %v5191
        %5263 = vmatpush.msra.mxu0 %v5183
        %5264 = vmatpush.msra.mxu0 %v5175
        %5265 = vmatpush.msra.mxu0 %v5167
        %5266 = vmatpush.msra.mxu0 %v5159
        %5267 = vmatpush.msra.mxu0 %v5151
        %5268 = vmatmul.f32.gmra.mxu0 %v5230
        %v5269 = vpop.f32.mrf.mxu0
        %v5270 = vadd.f32 %v5228, %v5269
        %5271 = vdwg.mxu0
        %5272 = vmatpush.msra.mxu0 0.0
        %5273 = vmatpush.msra.mxu0 0.0
        %5274 = vmatpush.msra.mxu0 0.0
        %5275 = vmatpush.msra.mxu0 0.0
        %5276 = vmatpush.msra.mxu0 0.0
        %5277 = vmatpush.msra.mxu0 0.0
        %5278 = vmatpush.msra.mxu0 0.0
        %5279 = vmatpush.msra.mxu0 %v5216
        %5280 = vmatpush.msra.mxu0 %v5208
        %5281 = vmatpush.msra.mxu0 %v5200
        %5282 = vmatpush.msra.mxu0 %v5192
        %5283 = vmatpush.msra.mxu0 %v5184
        %5284 = vmatpush.msra.mxu0 %v5176
        %5285 = vmatpush.msra.mxu0 %v5168
        %5286 = vmatpush.msra.mxu0 %v5160
        %5287 = vmatpush.msra.mxu0 %v5152
        %5288 = vmatmul.f32.gmra.mxu0 %v5230
        %v5289 = vpop.f32.mrf.mxu0
        %v5290 = vadd.f32 %v5228, %v5289
        %5291 = vdwg.mxu0
        %5292 = vmatpush.msra.mxu0 0.0
        %5293 = vmatpush.msra.mxu0 0.0
        %5294 = vmatpush.msra.mxu0 0.0
        %5295 = vmatpush.msra.mxu0 0.0
        %5296 = vmatpush.msra.mxu0 0.0
        %5297 = vmatpush.msra.mxu0 0.0
        %5298 = vmatpush.msra.mxu0 0.0
        %5299 = vmatpush.msra.mxu0 %v5217
        %5300 = vmatpush.msra.mxu0 %v5209
        %5301 = vmatpush.msra.mxu0 %v5201
        %5302 = vmatpush.msra.mxu0 %v5193
        %5303 = vmatpush.msra.mxu0 %v5185
        %5304 = vmatpush.msra.mxu0 %v5177
        %5305 = vmatpush.msra.mxu0 %v5169
        %5306 = vmatpush.msra.mxu0 %v5161
        %5307 = vmatpush.msra.mxu0 %v5153
        %5308 = vmatmul.f32.gmra.mxu0 %v5230
        %v5309 = vpop.f32.mrf.mxu0
        %v5310 = vadd.f32 %v5228, %v5309
        %5311 = vdwg.mxu0
        %5312 = vmatpush.msra.mxu0 0.0
        %5313 = vmatpush.msra.mxu0 0.0
        %5314 = vmatpush.msra.mxu0 0.0
        %5315 = vmatpush.msra.mxu0 0.0
        %5316 = vmatpush.msra.mxu0 0.0
        %5317 = vmatpush.msra.mxu0 0.0
        %5318 = vmatpush.msra.mxu0 0.0
        %5319 = vmatpush.msra.mxu0 %v5218
        %5320 = vmatpush.msra.mxu0 %v5210
        %5321 = vmatpush.msra.mxu0 %v5202
        %5322 = vmatpush.msra.mxu0 %v5194
        %5323 = vmatpush.msra.mxu0 %v5186
        %5324 = vmatpush.msra.mxu0 %v5178
        %5325 = vmatpush.msra.mxu0 %v5170
        %5326 = vmatpush.msra.mxu0 %v5162
        %5327 = vmatpush.msra.mxu0 %v5154
        %5328 = vmatmul.f32.gmra.mxu0 %v5230
        %v5329 = vpop.f32.mrf.mxu0
        %v5330 = vadd.f32 %v5228, %v5329
        %5331 = vdwg.mxu0
        %5332 = vmatpush.msra.mxu0 0.0
        %5333 = vmatpush.msra.mxu0 0.0
        %5334 = vmatpush.msra.mxu0 0.0
        %5335 = vmatpush.msra.mxu0 0.0
        %5336 = vmatpush.msra.mxu0 0.0
        %5337 = vmatpush.msra.mxu0 0.0
        %5338 = vmatpush.msra.mxu0 0.0
        %5339 = vmatpush.msra.mxu0 %v5219
        %5340 = vmatpush.msra.mxu0 %v5211
        %5341 = vmatpush.msra.mxu0 %v5203
        %5342 = vmatpush.msra.mxu0 %v5195
        %5343 = vmatpush.msra.mxu0 %v5187
        %5344 = vmatpush.msra.mxu0 %v5179
        %5345 = vmatpush.msra.mxu0 %v5171
        %5346 = vmatpush.msra.mxu0 %v5163
        %5347 = vmatpush.msra.mxu0 %v5155
        %5348 = vmatmul.f32.gmra.mxu0 %v5230
        %v5349 = vpop.f32.mrf.mxu0
        %v5350 = vadd.f32 %v5228, %v5349
        %5351 = vdwg.mxu0
        %5352 = vmatpush.msra.mxu0 0.0
        %5353 = vmatpush.msra.mxu0 0.0
        %5354 = vmatpush.msra.mxu0 0.0
        %5355 = vmatpush.msra.mxu0 0.0
        %5356 = vmatpush.msra.mxu0 0.0
        %5357 = vmatpush.msra.mxu0 0.0
        %5358 = vmatpush.msra.mxu0 0.0
        %5359 = vmatpush.msra.mxu0 %v5220
        %5360 = vmatpush.msra.mxu0 %v5212
        %5361 = vmatpush.msra.mxu0 %v5204
        %5362 = vmatpush.msra.mxu0 %v5196
        %5363 = vmatpush.msra.mxu0 %v5188
        %5364 = vmatpush.msra.mxu0 %v5180
        %5365 = vmatpush.msra.mxu0 %v5172
        %5366 = vmatpush.msra.mxu0 %v5164
        %5367 = vmatpush.msra.mxu0 %v5156
        %5368 = vmatmul.f32.gmra.mxu0 %v5230
        %v5369 = vpop.f32.mrf.mxu0
        %v5370 = vadd.f32 %v5228, %v5369
        %5371 = vdwg.mxu0
        %5372 = vmatpush.msra.mxu0 0.0
        %5373 = vmatpush.msra.mxu0 0.0
        %5374 = vmatpush.msra.mxu0 0.0
        %5375 = vmatpush.msra.mxu0 0.0
        %5376 = vmatpush.msra.mxu0 0.0
        %5377 = vmatpush.msra.mxu0 0.0
        %5378 = vmatpush.msra.mxu0 0.0
        %5379 = vmatpush.msra.mxu0 %v5221
        %5380 = vmatpush.msra.mxu0 %v5213
        %5381 = vmatpush.msra.mxu0 %v5205
        %5382 = vmatpush.msra.mxu0 %v5197
        %5383 = vmatpush.msra.mxu0 %v5189
        %5384 = vmatpush.msra.mxu0 %v5181
        %5385 = vmatpush.msra.mxu0 %v5173
        %5386 = vmatpush.msra.mxu0 %v5165
        %5387 = vmatpush.msra.mxu0 %v5157
        %5388 = vmatmul.f32.gmra.mxu0 %v5230
        %v5389 = vpop.f32.mrf.mxu0
        %v5390 = vadd.f32 %v5228, %v5389
        %5391 = vdwg.mxu0
        %v5392 = vlaneseq
        %v5393 = vand.u32 %v5392, 127
        %v5394 = vsel %vm1244, %v5250, 0.0
        %v5395 = vsel %vm1244, %v5270, 0.0
        %v5396 = vadd.f32 %v5394, %v5395
        %5397 = vadd.xlane.f32.xlu0 %v5396
        %v5398 = vpop.xlane.xlu0 %5397
        %v5399 = vmul.f32 %v5398, 0.00390625
        %vm5400 = vcmp.eq.s32.totalorder %v5393, 0
        %v5401 = vsel %vm5400, %v5399, 0.0
        %v5402 = vsel %vm1244, %v5290, 0.0
        %v5403 = vsel %vm1244, %v5310, 0.0
        %v5404 = vadd.f32 %v5402, %v5403
        %5405 = vadd.xlane.f32.xlu0 %v5404
        %v5406 = vpop.xlane.xlu0 %5405
        %v5407 = vmul.f32 %v5406, 0.00390625
        %vm5408 = vcmp.eq.s32.totalorder %v5393, 1
        %v5409 = vsel %vm5408, %v5407, %v5401
        %v5410 = vsel %vm1244, %v5330, 0.0
        %v5411 = vsel %vm1244, %v5350, 0.0
        %v5412 = vadd.f32 %v5410, %v5411
        %5413 = vadd.xlane.f32.xlu0 %v5412
        %v5414 = vpop.xlane.xlu0 %5413
        %v5415 = vmul.f32 %v5414, 0.00390625
        %vm5416 = vcmp.eq.s32.totalorder %v5393, 2
        %v5417 = vsel %vm5416, %v5415, %v5409
        %v5418 = vsel %vm1244, %v5370, 0.0
        %v5419 = vsel %vm1244, %v5390, 0.0
        %v5420 = vadd.f32 %v5418, %v5419
        %5421 = vadd.xlane.f32.xlu0 %v5420
        %v5422 = vpop.xlane.xlu0 %5421
        %v5423 = vmul.f32 %v5422, 0.00390625
        %vm5424 = vcmp.eq.s32.totalorder %v5393, 3
        %v5425 = vsel %vm5424, %v5423, %v5417
        %5426 = vst [vmem:[%s563] sm:$0x1] %v5425
        %p5427 = scmp.lt.s32.totalorder %s33, 1
        %s5428 = scalar_select %p5427, %s33, 1
        %s5429 = smul.addr %s5428, 8
        %s5430 = scalar_lea.vmem %s15, %s5429
        %p5431 = scmp.lt.s32.totalorder %s33, 1
        %s5432 = scalar_select %p5431, %s33, 1
        %s5433 = scalar_lea.vmem %s16, %s5432
        // Predicated region
        $region85: #{formant_discriminator_forward.1} parent=79 // pred_check
          %p5434 = pneg %p376
        $region86: #{formant_discriminator_forward.1} parent=79 // pred_check_branch
          %5436 = sbr.rel (%p5434) target = $region88
        $region87: #{formant_discriminator_forward.1} parent=79 // pred_region
          _
        $region88: #{formant_discriminator_forward.1} parent=79 // pred_fallthru
          _
        // Predicated region
        $region89: #{formant_discriminator_forward.1} parent=79 // pred_check
          %p5437 = pneg %p402
        $region90: #{formant_discriminator_forward.1} parent=79 // pred_check_branch
          %5439 = sbr.rel (%p5437) target = $region92
        $region91: #{formant_discriminator_forward.1} parent=79 // pred_region
          _
        $region92: #{formant_discriminator_forward.1} parent=79 // pred_fallthru
          _
      $region80: #{formant_discriminator_forward.1} parent=5 // pred_fallthru
        _
      %p5440 = scmp.le.s32.totalorder 2, %s28
      // Predicated region
      $region93: #{formant_discriminator_forward.1} parent=5 // pred_check
        %p5441 = pneg %p5440
      $region94: #{formant_discriminator_forward.1} parent=5 // pred_check_branch
        %5443 = sbr.rel (%p5441) target = $region96
      $region95: #{formant_discriminator_forward.1} parent=5 // pred_region
        %s5444 = ssub.s32 %s28, 2
        // Predicated region
        $region97: #{formant_discriminator_forward.1} parent=95 // pred_check
          %p5445 = pneg %p382
        $region98: #{formant_discriminator_forward.1} parent=95 // pred_check_branch
          %5447 = sbr.rel (%p5445) target = $region100
        $region99: #{formant_discriminator_forward.1} parent=95 // pred_region
          %p5448 = scmp.lt.s32.totalorder %s34, 1
          %s5449 = scalar_select %p5448, %s34, 1
          %s5450 = smul.addr %s5449, 8
          %s5451 = scalar_lea.vmem %s15, %s5450
        $region100: #{formant_discriminator_forward.1} parent=95 // pred_fallthru
          _
        // Predicated region
        $region101: #{formant_discriminator_forward.1} parent=95 // pred_check
          %p5452 = pneg %p408
        $region102: #{formant_discriminator_forward.1} parent=95 // pred_check_branch
          %5454 = sbr.rel (%p5452) target = $region104
        $region103: #{formant_discriminator_forward.1} parent=95 // pred_region
          %p5455 = scmp.lt.s32.totalorder %s34, 1
          %s5456 = scalar_select %p5455, %s34, 1
          %s5457 = scalar_lea.vmem %s16, %s5456
        $region104: #{formant_discriminator_forward.1} parent=95 // pred_fallthru
          _
      $region96: #{formant_discriminator_forward.1} parent=5 // pred_fallthru
        _
    $region6: #{formant_discriminator_forward.1} parent=1 // loop_footer
      %s32 = sadd.s32 1, %s28
    $region7: #{formant_discriminator_forward.1} parent=1 // loop_footer_branch
      %27 = sbr.rel target = $region3
    $region8: #{formant_discriminator_forward.1} parent=1 // loop_exit
      _
    %5458 = vsyncpa [#allocation6], 1
    %s5459 = scalar_lea.sflag [#allocation6], 1
    %5460 = vsyncpa %s5459, 1

</llo_original>
